<compile_context>
chip_gen: v7x
topology: tpu7x:2x2x1
jax: 0.10.0
libtpu: 0.0.40
codegen_flags: <defaults>
</compile_context>

<pallas_src>
import jax
import jax.numpy as jnp
from jax.experimental import pallas as pl
from jax.experimental.pallas import tpu as pltpu

_EPS = 1e-5
_SLOPE = 0.1  # LeakyReLU negative slope


def _leaky(v):
    return jnp.where(v >= 0, v, _SLOPE * v)


def _resblock_kernel(x_ref, w1_ref, g1_ref, be1_ref, w2_ref, g2_ref, be2_ref,
                     o_ref, pad_ref):
    N, H, W, CP = x_ref.shape
    NHW = N * H * W
    inv_n = 1.0 / float(NHW)

    # ---- zero ONLY the 1-pixel border ring (stays zero for both convs) ------
    zrow = jnp.zeros((N, 1, W + 2, CP), jnp.float32)
    zcol = jnp.zeros((N, H + 2, 1, CP), jnp.float32)
    pad_ref[:, 0:1, :, :] = zrow
    pad_ref[:, H + 1:H + 2, :, :] = zrow
    pad_ref[:, :, 0:1, :] = zcol
    pad_ref[:, :, W + 1:W + 2, :] = zcol

    def conv3x3(w_ref):
        """One im2col matmul over the current pad_ref interior."""
        xp = pad_ref[...]                                     # load once, slice the value
        cols = [xp[:, dy:dy + H, dx:dx + W, :]
                for dy in range(3) for dx in range(3)]        # 9 x (N, H, W, CP)
        patches = jnp.concatenate(cols, axis=-1)              # (N, H, W, 9*CP)
        patches = patches.reshape(NHW, 9 * CP).astype(jnp.bfloat16)
        # bf16 operands, f32 accumulation on the MXU.  No conv bias: it is
        # cancelled by the BatchNorm mean subtraction.
        return jnp.dot(patches, w_ref[...],
                       preferred_element_type=jnp.float32)    # (NHW, CP) f32

    def batchnorm(y, g_ref, b_ref):
        # single pass: sum + sum-of-squares, biased variance (torch training mode)
        s = jnp.sum(y, axis=0, keepdims=True)                 # (1, CP)
        ss = jnp.sum(y * y, axis=0, keepdims=True)            # (1, CP)
        mean = s * inv_n
        var = jnp.maximum(ss * inv_n - mean * mean, 0.0)
        scale = jax.lax.rsqrt(var + _EPS) * g_ref[...]
        return (y - mean) * scale + b_ref[...]

    # ---- conv1 + BN1 + LeakyReLU --------------------------------------------
    pad_ref[:, 1:H + 1, 1:W + 1, :] = x_ref[...]
    y = _leaky(batchnorm(conv3x3(w1_ref), g1_ref, be1_ref))   # (NHW, CP)

    # ---- conv2 + BN2 ---------------------------------------------------------
    pad_ref[:, 1:H + 1, 1:W + 1, :] = y.reshape(N, H, W, CP)  # border stays zero
    y = batchnorm(conv3x3(w2_ref), g2_ref, be2_ref)           # (NHW, CP)

    # ---- residual add + LeakyReLU (re-read x, do not keep it live) ----------
    o_ref[...] = _leaky(x_ref[...] + y.reshape(N, H, W, CP)).astype(o_ref.dtype)


def res_block_nchw(x_nchw, params):
    """x_nchw: (N, C, H, W) float32.  Params follow ResBlock.__init__ shapes."""
    N, C, H, W = x_nchw.shape
    CP = ((C + 127) // 128) * 128                       # lane-dense channel pad
    w1, b1, g1, be1, w2, b2, g2, be2 = params
    del b1, b2  # conv bias before BatchNorm is a mathematical no-op

    # NCHW -> NHWC, pad channels to CP with zeros (zero channels stay zero
    # through conv/BN/LeakyReLU/residual and are sliced off afterwards).
    x = jnp.transpose(x_nchw, (0, 2, 3, 1)).astype(jnp.float32)
    x = jnp.pad(x, ((0, 0), (0, 0), (0, 0), (0, CP - C)))

    def prep_w(w):  # (3, 3, C, C) HWIO -> (9*CP, CP) bf16, im2col-ordered
        wp = jnp.pad(w, ((0, 0), (0, 0), (0, CP - C), (0, CP - C)))
        return wp.reshape(9 * CP, CP).astype(jnp.bfloat16)

    def prep_vec(v, fill):  # (1, C) -> (1, CP) f32
        v = jnp.pad(v.reshape(-1), (0, CP - C), constant_values=fill)
        return v.reshape(1, CP).astype(jnp.float32)

    vspec = pl.BlockSpec(memory_space=pltpu.MemorySpace.VMEM)
    out = pl.pallas_call(
        _resblock_kernel,
        out_shape=jax.ShapeDtypeStruct((N, H, W, CP), jnp.float32),
        in_specs=[vspec] * 7,
        out_specs=vspec,
        scratch_shapes=[pltpu.VMEM((N, H + 2, W + 2, CP), jnp.float32)],
        compiler_params=pltpu.CompilerParams(vmem_limit_bytes=32 * 1024 * 1024),
    )(x, prep_w(w1), prep_vec(g1, 1.0), prep_vec(be1, 0.0),
         prep_w(w2), prep_vec(g2, 1.0), prep_vec(be2, 0.0))

    return jnp.transpose(out[..., :C], (0, 3, 1, 2))


# --------------------------- plain-JAX references -----------------------------
def _bn_ref(y, g, be):
    m = jnp.mean(y, axis=(0, 1, 2), keepdims=True)
    v = jnp.mean((y - m) ** 2, axis=(0, 1, 2), keepdims=True)
    return (y - m) * jax.lax.rsqrt(v + _EPS) * g.reshape(1, 1, 1, -1) \
        + be.reshape(1, 1, 1, -1)


def _reference_f32(x, params):
    """Faithful fp32 reference of the torch module (with conv bias)."""
    w1, b1, g1, be1, w2, b2, g2, be2 = params

    def conv(h, w, b):
        y = jax.lax.conv_general_dilated(
            h, w, (1, 1), 'SAME',
            dimension_numbers=('NHWC', 'HWIO', 'NHWC'),
            precision=jax.lax.Precision.HIGHEST)
        return y + b.reshape(1, 1, 1, -1)

    h = _leaky(_bn_ref(conv(x, w1, b1), g1, be1))
    h = _bn_ref(conv(h, w2, b2), g2, be2)
    return _leaky(x + h)


def _reference_bf16(x, params):
    """Mirrors the kernel numerics: bf16 conv operands, f32 accumulation, no bias."""
    w1, _, g1, be1, w2, _, g2, be2 = params

    def conv(h, w):
        return jax.lax.conv_general_dilated(
            h.astype(jnp.bfloat16), w.astype(jnp.bfloat16), (1, 1), 'SAME',
            dimension_numbers=('NHWC', 'HWIO', 'NHWC'),
            preferred_element_type=jnp.float32)

    h = _leaky(_bn_ref(conv(x, w1), g1, be1))
    h = _bn_ref(conv(h, w2), g2, be2)
    return _leaky(x + h)


def make_params(key, channels):
    """Deterministic synthetic parameters (shapes from ResBlock.__init__)."""
    k1, k2, k3, k4 = jax.random.split(key, 4)
    fan_in = channels * 3 * 3
    bound = 1.0 / jnp.sqrt(fan_in)
    w1 = jax.random.uniform(k1, (3, 3, channels, channels), jnp.float32, -bound, bound)
    b1 = jax.random.uniform(k2, (1, channels), jnp.float32, -bound, bound)
    w2 = jax.random.uniform(k3, (3, 3, channels, channels), jnp.float32, -bound, bound)
    b2 = jax.random.uniform(k4, (1, channels), jnp.float32, -bound, bound)
    # BatchNorm2d default init: weight=1, bias=0
    g1 = jnp.ones((1, channels), jnp.float32)
    be1 = jnp.zeros((1, channels), jnp.float32)
    g2 = jnp.ones((1, channels), jnp.float32)
    be2 = jnp.zeros((1, channels), jnp.float32)
    return (w1, b1, g1, be1, w2, b2, g2, be2)


if __name__ == "__main__":
    key = jax.random.PRNGKey(0)
    kx, kp = jax.random.split(key)

    N, C, H, W = 2, 4, 16, 16
    x_nchw = jax.random.normal(kx, (N, C, H, W), jnp.float32)
    params = make_params(kp, C)

    out = jax.block_until_ready(res_block_nchw(x_nchw, params))
    assert out.shape == (N, C, H, W) and out.dtype == jnp.float32

    x_nhwc = jnp.transpose(x_nchw, (0, 2, 3, 1))

    # tight check vs a reference that mirrors the kernel's bf16-MXU numerics
    ref_b = jnp.transpose(_reference_bf16(x_nhwc, params), (0, 3, 1, 2))
    assert jnp.allclose(out, ref_b, atol=1e-2, rtol=1e-2)

    # looser check vs the faithful fp32 torch-style reference (with conv bias:
    # its cancellation by BN is verified here too)
    ref_f = jnp.transpose(_reference_f32(x_nhwc, params), (0, 3, 1, 2))
    assert jnp.allclose(out, ref_f, atol=6e-2, rtol=6e-2)

    print("KERNEL_OK")
</pallas_src>

<mosaic_0001>
module attributes {stable_mosaic.version = 11 : i64} {
  func.func @_resblock_kernel(%arg0: memref<2x16x16x128xf32, #tpu.memory_space<vmem>>, %arg1: memref<1152x128xbf16, #tpu.memory_space<vmem>>, %arg2: memref<1x128xf32, #tpu.memory_space<vmem>>, %arg3: memref<1x128xf32, #tpu.memory_space<vmem>>, %arg4: memref<1152x128xbf16, #tpu.memory_space<vmem>>, %arg5: memref<1x128xf32, #tpu.memory_space<vmem>>, %arg6: memref<1x128xf32, #tpu.memory_space<vmem>>, %arg7: memref<2x16x16x128xf32, #tpu.memory_space<vmem>>, %arg8: memref<2x18x18x128xf32, #tpu.memory_space<vmem>>) attributes {dimension_semantics = [], scalar_prefetch = 0 : i64, scratch_operands = 1 : i64, tpu.core_type = #tpu.core_type<tc>} {
    %cst = arith.constant 0.000000e+00 : f32
    %0 = vector.broadcast %cst : f32 to vector<2x1x18x128xf32>
    %cst_0 = arith.constant 0.000000e+00 : f32
    %1 = vector.broadcast %cst_0 : f32 to vector<2x18x1x128xf32>
    %c0 = arith.constant 0 : index
    %c0_1 = arith.constant 0 : index
    %c0_2 = arith.constant 0 : index
    %c0_3 = arith.constant 0 : index
    %2 = vector.load %arg8[%c0, %c0_1, %c0_2, %c0_3] : memref<2x18x18x128xf32, #tpu.memory_space<vmem>>, vector<2x1x18x128xf32>
    tpu.vector_store %arg8[%c0, %c0_1, %c0_2, %c0_3], %0 {strides = array<i32>} : memref<2x18x18x128xf32, #tpu.memory_space<vmem>>, vector<2x1x18x128xf32>,
    %c0_4 = arith.constant 0 : index
    %c17 = arith.constant 17 : index
    %c0_5 = arith.constant 0 : index
    %c0_6 = arith.constant 0 : index
    %3 = vector.load %arg8[%c0_4, %c17, %c0_5, %c0_6] : memref<2x18x18x128xf32, #tpu.memory_space<vmem>>, vector<2x1x18x128xf32>
    tpu.vector_store %arg8[%c0_4, %c17, %c0_5, %c0_6], %0 {strides = array<i32>} : memref<2x18x18x128xf32, #tpu.memory_space<vmem>>, vector<2x1x18x128xf32>,
    %c0_7 = arith.constant 0 : index
    %c0_8 = arith.constant 0 : index
    %c0_9 = arith.constant 0 : index
    %c0_10 = arith.constant 0 : index
    %4 = vector.load %arg8[%c0_7, %c0_8, %c0_9, %c0_10] : memref<2x18x18x128xf32, #tpu.memory_space<vmem>>, vector<2x18x1x128xf32>
    tpu.vector_store %arg8[%c0_7, %c0_8, %c0_9, %c0_10], %1 {strides = array<i32>} : memref<2x18x18x128xf32, #tpu.memory_space<vmem>>, vector<2x18x1x128xf32>,
    %c0_11 = arith.constant 0 : index
    %c0_12 = arith.constant 0 : index
    %c17_13 = arith.constant 17 : index
    %c0_14 = arith.constant 0 : index
    %5 = vector.load %arg8[%c0_11, %c0_12, %c17_13, %c0_14] : memref<2x18x18x128xf32, #tpu.memory_space<vmem>>, vector<2x18x1x128xf32>
    tpu.vector_store %arg8[%c0_11, %c0_12, %c17_13, %c0_14], %1 {strides = array<i32>} : memref<2x18x18x128xf32, #tpu.memory_space<vmem>>, vector<2x18x1x128xf32>,
    %c0_15 = arith.constant 0 : index
    %c0_16 = arith.constant 0 : index
    %c0_17 = arith.constant 0 : index
    %c0_18 = arith.constant 0 : index
    %6 = vector.load %arg0[%c0_15, %c0_16, %c0_17, %c0_18] : memref<2x16x16x128xf32, #tpu.memory_space<vmem>>, vector<2x16x16x128xf32>
    %c0_19 = arith.constant 0 : index
    %c1 = arith.constant 1 : index
    %c1_20 = arith.constant 1 : index
    %c0_21 = arith.constant 0 : index
    %7 = vector.load %arg8[%c0_19, %c1, %c1_20, %c0_21] : memref<2x18x18x128xf32, #tpu.memory_space<vmem>>, vector<2x16x16x128xf32>
    tpu.vector_store %arg8[%c0_19, %c1, %c1_20, %c0_21], %6 {strides = array<i32>} : memref<2x18x18x128xf32, #tpu.memory_space<vmem>>, vector<2x16x16x128xf32>,
    %c0_22 = arith.constant 0 : index
    %c0_23 = arith.constant 0 : index
    %c0_24 = arith.constant 0 : index
    %c0_25 = arith.constant 0 : index
    %8 = vector.load %arg8[%c0_22, %c0_23, %c0_24, %c0_25] : memref<2x18x18x128xf32, #tpu.memory_space<vmem>>, vector<2x18x18x128xf32>
    %9 = vector.extract_strided_slice %8 {offsets = [0, 0, 0, 0], sizes = [2, 16, 16, 128], strides = [1, 1, 1, 1]} : vector<2x18x18x128xf32> to vector<2x16x16x128xf32>
    %10 = vector.extract_strided_slice %8 {offsets = [0, 0, 1, 0], sizes = [2, 16, 16, 128], strides = [1, 1, 1, 1]} : vector<2x18x18x128xf32> to vector<2x16x16x128xf32>
    %11 = vector.extract_strided_slice %8 {offsets = [0, 0, 2, 0], sizes = [2, 16, 16, 128], strides = [1, 1, 1, 1]} : vector<2x18x18x128xf32> to vector<2x16x16x128xf32>
    %12 = vector.extract_strided_slice %8 {offsets = [0, 1, 0, 0], sizes = [2, 16, 16, 128], strides = [1, 1, 1, 1]} : vector<2x18x18x128xf32> to vector<2x16x16x128xf32>
    %13 = vector.extract_strided_slice %8 {offsets = [0, 1, 1, 0], sizes = [2, 16, 16, 128], strides = [1, 1, 1, 1]} : vector<2x18x18x128xf32> to vector<2x16x16x128xf32>
    %14 = vector.extract_strided_slice %8 {offsets = [0, 1, 2, 0], sizes = [2, 16, 16, 128], strides = [1, 1, 1, 1]} : vector<2x18x18x128xf32> to vector<2x16x16x128xf32>
    %15 = vector.extract_strided_slice %8 {offsets = [0, 2, 0, 0], sizes = [2, 16, 16, 128], strides = [1, 1, 1, 1]} : vector<2x18x18x128xf32> to vector<2x16x16x128xf32>
    %16 = vector.extract_strided_slice %8 {offsets = [0, 2, 1, 0], sizes = [2, 16, 16, 128], strides = [1, 1, 1, 1]} : vector<2x18x18x128xf32> to vector<2x16x16x128xf32>
    %17 = vector.extract_strided_slice %8 {offsets = [0, 2, 2, 0], sizes = [2, 16, 16, 128], strides = [1, 1, 1, 1]} : vector<2x18x18x128xf32> to vector<2x16x16x128xf32>
    %18 = tpu.concatenate %9, %10, %11, %12, %13, %14, %15, %16, %17 in 3 : vector<2x16x16x128xf32>, vector<2x16x16x128xf32>, vector<2x16x16x128xf32>, vector<2x16x16x128xf32>, vector<2x16x16x128xf32>, vector<2x16x16x128xf32>, vector<2x16x16x128xf32>, vector<2x16x16x128xf32>, vector<2x16x16x128xf32> -> vector<2x16x16x1152xf32>
    %19 = vector.shape_cast %18 : vector<2x16x16x1152xf32> to vector<512x1152xf32>
    %20 = arith.truncf %19 : vector<512x1152xf32> to vector<512x1152xbf16>
    %c0_26 = arith.constant 0 : index
    %c0_27 = arith.constant 0 : index
    %21 = vector.load %arg1[%c0_26, %c0_27] : memref<1152x128xbf16, #tpu.memory_space<vmem>>, vector<1152x128xbf16>
    %cst_28 = arith.constant dense<0.000000e+00> : vector<512x128xf32>
    %22 = tpu.matmul %20, %21, %cst_28 {dimension_numbers = #tpu.dot_dimension_numbers<[1], [0], [0], [1], [0, 0, 1, 1], [], []>} : vector<512x1152xbf16>, vector<1152x128xbf16>, vector<512x128xf32> -> vector<512x128xf32>
    %cst_29 = arith.constant dense<0.000000e+00> : vector<128xf32>
    %23 = vector.multi_reduction <add>, %22, %cst_29 [0] : vector<512x128xf32> to vector<128xf32>
    %24 = vector.shape_cast %23 : vector<128xf32> to vector<1x128xf32>
    %25 = arith.mulf %22, %22 : vector<512x128xf32>
    %cst_30 = arith.constant dense<0.000000e+00> : vector<128xf32>
    %26 = vector.multi_reduction <add>, %25, %cst_30 [0] : vector<512x128xf32> to vector<128xf32>
    %27 = vector.shape_cast %26 : vector<128xf32> to vector<1x128xf32>
    %cst_31 = arith.constant 0.001953125 : f32
    %28 = vector.broadcast %cst_31 : f32 to vector<1x128xf32>
    %29 = arith.mulf %24, %28 : vector<1x128xf32>
    %cst_32 = arith.constant 0.001953125 : f32
    %30 = vector.broadcast %cst_32 : f32 to vector<1x128xf32>
    %31 = arith.mulf %27, %30 : vector<1x128xf32>
    %32 = arith.mulf %29, %29 : vector<1x128xf32>
    %33 = arith.subf %31, %32 : vector<1x128xf32>
    %cst_33 = arith.constant 0.000000e+00 : f32
    %34 = vector.broadcast %cst_33 : f32 to vector<1x128xf32>
    %35 = arith.maximumf %33, %34 : vector<1x128xf32>
    %cst_34 = arith.constant 9.99999974E-6 : f32
    %36 = vector.broadcast %cst_34 : f32 to vector<1x128xf32>
    %37 = arith.addf %35, %36 : vector<1x128xf32>
    %38 = math.rsqrt %37 : vector<1x128xf32>
    %c0_35 = arith.constant 0 : index
    %c0_36 = arith.constant 0 : index
    %39 = vector.load %arg2[%c0_35, %c0_36] : memref<1x128xf32, #tpu.memory_space<vmem>>, vector<1x128xf32>
    %40 = arith.mulf %38, %39 : vector<1x128xf32>
    %41 = vector.broadcast %29 : vector<1x128xf32> to vector<512x128xf32>
    %42 = arith.subf %22, %41 : vector<512x128xf32>
    %43 = vector.broadcast %40 : vector<1x128xf32> to vector<512x128xf32>
    %44 = arith.mulf %42, %43 : vector<512x128xf32>
    %c0_37 = arith.constant 0 : index
    %c0_38 = arith.constant 0 : index
    %45 = vector.load %arg3[%c0_37, %c0_38] : memref<1x128xf32, #tpu.memory_space<vmem>>, vector<1x128xf32>
    %46 = vector.broadcast %45 : vector<1x128xf32> to vector<512x128xf32>
    %47 = arith.addf %44, %46 : vector<512x128xf32>
    %cst_39 = arith.constant 0.000000e+00 : f32
    %48 = vector.broadcast %cst_39 : f32 to vector<512x128xf32>
    %49 = arith.cmpf oge, %47, %48 : vector<512x128xf32>
    %cst_40 = arith.constant 1.000000e-01 : f32
    %50 = vector.broadcast %cst_40 : f32 to vector<512x128xf32>
    %51 = arith.mulf %50, %47 : vector<512x128xf32>
    %52 = arith.select %49, %47, %51 : vector<512x128xi1>, vector<512x128xf32>
    %53 = vector.shape_cast %52 : vector<512x128xf32> to vector<2x16x16x128xf32>
    %c0_41 = arith.constant 0 : index
    %c1_42 = arith.constant 1 : index
    %c1_43 = arith.constant 1 : index
    %c0_44 = arith.constant 0 : index
    %54 = vector.load %arg8[%c0_41, %c1_42, %c1_43, %c0_44] : memref<2x18x18x128xf32, #tpu.memory_space<vmem>>, vector<2x16x16x128xf32>
    tpu.vector_store %arg8[%c0_41, %c1_42, %c1_43, %c0_44], %53 {strides = array<i32>} : memref<2x18x18x128xf32, #tpu.memory_space<vmem>>, vector<2x16x16x128xf32>,
    %c0_45 = arith.constant 0 : index
    %c0_46 = arith.constant 0 : index
    %c0_47 = arith.constant 0 : index
    %c0_48 = arith.constant 0 : index
    %55 = vector.load %arg8[%c0_45, %c0_46, %c0_47, %c0_48] : memref<2x18x18x128xf32, #tpu.memory_space<vmem>>, vector<2x18x18x128xf32>
    %56 = vector.extract_strided_slice %55 {offsets = [0, 0, 0, 0], sizes = [2, 16, 16, 128], strides = [1, 1, 1, 1]} : vector<2x18x18x128xf32> to vector<2x16x16x128xf32>
    %57 = vector.extract_strided_slice %55 {offsets = [0, 0, 1, 0], sizes = [2, 16, 16, 128], strides = [1, 1, 1, 1]} : vector<2x18x18x128xf32> to vector<2x16x16x128xf32>
    %58 = vector.extract_strided_slice %55 {offsets = [0, 0, 2, 0], sizes = [2, 16, 16, 128], strides = [1, 1, 1, 1]} : vector<2x18x18x128xf32> to vector<2x16x16x128xf32>
    %59 = vector.extract_strided_slice %55 {offsets = [0, 1, 0, 0], sizes = [2, 16, 16, 128], strides = [1, 1, 1, 1]} : vector<2x18x18x128xf32> to vector<2x16x16x128xf32>
    %60 = vector.extract_strided_slice %55 {offsets = [0, 1, 1, 0], sizes = [2, 16, 16, 128], strides = [1, 1, 1, 1]} : vector<2x18x18x128xf32> to vector<2x16x16x128xf32>
    %61 = vector.extract_strided_slice %55 {offsets = [0, 1, 2, 0], sizes = [2, 16, 16, 128], strides = [1, 1, 1, 1]} : vector<2x18x18x128xf32> to vector<2x16x16x128xf32>
    %62 = vector.extract_strided_slice %55 {offsets = [0, 2, 0, 0], sizes = [2, 16, 16, 128], strides = [1, 1, 1, 1]} : vector<2x18x18x128xf32> to vector<2x16x16x128xf32>
    %63 = vector.extract_strided_slice %55 {offsets = [0, 2, 1, 0], sizes = [2, 16, 16, 128], strides = [1, 1, 1, 1]} : vector<2x18x18x128xf32> to vector<2x16x16x128xf32>
    %64 = vector.extract_strided_slice %55 {offsets = [0, 2, 2, 0], sizes = [2, 16, 16, 128], strides = [1, 1, 1, 1]} : vector<2x18x18x128xf32> to vector<2x16x16x128xf32>
    %65 = tpu.concatenate %56, %57, %58, %59, %60, %61, %62, %63, %64 in 3 : vector<2x16x16x128xf32>, vector<2x16x16x128xf32>, vector<2x16x16x128xf32>, vector<2x16x16x128xf32>, vector<2x16x16x128xf32>, vector<2x16x16x128xf32>, vector<2x16x16x128xf32>, vector<2x16x16x128xf32>, vector<2x16x16x128xf32> -> vector<2x16x16x1152xf32>
    %66 = vector.shape_cast %65 : vector<2x16x16x1152xf32> to vector<512x1152xf32>
    %67 = arith.truncf %66 : vector<512x1152xf32> to vector<512x1152xbf16>
    %c0_49 = arith.constant 0 : index
    %c0_50 = arith.constant 0 : index
    %68 = vector.load %arg4[%c0_49, %c0_50] : memref<1152x128xbf16, #tpu.memory_space<vmem>>, vector<1152x128xbf16>
    %cst_51 = arith.constant dense<0.000000e+00> : vector<512x128xf32>
    %69 = tpu.matmul %67, %68, %cst_51 {dimension_numbers = #tpu.dot_dimension_numbers<[1], [0], [0], [1], [0, 0, 1, 1], [], []>} : vector<512x1152xbf16>, vector<1152x128xbf16>, vector<512x128xf32> -> vector<512x128xf32>
    %cst_52 = arith.constant dense<0.000000e+00> : vector<128xf32>
    %70 = vector.multi_reduction <add>, %69, %cst_52 [0] : vector<512x128xf32> to vector<128xf32>
    %71 = vector.shape_cast %70 : vector<128xf32> to vector<1x128xf32>
    %72 = arith.mulf %69, %69 : vector<512x128xf32>
    %cst_53 = arith.constant dense<0.000000e+00> : vector<128xf32>
    %73 = vector.multi_reduction <add>, %72, %cst_53 [0] : vector<512x128xf32> to vector<128xf32>
    %74 = vector.shape_cast %73 : vector<128xf32> to vector<1x128xf32>
    %cst_54 = arith.constant 0.001953125 : f32
    %75 = vector.broadcast %cst_54 : f32 to vector<1x128xf32>
    %76 = arith.mulf %71, %75 : vector<1x128xf32>
    %cst_55 = arith.constant 0.001953125 : f32
    %77 = vector.broadcast %cst_55 : f32 to vector<1x128xf32>
    %78 = arith.mulf %74, %77 : vector<1x128xf32>
    %79 = arith.mulf %76, %76 : vector<1x128xf32>
    %80 = arith.subf %78, %79 : vector<1x128xf32>
    %cst_56 = arith.constant 0.000000e+00 : f32
    %81 = vector.broadcast %cst_56 : f32 to vector<1x128xf32>
    %82 = arith.maximumf %80, %81 : vector<1x128xf32>
    %cst_57 = arith.constant 9.99999974E-6 : f32
    %83 = vector.broadcast %cst_57 : f32 to vector<1x128xf32>
    %84 = arith.addf %82, %83 : vector<1x128xf32>
    %85 = math.rsqrt %84 : vector<1x128xf32>
    %c0_58 = arith.constant 0 : index
    %c0_59 = arith.constant 0 : index
    %86 = vector.load %arg5[%c0_58, %c0_59] : memref<1x128xf32, #tpu.memory_space<vmem>>, vector<1x128xf32>
    %87 = arith.mulf %85, %86 : vector<1x128xf32>
    %88 = vector.broadcast %76 : vector<1x128xf32> to vector<512x128xf32>
    %89 = arith.subf %69, %88 : vector<512x128xf32>
    %90 = vector.broadcast %87 : vector<1x128xf32> to vector<512x128xf32>
    %91 = arith.mulf %89, %90 : vector<512x128xf32>
    %c0_60 = arith.constant 0 : index
    %c0_61 = arith.constant 0 : index
    %92 = vector.load %arg6[%c0_60, %c0_61] : memref<1x128xf32, #tpu.memory_space<vmem>>, vector<1x128xf32>
    %93 = vector.broadcast %92 : vector<1x128xf32> to vector<512x128xf32>
    %94 = arith.addf %91, %93 : vector<512x128xf32>
    %c0_62 = arith.constant 0 : index
    %c0_63 = arith.constant 0 : index
    %c0_64 = arith.constant 0 : index
    %c0_65 = arith.constant 0 : index
    %95 = vector.load %arg0[%c0_62, %c0_63, %c0_64, %c0_65] : memref<2x16x16x128xf32, #tpu.memory_space<vmem>>, vector<2x16x16x128xf32>
    %96 = vector.shape_cast %94 : vector<512x128xf32> to vector<2x16x16x128xf32>
    %97 = arith.addf %95, %96 : vector<2x16x16x128xf32>
    %cst_66 = arith.constant 0.000000e+00 : f32
    %98 = vector.broadcast %cst_66 : f32 to vector<2x16x16x128xf32>
    %99 = arith.cmpf oge, %97, %98 : vector<2x16x16x128xf32>
    %cst_67 = arith.constant 1.000000e-01 : f32
    %100 = vector.broadcast %cst_67 : f32 to vector<2x16x16x128xf32>
    %101 = arith.mulf %100, %97 : vector<2x16x16x128xf32>
    %102 = arith.select %99, %97, %101 : vector<2x16x16x128xi1>, vector<2x16x16x128xf32>
    %c0_68 = arith.constant 0 : index
    %c0_69 = arith.constant 0 : index
    %c0_70 = arith.constant 0 : index
    %c0_71 = arith.constant 0 : index
    %103 = vector.load %arg7[%c0_68, %c0_69, %c0_70, %c0_71] : memref<2x16x16x128xf32, #tpu.memory_space<vmem>>, vector<2x16x16x128xf32>
    tpu.vector_store %arg7[%c0_68, %c0_69, %c0_70, %c0_71], %102 {strides = array<i32>} : memref<2x16x16x128xf32, #tpu.memory_space<vmem>>, vector<2x16x16x128xf32>,
    return
  }
}

</mosaic_0001>

<llo_original>
// kernel: tpu_custom_call.1
$region0: #{tpu_custom_call.1}
  #allocation0 [shape = 'u32[]', space=smem, size = 0x4, offset = 0x4, fixed_abs, tag = 'smem constant byte address 0x4 - core index']
  #allocation1 [shape = 'u32[144,128]{1,0:T(1,128)}', space=vmem, size = 0x12000, scoped, tag = 'internal scratch']
  #allocation2 [shape = 'f32[2,18,18,128]{3,2,1,0:T(8,128)}', space=vmem, size = 0x6c000, scoped, tag = 'scratch operand']
  %s0 = inlined_call_operand.hbm [shape: f32[2,16,16,128], index: 0, kind: input, shape index: {}]
  %s1 = inlined_call_operand.hbm [shape: bf16[1152,128], index: 1, kind: input, shape index: {}]
  %s2 = inlined_call_operand.vmem [shape: f32[1,128], index: 2, kind: input, shape index: {}]
  %s3 = inlined_call_operand.vmem [shape: f32[1,128], index: 3, kind: input, shape index: {}]
  %s4 = inlined_call_operand.hbm [shape: bf16[1152,128], index: 4, kind: input, shape index: {}]
  %s5 = inlined_call_operand.vmem [shape: f32[1,128], index: 5, kind: input, shape index: {}]
  %s6 = inlined_call_operand.vmem [shape: f32[1,128], index: 6, kind: input, shape index: {}]
  %s7 = inlined_call_operand.hbm [shape: f32[2,16,16,128], index: 7, kind: output, shape index: {}]
  %s8 = sld [smem:[#allocation0]]
  $region50: #{tpu_custom_call.1} parent=0
    _
  %s10 = ssub.s32 1, %s8
  %s11 = scalar_select 0, %s10, %s8
  $region1: #{tpu_custom_call.1} parent=0
    #allocation3 [shape = 'u8[262144]{0}', space=vmem, size = 0x40000, scoped, tag = 'input window, operand 0, single buffered']
    #allocation4 [shape = 's32[1]{0}', space=sflag, size = 0x4, scoped, tag = 'scoped memory for tpu_custom_call.1']
    #allocation5 [shape = 's32[1]{0}', space=sflag, size = 0x4, scoped, tag = 'scoped memory for tpu_custom_call.1']
    #allocation6 [shape = 'u8[294912]{0}', space=vmem, size = 0x48000, scoped, tag = 'input window, operand 1, single buffered']
    #allocation7 [shape = 's32[1]{0}', space=sflag, size = 0x4, scoped, tag = 'scoped memory for tpu_custom_call.1']
    #allocation8 [shape = 'u8[294912]{0}', space=vmem, size = 0x48000, scoped, tag = 'input window, operand 4, single buffered']
    #allocation9 [shape = 'u8[262144]{0}', space=vmem, size = 0x40000, scoped, tag = 'output window, operand 0, single buffered']
    %12 = vsyncpa [#allocation4], 0
    %13 = vsyncpa [#allocation7], 0
    %14 = vsyncpa [#allocation5], 0
    // Predicated region
    $region2: #{tpu_custom_call.1} parent=1 // pred_check
      _
    $region3: #{tpu_custom_call.1} parent=1 // pred_check_branch
      %16 = sbr.rel (0) target = $region5
    $region4: #{tpu_custom_call.1} parent=1 // pred_region
      %s18 = ssub.s32 8192, 8192
      %19 = vsyncadd [#allocation4], %s18
      %s20 = sshll.u32 [#allocation3], 4
      %s21 = int_to_ptr.vmem [resolvable:$true] %s20
      %26 = dma.hbm_to_vmem [thread:$0]  %s0, 8192, %s21, [#allocation4], 128, 128, 8
    $region5: #{tpu_custom_call.1} parent=1 // pred_fallthru
      _
    // Predicated region
    $region6: #{tpu_custom_call.1} parent=1 // pred_check
      _
    $region7: #{tpu_custom_call.1} parent=1 // pred_check_branch
      %28 = sbr.rel (0) target = $region9
    $region8: #{tpu_custom_call.1} parent=1 // pred_region
      %s30 = ssub.s32 9216, 9216
      %31 = vsyncadd [#allocation7], %s30
      %s32 = sshll.u32 [#allocation6], 4
      %s33 = int_to_ptr.vmem [resolvable:$true] %s32
      %38 = dma.hbm_to_vmem [thread:$0]  %s1, 9216, %s33, [#allocation7], 64, 64, 4
    $region9: #{tpu_custom_call.1} parent=1 // pred_fallthru
      _
    // Predicated region
    $region10: #{tpu_custom_call.1} parent=1 // pred_check
      _
    $region11: #{tpu_custom_call.1} parent=1 // pred_check_branch
      %40 = sbr.rel (0) target = $region13
    $region12: #{tpu_custom_call.1} parent=1 // pred_region
      _
    $region13: #{tpu_custom_call.1} parent=1 // pred_fallthru
      _
    // Predicated region
    $region14: #{tpu_custom_call.1} parent=1 // pred_check
      _
    $region15: #{tpu_custom_call.1} parent=1 // pred_check_branch
      %42 = sbr.rel (0) target = $region17
    $region16: #{tpu_custom_call.1} parent=1 // pred_region
      _
    $region17: #{tpu_custom_call.1} parent=1 // pred_fallthru
      _
    // Predicated region
    $region18: #{tpu_custom_call.1} parent=1 // pred_check
      _
    $region19: #{tpu_custom_call.1} parent=1 // pred_check_branch
      %44 = sbr.rel (0) target = $region21
    $region20: #{tpu_custom_call.1} parent=1 // pred_region
      %s46 = ssub.s32 9216, 9216
      %47 = vsyncadd [#allocation7], %s46
      %s48 = sshll.u32 [#allocation8], 4
      %s49 = int_to_ptr.vmem [resolvable:$true] %s48
      %54 = dma.hbm_to_vmem [thread:$0]  %s4, 9216, %s49, [#allocation7], 64, 64, 4
    $region21: #{tpu_custom_call.1} parent=1 // pred_fallthru
      _
    // Predicated region
    $region22: #{tpu_custom_call.1} parent=1 // pred_check
      _
    $region23: #{tpu_custom_call.1} parent=1 // pred_check_branch
      %56 = sbr.rel (0) target = $region25
    $region24: #{tpu_custom_call.1} parent=1 // pred_region
      _
    $region25: #{tpu_custom_call.1} parent=1 // pred_fallthru
      _
    // Predicated region
    $region26: #{tpu_custom_call.1} parent=1 // pred_check
      _
    $region27: #{tpu_custom_call.1} parent=1 // pred_check_branch
      %58 = sbr.rel (0) target = $region29
    $region28: #{tpu_custom_call.1} parent=1 // pred_region
      _
    $region29: #{tpu_custom_call.1} parent=1 // pred_fallthru
      _
    // Predicated region
    $region30: #{tpu_custom_call.1} parent=1 // pred_check
      _
    $region31: #{tpu_custom_call.1} parent=1 // pred_check_branch
      %60 = sbr.rel (0) target = $region33
    $region32: #{tpu_custom_call.1} parent=1 // pred_region
      %61 = dma.done [#allocation4], 8192
    $region33: #{tpu_custom_call.1} parent=1 // pred_fallthru
      _
    // Predicated region
    $region34: #{tpu_custom_call.1} parent=1 // pred_check
      _
    $region35: #{tpu_custom_call.1} parent=1 // pred_check_branch
      %63 = sbr.rel (0) target = $region37
    $region36: #{tpu_custom_call.1} parent=1 // pred_region
      %64 = dma.done [#allocation7], 9216
    $region37: #{tpu_custom_call.1} parent=1 // pred_fallthru
      _
    // Predicated region
    $region38: #{tpu_custom_call.1} parent=1 // pred_check
      _
    $region39: #{tpu_custom_call.1} parent=1 // pred_check_branch
      %66 = sbr.rel (0) target = $region41
    $region40: #{tpu_custom_call.1} parent=1 // pred_region
      %67 = dma.done [#allocation7], 9216
    $region41: #{tpu_custom_call.1} parent=1 // pred_fallthru
      _
    %69 = vst [vmem:[#allocation2] sm:$0xff] 0.0
    %70 = vst [vmem:[#allocation2 + $0x8] sm:$0xff] 0.0
    %71 = vst [vmem:[#allocation2 + $0x10] sm:$0x3] 0.0
    %72 = vst [vmem:[#allocation2 + $0x1b0] sm:$0xff] 0.0
    %73 = vst [vmem:[#allocation2 + $0x1b8] sm:$0xff] 0.0
    %74 = vst [vmem:[#allocation2 + $0x1c0] sm:$0x3] 0.0
    %s75 = scalar_lea.vmem [#allocation2], 408
    %76 = vst [vmem:[%s75] sm:$0xff] 0.0
    %77 = vst [vmem:[%s75 + $0x8] sm:$0xff] 0.0
    %78 = vst [vmem:[%s75 + $0x10] sm:$0x3] 0.0
    %79 = vst [vmem:[%s75 + $0x1b0] sm:$0xff] 0.0
    %80 = vst [vmem:[%s75 + $0x1b8] sm:$0xff] 0.0
    %81 = vst [vmem:[%s75 + $0x1c0] sm:$0x3] 0.0
    %82 = vst [vmem:[#allocation2] sm:$0x1] 0.0
    %83 = vst [vmem:[#allocation2 + $0x18] sm:$0x1] 0.0
    %84 = vst [vmem:[#allocation2 + $0x30] sm:$0x1] 0.0
    %85 = vst [vmem:[#allocation2 + $0x48] sm:$0x1] 0.0
    %86 = vst [vmem:[#allocation2 + $0x60] sm:$0x1] 0.0
    %87 = vst [vmem:[#allocation2 + $0x78] sm:$0x1] 0.0
    %88 = vst [vmem:[#allocation2 + $0x90] sm:$0x1] 0.0
    %89 = vst [vmem:[#allocation2 + $0xa8] sm:$0x1] 0.0
    %90 = vst [vmem:[#allocation2 + $0xc0] sm:$0x1] 0.0
    %91 = vst [vmem:[#allocation2 + $0xd8] sm:$0x1] 0.0
    %92 = vst [vmem:[#allocation2 + $0xf0] sm:$0x1] 0.0
    %93 = vst [vmem:[#allocation2 + $0x108] sm:$0x1] 0.0
    %94 = vst [vmem:[#allocation2 + $0x120] sm:$0x1] 0.0
    %95 = vst [vmem:[#allocation2 + $0x138] sm:$0x1] 0.0
    %96 = vst [vmem:[#allocation2 + $0x150] sm:$0x1] 0.0
    %97 = vst [vmem:[#allocation2 + $0x168] sm:$0x1] 0.0
    %98 = vst [vmem:[#allocation2 + $0x180] sm:$0x1] 0.0
    %99 = vst [vmem:[#allocation2 + $0x198] sm:$0x1] 0.0
    %100 = vst [vmem:[#allocation2 + $0x1b0] sm:$0x1] 0.0
    %101 = vst [vmem:[#allocation2 + $0x1c8] sm:$0x1] 0.0
    %102 = vst [vmem:[#allocation2 + $0x1e0] sm:$0x1] 0.0
    %103 = vst [vmem:[#allocation2 + $0x1f8] sm:$0x1] 0.0
    %104 = vst [vmem:[#allocation2 + $0x210] sm:$0x1] 0.0
    %105 = vst [vmem:[#allocation2 + $0x228] sm:$0x1] 0.0
    %106 = vst [vmem:[#allocation2 + $0x240] sm:$0x1] 0.0
    %107 = vst [vmem:[#allocation2 + $0x258] sm:$0x1] 0.0
    %108 = vst [vmem:[#allocation2 + $0x270] sm:$0x1] 0.0
    %109 = vst [vmem:[#allocation2 + $0x288] sm:$0x1] 0.0
    %110 = vst [vmem:[#allocation2 + $0x2a0] sm:$0x1] 0.0
    %111 = vst [vmem:[#allocation2 + $0x2b8] sm:$0x1] 0.0
    %112 = vst [vmem:[#allocation2 + $0x2d0] sm:$0x1] 0.0
    %113 = vst [vmem:[#allocation2 + $0x2e8] sm:$0x1] 0.0
    %114 = vst [vmem:[#allocation2 + $0x300] sm:$0x1] 0.0
    %115 = vst [vmem:[#allocation2 + $0x318] sm:$0x1] 0.0
    %116 = vst [vmem:[#allocation2 + $0x330] sm:$0x1] 0.0
    %117 = vst [vmem:[#allocation2 + $0x348] sm:$0x1] 0.0
    %118 = vst [vmem:[#allocation2 + $0x11] sm:$0x1] 0.0
    %119 = vst [vmem:[#allocation2 + $0x29] sm:$0x1] 0.0
    %120 = vst [vmem:[#allocation2 + $0x41] sm:$0x1] 0.0
    %121 = vst [vmem:[#allocation2 + $0x59] sm:$0x1] 0.0
    %122 = vst [vmem:[#allocation2 + $0x71] sm:$0x1] 0.0
    %123 = vst [vmem:[#allocation2 + $0x89] sm:$0x1] 0.0
    %124 = vst [vmem:[#allocation2 + $0xa1] sm:$0x1] 0.0
    %125 = vst [vmem:[#allocation2 + $0xb9] sm:$0x1] 0.0
    %126 = vst [vmem:[#allocation2 + $0xd1] sm:$0x1] 0.0
    %127 = vst [vmem:[#allocation2 + $0xe9] sm:$0x1] 0.0
    %128 = vst [vmem:[#allocation2 + $0x101] sm:$0x1] 0.0
    %129 = vst [vmem:[#allocation2 + $0x119] sm:$0x1] 0.0
    %130 = vst [vmem:[#allocation2 + $0x131] sm:$0x1] 0.0
    %131 = vst [vmem:[#allocation2 + $0x149] sm:$0x1] 0.0
    %132 = vst [vmem:[#allocation2 + $0x161] sm:$0x1] 0.0
    %133 = vst [vmem:[#allocation2 + $0x179] sm:$0x1] 0.0
    %134 = vst [vmem:[#allocation2 + $0x191] sm:$0x1] 0.0
    %135 = vst [vmem:[#allocation2 + $0x1a9] sm:$0x1] 0.0
    %136 = vst [vmem:[#allocation2 + $0x1c1] sm:$0x1] 0.0
    %137 = vst [vmem:[#allocation2 + $0x1d9] sm:$0x1] 0.0
    %138 = vst [vmem:[#allocation2 + $0x1f1] sm:$0x1] 0.0
    %139 = vst [vmem:[#allocation2 + $0x209] sm:$0x1] 0.0
    %140 = vst [vmem:[#allocation2 + $0x221] sm:$0x1] 0.0
    %141 = vst [vmem:[#allocation2 + $0x239] sm:$0x1] 0.0
    %142 = vst [vmem:[#allocation2 + $0x251] sm:$0x1] 0.0
    %143 = vst [vmem:[#allocation2 + $0x269] sm:$0x1] 0.0
    %144 = vst [vmem:[#allocation2 + $0x281] sm:$0x1] 0.0
    %145 = vst [vmem:[#allocation2 + $0x299] sm:$0x1] 0.0
    %146 = vst [vmem:[#allocation2 + $0x2b1] sm:$0x1] 0.0
    %147 = vst [vmem:[#allocation2 + $0x2c9] sm:$0x1] 0.0
    %148 = vst [vmem:[#allocation2 + $0x2e1] sm:$0x1] 0.0
    %149 = vst [vmem:[#allocation2 + $0x2f9] sm:$0x1] 0.0
    %150 = vst [vmem:[#allocation2 + $0x311] sm:$0x1] 0.0
    %151 = vst [vmem:[#allocation2 + $0x329] sm:$0x1] 0.0
    %152 = vst [vmem:[#allocation2 + $0x341] sm:$0x1] 0.0
    %153 = vst [vmem:[#allocation2 + $0x359] sm:$0x1] 0.0
    %v154 = vld [vmem:[#allocation3] sm:$0xff]
    %v155 = vld [vmem:[#allocation3 + $0x8] sm:$0xff]
    %v156 = vld [vmem:[#allocation3 + $0x10] sm:$0xff]
    %v157 = vld [vmem:[#allocation3 + $0x18] sm:$0xff]
    %v158 = vld [vmem:[#allocation3 + $0x20] sm:$0xff]
    %v159 = vld [vmem:[#allocation3 + $0x28] sm:$0xff]
    %v160 = vld [vmem:[#allocation3 + $0x30] sm:$0xff]
    %v161 = vld [vmem:[#allocation3 + $0x38] sm:$0xff]
    %v162 = vld [vmem:[#allocation3 + $0x40] sm:$0xff]
    %v163 = vld [vmem:[#allocation3 + $0x48] sm:$0xff]
    %v164 = vld [vmem:[#allocation3 + $0x50] sm:$0xff]
    %v165 = vld [vmem:[#allocation3 + $0x58] sm:$0xff]
    %v166 = vld [vmem:[#allocation3 + $0x60] sm:$0xff]
    %v167 = vld [vmem:[#allocation3 + $0x68] sm:$0xff]
    %v168 = vld [vmem:[#allocation3 + $0x70] sm:$0xff]
    %v169 = vld [vmem:[#allocation3 + $0x78] sm:$0xff]
    %v170 = vld [vmem:[#allocation3 + $0x80] sm:$0xff]
    %v171 = vld [vmem:[#allocation3 + $0x88] sm:$0xff]
    %v172 = vld [vmem:[#allocation3 + $0x90] sm:$0xff]
    %v173 = vld [vmem:[#allocation3 + $0x98] sm:$0xff]
    %v174 = vld [vmem:[#allocation3 + $0xa0] sm:$0xff]
    %v175 = vld [vmem:[#allocation3 + $0xa8] sm:$0xff]
    %v176 = vld [vmem:[#allocation3 + $0xb0] sm:$0xff]
    %v177 = vld [vmem:[#allocation3 + $0xb8] sm:$0xff]
    %v178 = vld [vmem:[#allocation3 + $0xc0] sm:$0xff]
    %v179 = vld [vmem:[#allocation3 + $0xc8] sm:$0xff]
    %v180 = vld [vmem:[#allocation3 + $0xd0] sm:$0xff]
    %v181 = vld [vmem:[#allocation3 + $0xd8] sm:$0xff]
    %v182 = vld [vmem:[#allocation3 + $0xe0] sm:$0xff]
    %v183 = vld [vmem:[#allocation3 + $0xe8] sm:$0xff]
    %v184 = vld [vmem:[#allocation3 + $0xf0] sm:$0xff]
    %v185 = vld [vmem:[#allocation3 + $0xf8] sm:$0xff]
    %v186 = vld [vmem:[#allocation3 + $0x100] sm:$0xff]
    %v187 = vld [vmem:[#allocation3 + $0x108] sm:$0xff]
    %v188 = vld [vmem:[#allocation3 + $0x110] sm:$0xff]
    %v189 = vld [vmem:[#allocation3 + $0x118] sm:$0xff]
    %v190 = vld [vmem:[#allocation3 + $0x120] sm:$0xff]
    %v191 = vld [vmem:[#allocation3 + $0x128] sm:$0xff]
    %v192 = vld [vmem:[#allocation3 + $0x130] sm:$0xff]
    %v193 = vld [vmem:[#allocation3 + $0x138] sm:$0xff]
    %v194 = vld [vmem:[#allocation3 + $0x140] sm:$0xff]
    %v195 = vld [vmem:[#allocation3 + $0x148] sm:$0xff]
    %v196 = vld [vmem:[#allocation3 + $0x150] sm:$0xff]
    %v197 = vld [vmem:[#allocation3 + $0x158] sm:$0xff]
    %v198 = vld [vmem:[#allocation3 + $0x160] sm:$0xff]
    %v199 = vld [vmem:[#allocation3 + $0x168] sm:$0xff]
    %v200 = vld [vmem:[#allocation3 + $0x170] sm:$0xff]
    %v201 = vld [vmem:[#allocation3 + $0x178] sm:$0xff]
    %v202 = vld [vmem:[#allocation3 + $0x180] sm:$0xff]
    %v203 = vld [vmem:[#allocation3 + $0x188] sm:$0xff]
    %v204 = vld [vmem:[#allocation3 + $0x190] sm:$0xff]
    %v205 = vld [vmem:[#allocation3 + $0x198] sm:$0xff]
    %v206 = vld [vmem:[#allocation3 + $0x1a0] sm:$0xff]
    %v207 = vld [vmem:[#allocation3 + $0x1a8] sm:$0xff]
    %v208 = vld [vmem:[#allocation3 + $0x1b0] sm:$0xff]
    %v209 = vld [vmem:[#allocation3 + $0x1b8] sm:$0xff]
    %v210 = vld [vmem:[#allocation3 + $0x1c0] sm:$0xff]
    %v211 = vld [vmem:[#allocation3 + $0x1c8] sm:$0xff]
    %v212 = vld [vmem:[#allocation3 + $0x1d0] sm:$0xff]
    %v213 = vld [vmem:[#allocation3 + $0x1d8] sm:$0xff]
    %v214 = vld [vmem:[#allocation3 + $0x1e0] sm:$0xff]
    %v215 = vld [vmem:[#allocation3 + $0x1e8] sm:$0xff]
    %v216 = vld [vmem:[#allocation3 + $0x1f0] sm:$0xff]
    %v217 = vld [vmem:[#allocation3 + $0x1f8] sm:$0xff]
    %s218 = scalar_lea.vmem [#allocation2], 24
    %219 = vst [vmem:[%s218 + $0x1] sm:$0xff] %v154
    %220 = vst [vmem:[%s218 + $0x9] sm:$0xff] %v155
    %221 = vst [vmem:[%s218 + $0x19] sm:$0xff] %v156
    %222 = vst [vmem:[%s218 + $0x21] sm:$0xff] %v157
    %223 = vst [vmem:[%s218 + $0x31] sm:$0xff] %v158
    %224 = vst [vmem:[%s218 + $0x39] sm:$0xff] %v159
    %225 = vst [vmem:[%s218 + $0x49] sm:$0xff] %v160
    %226 = vst [vmem:[%s218 + $0x51] sm:$0xff] %v161
    %227 = vst [vmem:[%s218 + $0x61] sm:$0xff] %v162
    %228 = vst [vmem:[%s218 + $0x69] sm:$0xff] %v163
    %229 = vst [vmem:[%s218 + $0x79] sm:$0xff] %v164
    %230 = vst [vmem:[%s218 + $0x81] sm:$0xff] %v165
    %231 = vst [vmem:[%s218 + $0x91] sm:$0xff] %v166
    %232 = vst [vmem:[%s218 + $0x99] sm:$0xff] %v167
    %233 = vst [vmem:[%s218 + $0xa9] sm:$0xff] %v168
    %234 = vst [vmem:[%s218 + $0xb1] sm:$0xff] %v169
    %235 = vst [vmem:[%s218 + $0xc1] sm:$0xff] %v170
    %236 = vst [vmem:[%s218 + $0xc9] sm:$0xff] %v171
    %237 = vst [vmem:[%s218 + $0xd9] sm:$0xff] %v172
    %238 = vst [vmem:[%s218 + $0xe1] sm:$0xff] %v173
    %239 = vst [vmem:[%s218 + $0xf1] sm:$0xff] %v174
    %240 = vst [vmem:[%s218 + $0xf9] sm:$0xff] %v175
    %241 = vst [vmem:[%s218 + $0x109] sm:$0xff] %v176
    %242 = vst [vmem:[%s218 + $0x111] sm:$0xff] %v177
    %243 = vst [vmem:[%s218 + $0x121] sm:$0xff] %v178
    %244 = vst [vmem:[%s218 + $0x129] sm:$0xff] %v179
    %245 = vst [vmem:[%s218 + $0x139] sm:$0xff] %v180
    %246 = vst [vmem:[%s218 + $0x141] sm:$0xff] %v181
    %247 = vst [vmem:[%s218 + $0x151] sm:$0xff] %v182
    %248 = vst [vmem:[%s218 + $0x159] sm:$0xff] %v183
    %249 = vst [vmem:[%s218 + $0x169] sm:$0xff] %v184
    %250 = vst [vmem:[%s218 + $0x171] sm:$0xff] %v185
    %251 = vst [vmem:[%s218 + $0x1b1] sm:$0xff] %v186
    %252 = vst [vmem:[%s218 + $0x1b9] sm:$0xff] %v187
    %253 = vst [vmem:[%s218 + $0x1c9] sm:$0xff] %v188
    %254 = vst [vmem:[%s218 + $0x1d1] sm:$0xff] %v189
    %255 = vst [vmem:[%s218 + $0x1e1] sm:$0xff] %v190
    %256 = vst [vmem:[%s218 + $0x1e9] sm:$0xff] %v191
    %257 = vst [vmem:[%s218 + $0x1f9] sm:$0xff] %v192
    %258 = vst [vmem:[%s218 + $0x201] sm:$0xff] %v193
    %259 = vst [vmem:[%s218 + $0x211] sm:$0xff] %v194
    %260 = vst [vmem:[%s218 + $0x219] sm:$0xff] %v195
    %261 = vst [vmem:[%s218 + $0x229] sm:$0xff] %v196
    %262 = vst [vmem:[%s218 + $0x231] sm:$0xff] %v197
    %263 = vst [vmem:[%s218 + $0x241] sm:$0xff] %v198
    %264 = vst [vmem:[%s218 + $0x249] sm:$0xff] %v199
    %265 = vst [vmem:[%s218 + $0x259] sm:$0xff] %v200
    %266 = vst [vmem:[%s218 + $0x261] sm:$0xff] %v201
    %267 = vst [vmem:[%s218 + $0x271] sm:$0xff] %v202
    %268 = vst [vmem:[%s218 + $0x279] sm:$0xff] %v203
    %269 = vst [vmem:[%s218 + $0x289] sm:$0xff] %v204
    %270 = vst [vmem:[%s218 + $0x291] sm:$0xff] %v205
    %271 = vst [vmem:[%s218 + $0x2a1] sm:$0xff] %v206
    %272 = vst [vmem:[%s218 + $0x2a9] sm:$0xff] %v207
    %273 = vst [vmem:[%s218 + $0x2b9] sm:$0xff] %v208
    %274 = vst [vmem:[%s218 + $0x2c1] sm:$0xff] %v209
    %275 = vst [vmem:[%s218 + $0x2d1] sm:$0xff] %v210
    %276 = vst [vmem:[%s218 + $0x2d9] sm:$0xff] %v211
    %277 = vst [vmem:[%s218 + $0x2e9] sm:$0xff] %v212
    %278 = vst [vmem:[%s218 + $0x2f1] sm:$0xff] %v213
    %279 = vst [vmem:[%s218 + $0x301] sm:$0xff] %v214
    %280 = vst [vmem:[%s218 + $0x309] sm:$0xff] %v215
    %281 = vst [vmem:[%s218 + $0x319] sm:$0xff] %v216
    %282 = vst [vmem:[%s218 + $0x321] sm:$0xff] %v217
    %v283 = vld [vmem:[#allocation2] sm:$0xff]
    %v284 = vld [vmem:[#allocation2 + $0x8] sm:$0xff]
    %v285 = vld [vmem:[#allocation2 + $0x10] sm:$0x3]
    %v286 = vld [vmem:[#allocation2 + $0x18] sm:$0xff]
    %v287 = vld [vmem:[#allocation2 + $0x20] sm:$0xff]
    %v288 = vld [vmem:[#allocation2 + $0x28] sm:$0x3]
    %v289 = vld [vmem:[#allocation2 + $0x30] sm:$0xff]
    %v290 = vld [vmem:[#allocation2 + $0x38] sm:$0xff]
    %v291 = vld [vmem:[#allocation2 + $0x40] sm:$0x3]
    %v292 = vld [vmem:[#allocation2 + $0x48] sm:$0xff]
    %v293 = vld [vmem:[#allocation2 + $0x50] sm:$0xff]
    %v294 = vld [vmem:[#allocation2 + $0x58] sm:$0x3]
    %v295 = vld [vmem:[#allocation2 + $0x60] sm:$0xff]
    %v296 = vld [vmem:[#allocation2 + $0x68] sm:$0xff]
    %v297 = vld [vmem:[#allocation2 + $0x70] sm:$0x3]
    %v298 = vld [vmem:[#allocation2 + $0x78] sm:$0xff]
    %v299 = vld [vmem:[#allocation2 + $0x80] sm:$0xff]
    %v300 = vld [vmem:[#allocation2 + $0x88] sm:$0x3]
    %v301 = vld [vmem:[#allocation2 + $0x90] sm:$0xff]
    %v302 = vld [vmem:[#allocation2 + $0x98] sm:$0xff]
    %v303 = vld [vmem:[#allocation2 + $0xa0] sm:$0x3]
    %v304 = vld [vmem:[#allocation2 + $0xa8] sm:$0xff]
    %v305 = vld [vmem:[#allocation2 + $0xb0] sm:$0xff]
    %v306 = vld [vmem:[#allocation2 + $0xb8] sm:$0x3]
    %v307 = vld [vmem:[#allocation2 + $0xc0] sm:$0xff]
    %v308 = vld [vmem:[#allocation2 + $0xc8] sm:$0xff]
    %v309 = vld [vmem:[#allocation2 + $0xd0] sm:$0x3]
    %v310 = vld [vmem:[#allocation2 + $0xd8] sm:$0xff]
    %v311 = vld [vmem:[#allocation2 + $0xe0] sm:$0xff]
    %v312 = vld [vmem:[#allocation2 + $0xe8] sm:$0x3]
    %v313 = vld [vmem:[#allocation2 + $0xf0] sm:$0xff]
    %v314 = vld [vmem:[#allocation2 + $0xf8] sm:$0xff]
    %v315 = vld [vmem:[#allocation2 + $0x100] sm:$0x3]
    %v316 = vld [vmem:[#allocation2 + $0x108] sm:$0xff]
    %v317 = vld [vmem:[#allocation2 + $0x110] sm:$0xff]
    %v318 = vld [vmem:[#allocation2 + $0x118] sm:$0x3]
    %v319 = vld [vmem:[#allocation2 + $0x120] sm:$0xff]
    %v320 = vld [vmem:[#allocation2 + $0x128] sm:$0xff]
    %v321 = vld [vmem:[#allocation2 + $0x130] sm:$0x3]
    %v322 = vld [vmem:[#allocation2 + $0x138] sm:$0xff]
    %v323 = vld [vmem:[#allocation2 + $0x140] sm:$0xff]
    %v324 = vld [vmem:[#allocation2 + $0x148] sm:$0x3]
    %v325 = vld [vmem:[#allocation2 + $0x150] sm:$0xff]
    %v326 = vld [vmem:[#allocation2 + $0x158] sm:$0xff]
    %v327 = vld [vmem:[#allocation2 + $0x160] sm:$0x3]
    %v328 = vld [vmem:[#allocation2 + $0x168] sm:$0xff]
    %v329 = vld [vmem:[#allocation2 + $0x170] sm:$0xff]
    %v330 = vld [vmem:[#allocation2 + $0x178] sm:$0x3]
    %v331 = vld [vmem:[#allocation2 + $0x180] sm:$0xff]
    %v332 = vld [vmem:[#allocation2 + $0x188] sm:$0xff]
    %v333 = vld [vmem:[#allocation2 + $0x190] sm:$0x3]
    %v334 = vld [vmem:[#allocation2 + $0x198] sm:$0xff]
    %v335 = vld [vmem:[#allocation2 + $0x1a0] sm:$0xff]
    %v336 = vld [vmem:[#allocation2 + $0x1a8] sm:$0x3]
    %v337 = vld [vmem:[#allocation2 + $0x1b0] sm:$0xff]
    %v338 = vld [vmem:[#allocation2 + $0x1b8] sm:$0xff]
    %v339 = vld [vmem:[#allocation2 + $0x1c0] sm:$0x3]
    %v340 = vld [vmem:[#allocation2 + $0x1c8] sm:$0xff]
    %v341 = vld [vmem:[#allocation2 + $0x1d0] sm:$0xff]
    %v342 = vld [vmem:[#allocation2 + $0x1d8] sm:$0x3]
    %v343 = vld [vmem:[#allocation2 + $0x1e0] sm:$0xff]
    %v344 = vld [vmem:[#allocation2 + $0x1e8] sm:$0xff]
    %v345 = vld [vmem:[#allocation2 + $0x1f0] sm:$0x3]
    %v346 = vld [vmem:[#allocation2 + $0x1f8] sm:$0xff]
    %v347 = vld [vmem:[#allocation2 + $0x200] sm:$0xff]
    %v348 = vld [vmem:[#allocation2 + $0x208] sm:$0x3]
    %v349 = vld [vmem:[#allocation2 + $0x210] sm:$0xff]
    %v350 = vld [vmem:[#allocation2 + $0x218] sm:$0xff]
    %v351 = vld [vmem:[#allocation2 + $0x220] sm:$0x3]
    %v352 = vld [vmem:[#allocation2 + $0x228] sm:$0xff]
    %v353 = vld [vmem:[#allocation2 + $0x230] sm:$0xff]
    %v354 = vld [vmem:[#allocation2 + $0x238] sm:$0x3]
    %v355 = vld [vmem:[#allocation2 + $0x240] sm:$0xff]
    %v356 = vld [vmem:[#allocation2 + $0x248] sm:$0xff]
    %v357 = vld [vmem:[#allocation2 + $0x250] sm:$0x3]
    %v358 = vld [vmem:[#allocation2 + $0x258] sm:$0xff]
    %v359 = vld [vmem:[#allocation2 + $0x260] sm:$0xff]
    %v360 = vld [vmem:[#allocation2 + $0x268] sm:$0x3]
    %v361 = vld [vmem:[#allocation2 + $0x270] sm:$0xff]
    %v362 = vld [vmem:[#allocation2 + $0x278] sm:$0xff]
    %v363 = vld [vmem:[#allocation2 + $0x280] sm:$0x3]
    %v364 = vld [vmem:[#allocation2 + $0x288] sm:$0xff]
    %v365 = vld [vmem:[#allocation2 + $0x290] sm:$0xff]
    %v366 = vld [vmem:[#allocation2 + $0x298] sm:$0x3]
    %v367 = vld [vmem:[#allocation2 + $0x2a0] sm:$0xff]
    %v368 = vld [vmem:[#allocation2 + $0x2a8] sm:$0xff]
    %v369 = vld [vmem:[#allocation2 + $0x2b0] sm:$0x3]
    %v370 = vld [vmem:[#allocation2 + $0x2b8] sm:$0xff]
    %v371 = vld [vmem:[#allocation2 + $0x2c0] sm:$0xff]
    %v372 = vld [vmem:[#allocation2 + $0x2c8] sm:$0x3]
    %v373 = vld [vmem:[#allocation2 + $0x2d0] sm:$0xff]
    %v374 = vld [vmem:[#allocation2 + $0x2d8] sm:$0xff]
    %v375 = vld [vmem:[#allocation2 + $0x2e0] sm:$0x3]
    %v376 = vld [vmem:[#allocation2 + $0x2e8] sm:$0xff]
    %v377 = vld [vmem:[#allocation2 + $0x2f0] sm:$0xff]
    %v378 = vld [vmem:[#allocation2 + $0x2f8] sm:$0x3]
    %v379 = vld [vmem:[#allocation2 + $0x300] sm:$0xff]
    %v380 = vld [vmem:[#allocation2 + $0x308] sm:$0xff]
    %v381 = vld [vmem:[#allocation2 + $0x310] sm:$0x3]
    %v382 = vld [vmem:[#allocation2 + $0x318] sm:$0xff]
    %v383 = vld [vmem:[#allocation2 + $0x320] sm:$0xff]
    %v384 = vld [vmem:[#allocation2 + $0x328] sm:$0x3]
    %v385 = vld [vmem:[#allocation2 + $0x330] sm:$0xff]
    %v386 = vld [vmem:[#allocation2 + $0x338] sm:$0xff]
    %v387 = vld [vmem:[#allocation2 + $0x340] sm:$0x3]
    %v388 = vld [vmem:[#allocation2 + $0x348] sm:$0xff]
    %v389 = vld [vmem:[#allocation2 + $0x350] sm:$0xff]
    %v390 = vld [vmem:[#allocation2 + $0x358] sm:$0x3]
    %vm487 = vcmask 1046528
    %v488 = vrot.slane %v283, 1
    %v489 = vrot.slane %v284, 1
    %v490 = vsel %vm487, %v488, %v489
    %v491 = vrot.slane %v285, 1
    %v492 = vsel %vm487, %v489, %v491
    %v493 = vrot.slane %v286, 1
    %v494 = vrot.slane %v287, 1
    %v495 = vsel %vm487, %v493, %v494
    %v496 = vrot.slane %v288, 1
    %v497 = vsel %vm487, %v494, %v496
    %v498 = vrot.slane %v289, 1
    %v499 = vrot.slane %v290, 1
    %v500 = vsel %vm487, %v498, %v499
    %v501 = vrot.slane %v291, 1
    %v502 = vsel %vm487, %v499, %v501
    %v503 = vrot.slane %v292, 1
    %v504 = vrot.slane %v293, 1
    %v505 = vsel %vm487, %v503, %v504
    %v506 = vrot.slane %v294, 1
    %v507 = vsel %vm487, %v504, %v506
    %v508 = vrot.slane %v295, 1
    %v509 = vrot.slane %v296, 1
    %v510 = vsel %vm487, %v508, %v509
    %v511 = vrot.slane %v297, 1
    %v512 = vsel %vm487, %v509, %v511
    %v513 = vrot.slane %v298, 1
    %v514 = vrot.slane %v299, 1
    %v515 = vsel %vm487, %v513, %v514
    %v516 = vrot.slane %v300, 1
    %v517 = vsel %vm487, %v514, %v516
    %v518 = vrot.slane %v301, 1
    %v519 = vrot.slane %v302, 1
    %v520 = vsel %vm487, %v518, %v519
    %v521 = vrot.slane %v303, 1
    %v522 = vsel %vm487, %v519, %v521
    %v523 = vrot.slane %v304, 1
    %v524 = vrot.slane %v305, 1
    %v525 = vsel %vm487, %v523, %v524
    %v526 = vrot.slane %v306, 1
    %v527 = vsel %vm487, %v524, %v526
    %v528 = vrot.slane %v307, 1
    %v529 = vrot.slane %v308, 1
    %v530 = vsel %vm487, %v528, %v529
    %v531 = vrot.slane %v309, 1
    %v532 = vsel %vm487, %v529, %v531
    %v533 = vrot.slane %v310, 1
    %v534 = vrot.slane %v311, 1
    %v535 = vsel %vm487, %v533, %v534
    %v536 = vrot.slane %v312, 1
    %v537 = vsel %vm487, %v534, %v536
    %v538 = vrot.slane %v313, 1
    %v539 = vrot.slane %v314, 1
    %v540 = vsel %vm487, %v538, %v539
    %v541 = vrot.slane %v315, 1
    %v542 = vsel %vm487, %v539, %v541
    %v543 = vrot.slane %v316, 1
    %v544 = vrot.slane %v317, 1
    %v545 = vsel %vm487, %v543, %v544
    %v546 = vrot.slane %v318, 1
    %v547 = vsel %vm487, %v544, %v546
    %v548 = vrot.slane %v319, 1
    %v549 = vrot.slane %v320, 1
    %v550 = vsel %vm487, %v548, %v549
    %v551 = vrot.slane %v321, 1
    %v552 = vsel %vm487, %v549, %v551
    %v553 = vrot.slane %v322, 1
    %v554 = vrot.slane %v323, 1
    %v555 = vsel %vm487, %v553, %v554
    %v556 = vrot.slane %v324, 1
    %v557 = vsel %vm487, %v554, %v556
    %v558 = vrot.slane %v325, 1
    %v559 = vrot.slane %v326, 1
    %v560 = vsel %vm487, %v558, %v559
    %v561 = vrot.slane %v327, 1
    %v562 = vsel %vm487, %v559, %v561
    %v563 = vrot.slane %v328, 1
    %v564 = vrot.slane %v329, 1
    %v565 = vsel %vm487, %v563, %v564
    %v566 = vrot.slane %v330, 1
    %v567 = vsel %vm487, %v564, %v566
    %v568 = vrot.slane %v337, 1
    %v569 = vrot.slane %v338, 1
    %v570 = vsel %vm487, %v568, %v569
    %v571 = vrot.slane %v339, 1
    %v572 = vsel %vm487, %v569, %v571
    %v573 = vrot.slane %v340, 1
    %v574 = vrot.slane %v341, 1
    %v575 = vsel %vm487, %v573, %v574
    %v576 = vrot.slane %v342, 1
    %v577 = vsel %vm487, %v574, %v576
    %v578 = vrot.slane %v343, 1
    %v579 = vrot.slane %v344, 1
    %v580 = vsel %vm487, %v578, %v579
    %v581 = vrot.slane %v345, 1
    %v582 = vsel %vm487, %v579, %v581
    %v583 = vrot.slane %v346, 1
    %v584 = vrot.slane %v347, 1
    %v585 = vsel %vm487, %v583, %v584
    %v586 = vrot.slane %v348, 1
    %v587 = vsel %vm487, %v584, %v586
    %v588 = vrot.slane %v349, 1
    %v589 = vrot.slane %v350, 1
    %v590 = vsel %vm487, %v588, %v589
    %v591 = vrot.slane %v351, 1
    %v592 = vsel %vm487, %v589, %v591
    %v593 = vrot.slane %v352, 1
    %v594 = vrot.slane %v353, 1
    %v595 = vsel %vm487, %v593, %v594
    %v596 = vrot.slane %v354, 1
    %v597 = vsel %vm487, %v594, %v596
    %v598 = vrot.slane %v355, 1
    %v599 = vrot.slane %v356, 1
    %v600 = vsel %vm487, %v598, %v599
    %v601 = vrot.slane %v357, 1
    %v602 = vsel %vm487, %v599, %v601
    %v603 = vrot.slane %v358, 1
    %v604 = vrot.slane %v359, 1
    %v605 = vsel %vm487, %v603, %v604
    %v606 = vrot.slane %v360, 1
    %v607 = vsel %vm487, %v604, %v606
    %v608 = vrot.slane %v361, 1
    %v609 = vrot.slane %v362, 1
    %v610 = vsel %vm487, %v608, %v609
    %v611 = vrot.slane %v363, 1
    %v612 = vsel %vm487, %v609, %v611
    %v613 = vrot.slane %v364, 1
    %v614 = vrot.slane %v365, 1
    %v615 = vsel %vm487, %v613, %v614
    %v616 = vrot.slane %v366, 1
    %v617 = vsel %vm487, %v614, %v616
    %v618 = vrot.slane %v367, 1
    %v619 = vrot.slane %v368, 1
    %v620 = vsel %vm487, %v618, %v619
    %v621 = vrot.slane %v369, 1
    %v622 = vsel %vm487, %v619, %v621
    %v623 = vrot.slane %v370, 1
    %v624 = vrot.slane %v371, 1
    %v625 = vsel %vm487, %v623, %v624
    %v626 = vrot.slane %v372, 1
    %v627 = vsel %vm487, %v624, %v626
    %v628 = vrot.slane %v373, 1
    %v629 = vrot.slane %v374, 1
    %v630 = vsel %vm487, %v628, %v629
    %v631 = vrot.slane %v375, 1
    %v632 = vsel %vm487, %v629, %v631
    %v633 = vrot.slane %v376, 1
    %v634 = vrot.slane %v377, 1
    %v635 = vsel %vm487, %v633, %v634
    %v636 = vrot.slane %v378, 1
    %v637 = vsel %vm487, %v634, %v636
    %v638 = vrot.slane %v379, 1
    %v639 = vrot.slane %v380, 1
    %v640 = vsel %vm487, %v638, %v639
    %v641 = vrot.slane %v381, 1
    %v642 = vsel %vm487, %v639, %v641
    %v643 = vrot.slane %v382, 1
    %v644 = vrot.slane %v383, 1
    %v645 = vsel %vm487, %v643, %v644
    %v646 = vrot.slane %v384, 1
    %v647 = vsel %vm487, %v644, %v646
    %vm712 = vcmask 1045504
    %v713 = vrot.slane %v283, 2
    %v714 = vrot.slane %v284, 2
    %v715 = vsel %vm712, %v713, %v714
    %v716 = vrot.slane %v285, 2
    %v717 = vsel %vm712, %v714, %v716
    %v718 = vrot.slane %v286, 2
    %v719 = vrot.slane %v287, 2
    %v720 = vsel %vm712, %v718, %v719
    %v721 = vrot.slane %v288, 2
    %v722 = vsel %vm712, %v719, %v721
    %v723 = vrot.slane %v289, 2
    %v724 = vrot.slane %v290, 2
    %v725 = vsel %vm712, %v723, %v724
    %v726 = vrot.slane %v291, 2
    %v727 = vsel %vm712, %v724, %v726
    %v728 = vrot.slane %v292, 2
    %v729 = vrot.slane %v293, 2
    %v730 = vsel %vm712, %v728, %v729
    %v731 = vrot.slane %v294, 2
    %v732 = vsel %vm712, %v729, %v731
    %v733 = vrot.slane %v295, 2
    %v734 = vrot.slane %v296, 2
    %v735 = vsel %vm712, %v733, %v734
    %v736 = vrot.slane %v297, 2
    %v737 = vsel %vm712, %v734, %v736
    %v738 = vrot.slane %v298, 2
    %v739 = vrot.slane %v299, 2
    %v740 = vsel %vm712, %v738, %v739
    %v741 = vrot.slane %v300, 2
    %v742 = vsel %vm712, %v739, %v741
    %v743 = vrot.slane %v301, 2
    %v744 = vrot.slane %v302, 2
    %v745 = vsel %vm712, %v743, %v744
    %v746 = vrot.slane %v303, 2
    %v747 = vsel %vm712, %v744, %v746
    %v748 = vrot.slane %v304, 2
    %v749 = vrot.slane %v305, 2
    %v750 = vsel %vm712, %v748, %v749
    %v751 = vrot.slane %v306, 2
    %v752 = vsel %vm712, %v749, %v751
    %v753 = vrot.slane %v307, 2
    %v754 = vrot.slane %v308, 2
    %v755 = vsel %vm712, %v753, %v754
    %v756 = vrot.slane %v309, 2
    %v757 = vsel %vm712, %v754, %v756
    %v758 = vrot.slane %v310, 2
    %v759 = vrot.slane %v311, 2
    %v760 = vsel %vm712, %v758, %v759
    %v761 = vrot.slane %v312, 2
    %v762 = vsel %vm712, %v759, %v761
    %v763 = vrot.slane %v313, 2
    %v764 = vrot.slane %v314, 2
    %v765 = vsel %vm712, %v763, %v764
    %v766 = vrot.slane %v315, 2
    %v767 = vsel %vm712, %v764, %v766
    %v768 = vrot.slane %v316, 2
    %v769 = vrot.slane %v317, 2
    %v770 = vsel %vm712, %v768, %v769
    %v771 = vrot.slane %v318, 2
    %v772 = vsel %vm712, %v769, %v771
    %v773 = vrot.slane %v319, 2
    %v774 = vrot.slane %v320, 2
    %v775 = vsel %vm712, %v773, %v774
    %v776 = vrot.slane %v321, 2
    %v777 = vsel %vm712, %v774, %v776
    %v778 = vrot.slane %v322, 2
    %v779 = vrot.slane %v323, 2
    %v780 = vsel %vm712, %v778, %v779
    %v781 = vrot.slane %v324, 2
    %v782 = vsel %vm712, %v779, %v781
    %v783 = vrot.slane %v325, 2
    %v784 = vrot.slane %v326, 2
    %v785 = vsel %vm712, %v783, %v784
    %v786 = vrot.slane %v327, 2
    %v787 = vsel %vm712, %v784, %v786
    %v788 = vrot.slane %v328, 2
    %v789 = vrot.slane %v329, 2
    %v790 = vsel %vm712, %v788, %v789
    %v791 = vrot.slane %v330, 2
    %v792 = vsel %vm712, %v789, %v791
    %v793 = vrot.slane %v337, 2
    %v794 = vrot.slane %v338, 2
    %v795 = vsel %vm712, %v793, %v794
    %v796 = vrot.slane %v339, 2
    %v797 = vsel %vm712, %v794, %v796
    %v798 = vrot.slane %v340, 2
    %v799 = vrot.slane %v341, 2
    %v800 = vsel %vm712, %v798, %v799
    %v801 = vrot.slane %v342, 2
    %v802 = vsel %vm712, %v799, %v801
    %v803 = vrot.slane %v343, 2
    %v804 = vrot.slane %v344, 2
    %v805 = vsel %vm712, %v803, %v804
    %v806 = vrot.slane %v345, 2
    %v807 = vsel %vm712, %v804, %v806
    %v808 = vrot.slane %v346, 2
    %v809 = vrot.slane %v347, 2
    %v810 = vsel %vm712, %v808, %v809
    %v811 = vrot.slane %v348, 2
    %v812 = vsel %vm712, %v809, %v811
    %v813 = vrot.slane %v349, 2
    %v814 = vrot.slane %v350, 2
    %v815 = vsel %vm712, %v813, %v814
    %v816 = vrot.slane %v351, 2
    %v817 = vsel %vm712, %v814, %v816
    %v818 = vrot.slane %v352, 2
    %v819 = vrot.slane %v353, 2
    %v820 = vsel %vm712, %v818, %v819
    %v821 = vrot.slane %v354, 2
    %v822 = vsel %vm712, %v819, %v821
    %v823 = vrot.slane %v355, 2
    %v824 = vrot.slane %v356, 2
    %v825 = vsel %vm712, %v823, %v824
    %v826 = vrot.slane %v357, 2
    %v827 = vsel %vm712, %v824, %v826
    %v828 = vrot.slane %v358, 2
    %v829 = vrot.slane %v359, 2
    %v830 = vsel %vm712, %v828, %v829
    %v831 = vrot.slane %v360, 2
    %v832 = vsel %vm712, %v829, %v831
    %v833 = vrot.slane %v361, 2
    %v834 = vrot.slane %v362, 2
    %v835 = vsel %vm712, %v833, %v834
    %v836 = vrot.slane %v363, 2
    %v837 = vsel %vm712, %v834, %v836
    %v838 = vrot.slane %v364, 2
    %v839 = vrot.slane %v365, 2
    %v840 = vsel %vm712, %v838, %v839
    %v841 = vrot.slane %v366, 2
    %v842 = vsel %vm712, %v839, %v841
    %v843 = vrot.slane %v367, 2
    %v844 = vrot.slane %v368, 2
    %v845 = vsel %vm712, %v843, %v844
    %v846 = vrot.slane %v369, 2
    %v847 = vsel %vm712, %v844, %v846
    %v848 = vrot.slane %v370, 2
    %v849 = vrot.slane %v371, 2
    %v850 = vsel %vm712, %v848, %v849
    %v851 = vrot.slane %v372, 2
    %v852 = vsel %vm712, %v849, %v851
    %v853 = vrot.slane %v373, 2
    %v854 = vrot.slane %v374, 2
    %v855 = vsel %vm712, %v853, %v854
    %v856 = vrot.slane %v375, 2
    %v857 = vsel %vm712, %v854, %v856
    %v858 = vrot.slane %v376, 2
    %v859 = vrot.slane %v377, 2
    %v860 = vsel %vm712, %v858, %v859
    %v861 = vrot.slane %v378, 2
    %v862 = vsel %vm712, %v859, %v861
    %v863 = vrot.slane %v379, 2
    %v864 = vrot.slane %v380, 2
    %v865 = vsel %vm712, %v863, %v864
    %v866 = vrot.slane %v381, 2
    %v867 = vsel %vm712, %v864, %v866
    %v868 = vrot.slane %v382, 2
    %v869 = vrot.slane %v383, 2
    %v870 = vsel %vm712, %v868, %v869
    %v871 = vrot.slane %v384, 2
    %v872 = vsel %vm712, %v869, %v871
    %v943 = vrot.slane %v331, 1
    %v944 = vrot.slane %v332, 1
    %v945 = vsel %vm487, %v943, %v944
    %v946 = vrot.slane %v333, 1
    %v947 = vsel %vm487, %v944, %v946
    %v948 = vrot.slane %v385, 1
    %v949 = vrot.slane %v386, 1
    %v950 = vsel %vm487, %v948, %v949
    %v951 = vrot.slane %v387, 1
    %v952 = vsel %vm487, %v949, %v951
    %v957 = vrot.slane %v331, 2
    %v958 = vrot.slane %v332, 2
    %v959 = vsel %vm712, %v957, %v958
    %v960 = vrot.slane %v333, 2
    %v961 = vsel %vm712, %v958, %v960
    %v962 = vrot.slane %v385, 2
    %v963 = vrot.slane %v386, 2
    %v964 = vsel %vm712, %v962, %v963
    %v965 = vrot.slane %v387, 2
    %v966 = vsel %vm712, %v963, %v965
    %v977 = vrot.slane %v334, 1
    %v978 = vrot.slane %v335, 1
    %v979 = vsel %vm487, %v977, %v978
    %v980 = vrot.slane %v336, 1
    %v981 = vsel %vm487, %v978, %v980
    %v982 = vrot.slane %v388, 1
    %v983 = vrot.slane %v389, 1
    %v984 = vsel %vm487, %v982, %v983
    %v985 = vrot.slane %v390, 1
    %v986 = vsel %vm487, %v983, %v985
    %v991 = vrot.slane %v334, 2
    %v992 = vrot.slane %v335, 2
    %v993 = vsel %vm712, %v991, %v992
    %v994 = vrot.slane %v336, 2
    %v995 = vsel %vm712, %v992, %v994
    %v996 = vrot.slane %v388, 2
    %v997 = vrot.slane %v389, 2
    %v998 = vsel %vm712, %v996, %v997
    %v999 = vrot.slane %v390, 2
    %v1000 = vsel %vm712, %v997, %v999
    %v1005 = vpack.c.bf16 %v284, %v283
    %v1006 = vpack.c.bf16 %v492, %v490
    %v1007 = vpack.c.bf16 %v717, %v715
    %v1008 = vpack.c.bf16 %v287, %v286
    %v1009 = vpack.c.bf16 %v497, %v495
    %v1010 = vpack.c.bf16 %v722, %v720
    %v1011 = vpack.c.bf16 %v290, %v289
    %v1012 = vpack.c.bf16 %v502, %v500
    %v1013 = vpack.c.bf16 %v727, %v725
    %v1014 = vpack.c.bf16 %v293, %v292
    %v1015 = vpack.c.bf16 %v507, %v505
    %v1016 = vpack.c.bf16 %v732, %v730
    %v1017 = vpack.c.bf16 %v296, %v295
    %v1018 = vpack.c.bf16 %v512, %v510
    %v1019 = vpack.c.bf16 %v737, %v735
    %v1020 = vpack.c.bf16 %v299, %v298
    %v1021 = vpack.c.bf16 %v517, %v515
    %v1022 = vpack.c.bf16 %v742, %v740
    %v1023 = vpack.c.bf16 %v302, %v301
    %v1024 = vpack.c.bf16 %v522, %v520
    %v1025 = vpack.c.bf16 %v747, %v745
    %v1026 = vpack.c.bf16 %v305, %v304
    %v1027 = vpack.c.bf16 %v527, %v525
    %v1028 = vpack.c.bf16 %v752, %v750
    %v1029 = vpack.c.bf16 %v308, %v307
    %v1030 = vpack.c.bf16 %v532, %v530
    %v1031 = vpack.c.bf16 %v757, %v755
    %v1032 = vpack.c.bf16 %v311, %v310
    %v1033 = vpack.c.bf16 %v537, %v535
    %v1034 = vpack.c.bf16 %v762, %v760
    %v1035 = vpack.c.bf16 %v314, %v313
    %v1036 = vpack.c.bf16 %v542, %v540
    %v1037 = vpack.c.bf16 %v767, %v765
    %v1038 = vpack.c.bf16 %v317, %v316
    %v1039 = vpack.c.bf16 %v547, %v545
    %v1040 = vpack.c.bf16 %v772, %v770
    %v1041 = vpack.c.bf16 %v320, %v319
    %v1042 = vpack.c.bf16 %v552, %v550
    %v1043 = vpack.c.bf16 %v777, %v775
    %v1044 = vpack.c.bf16 %v323, %v322
    %v1045 = vpack.c.bf16 %v557, %v555
    %v1046 = vpack.c.bf16 %v782, %v780
    %v1047 = vpack.c.bf16 %v326, %v325
    %v1048 = vpack.c.bf16 %v562, %v560
    %v1049 = vpack.c.bf16 %v787, %v785
    %v1050 = vpack.c.bf16 %v329, %v328
    %v1051 = vpack.c.bf16 %v567, %v565
    %v1052 = vpack.c.bf16 %v792, %v790
    %v1053 = vpack.c.bf16 %v332, %v331
    %v1054 = vpack.c.bf16 %v947, %v945
    %v1055 = vpack.c.bf16 %v961, %v959
    %v1056 = vpack.c.bf16 %v335, %v334
    %v1057 = vpack.c.bf16 %v981, %v979
    %v1058 = vpack.c.bf16 %v995, %v993
    %v1059 = vpack.c.bf16 %v338, %v337
    %v1060 = vpack.c.bf16 %v572, %v570
    %v1061 = vpack.c.bf16 %v797, %v795
    %v1062 = vpack.c.bf16 %v341, %v340
    %v1063 = vpack.c.bf16 %v577, %v575
    %v1064 = vpack.c.bf16 %v802, %v800
    %v1065 = vpack.c.bf16 %v344, %v343
    %v1066 = vpack.c.bf16 %v582, %v580
    %v1067 = vpack.c.bf16 %v807, %v805
    %v1068 = vpack.c.bf16 %v347, %v346
    %v1069 = vpack.c.bf16 %v587, %v585
    %v1070 = vpack.c.bf16 %v812, %v810
    %v1071 = vpack.c.bf16 %v350, %v349
    %v1072 = vpack.c.bf16 %v592, %v590
    %v1073 = vpack.c.bf16 %v817, %v815
    %v1074 = vpack.c.bf16 %v353, %v352
    %v1075 = vpack.c.bf16 %v597, %v595
    %v1076 = vpack.c.bf16 %v822, %v820
    %v1077 = vpack.c.bf16 %v356, %v355
    %v1078 = vpack.c.bf16 %v602, %v600
    %v1079 = vpack.c.bf16 %v827, %v825
    %v1080 = vpack.c.bf16 %v359, %v358
    %v1081 = vpack.c.bf16 %v607, %v605
    %v1082 = vpack.c.bf16 %v832, %v830
    %v1083 = vpack.c.bf16 %v362, %v361
    %v1084 = vpack.c.bf16 %v612, %v610
    %v1085 = vpack.c.bf16 %v837, %v835
    %v1086 = vpack.c.bf16 %v365, %v364
    %v1087 = vpack.c.bf16 %v617, %v615
    %v1088 = vpack.c.bf16 %v842, %v840
    %v1089 = vpack.c.bf16 %v368, %v367
    %v1090 = vpack.c.bf16 %v622, %v620
    %v1091 = vpack.c.bf16 %v847, %v845
    %v1092 = vpack.c.bf16 %v371, %v370
    %v1093 = vpack.c.bf16 %v627, %v625
    %v1094 = vpack.c.bf16 %v852, %v850
    %v1095 = vpack.c.bf16 %v374, %v373
    %v1096 = vpack.c.bf16 %v632, %v630
    %v1097 = vpack.c.bf16 %v857, %v855
    %v1098 = vpack.c.bf16 %v377, %v376
    %v1099 = vpack.c.bf16 %v637, %v635
    %v1100 = vpack.c.bf16 %v862, %v860
    %v1101 = vpack.c.bf16 %v380, %v379
    %v1102 = vpack.c.bf16 %v642, %v640
    %v1103 = vpack.c.bf16 %v867, %v865
    %v1104 = vpack.c.bf16 %v383, %v382
    %v1105 = vpack.c.bf16 %v647, %v645
    %v1106 = vpack.c.bf16 %v872, %v870
    %v1107 = vpack.c.bf16 %v386, %v385
    %v1108 = vpack.c.bf16 %v952, %v950
    %v1109 = vpack.c.bf16 %v966, %v964
    %v1110 = vpack.c.bf16 %v389, %v388
    %v1111 = vpack.c.bf16 %v986, %v984
    %v1112 = vpack.c.bf16 %v1000, %v998
    %v1113 = vld [vmem:[#allocation6] sm:$0xf]
    %v1114 = vld [vmem:[#allocation6 + $0x4] sm:$0xf]
    %v1115 = vld [vmem:[#allocation6 + $0x8] sm:$0xf]
    %v1116 = vld [vmem:[#allocation6 + $0xc] sm:$0xf]
    %v1117 = vld [vmem:[#allocation6 + $0x10] sm:$0xf]
    %v1118 = vld [vmem:[#allocation6 + $0x14] sm:$0xf]
    %v1119 = vld [vmem:[#allocation6 + $0x18] sm:$0xf]
    %v1120 = vld [vmem:[#allocation6 + $0x1c] sm:$0xf]
    %v1121 = vld [vmem:[#allocation6 + $0x20] sm:$0xf]
    %v1122 = vld [vmem:[#allocation6 + $0x24] sm:$0xf]
    %v1123 = vld [vmem:[#allocation6 + $0x28] sm:$0xf]
    %v1124 = vld [vmem:[#allocation6 + $0x2c] sm:$0xf]
    %v1125 = vld [vmem:[#allocation6 + $0x30] sm:$0xf]
    %v1126 = vld [vmem:[#allocation6 + $0x34] sm:$0xf]
    %v1127 = vld [vmem:[#allocation6 + $0x38] sm:$0xf]
    %v1128 = vld [vmem:[#allocation6 + $0x3c] sm:$0xf]
    %v1129 = vld [vmem:[#allocation6 + $0x40] sm:$0xf]
    %v1130 = vld [vmem:[#allocation6 + $0x44] sm:$0xf]
    %v1131 = vld [vmem:[#allocation6 + $0x48] sm:$0xf]
    %v1132 = vld [vmem:[#allocation6 + $0x4c] sm:$0xf]
    %v1133 = vld [vmem:[#allocation6 + $0x50] sm:$0xf]
    %v1134 = vld [vmem:[#allocation6 + $0x54] sm:$0xf]
    %v1135 = vld [vmem:[#allocation6 + $0x58] sm:$0xf]
    %v1136 = vld [vmem:[#allocation6 + $0x5c] sm:$0xf]
    %v1137 = vld [vmem:[#allocation6 + $0x60] sm:$0xf]
    %v1138 = vld [vmem:[#allocation6 + $0x64] sm:$0xf]
    %v1139 = vld [vmem:[#allocation6 + $0x68] sm:$0xf]
    %v1140 = vld [vmem:[#allocation6 + $0x6c] sm:$0xf]
    %v1141 = vld [vmem:[#allocation6 + $0x70] sm:$0xf]
    %v1142 = vld [vmem:[#allocation6 + $0x74] sm:$0xf]
    %v1143 = vld [vmem:[#allocation6 + $0x78] sm:$0xf]
    %v1144 = vld [vmem:[#allocation6 + $0x7c] sm:$0xf]
    %v1145 = vld [vmem:[#allocation6 + $0x80] sm:$0xf]
    %v1146 = vld [vmem:[#allocation6 + $0x84] sm:$0xf]
    %v1147 = vld [vmem:[#allocation6 + $0x88] sm:$0xf]
    %v1148 = vld [vmem:[#allocation6 + $0x8c] sm:$0xf]
    %v1149 = vld [vmem:[#allocation6 + $0x90] sm:$0xf]
    %v1150 = vld [vmem:[#allocation6 + $0x94] sm:$0xf]
    %v1151 = vld [vmem:[#allocation6 + $0x98] sm:$0xf]
    %v1152 = vld [vmem:[#allocation6 + $0x9c] sm:$0xf]
    %v1153 = vld [vmem:[#allocation6 + $0xa0] sm:$0xf]
    %v1154 = vld [vmem:[#allocation6 + $0xa4] sm:$0xf]
    %v1155 = vld [vmem:[#allocation6 + $0xa8] sm:$0xf]
    %v1156 = vld [vmem:[#allocation6 + $0xac] sm:$0xf]
    %v1157 = vld [vmem:[#allocation6 + $0xb0] sm:$0xf]
    %v1158 = vld [vmem:[#allocation6 + $0xb4] sm:$0xf]
    %v1159 = vld [vmem:[#allocation6 + $0xb8] sm:$0xf]
    %v1160 = vld [vmem:[#allocation6 + $0xbc] sm:$0xf]
    %v1161 = vld [vmem:[#allocation6 + $0xc0] sm:$0xf]
    %v1162 = vld [vmem:[#allocation6 + $0xc4] sm:$0xf]
    %v1163 = vld [vmem:[#allocation6 + $0xc8] sm:$0xf]
    %v1164 = vld [vmem:[#allocation6 + $0xcc] sm:$0xf]
    %v1165 = vld [vmem:[#allocation6 + $0xd0] sm:$0xf]
    %v1166 = vld [vmem:[#allocation6 + $0xd4] sm:$0xf]
    %v1167 = vld [vmem:[#allocation6 + $0xd8] sm:$0xf]
    %v1168 = vld [vmem:[#allocation6 + $0xdc] sm:$0xf]
    %v1169 = vld [vmem:[#allocation6 + $0xe0] sm:$0xf]
    %v1170 = vld [vmem:[#allocation6 + $0xe4] sm:$0xf]
    %v1171 = vld [vmem:[#allocation6 + $0xe8] sm:$0xf]
    %v1172 = vld [vmem:[#allocation6 + $0xec] sm:$0xf]
    %v1173 = vld [vmem:[#allocation6 + $0xf0] sm:$0xf]
    %v1174 = vld [vmem:[#allocation6 + $0xf4] sm:$0xf]
    %v1175 = vld [vmem:[#allocation6 + $0xf8] sm:$0xf]
    %v1176 = vld [vmem:[#allocation6 + $0xfc] sm:$0xf]
    %v1177 = vld [vmem:[#allocation6 + $0x100] sm:$0xf]
    %v1178 = vld [vmem:[#allocation6 + $0x104] sm:$0xf]
    %v1179 = vld [vmem:[#allocation6 + $0x108] sm:$0xf]
    %v1180 = vld [vmem:[#allocation6 + $0x10c] sm:$0xf]
    %v1181 = vld [vmem:[#allocation6 + $0x110] sm:$0xf]
    %v1182 = vld [vmem:[#allocation6 + $0x114] sm:$0xf]
    %v1183 = vld [vmem:[#allocation6 + $0x118] sm:$0xf]
    %v1184 = vld [vmem:[#allocation6 + $0x11c] sm:$0xf]
    %v1185 = vld [vmem:[#allocation6 + $0x120] sm:$0xf]
    %v1186 = vld [vmem:[#allocation6 + $0x124] sm:$0xf]
    %v1187 = vld [vmem:[#allocation6 + $0x128] sm:$0xf]
    %v1188 = vld [vmem:[#allocation6 + $0x12c] sm:$0xf]
    %v1189 = vld [vmem:[#allocation6 + $0x130] sm:$0xf]
    %v1190 = vld [vmem:[#allocation6 + $0x134] sm:$0xf]
    %v1191 = vld [vmem:[#allocation6 + $0x138] sm:$0xf]
    %v1192 = vld [vmem:[#allocation6 + $0x13c] sm:$0xf]
    %v1193 = vld [vmem:[#allocation6 + $0x140] sm:$0xf]
    %v1194 = vld [vmem:[#allocation6 + $0x144] sm:$0xf]
    %v1195 = vld [vmem:[#allocation6 + $0x148] sm:$0xf]
    %v1196 = vld [vmem:[#allocation6 + $0x14c] sm:$0xf]
    %v1197 = vld [vmem:[#allocation6 + $0x150] sm:$0xf]
    %v1198 = vld [vmem:[#allocation6 + $0x154] sm:$0xf]
    %v1199 = vld [vmem:[#allocation6 + $0x158] sm:$0xf]
    %v1200 = vld [vmem:[#allocation6 + $0x15c] sm:$0xf]
    %v1201 = vld [vmem:[#allocation6 + $0x160] sm:$0xf]
    %v1202 = vld [vmem:[#allocation6 + $0x164] sm:$0xf]
    %v1203 = vld [vmem:[#allocation6 + $0x168] sm:$0xf]
    %v1204 = vld [vmem:[#allocation6 + $0x16c] sm:$0xf]
    %v1205 = vld [vmem:[#allocation6 + $0x170] sm:$0xf]
    %v1206 = vld [vmem:[#allocation6 + $0x174] sm:$0xf]
    %v1207 = vld [vmem:[#allocation6 + $0x178] sm:$0xf]
    %v1208 = vld [vmem:[#allocation6 + $0x17c] sm:$0xf]
    %v1209 = vld [vmem:[#allocation6 + $0x180] sm:$0xf]
    %v1210 = vld [vmem:[#allocation6 + $0x184] sm:$0xf]
    %v1211 = vld [vmem:[#allocation6 + $0x188] sm:$0xf]
    %v1212 = vld [vmem:[#allocation6 + $0x18c] sm:$0xf]
    %v1213 = vld [vmem:[#allocation6 + $0x190] sm:$0xf]
    %v1214 = vld [vmem:[#allocation6 + $0x194] sm:$0xf]
    %v1215 = vld [vmem:[#allocation6 + $0x198] sm:$0xf]
    %v1216 = vld [vmem:[#allocation6 + $0x19c] sm:$0xf]
    %v1217 = vld [vmem:[#allocation6 + $0x1a0] sm:$0xf]
    %v1218 = vld [vmem:[#allocation6 + $0x1a4] sm:$0xf]
    %v1219 = vld [vmem:[#allocation6 + $0x1a8] sm:$0xf]
    %v1220 = vld [vmem:[#allocation6 + $0x1ac] sm:$0xf]
    %v1221 = vld [vmem:[#allocation6 + $0x1b0] sm:$0xf]
    %v1222 = vld [vmem:[#allocation6 + $0x1b4] sm:$0xf]
    %v1223 = vld [vmem:[#allocation6 + $0x1b8] sm:$0xf]
    %v1224 = vld [vmem:[#allocation6 + $0x1bc] sm:$0xf]
    %v1225 = vld [vmem:[#allocation6 + $0x1c0] sm:$0xf]
    %v1226 = vld [vmem:[#allocation6 + $0x1c4] sm:$0xf]
    %v1227 = vld [vmem:[#allocation6 + $0x1c8] sm:$0xf]
    %v1228 = vld [vmem:[#allocation6 + $0x1cc] sm:$0xf]
    %v1229 = vld [vmem:[#allocation6 + $0x1d0] sm:$0xf]
    %v1230 = vld [vmem:[#allocation6 + $0x1d4] sm:$0xf]
    %v1231 = vld [vmem:[#allocation6 + $0x1d8] sm:$0xf]
    %v1232 = vld [vmem:[#allocation6 + $0x1dc] sm:$0xf]
    %v1233 = vld [vmem:[#allocation6 + $0x1e0] sm:$0xf]
    %v1234 = vld [vmem:[#allocation6 + $0x1e4] sm:$0xf]
    %v1235 = vld [vmem:[#allocation6 + $0x1e8] sm:$0xf]
    %v1236 = vld [vmem:[#allocation6 + $0x1ec] sm:$0xf]
    %v1237 = vld [vmem:[#allocation6 + $0x1f0] sm:$0xf]
    %v1238 = vld [vmem:[#allocation6 + $0x1f4] sm:$0xf]
    %v1239 = vld [vmem:[#allocation6 + $0x1f8] sm:$0xf]
    %v1240 = vld [vmem:[#allocation6 + $0x1fc] sm:$0xf]
    %v1241 = vld [vmem:[#allocation6 + $0x200] sm:$0xf]
    %v1242 = vld [vmem:[#allocation6 + $0x204] sm:$0xf]
    %v1243 = vld [vmem:[#allocation6 + $0x208] sm:$0xf]
    %v1244 = vld [vmem:[#allocation6 + $0x20c] sm:$0xf]
    %v1245 = vld [vmem:[#allocation6 + $0x210] sm:$0xf]
    %v1246 = vld [vmem:[#allocation6 + $0x214] sm:$0xf]
    %v1247 = vld [vmem:[#allocation6 + $0x218] sm:$0xf]
    %v1248 = vld [vmem:[#allocation6 + $0x21c] sm:$0xf]
    %v1249 = vld [vmem:[#allocation6 + $0x220] sm:$0xf]
    %v1250 = vld [vmem:[#allocation6 + $0x224] sm:$0xf]
    %v1251 = vld [vmem:[#allocation6 + $0x228] sm:$0xf]
    %v1252 = vld [vmem:[#allocation6 + $0x22c] sm:$0xf]
    %v1253 = vld [vmem:[#allocation6 + $0x230] sm:$0xf]
    %v1254 = vld [vmem:[#allocation6 + $0x234] sm:$0xf]
    %v1255 = vld [vmem:[#allocation6 + $0x238] sm:$0xf]
    %v1256 = vld [vmem:[#allocation6 + $0x23c] sm:$0xf]
    %v1401 = vunpack.c.l.b16 %v1113
    %v1402 = vunpack.c.l.b16 %v1114
    %v1403 = vunpack.c.l.b16 %v1115
    %v1404 = vunpack.c.l.b16 %v1116
    %v1405 = vunpack.c.l.b16 %v1117
    %v1406 = vunpack.c.l.b16 %v1118
    %v1407 = vunpack.c.l.b16 %v1119
    %v1408 = vunpack.c.l.b16 %v1120
    %v1409 = vunpack.c.l.b16 %v1121
    %v1410 = vunpack.c.l.b16 %v1122
    %v1411 = vunpack.c.l.b16 %v1123
    %v1412 = vunpack.c.l.b16 %v1124
    %v1413 = vunpack.c.l.b16 %v1125
    %v1414 = vunpack.c.l.b16 %v1126
    %v1415 = vunpack.c.l.b16 %v1127
    %v1416 = vunpack.c.l.b16 %v1128
    %v1417 = vunpack.c.l.b16 %v1129
    %v1418 = vunpack.c.l.b16 %v1130
    %v1419 = vunpack.c.l.b16 %v1131
    %v1420 = vunpack.c.l.b16 %v1132
    %v1421 = vunpack.c.l.b16 %v1133
    %v1422 = vunpack.c.l.b16 %v1134
    %v1423 = vunpack.c.l.b16 %v1135
    %v1424 = vunpack.c.l.b16 %v1136
    %v1425 = vunpack.c.l.b16 %v1137
    %v1426 = vunpack.c.l.b16 %v1138
    %v1427 = vunpack.c.l.b16 %v1139
    %v1428 = vunpack.c.l.b16 %v1140
    %v1429 = vunpack.c.l.b16 %v1141
    %v1430 = vunpack.c.l.b16 %v1142
    %v1431 = vunpack.c.l.b16 %v1143
    %v1432 = vunpack.c.l.b16 %v1144
    %v1433 = vunpack.c.l.b16 %v1145
    %v1434 = vunpack.c.l.b16 %v1146
    %v1435 = vunpack.c.l.b16 %v1147
    %v1436 = vunpack.c.l.b16 %v1148
    %v1437 = vunpack.c.l.b16 %v1149
    %v1438 = vunpack.c.l.b16 %v1150
    %v1439 = vunpack.c.l.b16 %v1151
    %v1440 = vunpack.c.l.b16 %v1152
    %v1441 = vunpack.c.l.b16 %v1153
    %v1442 = vunpack.c.l.b16 %v1154
    %v1443 = vunpack.c.l.b16 %v1155
    %v1444 = vunpack.c.l.b16 %v1156
    %v1445 = vunpack.c.l.b16 %v1157
    %v1446 = vunpack.c.l.b16 %v1158
    %v1447 = vunpack.c.l.b16 %v1159
    %v1448 = vunpack.c.l.b16 %v1160
    %v1449 = vunpack.c.l.b16 %v1161
    %v1450 = vunpack.c.l.b16 %v1162
    %v1451 = vunpack.c.l.b16 %v1163
    %v1452 = vunpack.c.l.b16 %v1164
    %v1453 = vunpack.c.l.b16 %v1165
    %v1454 = vunpack.c.l.b16 %v1166
    %v1455 = vunpack.c.l.b16 %v1167
    %v1456 = vunpack.c.l.b16 %v1168
    %v1457 = vunpack.c.l.b16 %v1169
    %v1458 = vunpack.c.l.b16 %v1170
    %v1459 = vunpack.c.l.b16 %v1171
    %v1460 = vunpack.c.l.b16 %v1172
    %v1461 = vunpack.c.l.b16 %v1173
    %v1462 = vunpack.c.l.b16 %v1174
    %v1463 = vunpack.c.l.b16 %v1175
    %v1464 = vunpack.c.l.b16 %v1176
    %v1465 = vunpack.c.l.b16 %v1177
    %v1466 = vunpack.c.l.b16 %v1178
    %v1467 = vunpack.c.l.b16 %v1179
    %v1468 = vunpack.c.l.b16 %v1180
    %v1469 = vunpack.c.l.b16 %v1181
    %v1470 = vunpack.c.l.b16 %v1182
    %v1471 = vunpack.c.l.b16 %v1183
    %v1472 = vunpack.c.l.b16 %v1184
    %v1473 = vunpack.c.l.b16 %v1185
    %v1474 = vunpack.c.l.b16 %v1186
    %v1475 = vunpack.c.l.b16 %v1187
    %v1476 = vunpack.c.l.b16 %v1188
    %v1477 = vunpack.c.l.b16 %v1189
    %v1478 = vunpack.c.l.b16 %v1190
    %v1479 = vunpack.c.l.b16 %v1191
    %v1480 = vunpack.c.l.b16 %v1192
    %v1481 = vunpack.c.l.b16 %v1193
    %v1482 = vunpack.c.l.b16 %v1194
    %v1483 = vunpack.c.l.b16 %v1195
    %v1484 = vunpack.c.l.b16 %v1196
    %v1485 = vunpack.c.l.b16 %v1197
    %v1486 = vunpack.c.l.b16 %v1198
    %v1487 = vunpack.c.l.b16 %v1199
    %v1488 = vunpack.c.l.b16 %v1200
    %v1489 = vunpack.c.l.b16 %v1201
    %v1490 = vunpack.c.l.b16 %v1202
    %v1491 = vunpack.c.l.b16 %v1203
    %v1492 = vunpack.c.l.b16 %v1204
    %v1493 = vunpack.c.l.b16 %v1205
    %v1494 = vunpack.c.l.b16 %v1206
    %v1495 = vunpack.c.l.b16 %v1207
    %v1496 = vunpack.c.l.b16 %v1208
    %v1497 = vunpack.c.l.b16 %v1209
    %v1498 = vunpack.c.l.b16 %v1210
    %v1499 = vunpack.c.l.b16 %v1211
    %v1500 = vunpack.c.l.b16 %v1212
    %v1501 = vunpack.c.l.b16 %v1213
    %v1502 = vunpack.c.l.b16 %v1214
    %v1503 = vunpack.c.l.b16 %v1215
    %v1504 = vunpack.c.l.b16 %v1216
    %v1505 = vunpack.c.l.b16 %v1217
    %v1506 = vunpack.c.l.b16 %v1218
    %v1507 = vunpack.c.l.b16 %v1219
    %v1508 = vunpack.c.l.b16 %v1220
    %v1509 = vunpack.c.l.b16 %v1221
    %v1510 = vunpack.c.l.b16 %v1222
    %v1511 = vunpack.c.l.b16 %v1223
    %v1512 = vunpack.c.l.b16 %v1224
    %v1513 = vunpack.c.l.b16 %v1225
    %v1514 = vunpack.c.l.b16 %v1226
    %v1515 = vunpack.c.l.b16 %v1227
    %v1516 = vunpack.c.l.b16 %v1228
    %v1517 = vunpack.c.l.b16 %v1229
    %v1518 = vunpack.c.l.b16 %v1230
    %v1519 = vunpack.c.l.b16 %v1231
    %v1520 = vunpack.c.l.b16 %v1232
    %v1521 = vunpack.c.l.b16 %v1233
    %v1522 = vunpack.c.l.b16 %v1234
    %v1523 = vunpack.c.l.b16 %v1235
    %v1524 = vunpack.c.l.b16 %v1236
    %v1525 = vunpack.c.l.b16 %v1237
    %v1526 = vunpack.c.l.b16 %v1238
    %v1527 = vunpack.c.l.b16 %v1239
    %v1528 = vunpack.c.l.b16 %v1240
    %v1529 = vunpack.c.l.b16 %v1241
    %v1530 = vunpack.c.l.b16 %v1242
    %v1531 = vunpack.c.l.b16 %v1243
    %v1532 = vunpack.c.l.b16 %v1244
    %v1533 = vunpack.c.l.b16 %v1245
    %v1534 = vunpack.c.l.b16 %v1246
    %v1535 = vunpack.c.l.b16 %v1247
    %v1536 = vunpack.c.l.b16 %v1248
    %v1537 = vunpack.c.l.b16 %v1249
    %v1538 = vunpack.c.l.b16 %v1250
    %v1539 = vunpack.c.l.b16 %v1251
    %v1540 = vunpack.c.l.b16 %v1252
    %v1541 = vunpack.c.l.b16 %v1253
    %v1542 = vunpack.c.l.b16 %v1254
    %v1543 = vunpack.c.l.b16 %v1255
    %v1544 = vunpack.c.l.b16 %v1256
    %v1545 = vpack.c.b16 %v1402, %v1401
    %v1546 = vpack.c.b16 %v1404, %v1403
    %v1547 = vpack.c.b16 %v1406, %v1405
    %v1548 = vpack.c.b16 %v1408, %v1407
    %v1549 = vpack.c.b16 %v1410, %v1409
    %v1550 = vpack.c.b16 %v1412, %v1411
    %v1551 = vpack.c.b16 %v1414, %v1413
    %v1552 = vpack.c.b16 %v1416, %v1415
    %v1553 = vpack.c.b16 %v1418, %v1417
    %v1554 = vpack.c.b16 %v1420, %v1419
    %v1555 = vpack.c.b16 %v1422, %v1421
    %v1556 = vpack.c.b16 %v1424, %v1423
    %v1557 = vpack.c.b16 %v1426, %v1425
    %v1558 = vpack.c.b16 %v1428, %v1427
    %v1559 = vpack.c.b16 %v1430, %v1429
    %v1560 = vpack.c.b16 %v1432, %v1431
    %v1561 = vpack.c.b16 %v1434, %v1433
    %v1562 = vpack.c.b16 %v1436, %v1435
    %v1563 = vpack.c.b16 %v1438, %v1437
    %v1564 = vpack.c.b16 %v1440, %v1439
    %v1565 = vpack.c.b16 %v1442, %v1441
    %v1566 = vpack.c.b16 %v1444, %v1443
    %v1567 = vpack.c.b16 %v1446, %v1445
    %v1568 = vpack.c.b16 %v1448, %v1447
    %v1569 = vpack.c.b16 %v1450, %v1449
    %v1570 = vpack.c.b16 %v1452, %v1451
    %v1571 = vpack.c.b16 %v1454, %v1453
    %v1572 = vpack.c.b16 %v1456, %v1455
    %v1573 = vpack.c.b16 %v1458, %v1457
    %v1574 = vpack.c.b16 %v1460, %v1459
    %v1575 = vpack.c.b16 %v1462, %v1461
    %v1576 = vpack.c.b16 %v1464, %v1463
    %v1577 = vpack.c.b16 %v1466, %v1465
    %v1578 = vpack.c.b16 %v1468, %v1467
    %v1579 = vpack.c.b16 %v1470, %v1469
    %v1580 = vpack.c.b16 %v1472, %v1471
    %v1581 = vpack.c.b16 %v1474, %v1473
    %v1582 = vpack.c.b16 %v1476, %v1475
    %v1583 = vpack.c.b16 %v1478, %v1477
    %v1584 = vpack.c.b16 %v1480, %v1479
    %v1585 = vpack.c.b16 %v1482, %v1481
    %v1586 = vpack.c.b16 %v1484, %v1483
    %v1587 = vpack.c.b16 %v1486, %v1485
    %v1588 = vpack.c.b16 %v1488, %v1487
    %v1589 = vpack.c.b16 %v1490, %v1489
    %v1590 = vpack.c.b16 %v1492, %v1491
    %v1591 = vpack.c.b16 %v1494, %v1493
    %v1592 = vpack.c.b16 %v1496, %v1495
    %v1593 = vpack.c.b16 %v1498, %v1497
    %v1594 = vpack.c.b16 %v1500, %v1499
    %v1595 = vpack.c.b16 %v1502, %v1501
    %v1596 = vpack.c.b16 %v1504, %v1503
    %v1597 = vpack.c.b16 %v1506, %v1505
    %v1598 = vpack.c.b16 %v1508, %v1507
    %v1599 = vpack.c.b16 %v1510, %v1509
    %v1600 = vpack.c.b16 %v1512, %v1511
    %v1601 = vpack.c.b16 %v1514, %v1513
    %v1602 = vpack.c.b16 %v1516, %v1515
    %v1603 = vpack.c.b16 %v1518, %v1517
    %v1604 = vpack.c.b16 %v1520, %v1519
    %v1605 = vpack.c.b16 %v1522, %v1521
    %v1606 = vpack.c.b16 %v1524, %v1523
    %v1607 = vpack.c.b16 %v1526, %v1525
    %v1608 = vpack.c.b16 %v1528, %v1527
    %v1609 = vpack.c.b16 %v1530, %v1529
    %v1610 = vpack.c.b16 %v1532, %v1531
    %v1611 = vpack.c.b16 %v1534, %v1533
    %v1612 = vpack.c.b16 %v1536, %v1535
    %v1613 = vpack.c.b16 %v1538, %v1537
    %v1614 = vpack.c.b16 %v1540, %v1539
    %v1615 = vpack.c.b16 %v1542, %v1541
    %v1616 = vpack.c.b16 %v1544, %v1543
    %1689 = vmatprep.subr.bf16.mxu0 0
    %1690 = vmatpush1.bf16.msra.mxu0 %v1545
    %1691 = vmatprep.subr.bf16.mxu0 0
    %1692 = vmatpush1.bf16.msra.mxu0 %v1546
    %1693 = vmatprep.subr.bf16.mxu0 0
    %1694 = vmatpush1.bf16.msra.mxu0 %v1547
    %1695 = vmatprep.subr.bf16.mxu0 0
    %1696 = vmatpush1.bf16.msra.mxu0 %v1548
    %1697 = vmatprep.subr.bf16.mxu0 0
    %1698 = vmatpush1.bf16.msra.mxu0 %v1549
    %1699 = vmatprep.subr.bf16.mxu0 0
    %1700 = vmatpush1.bf16.msra.mxu0 %v1550
    %1701 = vmatprep.subr.bf16.mxu0 0
    %1702 = vmatpush1.bf16.msra.mxu0 %v1551
    %1703 = vmatprep.subr.bf16.mxu0 0
    %1704 = vmatpush1.bf16.msra.mxu0 %v1552
    %1705 = vmatprep.subr.bf16.mxu0 0
    %1706 = vmatpush1.bf16.msra.mxu0 %v1553
    %1707 = vmatprep.subr.bf16.mxu0 0
    %1708 = vmatpush1.bf16.msra.mxu0 %v1554
    %1709 = vmatprep.subr.bf16.mxu0 0
    %1710 = vmatpush1.bf16.msra.mxu0 %v1555
    %1711 = vmatprep.subr.bf16.mxu0 0
    %1712 = vmatpush1.bf16.msra.mxu0 %v1556
    %1713 = vmatprep.subr.bf16.mxu0 0
    %1714 = vmatpush1.bf16.msra.mxu0 %v1557
    %1715 = vmatprep.subr.bf16.mxu0 0
    %1716 = vmatpush1.bf16.msra.mxu0 %v1558
    %1717 = vmatprep.subr.bf16.mxu0 0
    %1718 = vmatpush1.bf16.msra.mxu0 %v1559
    %1719 = vmatprep.subr.bf16.mxu0 0
    %1720 = vmatpush1.bf16.msra.mxu0 %v1560
    %1721 = vmatprep.mubr.bf16.mxu0 %v1006
    %1722 = vmatmul.mubr.bf16.gmra.mrb[0].mxu0 %v1005
    %v1723 = vpop.f32.mrb[0].mxu0
    %v1724 = vadd.f32 0.0, %v1723
    %v1725 = vpop.f32.mrb[0].mxu0
    %v1726 = vpop.f32.mrb[0].mxu0
    %v1727 = vadd.f32 0.0, %v1726
    %v1728 = vpop.f32.mrb[0].mxu0
    %1729 = vmatprep.mubr.bf16.mxu0 %v1009
    %1730 = vmatmul.mubr.bf16.gmra.mrb[0].mxu0 %v1008
    %v1731 = vpop.f32.mrb[0].mxu0
    %v1732 = vadd.f32 0.0, %v1731
    %v1733 = vpop.f32.mrb[0].mxu0
    %v1734 = vpop.f32.mrb[0].mxu0
    %v1735 = vadd.f32 0.0, %v1734
    %v1736 = vpop.f32.mrb[0].mxu0
    %1737 = vmatprep.mubr.bf16.mxu0 %v1012
    %1738 = vmatmul.mubr.bf16.gmra.mrb[0].mxu0 %v1011
    %v1739 = vpop.f32.mrb[0].mxu0
    %v1740 = vadd.f32 0.0, %v1739
    %v1741 = vpop.f32.mrb[0].mxu0
    %v1742 = vpop.f32.mrb[0].mxu0
    %v1743 = vadd.f32 0.0, %v1742
    %v1744 = vpop.f32.mrb[0].mxu0
    %1745 = vmatprep.mubr.bf16.mxu0 %v1015
    %1746 = vmatmul.mubr.bf16.gmra.mrb[0].mxu0 %v1014
    %v1747 = vpop.f32.mrb[0].mxu0
    %v1748 = vadd.f32 0.0, %v1747
    %v1749 = vpop.f32.mrb[0].mxu0
    %v1750 = vpop.f32.mrb[0].mxu0
    %v1751 = vadd.f32 0.0, %v1750
    %v1752 = vpop.f32.mrb[0].mxu0
    %1753 = vmatprep.mubr.bf16.mxu0 %v1018
    %1754 = vmatmul.mubr.bf16.gmra.mrb[0].mxu0 %v1017
    %v1755 = vpop.f32.mrb[0].mxu0
    %v1756 = vadd.f32 0.0, %v1755
    %v1757 = vpop.f32.mrb[0].mxu0
    %v1758 = vpop.f32.mrb[0].mxu0
    %v1759 = vadd.f32 0.0, %v1758
    %v1760 = vpop.f32.mrb[0].mxu0
    %1761 = vmatprep.mubr.bf16.mxu0 %v1021
    %1762 = vmatmul.mubr.bf16.gmra.mrb[0].mxu0 %v1020
    %v1763 = vpop.f32.mrb[0].mxu0
    %v1764 = vadd.f32 0.0, %v1763
    %v1765 = vpop.f32.mrb[0].mxu0
    %v1766 = vpop.f32.mrb[0].mxu0
    %v1767 = vadd.f32 0.0, %v1766
    %v1768 = vpop.f32.mrb[0].mxu0
    %1769 = vmatprep.mubr.bf16.mxu0 %v1024
    %1770 = vmatmul.mubr.bf16.gmra.mrb[0].mxu0 %v1023
    %v1771 = vpop.f32.mrb[0].mxu0
    %v1772 = vadd.f32 0.0, %v1771
    %v1773 = vpop.f32.mrb[0].mxu0
    %v1774 = vpop.f32.mrb[0].mxu0
    %v1775 = vadd.f32 0.0, %v1774
    %v1776 = vpop.f32.mrb[0].mxu0
    %1777 = vmatprep.mubr.bf16.mxu0 %v1027
    %1778 = vmatmul.mubr.bf16.gmra.mrb[0].mxu0 %v1026
    %v1779 = vpop.f32.mrb[0].mxu0
    %v1780 = vadd.f32 0.0, %v1779
    %v1781 = vpop.f32.mrb[0].mxu0
    %v1782 = vpop.f32.mrb[0].mxu0
    %v1783 = vadd.f32 0.0, %v1782
    %v1784 = vpop.f32.mrb[0].mxu0
    %1785 = vmatprep.mubr.bf16.mxu0 %v1030
    %1786 = vmatmul.mubr.bf16.gmra.mrb[0].mxu0 %v1029
    %v1787 = vpop.f32.mrb[0].mxu0
    %v1788 = vadd.f32 0.0, %v1787
    %v1789 = vpop.f32.mrb[0].mxu0
    %v1790 = vpop.f32.mrb[0].mxu0
    %v1791 = vadd.f32 0.0, %v1790
    %v1792 = vpop.f32.mrb[0].mxu0
    %1793 = vmatprep.mubr.bf16.mxu0 %v1033
    %1794 = vmatmul.mubr.bf16.gmra.mrb[0].mxu0 %v1032
    %v1795 = vpop.f32.mrb[0].mxu0
    %v1796 = vadd.f32 0.0, %v1795
    %v1797 = vpop.f32.mrb[0].mxu0
    %v1798 = vpop.f32.mrb[0].mxu0
    %v1799 = vadd.f32 0.0, %v1798
    %v1800 = vpop.f32.mrb[0].mxu0
    %1801 = vmatprep.mubr.bf16.mxu0 %v1036
    %1802 = vmatmul.mubr.bf16.gmra.mrb[0].mxu0 %v1035
    %v1803 = vpop.f32.mrb[0].mxu0
    %v1804 = vadd.f32 0.0, %v1803
    %v1805 = vpop.f32.mrb[0].mxu0
    %v1806 = vpop.f32.mrb[0].mxu0
    %v1807 = vadd.f32 0.0, %v1806
    %v1808 = vpop.f32.mrb[0].mxu0
    %1809 = vmatprep.mubr.bf16.mxu0 %v1039
    %1810 = vmatmul.mubr.bf16.gmra.mrb[0].mxu0 %v1038
    %v1811 = vpop.f32.mrb[0].mxu0
    %v1812 = vadd.f32 0.0, %v1811
    %v1813 = vpop.f32.mrb[0].mxu0
    %v1814 = vpop.f32.mrb[0].mxu0
    %v1815 = vadd.f32 0.0, %v1814
    %v1816 = vpop.f32.mrb[0].mxu0
    %1817 = vmatprep.mubr.bf16.mxu0 %v1042
    %1818 = vmatmul.mubr.bf16.gmra.mrb[0].mxu0 %v1041
    %v1819 = vpop.f32.mrb[0].mxu0
    %v1820 = vadd.f32 0.0, %v1819
    %v1821 = vpop.f32.mrb[0].mxu0
    %v1822 = vpop.f32.mrb[0].mxu0
    %v1823 = vadd.f32 0.0, %v1822
    %v1824 = vpop.f32.mrb[0].mxu0
    %1825 = vmatprep.mubr.bf16.mxu0 %v1045
    %1826 = vmatmul.mubr.bf16.gmra.mrb[0].mxu0 %v1044
    %v1827 = vpop.f32.mrb[0].mxu0
    %v1828 = vadd.f32 0.0, %v1827
    %v1829 = vpop.f32.mrb[0].mxu0
    %v1830 = vpop.f32.mrb[0].mxu0
    %v1831 = vadd.f32 0.0, %v1830
    %v1832 = vpop.f32.mrb[0].mxu0
    %1833 = vmatprep.mubr.bf16.mxu0 %v1048
    %1834 = vmatmul.mubr.bf16.gmra.mrb[0].mxu0 %v1047
    %v1835 = vpop.f32.mrb[0].mxu0
    %v1836 = vadd.f32 0.0, %v1835
    %v1837 = vpop.f32.mrb[0].mxu0
    %v1838 = vpop.f32.mrb[0].mxu0
    %v1839 = vadd.f32 0.0, %v1838
    %v1840 = vpop.f32.mrb[0].mxu0
    %1841 = vmatprep.mubr.bf16.mxu0 %v1051
    %1842 = vmatmul.mubr.bf16.gmra.mrb[0].mxu0 %v1050
    %v1843 = vpop.f32.mrb[0].mxu0
    %v1844 = vadd.f32 0.0, %v1843
    %v1845 = vpop.f32.mrb[0].mxu0
    %v1846 = vpop.f32.mrb[0].mxu0
    %v1847 = vadd.f32 0.0, %v1846
    %v1848 = vpop.f32.mrb[0].mxu0
    %1849 = vmatprep.mubr.bf16.mxu0 %v1060
    %1850 = vmatmul.mubr.bf16.gmra.mrb[0].mxu0 %v1059
    %v1851 = vpop.f32.mrb[0].mxu0
    %v1852 = vadd.f32 0.0, %v1851
    %v1853 = vpop.f32.mrb[0].mxu0
    %v1854 = vpop.f32.mrb[0].mxu0
    %v1855 = vadd.f32 0.0, %v1854
    %v1856 = vpop.f32.mrb[0].mxu0
    %1857 = vmatprep.mubr.bf16.mxu0 %v1063
    %1858 = vmatmul.mubr.bf16.gmra.mrb[0].mxu0 %v1062
    %v1859 = vpop.f32.mrb[0].mxu0
    %v1860 = vadd.f32 0.0, %v1859
    %v1861 = vpop.f32.mrb[0].mxu0
    %v1862 = vpop.f32.mrb[0].mxu0
    %v1863 = vadd.f32 0.0, %v1862
    %v1864 = vpop.f32.mrb[0].mxu0
    %1865 = vmatprep.mubr.bf16.mxu0 %v1066
    %1866 = vmatmul.mubr.bf16.gmra.mrb[0].mxu0 %v1065
    %v1867 = vpop.f32.mrb[0].mxu0
    %v1868 = vadd.f32 0.0, %v1867
    %v1869 = vpop.f32.mrb[0].mxu0
    %v1870 = vpop.f32.mrb[0].mxu0
    %v1871 = vadd.f32 0.0, %v1870
    %v1872 = vpop.f32.mrb[0].mxu0
    %1873 = vmatprep.mubr.bf16.mxu0 %v1069
    %1874 = vmatmul.mubr.bf16.gmra.mrb[0].mxu0 %v1068
    %v1875 = vpop.f32.mrb[0].mxu0
    %v1876 = vadd.f32 0.0, %v1875
    %v1877 = vpop.f32.mrb[0].mxu0
    %v1878 = vpop.f32.mrb[0].mxu0
    %v1879 = vadd.f32 0.0, %v1878
    %v1880 = vpop.f32.mrb[0].mxu0
    %1881 = vmatprep.mubr.bf16.mxu0 %v1072
    %1882 = vmatmul.mubr.bf16.gmra.mrb[0].mxu0 %v1071
    %v1883 = vpop.f32.mrb[0].mxu0
    %v1884 = vadd.f32 0.0, %v1883
    %v1885 = vpop.f32.mrb[0].mxu0
    %v1886 = vpop.f32.mrb[0].mxu0
    %v1887 = vadd.f32 0.0, %v1886
    %v1888 = vpop.f32.mrb[0].mxu0
    %1889 = vmatprep.mubr.bf16.mxu0 %v1075
    %1890 = vmatmul.mubr.bf16.gmra.mrb[0].mxu0 %v1074
    %v1891 = vpop.f32.mrb[0].mxu0
    %v1892 = vadd.f32 0.0, %v1891
    %v1893 = vpop.f32.mrb[0].mxu0
    %v1894 = vpop.f32.mrb[0].mxu0
    %v1895 = vadd.f32 0.0, %v1894
    %v1896 = vpop.f32.mrb[0].mxu0
    %1897 = vmatprep.mubr.bf16.mxu0 %v1078
    %1898 = vmatmul.mubr.bf16.gmra.mrb[0].mxu0 %v1077
    %v1899 = vpop.f32.mrb[0].mxu0
    %v1900 = vadd.f32 0.0, %v1899
    %v1901 = vpop.f32.mrb[0].mxu0
    %v1902 = vpop.f32.mrb[0].mxu0
    %v1903 = vadd.f32 0.0, %v1902
    %v1904 = vpop.f32.mrb[0].mxu0
    %1905 = vmatprep.mubr.bf16.mxu0 %v1081
    %1906 = vmatmul.mubr.bf16.gmra.mrb[0].mxu0 %v1080
    %v1907 = vpop.f32.mrb[0].mxu0
    %v1908 = vadd.f32 0.0, %v1907
    %v1909 = vpop.f32.mrb[0].mxu0
    %v1910 = vpop.f32.mrb[0].mxu0
    %v1911 = vadd.f32 0.0, %v1910
    %v1912 = vpop.f32.mrb[0].mxu0
    %1913 = vmatprep.mubr.bf16.mxu0 %v1084
    %1914 = vmatmul.mubr.bf16.gmra.mrb[0].mxu0 %v1083
    %v1915 = vpop.f32.mrb[0].mxu0
    %v1916 = vadd.f32 0.0, %v1915
    %v1917 = vpop.f32.mrb[0].mxu0
    %v1918 = vpop.f32.mrb[0].mxu0
    %v1919 = vadd.f32 0.0, %v1918
    %v1920 = vpop.f32.mrb[0].mxu0
    %1921 = vmatprep.mubr.bf16.mxu0 %v1087
    %1922 = vmatmul.mubr.bf16.gmra.mrb[0].mxu0 %v1086
    %v1923 = vpop.f32.mrb[0].mxu0
    %v1924 = vadd.f32 0.0, %v1923
    %v1925 = vpop.f32.mrb[0].mxu0
    %v1926 = vpop.f32.mrb[0].mxu0
    %v1927 = vadd.f32 0.0, %v1926
    %v1928 = vpop.f32.mrb[0].mxu0
    %1929 = vmatprep.mubr.bf16.mxu0 %v1090
    %1930 = vmatmul.mubr.bf16.gmra.mrb[0].mxu0 %v1089
    %v1931 = vpop.f32.mrb[0].mxu0
    %v1932 = vadd.f32 0.0, %v1931
    %v1933 = vpop.f32.mrb[0].mxu0
    %v1934 = vpop.f32.mrb[0].mxu0
    %v1935 = vadd.f32 0.0, %v1934
    %v1936 = vpop.f32.mrb[0].mxu0
    %1937 = vmatprep.mubr.bf16.mxu0 %v1093
    %1938 = vmatmul.mubr.bf16.gmra.mrb[0].mxu0 %v1092
    %v1939 = vpop.f32.mrb[0].mxu0
    %v1940 = vadd.f32 0.0, %v1939
    %v1941 = vpop.f32.mrb[0].mxu0
    %v1942 = vpop.f32.mrb[0].mxu0
    %v1943 = vadd.f32 0.0, %v1942
    %v1944 = vpop.f32.mrb[0].mxu0
    %1945 = vmatprep.mubr.bf16.mxu0 %v1096
    %1946 = vmatmul.mubr.bf16.gmra.mrb[0].mxu0 %v1095
    %v1947 = vpop.f32.mrb[0].mxu0
    %v1948 = vadd.f32 0.0, %v1947
    %v1949 = vpop.f32.mrb[0].mxu0
    %v1950 = vpop.f32.mrb[0].mxu0
    %v1951 = vadd.f32 0.0, %v1950
    %v1952 = vpop.f32.mrb[0].mxu0
    %1953 = vmatprep.mubr.bf16.mxu0 %v1099
    %1954 = vmatmul.mubr.bf16.gmra.mrb[0].mxu0 %v1098
    %v1955 = vpop.f32.mrb[0].mxu0
    %v1956 = vadd.f32 0.0, %v1955
    %v1957 = vpop.f32.mrb[0].mxu0
    %v1958 = vpop.f32.mrb[0].mxu0
    %v1959 = vadd.f32 0.0, %v1958
    %v1960 = vpop.f32.mrb[0].mxu0
    %1961 = vmatprep.mubr.bf16.mxu0 %v1102
    %1962 = vmatmul.mubr.bf16.gmra.mrb[0].mxu0 %v1101
    %v1963 = vpop.f32.mrb[0].mxu0
    %v1964 = vadd.f32 0.0, %v1963
    %v1965 = vpop.f32.mrb[0].mxu0
    %v1966 = vpop.f32.mrb[0].mxu0
    %v1967 = vadd.f32 0.0, %v1966
    %v1968 = vpop.f32.mrb[0].mxu0
    %1969 = vmatprep.mubr.bf16.mxu0 %v1105
    %1970 = vmatmul.mubr.bf16.gmra.mrb[0].mxu0 %v1104
    %v1971 = vpop.f32.mrb[0].mxu0
    %v1972 = vadd.f32 0.0, %v1971
    %v1973 = vpop.f32.mrb[0].mxu0
    %v1974 = vpop.f32.mrb[0].mxu0
    %v1975 = vadd.f32 0.0, %v1974
    %v1976 = vpop.f32.mrb[0].mxu0
    %1977 = vdwg.mxu0
    %1978 = vmatprep.subr.bf16.mxu0 0
    %1979 = vmatpush1.bf16.msra.mxu0 %v1561
    %1980 = vmatprep.subr.bf16.mxu0 0
    %1981 = vmatpush1.bf16.msra.mxu0 %v1562
    %1982 = vmatprep.subr.bf16.mxu0 0
    %1983 = vmatpush1.bf16.msra.mxu0 %v1563
    %1984 = vmatprep.subr.bf16.mxu0 0
    %1985 = vmatpush1.bf16.msra.mxu0 %v1564
    %1986 = vmatprep.subr.bf16.mxu0 0
    %1987 = vmatpush1.bf16.msra.mxu0 %v1565
    %1988 = vmatprep.subr.bf16.mxu0 0
    %1989 = vmatpush1.bf16.msra.mxu0 %v1566
    %1990 = vmatprep.subr.bf16.mxu0 0
    %1991 = vmatpush1.bf16.msra.mxu0 %v1567
    %1992 = vmatprep.subr.bf16.mxu0 0
    %1993 = vmatpush1.bf16.msra.mxu0 %v1568
    %1994 = vmatprep.subr.bf16.mxu0 0
    %1995 = vmatpush1.bf16.msra.mxu0 %v1569
    %1996 = vmatprep.subr.bf16.mxu0 0
    %1997 = vmatpush1.bf16.msra.mxu0 %v1570
    %1998 = vmatprep.subr.bf16.mxu0 0
    %1999 = vmatpush1.bf16.msra.mxu0 %v1571
    %2000 = vmatprep.subr.bf16.mxu0 0
    %2001 = vmatpush1.bf16.msra.mxu0 %v1572
    %2002 = vmatprep.subr.bf16.mxu0 0
    %2003 = vmatpush1.bf16.msra.mxu0 %v1573
    %2004 = vmatprep.subr.bf16.mxu0 0
    %2005 = vmatpush1.bf16.msra.mxu0 %v1574
    %2006 = vmatprep.subr.bf16.mxu0 0
    %2007 = vmatpush1.bf16.msra.mxu0 %v1575
    %2008 = vmatprep.subr.bf16.mxu0 0
    %2009 = vmatpush1.bf16.msra.mxu0 %v1576
    %2010 = vmatprep.mubr.bf16.mxu0 %v1008
    %2011 = vmatmul.mubr.bf16.gmra.mrb[0].mxu0 %v1007
    %v2012 = vpop.f32.mrb[0].mxu0
    %v2013 = vadd.f32 %v1724, %v2012
    %v2014 = vpop.f32.mrb[0].mxu0
    %v2015 = vpop.f32.mrb[0].mxu0
    %v2016 = vadd.f32 %v1727, %v2015
    %v2017 = vpop.f32.mrb[0].mxu0
    %2018 = vmatprep.mubr.bf16.mxu0 %v1011
    %2019 = vmatmul.mubr.bf16.gmra.mrb[0].mxu0 %v1010
    %v2020 = vpop.f32.mrb[0].mxu0
    %v2021 = vadd.f32 %v1732, %v2020
    %v2022 = vpop.f32.mrb[0].mxu0
    %v2023 = vpop.f32.mrb[0].mxu0
    %v2024 = vadd.f32 %v1735, %v2023
    %v2025 = vpop.f32.mrb[0].mxu0
    %2026 = vmatprep.mubr.bf16.mxu0 %v1014
    %2027 = vmatmul.mubr.bf16.gmra.mrb[0].mxu0 %v1013
    %v2028 = vpop.f32.mrb[0].mxu0
    %v2029 = vadd.f32 %v1740, %v2028
    %v2030 = vpop.f32.mrb[0].mxu0
    %v2031 = vpop.f32.mrb[0].mxu0
    %v2032 = vadd.f32 %v1743, %v2031
    %v2033 = vpop.f32.mrb[0].mxu0
    %2034 = vmatprep.mubr.bf16.mxu0 %v1017
    %2035 = vmatmul.mubr.bf16.gmra.mrb[0].mxu0 %v1016
    %v2036 = vpop.f32.mrb[0].mxu0
    %v2037 = vadd.f32 %v1748, %v2036
    %v2038 = vpop.f32.mrb[0].mxu0
    %v2039 = vpop.f32.mrb[0].mxu0
    %v2040 = vadd.f32 %v1751, %v2039
    %v2041 = vpop.f32.mrb[0].mxu0
    %2042 = vmatprep.mubr.bf16.mxu0 %v1020
    %2043 = vmatmul.mubr.bf16.gmra.mrb[0].mxu0 %v1019
    %v2044 = vpop.f32.mrb[0].mxu0
    %v2045 = vadd.f32 %v1756, %v2044
    %v2046 = vpop.f32.mrb[0].mxu0
    %v2047 = vpop.f32.mrb[0].mxu0
    %v2048 = vadd.f32 %v1759, %v2047
    %v2049 = vpop.f32.mrb[0].mxu0
    %2050 = vmatprep.mubr.bf16.mxu0 %v1023
    %2051 = vmatmul.mubr.bf16.gmra.mrb[0].mxu0 %v1022
    %v2052 = vpop.f32.mrb[0].mxu0
    %v2053 = vadd.f32 %v1764, %v2052
    %v2054 = vpop.f32.mrb[0].mxu0
    %v2055 = vpop.f32.mrb[0].mxu0
    %v2056 = vadd.f32 %v1767, %v2055
    %v2057 = vpop.f32.mrb[0].mxu0
    %2058 = vmatprep.mubr.bf16.mxu0 %v1026
    %2059 = vmatmul.mubr.bf16.gmra.mrb[0].mxu0 %v1025
    %v2060 = vpop.f32.mrb[0].mxu0
    %v2061 = vadd.f32 %v1772, %v2060
    %v2062 = vpop.f32.mrb[0].mxu0
    %v2063 = vpop.f32.mrb[0].mxu0
    %v2064 = vadd.f32 %v1775, %v2063
    %v2065 = vpop.f32.mrb[0].mxu0
    %2066 = vmatprep.mubr.bf16.mxu0 %v1029
    %2067 = vmatmul.mubr.bf16.gmra.mrb[0].mxu0 %v1028
    %v2068 = vpop.f32.mrb[0].mxu0
    %v2069 = vadd.f32 %v1780, %v2068
    %v2070 = vpop.f32.mrb[0].mxu0
    %v2071 = vpop.f32.mrb[0].mxu0
    %v2072 = vadd.f32 %v1783, %v2071
    %v2073 = vpop.f32.mrb[0].mxu0
    %2074 = vmatprep.mubr.bf16.mxu0 %v1032
    %2075 = vmatmul.mubr.bf16.gmra.mrb[0].mxu0 %v1031
    %v2076 = vpop.f32.mrb[0].mxu0
    %v2077 = vadd.f32 %v1788, %v2076
    %v2078 = vpop.f32.mrb[0].mxu0
    %v2079 = vpop.f32.mrb[0].mxu0
    %v2080 = vadd.f32 %v1791, %v2079
    %v2081 = vpop.f32.mrb[0].mxu0
    %2082 = vmatprep.mubr.bf16.mxu0 %v1035
    %2083 = vmatmul.mubr.bf16.gmra.mrb[0].mxu0 %v1034
    %v2084 = vpop.f32.mrb[0].mxu0
    %v2085 = vadd.f32 %v1796, %v2084
    %v2086 = vpop.f32.mrb[0].mxu0
    %v2087 = vpop.f32.mrb[0].mxu0
    %v2088 = vadd.f32 %v1799, %v2087
    %v2089 = vpop.f32.mrb[0].mxu0
    %2090 = vmatprep.mubr.bf16.mxu0 %v1038
    %2091 = vmatmul.mubr.bf16.gmra.mrb[0].mxu0 %v1037
    %v2092 = vpop.f32.mrb[0].mxu0
    %v2093 = vadd.f32 %v1804, %v2092
    %v2094 = vpop.f32.mrb[0].mxu0
    %v2095 = vpop.f32.mrb[0].mxu0
    %v2096 = vadd.f32 %v1807, %v2095
    %v2097 = vpop.f32.mrb[0].mxu0
    %2098 = vmatprep.mubr.bf16.mxu0 %v1041
    %2099 = vmatmul.mubr.bf16.gmra.mrb[0].mxu0 %v1040
    %v2100 = vpop.f32.mrb[0].mxu0
    %v2101 = vadd.f32 %v1812, %v2100
    %v2102 = vpop.f32.mrb[0].mxu0
    %v2103 = vpop.f32.mrb[0].mxu0
    %v2104 = vadd.f32 %v1815, %v2103
    %v2105 = vpop.f32.mrb[0].mxu0
    %2106 = vmatprep.mubr.bf16.mxu0 %v1044
    %2107 = vmatmul.mubr.bf16.gmra.mrb[0].mxu0 %v1043
    %v2108 = vpop.f32.mrb[0].mxu0
    %v2109 = vadd.f32 %v1820, %v2108
    %v2110 = vpop.f32.mrb[0].mxu0
    %v2111 = vpop.f32.mrb[0].mxu0
    %v2112 = vadd.f32 %v1823, %v2111
    %v2113 = vpop.f32.mrb[0].mxu0
    %2114 = vmatprep.mubr.bf16.mxu0 %v1047
    %2115 = vmatmul.mubr.bf16.gmra.mrb[0].mxu0 %v1046
    %v2116 = vpop.f32.mrb[0].mxu0
    %v2117 = vadd.f32 %v1828, %v2116
    %v2118 = vpop.f32.mrb[0].mxu0
    %v2119 = vpop.f32.mrb[0].mxu0
    %v2120 = vadd.f32 %v1831, %v2119
    %v2121 = vpop.f32.mrb[0].mxu0
    %2122 = vmatprep.mubr.bf16.mxu0 %v1050
    %2123 = vmatmul.mubr.bf16.gmra.mrb[0].mxu0 %v1049
    %v2124 = vpop.f32.mrb[0].mxu0
    %v2125 = vadd.f32 %v1836, %v2124
    %v2126 = vpop.f32.mrb[0].mxu0
    %v2127 = vpop.f32.mrb[0].mxu0
    %v2128 = vadd.f32 %v1839, %v2127
    %v2129 = vpop.f32.mrb[0].mxu0
    %2130 = vmatprep.mubr.bf16.mxu0 %v1053
    %2131 = vmatmul.mubr.bf16.gmra.mrb[0].mxu0 %v1052
    %v2132 = vpop.f32.mrb[0].mxu0
    %v2133 = vadd.f32 %v1844, %v2132
    %v2134 = vpop.f32.mrb[0].mxu0
    %v2135 = vpop.f32.mrb[0].mxu0
    %v2136 = vadd.f32 %v1847, %v2135
    %v2137 = vpop.f32.mrb[0].mxu0
    %2138 = vmatprep.mubr.bf16.mxu0 %v1062
    %2139 = vmatmul.mubr.bf16.gmra.mrb[0].mxu0 %v1061
    %v2140 = vpop.f32.mrb[0].mxu0
    %v2141 = vadd.f32 %v1852, %v2140
    %v2142 = vpop.f32.mrb[0].mxu0
    %v2143 = vpop.f32.mrb[0].mxu0
    %v2144 = vadd.f32 %v1855, %v2143
    %v2145 = vpop.f32.mrb[0].mxu0
    %2146 = vmatprep.mubr.bf16.mxu0 %v1065
    %2147 = vmatmul.mubr.bf16.gmra.mrb[0].mxu0 %v1064
    %v2148 = vpop.f32.mrb[0].mxu0
    %v2149 = vadd.f32 %v1860, %v2148
    %v2150 = vpop.f32.mrb[0].mxu0
    %v2151 = vpop.f32.mrb[0].mxu0
    %v2152 = vadd.f32 %v1863, %v2151
    %v2153 = vpop.f32.mrb[0].mxu0
    %2154 = vmatprep.mubr.bf16.mxu0 %v1068
    %2155 = vmatmul.mubr.bf16.gmra.mrb[0].mxu0 %v1067
    %v2156 = vpop.f32.mrb[0].mxu0
    %v2157 = vadd.f32 %v1868, %v2156
    %v2158 = vpop.f32.mrb[0].mxu0
    %v2159 = vpop.f32.mrb[0].mxu0
    %v2160 = vadd.f32 %v1871, %v2159
    %v2161 = vpop.f32.mrb[0].mxu0
    %2162 = vmatprep.mubr.bf16.mxu0 %v1071
    %2163 = vmatmul.mubr.bf16.gmra.mrb[0].mxu0 %v1070
    %v2164 = vpop.f32.mrb[0].mxu0
    %v2165 = vadd.f32 %v1876, %v2164
    %v2166 = vpop.f32.mrb[0].mxu0
    %v2167 = vpop.f32.mrb[0].mxu0
    %v2168 = vadd.f32 %v1879, %v2167
    %v2169 = vpop.f32.mrb[0].mxu0
    %2170 = vmatprep.mubr.bf16.mxu0 %v1074
    %2171 = vmatmul.mubr.bf16.gmra.mrb[0].mxu0 %v1073
    %v2172 = vpop.f32.mrb[0].mxu0
    %v2173 = vadd.f32 %v1884, %v2172
    %v2174 = vpop.f32.mrb[0].mxu0
    %v2175 = vpop.f32.mrb[0].mxu0
    %v2176 = vadd.f32 %v1887, %v2175
    %v2177 = vpop.f32.mrb[0].mxu0
    %2178 = vmatprep.mubr.bf16.mxu0 %v1077
    %2179 = vmatmul.mubr.bf16.gmra.mrb[0].mxu0 %v1076
    %v2180 = vpop.f32.mrb[0].mxu0
    %v2181 = vadd.f32 %v1892, %v2180
    %v2182 = vpop.f32.mrb[0].mxu0
    %v2183 = vpop.f32.mrb[0].mxu0
    %v2184 = vadd.f32 %v1895, %v2183
    %v2185 = vpop.f32.mrb[0].mxu0
    %2186 = vmatprep.mubr.bf16.mxu0 %v1080
    %2187 = vmatmul.mubr.bf16.gmra.mrb[0].mxu0 %v1079
    %v2188 = vpop.f32.mrb[0].mxu0
    %v2189 = vadd.f32 %v1900, %v2188
    %v2190 = vpop.f32.mrb[0].mxu0
    %v2191 = vpop.f32.mrb[0].mxu0
    %v2192 = vadd.f32 %v1903, %v2191
    %v2193 = vpop.f32.mrb[0].mxu0
    %2194 = vmatprep.mubr.bf16.mxu0 %v1083
    %2195 = vmatmul.mubr.bf16.gmra.mrb[0].mxu0 %v1082
    %v2196 = vpop.f32.mrb[0].mxu0
    %v2197 = vadd.f32 %v1908, %v2196
    %v2198 = vpop.f32.mrb[0].mxu0
    %v2199 = vpop.f32.mrb[0].mxu0
    %v2200 = vadd.f32 %v1911, %v2199
    %v2201 = vpop.f32.mrb[0].mxu0
    %2202 = vmatprep.mubr.bf16.mxu0 %v1086
    %2203 = vmatmul.mubr.bf16.gmra.mrb[0].mxu0 %v1085
    %v2204 = vpop.f32.mrb[0].mxu0
    %v2205 = vadd.f32 %v1916, %v2204
    %v2206 = vpop.f32.mrb[0].mxu0
    %v2207 = vpop.f32.mrb[0].mxu0
    %v2208 = vadd.f32 %v1919, %v2207
    %v2209 = vpop.f32.mrb[0].mxu0
    %2210 = vmatprep.mubr.bf16.mxu0 %v1089
    %2211 = vmatmul.mubr.bf16.gmra.mrb[0].mxu0 %v1088
    %v2212 = vpop.f32.mrb[0].mxu0
    %v2213 = vadd.f32 %v1924, %v2212
    %v2214 = vpop.f32.mrb[0].mxu0
    %v2215 = vpop.f32.mrb[0].mxu0
    %v2216 = vadd.f32 %v1927, %v2215
    %v2217 = vpop.f32.mrb[0].mxu0
    %2218 = vmatprep.mubr.bf16.mxu0 %v1092
    %2219 = vmatmul.mubr.bf16.gmra.mrb[0].mxu0 %v1091
    %v2220 = vpop.f32.mrb[0].mxu0
    %v2221 = vadd.f32 %v1932, %v2220
    %v2222 = vpop.f32.mrb[0].mxu0
    %v2223 = vpop.f32.mrb[0].mxu0
    %v2224 = vadd.f32 %v1935, %v2223
    %v2225 = vpop.f32.mrb[0].mxu0
    %2226 = vmatprep.mubr.bf16.mxu0 %v1095
    %2227 = vmatmul.mubr.bf16.gmra.mrb[0].mxu0 %v1094
    %v2228 = vpop.f32.mrb[0].mxu0
    %v2229 = vadd.f32 %v1940, %v2228
    %v2230 = vpop.f32.mrb[0].mxu0
    %v2231 = vpop.f32.mrb[0].mxu0
    %v2232 = vadd.f32 %v1943, %v2231
    %v2233 = vpop.f32.mrb[0].mxu0
    %2234 = vmatprep.mubr.bf16.mxu0 %v1098
    %2235 = vmatmul.mubr.bf16.gmra.mrb[0].mxu0 %v1097
    %v2236 = vpop.f32.mrb[0].mxu0
    %v2237 = vadd.f32 %v1948, %v2236
    %v2238 = vpop.f32.mrb[0].mxu0
    %v2239 = vpop.f32.mrb[0].mxu0
    %v2240 = vadd.f32 %v1951, %v2239
    %v2241 = vpop.f32.mrb[0].mxu0
    %2242 = vmatprep.mubr.bf16.mxu0 %v1101
    %2243 = vmatmul.mubr.bf16.gmra.mrb[0].mxu0 %v1100
    %v2244 = vpop.f32.mrb[0].mxu0
    %v2245 = vadd.f32 %v1956, %v2244
    %v2246 = vpop.f32.mrb[0].mxu0
    %v2247 = vpop.f32.mrb[0].mxu0
    %v2248 = vadd.f32 %v1959, %v2247
    %v2249 = vpop.f32.mrb[0].mxu0
    %2250 = vmatprep.mubr.bf16.mxu0 %v1104
    %2251 = vmatmul.mubr.bf16.gmra.mrb[0].mxu0 %v1103
    %v2252 = vpop.f32.mrb[0].mxu0
    %v2253 = vadd.f32 %v1964, %v2252
    %v2254 = vpop.f32.mrb[0].mxu0
    %v2255 = vpop.f32.mrb[0].mxu0
    %v2256 = vadd.f32 %v1967, %v2255
    %v2257 = vpop.f32.mrb[0].mxu0
    %2258 = vmatprep.mubr.bf16.mxu0 %v1107
    %2259 = vmatmul.mubr.bf16.gmra.mrb[0].mxu0 %v1106
    %v2260 = vpop.f32.mrb[0].mxu0
    %v2261 = vadd.f32 %v1972, %v2260
    %v2262 = vpop.f32.mrb[0].mxu0
    %v2263 = vpop.f32.mrb[0].mxu0
    %v2264 = vadd.f32 %v1975, %v2263
    %v2265 = vpop.f32.mrb[0].mxu0
    %2266 = vdwg.mxu0
    %2267 = vmatprep.subr.bf16.mxu0 0
    %2268 = vmatpush1.bf16.msra.mxu0 %v1577
    %2269 = vmatprep.subr.bf16.mxu0 0
    %2270 = vmatpush1.bf16.msra.mxu0 %v1578
    %2271 = vmatprep.subr.bf16.mxu0 0
    %2272 = vmatpush1.bf16.msra.mxu0 %v1579
    %2273 = vmatprep.subr.bf16.mxu0 0
    %2274 = vmatpush1.bf16.msra.mxu0 %v1580
    %2275 = vmatprep.subr.bf16.mxu0 0
    %2276 = vmatpush1.bf16.msra.mxu0 %v1581
    %2277 = vmatprep.subr.bf16.mxu0 0
    %2278 = vmatpush1.bf16.msra.mxu0 %v1582
    %2279 = vmatprep.subr.bf16.mxu0 0
    %2280 = vmatpush1.bf16.msra.mxu0 %v1583
    %2281 = vmatprep.subr.bf16.mxu0 0
    %2282 = vmatpush1.bf16.msra.mxu0 %v1584
    %2283 = vmatprep.subr.bf16.mxu0 0
    %2284 = vmatpush1.bf16.msra.mxu0 %v1585
    %2285 = vmatprep.subr.bf16.mxu0 0
    %2286 = vmatpush1.bf16.msra.mxu0 %v1586
    %2287 = vmatprep.subr.bf16.mxu0 0
    %2288 = vmatpush1.bf16.msra.mxu0 %v1587
    %2289 = vmatprep.subr.bf16.mxu0 0
    %2290 = vmatpush1.bf16.msra.mxu0 %v1588
    %2291 = vmatprep.subr.bf16.mxu0 0
    %2292 = vmatpush1.bf16.msra.mxu0 %v1589
    %2293 = vmatprep.subr.bf16.mxu0 0
    %2294 = vmatpush1.bf16.msra.mxu0 %v1590
    %2295 = vmatprep.subr.bf16.mxu0 0
    %2296 = vmatpush1.bf16.msra.mxu0 %v1591
    %2297 = vmatprep.subr.bf16.mxu0 0
    %2298 = vmatpush1.bf16.msra.mxu0 %v1592
    %2299 = vmatprep.mubr.bf16.mxu0 %v1010
    %2300 = vmatmul.mubr.bf16.gmra.mrb[0].mxu0 %v1009
    %v2301 = vpop.f32.mrb[0].mxu0
    %v2302 = vadd.f32 %v2013, %v2301
    %v2303 = vpop.f32.mrb[0].mxu0
    %v2304 = vpop.f32.mrb[0].mxu0
    %v2305 = vadd.f32 %v2016, %v2304
    %v2306 = vpop.f32.mrb[0].mxu0
    %2307 = vmatprep.mubr.bf16.mxu0 %v1013
    %2308 = vmatmul.mubr.bf16.gmra.mrb[0].mxu0 %v1012
    %v2309 = vpop.f32.mrb[0].mxu0
    %v2310 = vadd.f32 %v2021, %v2309
    %v2311 = vpop.f32.mrb[0].mxu0
    %v2312 = vpop.f32.mrb[0].mxu0
    %v2313 = vadd.f32 %v2024, %v2312
    %v2314 = vpop.f32.mrb[0].mxu0
    %2315 = vmatprep.mubr.bf16.mxu0 %v1016
    %2316 = vmatmul.mubr.bf16.gmra.mrb[0].mxu0 %v1015
    %v2317 = vpop.f32.mrb[0].mxu0
    %v2318 = vadd.f32 %v2029, %v2317
    %v2319 = vpop.f32.mrb[0].mxu0
    %v2320 = vpop.f32.mrb[0].mxu0
    %v2321 = vadd.f32 %v2032, %v2320
    %v2322 = vpop.f32.mrb[0].mxu0
    %2323 = vmatprep.mubr.bf16.mxu0 %v1019
    %2324 = vmatmul.mubr.bf16.gmra.mrb[0].mxu0 %v1018
    %v2325 = vpop.f32.mrb[0].mxu0
    %v2326 = vadd.f32 %v2037, %v2325
    %v2327 = vpop.f32.mrb[0].mxu0
    %v2328 = vpop.f32.mrb[0].mxu0
    %v2329 = vadd.f32 %v2040, %v2328
    %v2330 = vpop.f32.mrb[0].mxu0
    %2331 = vmatprep.mubr.bf16.mxu0 %v1022
    %2332 = vmatmul.mubr.bf16.gmra.mrb[0].mxu0 %v1021
    %v2333 = vpop.f32.mrb[0].mxu0
    %v2334 = vadd.f32 %v2045, %v2333
    %v2335 = vpop.f32.mrb[0].mxu0
    %v2336 = vpop.f32.mrb[0].mxu0
    %v2337 = vadd.f32 %v2048, %v2336
    %v2338 = vpop.f32.mrb[0].mxu0
    %2339 = vmatprep.mubr.bf16.mxu0 %v1025
    %2340 = vmatmul.mubr.bf16.gmra.mrb[0].mxu0 %v1024
    %v2341 = vpop.f32.mrb[0].mxu0
    %v2342 = vadd.f32 %v2053, %v2341
    %v2343 = vpop.f32.mrb[0].mxu0
    %v2344 = vpop.f32.mrb[0].mxu0
    %v2345 = vadd.f32 %v2056, %v2344
    %v2346 = vpop.f32.mrb[0].mxu0
    %2347 = vmatprep.mubr.bf16.mxu0 %v1028
    %2348 = vmatmul.mubr.bf16.gmra.mrb[0].mxu0 %v1027
    %v2349 = vpop.f32.mrb[0].mxu0
    %v2350 = vadd.f32 %v2061, %v2349
    %v2351 = vpop.f32.mrb[0].mxu0
    %v2352 = vpop.f32.mrb[0].mxu0
    %v2353 = vadd.f32 %v2064, %v2352
    %v2354 = vpop.f32.mrb[0].mxu0
    %2355 = vmatprep.mubr.bf16.mxu0 %v1031
    %2356 = vmatmul.mubr.bf16.gmra.mrb[0].mxu0 %v1030
    %v2357 = vpop.f32.mrb[0].mxu0
    %v2358 = vadd.f32 %v2069, %v2357
    %v2359 = vpop.f32.mrb[0].mxu0
    %v2360 = vpop.f32.mrb[0].mxu0
    %v2361 = vadd.f32 %v2072, %v2360
    %v2362 = vpop.f32.mrb[0].mxu0
    %2363 = vmatprep.mubr.bf16.mxu0 %v1034
    %2364 = vmatmul.mubr.bf16.gmra.mrb[0].mxu0 %v1033
    %v2365 = vpop.f32.mrb[0].mxu0
    %v2366 = vadd.f32 %v2077, %v2365
    %v2367 = vpop.f32.mrb[0].mxu0
    %v2368 = vpop.f32.mrb[0].mxu0
    %v2369 = vadd.f32 %v2080, %v2368
    %v2370 = vpop.f32.mrb[0].mxu0
    %2371 = vmatprep.mubr.bf16.mxu0 %v1037
    %2372 = vmatmul.mubr.bf16.gmra.mrb[0].mxu0 %v1036
    %v2373 = vpop.f32.mrb[0].mxu0
    %v2374 = vadd.f32 %v2085, %v2373
    %v2375 = vpop.f32.mrb[0].mxu0
    %v2376 = vpop.f32.mrb[0].mxu0
    %v2377 = vadd.f32 %v2088, %v2376
    %v2378 = vpop.f32.mrb[0].mxu0
    %2379 = vmatprep.mubr.bf16.mxu0 %v1040
    %2380 = vmatmul.mubr.bf16.gmra.mrb[0].mxu0 %v1039
    %v2381 = vpop.f32.mrb[0].mxu0
    %v2382 = vadd.f32 %v2093, %v2381
    %v2383 = vpop.f32.mrb[0].mxu0
    %v2384 = vpop.f32.mrb[0].mxu0
    %v2385 = vadd.f32 %v2096, %v2384
    %v2386 = vpop.f32.mrb[0].mxu0
    %2387 = vmatprep.mubr.bf16.mxu0 %v1043
    %2388 = vmatmul.mubr.bf16.gmra.mrb[0].mxu0 %v1042
    %v2389 = vpop.f32.mrb[0].mxu0
    %v2390 = vadd.f32 %v2101, %v2389
    %v2391 = vpop.f32.mrb[0].mxu0
    %v2392 = vpop.f32.mrb[0].mxu0
    %v2393 = vadd.f32 %v2104, %v2392
    %v2394 = vpop.f32.mrb[0].mxu0
    %2395 = vmatprep.mubr.bf16.mxu0 %v1046
    %2396 = vmatmul.mubr.bf16.gmra.mrb[0].mxu0 %v1045
    %v2397 = vpop.f32.mrb[0].mxu0
    %v2398 = vadd.f32 %v2109, %v2397
    %v2399 = vpop.f32.mrb[0].mxu0
    %v2400 = vpop.f32.mrb[0].mxu0
    %v2401 = vadd.f32 %v2112, %v2400
    %v2402 = vpop.f32.mrb[0].mxu0
    %2403 = vmatprep.mubr.bf16.mxu0 %v1049
    %2404 = vmatmul.mubr.bf16.gmra.mrb[0].mxu0 %v1048
    %v2405 = vpop.f32.mrb[0].mxu0
    %v2406 = vadd.f32 %v2117, %v2405
    %v2407 = vpop.f32.mrb[0].mxu0
    %v2408 = vpop.f32.mrb[0].mxu0
    %v2409 = vadd.f32 %v2120, %v2408
    %v2410 = vpop.f32.mrb[0].mxu0
    %2411 = vmatprep.mubr.bf16.mxu0 %v1052
    %2412 = vmatmul.mubr.bf16.gmra.mrb[0].mxu0 %v1051
    %v2413 = vpop.f32.mrb[0].mxu0
    %v2414 = vadd.f32 %v2125, %v2413
    %v2415 = vpop.f32.mrb[0].mxu0
    %v2416 = vpop.f32.mrb[0].mxu0
    %v2417 = vadd.f32 %v2128, %v2416
    %v2418 = vpop.f32.mrb[0].mxu0
    %2419 = vmatprep.mubr.bf16.mxu0 %v1055
    %2420 = vmatmul.mubr.bf16.gmra.mrb[0].mxu0 %v1054
    %v2421 = vpop.f32.mrb[0].mxu0
    %v2422 = vadd.f32 %v2133, %v2421
    %v2423 = vpop.f32.mrb[0].mxu0
    %v2424 = vpop.f32.mrb[0].mxu0
    %v2425 = vadd.f32 %v2136, %v2424
    %v2426 = vpop.f32.mrb[0].mxu0
    %2427 = vmatprep.mubr.bf16.mxu0 %v1064
    %2428 = vmatmul.mubr.bf16.gmra.mrb[0].mxu0 %v1063
    %v2429 = vpop.f32.mrb[0].mxu0
    %v2430 = vadd.f32 %v2141, %v2429
    %v2431 = vpop.f32.mrb[0].mxu0
    %v2432 = vpop.f32.mrb[0].mxu0
    %v2433 = vadd.f32 %v2144, %v2432
    %v2434 = vpop.f32.mrb[0].mxu0
    %2435 = vmatprep.mubr.bf16.mxu0 %v1067
    %2436 = vmatmul.mubr.bf16.gmra.mrb[0].mxu0 %v1066
    %v2437 = vpop.f32.mrb[0].mxu0
    %v2438 = vadd.f32 %v2149, %v2437
    %v2439 = vpop.f32.mrb[0].mxu0
    %v2440 = vpop.f32.mrb[0].mxu0
    %v2441 = vadd.f32 %v2152, %v2440
    %v2442 = vpop.f32.mrb[0].mxu0
    %2443 = vmatprep.mubr.bf16.mxu0 %v1070
    %2444 = vmatmul.mubr.bf16.gmra.mrb[0].mxu0 %v1069
    %v2445 = vpop.f32.mrb[0].mxu0
    %v2446 = vadd.f32 %v2157, %v2445
    %v2447 = vpop.f32.mrb[0].mxu0
    %v2448 = vpop.f32.mrb[0].mxu0
    %v2449 = vadd.f32 %v2160, %v2448
    %v2450 = vpop.f32.mrb[0].mxu0
    %2451 = vmatprep.mubr.bf16.mxu0 %v1073
    %2452 = vmatmul.mubr.bf16.gmra.mrb[0].mxu0 %v1072
    %v2453 = vpop.f32.mrb[0].mxu0
    %v2454 = vadd.f32 %v2165, %v2453
    %v2455 = vpop.f32.mrb[0].mxu0
    %v2456 = vpop.f32.mrb[0].mxu0
    %v2457 = vadd.f32 %v2168, %v2456
    %v2458 = vpop.f32.mrb[0].mxu0
    %2459 = vmatprep.mubr.bf16.mxu0 %v1076
    %2460 = vmatmul.mubr.bf16.gmra.mrb[0].mxu0 %v1075
    %v2461 = vpop.f32.mrb[0].mxu0
    %v2462 = vadd.f32 %v2173, %v2461
    %v2463 = vpop.f32.mrb[0].mxu0
    %v2464 = vpop.f32.mrb[0].mxu0
    %v2465 = vadd.f32 %v2176, %v2464
    %v2466 = vpop.f32.mrb[0].mxu0
    %2467 = vmatprep.mubr.bf16.mxu0 %v1079
    %2468 = vmatmul.mubr.bf16.gmra.mrb[0].mxu0 %v1078
    %v2469 = vpop.f32.mrb[0].mxu0
    %v2470 = vadd.f32 %v2181, %v2469
    %v2471 = vpop.f32.mrb[0].mxu0
    %v2472 = vpop.f32.mrb[0].mxu0
    %v2473 = vadd.f32 %v2184, %v2472
    %v2474 = vpop.f32.mrb[0].mxu0
    %2475 = vmatprep.mubr.bf16.mxu0 %v1082
    %2476 = vmatmul.mubr.bf16.gmra.mrb[0].mxu0 %v1081
    %v2477 = vpop.f32.mrb[0].mxu0
    %v2478 = vadd.f32 %v2189, %v2477
    %v2479 = vpop.f32.mrb[0].mxu0
    %v2480 = vpop.f32.mrb[0].mxu0
    %v2481 = vadd.f32 %v2192, %v2480
    %v2482 = vpop.f32.mrb[0].mxu0
    %2483 = vmatprep.mubr.bf16.mxu0 %v1085
    %2484 = vmatmul.mubr.bf16.gmra.mrb[0].mxu0 %v1084
    %v2485 = vpop.f32.mrb[0].mxu0
    %v2486 = vadd.f32 %v2197, %v2485
    %v2487 = vpop.f32.mrb[0].mxu0
    %v2488 = vpop.f32.mrb[0].mxu0
    %v2489 = vadd.f32 %v2200, %v2488
    %v2490 = vpop.f32.mrb[0].mxu0
    %2491 = vmatprep.mubr.bf16.mxu0 %v1088
    %2492 = vmatmul.mubr.bf16.gmra.mrb[0].mxu0 %v1087
    %v2493 = vpop.f32.mrb[0].mxu0
    %v2494 = vadd.f32 %v2205, %v2493
    %v2495 = vpop.f32.mrb[0].mxu0
    %v2496 = vpop.f32.mrb[0].mxu0
    %v2497 = vadd.f32 %v2208, %v2496
    %v2498 = vpop.f32.mrb[0].mxu0
    %2499 = vmatprep.mubr.bf16.mxu0 %v1091
    %2500 = vmatmul.mubr.bf16.gmra.mrb[0].mxu0 %v1090
    %v2501 = vpop.f32.mrb[0].mxu0
    %v2502 = vadd.f32 %v2213, %v2501
    %v2503 = vpop.f32.mrb[0].mxu0
    %v2504 = vpop.f32.mrb[0].mxu0
    %v2505 = vadd.f32 %v2216, %v2504
    %v2506 = vpop.f32.mrb[0].mxu0
    %2507 = vmatprep.mubr.bf16.mxu0 %v1094
    %2508 = vmatmul.mubr.bf16.gmra.mrb[0].mxu0 %v1093
    %v2509 = vpop.f32.mrb[0].mxu0
    %v2510 = vadd.f32 %v2221, %v2509
    %v2511 = vpop.f32.mrb[0].mxu0
    %v2512 = vpop.f32.mrb[0].mxu0
    %v2513 = vadd.f32 %v2224, %v2512
    %v2514 = vpop.f32.mrb[0].mxu0
    %2515 = vmatprep.mubr.bf16.mxu0 %v1097
    %2516 = vmatmul.mubr.bf16.gmra.mrb[0].mxu0 %v1096
    %v2517 = vpop.f32.mrb[0].mxu0
    %v2518 = vadd.f32 %v2229, %v2517
    %v2519 = vpop.f32.mrb[0].mxu0
    %v2520 = vpop.f32.mrb[0].mxu0
    %v2521 = vadd.f32 %v2232, %v2520
    %v2522 = vpop.f32.mrb[0].mxu0
    %2523 = vmatprep.mubr.bf16.mxu0 %v1100
    %2524 = vmatmul.mubr.bf16.gmra.mrb[0].mxu0 %v1099
    %v2525 = vpop.f32.mrb[0].mxu0
    %v2526 = vadd.f32 %v2237, %v2525
    %v2527 = vpop.f32.mrb[0].mxu0
    %v2528 = vpop.f32.mrb[0].mxu0
    %v2529 = vadd.f32 %v2240, %v2528
    %v2530 = vpop.f32.mrb[0].mxu0
    %2531 = vmatprep.mubr.bf16.mxu0 %v1103
    %2532 = vmatmul.mubr.bf16.gmra.mrb[0].mxu0 %v1102
    %v2533 = vpop.f32.mrb[0].mxu0
    %v2534 = vadd.f32 %v2245, %v2533
    %v2535 = vpop.f32.mrb[0].mxu0
    %v2536 = vpop.f32.mrb[0].mxu0
    %v2537 = vadd.f32 %v2248, %v2536
    %v2538 = vpop.f32.mrb[0].mxu0
    %2539 = vmatprep.mubr.bf16.mxu0 %v1106
    %2540 = vmatmul.mubr.bf16.gmra.mrb[0].mxu0 %v1105
    %v2541 = vpop.f32.mrb[0].mxu0
    %v2542 = vadd.f32 %v2253, %v2541
    %v2543 = vpop.f32.mrb[0].mxu0
    %v2544 = vpop.f32.mrb[0].mxu0
    %v2545 = vadd.f32 %v2256, %v2544
    %v2546 = vpop.f32.mrb[0].mxu0
    %2547 = vmatprep.mubr.bf16.mxu0 %v1109
    %2548 = vmatmul.mubr.bf16.gmra.mrb[0].mxu0 %v1108
    %v2549 = vpop.f32.mrb[0].mxu0
    %v2550 = vadd.f32 %v2261, %v2549
    %v2551 = vpop.f32.mrb[0].mxu0
    %v2552 = vpop.f32.mrb[0].mxu0
    %v2553 = vadd.f32 %v2264, %v2552
    %v2554 = vpop.f32.mrb[0].mxu0
    %2555 = vdwg.mxu0
    %2556 = vmatprep.subr.bf16.mxu0 0
    %2557 = vmatpush1.bf16.msra.mxu0 %v1593
    %2558 = vmatprep.subr.bf16.mxu0 0
    %2559 = vmatpush1.bf16.msra.mxu0 %v1594
    %2560 = vmatprep.subr.bf16.mxu0 0
    %2561 = vmatpush1.bf16.msra.mxu0 %v1595
    %2562 = vmatprep.subr.bf16.mxu0 0
    %2563 = vmatpush1.bf16.msra.mxu0 %v1596
    %2564 = vmatprep.subr.bf16.mxu0 0
    %2565 = vmatpush1.bf16.msra.mxu0 %v1597
    %2566 = vmatprep.subr.bf16.mxu0 0
    %2567 = vmatpush1.bf16.msra.mxu0 %v1598
    %2568 = vmatprep.subr.bf16.mxu0 0
    %2569 = vmatpush1.bf16.msra.mxu0 %v1599
    %2570 = vmatprep.subr.bf16.mxu0 0
    %2571 = vmatpush1.bf16.msra.mxu0 %v1600
    %2572 = vmatprep.subr.bf16.mxu0 0
    %2573 = vmatpush1.bf16.msra.mxu0 %v1601
    %2574 = vmatprep.subr.bf16.mxu0 0
    %2575 = vmatpush1.bf16.msra.mxu0 %v1602
    %2576 = vmatprep.subr.bf16.mxu0 0
    %2577 = vmatpush1.bf16.msra.mxu0 %v1603
    %2578 = vmatprep.subr.bf16.mxu0 0
    %2579 = vmatpush1.bf16.msra.mxu0 %v1604
    %2580 = vmatprep.subr.bf16.mxu0 0
    %2581 = vmatpush1.bf16.msra.mxu0 %v1605
    %2582 = vmatprep.subr.bf16.mxu0 0
    %2583 = vmatpush1.bf16.msra.mxu0 %v1606
    %2584 = vmatprep.subr.bf16.mxu0 0
    %2585 = vmatpush1.bf16.msra.mxu0 %v1607
    %2586 = vmatprep.subr.bf16.mxu0 0
    %2587 = vmatpush1.bf16.msra.mxu0 %v1608
    %2588 = vmatprep.mubr.bf16.mxu0 %v1012
    %2589 = vmatmul.mubr.bf16.gmra.mrb[0].mxu0 %v1011
    %v2590 = vpop.f32.mrb[0].mxu0
    %v2591 = vadd.f32 %v2302, %v2590
    %v2592 = vpop.f32.mrb[0].mxu0
    %v2593 = vpop.f32.mrb[0].mxu0
    %v2594 = vadd.f32 %v2305, %v2593
    %v2595 = vpop.f32.mrb[0].mxu0
    %2596 = vmatprep.mubr.bf16.mxu0 %v1015
    %2597 = vmatmul.mubr.bf16.gmra.mrb[0].mxu0 %v1014
    %v2598 = vpop.f32.mrb[0].mxu0
    %v2599 = vadd.f32 %v2310, %v2598
    %v2600 = vpop.f32.mrb[0].mxu0
    %v2601 = vpop.f32.mrb[0].mxu0
    %v2602 = vadd.f32 %v2313, %v2601
    %v2603 = vpop.f32.mrb[0].mxu0
    %2604 = vmatprep.mubr.bf16.mxu0 %v1018
    %2605 = vmatmul.mubr.bf16.gmra.mrb[0].mxu0 %v1017
    %v2606 = vpop.f32.mrb[0].mxu0
    %v2607 = vadd.f32 %v2318, %v2606
    %v2608 = vpop.f32.mrb[0].mxu0
    %v2609 = vpop.f32.mrb[0].mxu0
    %v2610 = vadd.f32 %v2321, %v2609
    %v2611 = vpop.f32.mrb[0].mxu0
    %2612 = vmatprep.mubr.bf16.mxu0 %v1021
    %2613 = vmatmul.mubr.bf16.gmra.mrb[0].mxu0 %v1020
    %v2614 = vpop.f32.mrb[0].mxu0
    %v2615 = vadd.f32 %v2326, %v2614
    %v2616 = vpop.f32.mrb[0].mxu0
    %v2617 = vpop.f32.mrb[0].mxu0
    %v2618 = vadd.f32 %v2329, %v2617
    %v2619 = vpop.f32.mrb[0].mxu0
    %2620 = vmatprep.mubr.bf16.mxu0 %v1024
    %2621 = vmatmul.mubr.bf16.gmra.mrb[0].mxu0 %v1023
    %v2622 = vpop.f32.mrb[0].mxu0
    %v2623 = vadd.f32 %v2334, %v2622
    %v2624 = vpop.f32.mrb[0].mxu0
    %v2625 = vpop.f32.mrb[0].mxu0
    %v2626 = vadd.f32 %v2337, %v2625
    %v2627 = vpop.f32.mrb[0].mxu0
    %2628 = vmatprep.mubr.bf16.mxu0 %v1027
    %2629 = vmatmul.mubr.bf16.gmra.mrb[0].mxu0 %v1026
    %v2630 = vpop.f32.mrb[0].mxu0
    %v2631 = vadd.f32 %v2342, %v2630
    %v2632 = vpop.f32.mrb[0].mxu0
    %v2633 = vpop.f32.mrb[0].mxu0
    %v2634 = vadd.f32 %v2345, %v2633
    %v2635 = vpop.f32.mrb[0].mxu0
    %2636 = vmatprep.mubr.bf16.mxu0 %v1030
    %2637 = vmatmul.mubr.bf16.gmra.mrb[0].mxu0 %v1029
    %v2638 = vpop.f32.mrb[0].mxu0
    %v2639 = vadd.f32 %v2350, %v2638
    %v2640 = vpop.f32.mrb[0].mxu0
    %v2641 = vpop.f32.mrb[0].mxu0
    %v2642 = vadd.f32 %v2353, %v2641
    %v2643 = vpop.f32.mrb[0].mxu0
    %2644 = vmatprep.mubr.bf16.mxu0 %v1033
    %2645 = vmatmul.mubr.bf16.gmra.mrb[0].mxu0 %v1032
    %v2646 = vpop.f32.mrb[0].mxu0
    %v2647 = vadd.f32 %v2358, %v2646
    %v2648 = vpop.f32.mrb[0].mxu0
    %v2649 = vpop.f32.mrb[0].mxu0
    %v2650 = vadd.f32 %v2361, %v2649
    %v2651 = vpop.f32.mrb[0].mxu0
    %2652 = vmatprep.mubr.bf16.mxu0 %v1036
    %2653 = vmatmul.mubr.bf16.gmra.mrb[0].mxu0 %v1035
    %v2654 = vpop.f32.mrb[0].mxu0
    %v2655 = vadd.f32 %v2366, %v2654
    %v2656 = vpop.f32.mrb[0].mxu0
    %v2657 = vpop.f32.mrb[0].mxu0
    %v2658 = vadd.f32 %v2369, %v2657
    %v2659 = vpop.f32.mrb[0].mxu0
    %2660 = vmatprep.mubr.bf16.mxu0 %v1039
    %2661 = vmatmul.mubr.bf16.gmra.mrb[0].mxu0 %v1038
    %v2662 = vpop.f32.mrb[0].mxu0
    %v2663 = vadd.f32 %v2374, %v2662
    %v2664 = vpop.f32.mrb[0].mxu0
    %v2665 = vpop.f32.mrb[0].mxu0
    %v2666 = vadd.f32 %v2377, %v2665
    %v2667 = vpop.f32.mrb[0].mxu0
    %2668 = vmatprep.mubr.bf16.mxu0 %v1042
    %2669 = vmatmul.mubr.bf16.gmra.mrb[0].mxu0 %v1041
    %v2670 = vpop.f32.mrb[0].mxu0
    %v2671 = vadd.f32 %v2382, %v2670
    %v2672 = vpop.f32.mrb[0].mxu0
    %v2673 = vpop.f32.mrb[0].mxu0
    %v2674 = vadd.f32 %v2385, %v2673
    %v2675 = vpop.f32.mrb[0].mxu0
    %2676 = vmatprep.mubr.bf16.mxu0 %v1045
    %2677 = vmatmul.mubr.bf16.gmra.mrb[0].mxu0 %v1044
    %v2678 = vpop.f32.mrb[0].mxu0
    %v2679 = vadd.f32 %v2390, %v2678
    %v2680 = vpop.f32.mrb[0].mxu0
    %v2681 = vpop.f32.mrb[0].mxu0
    %v2682 = vadd.f32 %v2393, %v2681
    %v2683 = vpop.f32.mrb[0].mxu0
    %2684 = vmatprep.mubr.bf16.mxu0 %v1048
    %2685 = vmatmul.mubr.bf16.gmra.mrb[0].mxu0 %v1047
    %v2686 = vpop.f32.mrb[0].mxu0
    %v2687 = vadd.f32 %v2398, %v2686
    %v2688 = vpop.f32.mrb[0].mxu0
    %v2689 = vpop.f32.mrb[0].mxu0
    %v2690 = vadd.f32 %v2401, %v2689
    %v2691 = vpop.f32.mrb[0].mxu0
    %2692 = vmatprep.mubr.bf16.mxu0 %v1051
    %2693 = vmatmul.mubr.bf16.gmra.mrb[0].mxu0 %v1050
    %v2694 = vpop.f32.mrb[0].mxu0
    %v2695 = vadd.f32 %v2406, %v2694
    %v2696 = vpop.f32.mrb[0].mxu0
    %v2697 = vpop.f32.mrb[0].mxu0
    %v2698 = vadd.f32 %v2409, %v2697
    %v2699 = vpop.f32.mrb[0].mxu0
    %2700 = vmatprep.mubr.bf16.mxu0 %v1054
    %2701 = vmatmul.mubr.bf16.gmra.mrb[0].mxu0 %v1053
    %v2702 = vpop.f32.mrb[0].mxu0
    %v2703 = vadd.f32 %v2414, %v2702
    %v2704 = vpop.f32.mrb[0].mxu0
    %v2705 = vpop.f32.mrb[0].mxu0
    %v2706 = vadd.f32 %v2417, %v2705
    %v2707 = vpop.f32.mrb[0].mxu0
    %2708 = vmatprep.mubr.bf16.mxu0 %v1057
    %2709 = vmatmul.mubr.bf16.gmra.mrb[0].mxu0 %v1056
    %v2710 = vpop.f32.mrb[0].mxu0
    %v2711 = vadd.f32 %v2422, %v2710
    %v2712 = vpop.f32.mrb[0].mxu0
    %v2713 = vpop.f32.mrb[0].mxu0
    %v2714 = vadd.f32 %v2425, %v2713
    %v2715 = vpop.f32.mrb[0].mxu0
    %2716 = vmatprep.mubr.bf16.mxu0 %v1066
    %2717 = vmatmul.mubr.bf16.gmra.mrb[0].mxu0 %v1065
    %v2718 = vpop.f32.mrb[0].mxu0
    %v2719 = vadd.f32 %v2430, %v2718
    %v2720 = vpop.f32.mrb[0].mxu0
    %v2721 = vpop.f32.mrb[0].mxu0
    %v2722 = vadd.f32 %v2433, %v2721
    %v2723 = vpop.f32.mrb[0].mxu0
    %2724 = vmatprep.mubr.bf16.mxu0 %v1069
    %2725 = vmatmul.mubr.bf16.gmra.mrb[0].mxu0 %v1068
    %v2726 = vpop.f32.mrb[0].mxu0
    %v2727 = vadd.f32 %v2438, %v2726
    %v2728 = vpop.f32.mrb[0].mxu0
    %v2729 = vpop.f32.mrb[0].mxu0
    %v2730 = vadd.f32 %v2441, %v2729
    %v2731 = vpop.f32.mrb[0].mxu0
    %2732 = vmatprep.mubr.bf16.mxu0 %v1072
    %2733 = vmatmul.mubr.bf16.gmra.mrb[0].mxu0 %v1071
    %v2734 = vpop.f32.mrb[0].mxu0
    %v2735 = vadd.f32 %v2446, %v2734
    %v2736 = vpop.f32.mrb[0].mxu0
    %v2737 = vpop.f32.mrb[0].mxu0
    %v2738 = vadd.f32 %v2449, %v2737
    %v2739 = vpop.f32.mrb[0].mxu0
    %2740 = vmatprep.mubr.bf16.mxu0 %v1075
    %2741 = vmatmul.mubr.bf16.gmra.mrb[0].mxu0 %v1074
    %v2742 = vpop.f32.mrb[0].mxu0
    %v2743 = vadd.f32 %v2454, %v2742
    %v2744 = vpop.f32.mrb[0].mxu0
    %v2745 = vpop.f32.mrb[0].mxu0
    %v2746 = vadd.f32 %v2457, %v2745
    %v2747 = vpop.f32.mrb[0].mxu0
    %2748 = vmatprep.mubr.bf16.mxu0 %v1078
    %2749 = vmatmul.mubr.bf16.gmra.mrb[0].mxu0 %v1077
    %v2750 = vpop.f32.mrb[0].mxu0
    %v2751 = vadd.f32 %v2462, %v2750
    %v2752 = vpop.f32.mrb[0].mxu0
    %v2753 = vpop.f32.mrb[0].mxu0
    %v2754 = vadd.f32 %v2465, %v2753
    %v2755 = vpop.f32.mrb[0].mxu0
    %2756 = vmatprep.mubr.bf16.mxu0 %v1081
    %2757 = vmatmul.mubr.bf16.gmra.mrb[0].mxu0 %v1080
    %v2758 = vpop.f32.mrb[0].mxu0
    %v2759 = vadd.f32 %v2470, %v2758
    %v2760 = vpop.f32.mrb[0].mxu0
    %v2761 = vpop.f32.mrb[0].mxu0
    %v2762 = vadd.f32 %v2473, %v2761
    %v2763 = vpop.f32.mrb[0].mxu0
    %2764 = vmatprep.mubr.bf16.mxu0 %v1084
    %2765 = vmatmul.mubr.bf16.gmra.mrb[0].mxu0 %v1083
    %v2766 = vpop.f32.mrb[0].mxu0
    %v2767 = vadd.f32 %v2478, %v2766
    %v2768 = vpop.f32.mrb[0].mxu0
    %v2769 = vpop.f32.mrb[0].mxu0
    %v2770 = vadd.f32 %v2481, %v2769
    %v2771 = vpop.f32.mrb[0].mxu0
    %2772 = vmatprep.mubr.bf16.mxu0 %v1087
    %2773 = vmatmul.mubr.bf16.gmra.mrb[0].mxu0 %v1086
    %v2774 = vpop.f32.mrb[0].mxu0
    %v2775 = vadd.f32 %v2486, %v2774
    %v2776 = vpop.f32.mrb[0].mxu0
    %v2777 = vpop.f32.mrb[0].mxu0
    %v2778 = vadd.f32 %v2489, %v2777
    %v2779 = vpop.f32.mrb[0].mxu0
    %2780 = vmatprep.mubr.bf16.mxu0 %v1090
    %2781 = vmatmul.mubr.bf16.gmra.mrb[0].mxu0 %v1089
    %v2782 = vpop.f32.mrb[0].mxu0
    %v2783 = vadd.f32 %v2494, %v2782
    %v2784 = vpop.f32.mrb[0].mxu0
    %v2785 = vpop.f32.mrb[0].mxu0
    %v2786 = vadd.f32 %v2497, %v2785
    %v2787 = vpop.f32.mrb[0].mxu0
    %2788 = vmatprep.mubr.bf16.mxu0 %v1093
    %2789 = vmatmul.mubr.bf16.gmra.mrb[0].mxu0 %v1092
    %v2790 = vpop.f32.mrb[0].mxu0
    %v2791 = vadd.f32 %v2502, %v2790
    %v2792 = vpop.f32.mrb[0].mxu0
    %v2793 = vpop.f32.mrb[0].mxu0
    %v2794 = vadd.f32 %v2505, %v2793
    %v2795 = vpop.f32.mrb[0].mxu0
    %2796 = vmatprep.mubr.bf16.mxu0 %v1096
    %2797 = vmatmul.mubr.bf16.gmra.mrb[0].mxu0 %v1095
    %v2798 = vpop.f32.mrb[0].mxu0
    %v2799 = vadd.f32 %v2510, %v2798
    %v2800 = vpop.f32.mrb[0].mxu0
    %v2801 = vpop.f32.mrb[0].mxu0
    %v2802 = vadd.f32 %v2513, %v2801
    %v2803 = vpop.f32.mrb[0].mxu0
    %2804 = vmatprep.mubr.bf16.mxu0 %v1099
    %2805 = vmatmul.mubr.bf16.gmra.mrb[0].mxu0 %v1098
    %v2806 = vpop.f32.mrb[0].mxu0
    %v2807 = vadd.f32 %v2518, %v2806
    %v2808 = vpop.f32.mrb[0].mxu0
    %v2809 = vpop.f32.mrb[0].mxu0
    %v2810 = vadd.f32 %v2521, %v2809
    %v2811 = vpop.f32.mrb[0].mxu0
    %2812 = vmatprep.mubr.bf16.mxu0 %v1102
    %2813 = vmatmul.mubr.bf16.gmra.mrb[0].mxu0 %v1101
    %v2814 = vpop.f32.mrb[0].mxu0
    %v2815 = vadd.f32 %v2526, %v2814
    %v2816 = vpop.f32.mrb[0].mxu0
    %v2817 = vpop.f32.mrb[0].mxu0
    %v2818 = vadd.f32 %v2529, %v2817
    %v2819 = vpop.f32.mrb[0].mxu0
    %2820 = vmatprep.mubr.bf16.mxu0 %v1105
    %2821 = vmatmul.mubr.bf16.gmra.mrb[0].mxu0 %v1104
    %v2822 = vpop.f32.mrb[0].mxu0
    %v2823 = vadd.f32 %v2534, %v2822
    %v2824 = vpop.f32.mrb[0].mxu0
    %v2825 = vpop.f32.mrb[0].mxu0
    %v2826 = vadd.f32 %v2537, %v2825
    %v2827 = vpop.f32.mrb[0].mxu0
    %2828 = vmatprep.mubr.bf16.mxu0 %v1108
    %2829 = vmatmul.mubr.bf16.gmra.mrb[0].mxu0 %v1107
    %v2830 = vpop.f32.mrb[0].mxu0
    %v2831 = vadd.f32 %v2542, %v2830
    %v2832 = vpop.f32.mrb[0].mxu0
    %v2833 = vpop.f32.mrb[0].mxu0
    %v2834 = vadd.f32 %v2545, %v2833
    %v2835 = vpop.f32.mrb[0].mxu0
    %2836 = vmatprep.mubr.bf16.mxu0 %v1111
    %2837 = vmatmul.mubr.bf16.gmra.mrb[0].mxu0 %v1110
    %v2838 = vpop.f32.mrb[0].mxu0
    %v2839 = vadd.f32 %v2550, %v2838
    %v2840 = vpop.f32.mrb[0].mxu0
    %v2841 = vpop.f32.mrb[0].mxu0
    %v2842 = vadd.f32 %v2553, %v2841
    %v2843 = vpop.f32.mrb[0].mxu0
    %2844 = vdwg.mxu0
    %2845 = vmatprep.subr.bf16.mxu0 0
    %2846 = vmatpush1.bf16.msra.mxu0 %v1609
    %2847 = vmatprep.subr.bf16.mxu0 0
    %2848 = vmatpush1.bf16.msra.mxu0 %v1610
    %2849 = vmatprep.subr.bf16.mxu0 0
    %2850 = vmatpush1.bf16.msra.mxu0 %v1611
    %2851 = vmatprep.subr.bf16.mxu0 0
    %2852 = vmatpush1.bf16.msra.mxu0 %v1612
    %2853 = vmatprep.subr.bf16.mxu0 0
    %2854 = vmatpush1.bf16.msra.mxu0 %v1613
    %2855 = vmatprep.subr.bf16.mxu0 0
    %2856 = vmatpush1.bf16.msra.mxu0 %v1614
    %2857 = vmatprep.subr.bf16.mxu0 0
    %2858 = vmatpush1.bf16.msra.mxu0 %v1615
    %2859 = vmatprep.subr.bf16.mxu0 0
    %2860 = vmatpush1.bf16.msra.mxu0 %v1616
    %2861 = vmatprep.subr.bf16.mxu0 0
    %2862 = vmatpush1.bf16.msra.mxu0 0
    %2863 = vmatprep.subr.bf16.mxu0 0
    %2864 = vmatpush1.bf16.msra.mxu0 0
    %2865 = vmatprep.subr.bf16.mxu0 0
    %2866 = vmatpush1.bf16.msra.mxu0 0
    %2867 = vmatprep.subr.bf16.mxu0 0
    %2868 = vmatpush1.bf16.msra.mxu0 0
    %2869 = vmatprep.subr.bf16.mxu0 0
    %2870 = vmatpush1.bf16.msra.mxu0 0
    %2871 = vmatprep.subr.bf16.mxu0 0
    %2872 = vmatpush1.bf16.msra.mxu0 0
    %2873 = vmatprep.subr.bf16.mxu0 0
    %2874 = vmatpush1.bf16.msra.mxu0 0
    %2875 = vmatprep.subr.bf16.mxu0 0
    %2876 = vmatpush1.bf16.msra.mxu0 0
    %2877 = vmatprep.mubr.bf16.mxu0 0
    %2878 = vmatmul.mubr.bf16.gmra.mrb[0].mxu0 %v1013
    %v2879 = vpop.f32.mrb[0].mxu0
    %v2880 = vadd.f32 %v2591, %v2879
    %v2881 = vpop.f32.mrb[0].mxu0
    %v2882 = vpop.f32.mrb[0].mxu0
    %v2883 = vadd.f32 %v2594, %v2882
    %v2884 = vpop.f32.mrb[0].mxu0
    %2885 = vmatprep.mubr.bf16.mxu0 0
    %2886 = vmatmul.mubr.bf16.gmra.mrb[0].mxu0 %v1016
    %v2887 = vpop.f32.mrb[0].mxu0
    %v2888 = vadd.f32 %v2599, %v2887
    %v2889 = vpop.f32.mrb[0].mxu0
    %v2890 = vpop.f32.mrb[0].mxu0
    %v2891 = vadd.f32 %v2602, %v2890
    %v2892 = vpop.f32.mrb[0].mxu0
    %2893 = vmatprep.mubr.bf16.mxu0 0
    %2894 = vmatmul.mubr.bf16.gmra.mrb[0].mxu0 %v1019
    %v2895 = vpop.f32.mrb[0].mxu0
    %v2896 = vadd.f32 %v2607, %v2895
    %v2897 = vpop.f32.mrb[0].mxu0
    %v2898 = vpop.f32.mrb[0].mxu0
    %v2899 = vadd.f32 %v2610, %v2898
    %v2900 = vpop.f32.mrb[0].mxu0
    %2901 = vmatprep.mubr.bf16.mxu0 0
    %2902 = vmatmul.mubr.bf16.gmra.mrb[0].mxu0 %v1022
    %v2903 = vpop.f32.mrb[0].mxu0
    %v2904 = vadd.f32 %v2615, %v2903
    %v2905 = vpop.f32.mrb[0].mxu0
    %v2906 = vpop.f32.mrb[0].mxu0
    %v2907 = vadd.f32 %v2618, %v2906
    %v2908 = vpop.f32.mrb[0].mxu0
    %2909 = vmatprep.mubr.bf16.mxu0 0
    %2910 = vmatmul.mubr.bf16.gmra.mrb[0].mxu0 %v1025
    %v2911 = vpop.f32.mrb[0].mxu0
    %v2912 = vadd.f32 %v2623, %v2911
    %v2913 = vpop.f32.mrb[0].mxu0
    %v2914 = vpop.f32.mrb[0].mxu0
    %v2915 = vadd.f32 %v2626, %v2914
    %v2916 = vpop.f32.mrb[0].mxu0
    %2917 = vmatprep.mubr.bf16.mxu0 0
    %2918 = vmatmul.mubr.bf16.gmra.mrb[0].mxu0 %v1028
    %v2919 = vpop.f32.mrb[0].mxu0
    %v2920 = vadd.f32 %v2631, %v2919
    %v2921 = vpop.f32.mrb[0].mxu0
    %v2922 = vpop.f32.mrb[0].mxu0
    %v2923 = vadd.f32 %v2634, %v2922
    %v2924 = vpop.f32.mrb[0].mxu0
    %2925 = vmatprep.mubr.bf16.mxu0 0
    %2926 = vmatmul.mubr.bf16.gmra.mrb[0].mxu0 %v1031
    %v2927 = vpop.f32.mrb[0].mxu0
    %v2928 = vadd.f32 %v2639, %v2927
    %v2929 = vpop.f32.mrb[0].mxu0
    %v2930 = vpop.f32.mrb[0].mxu0
    %v2931 = vadd.f32 %v2642, %v2930
    %v2932 = vpop.f32.mrb[0].mxu0
    %2933 = vmatprep.mubr.bf16.mxu0 0
    %2934 = vmatmul.mubr.bf16.gmra.mrb[0].mxu0 %v1034
    %v2935 = vpop.f32.mrb[0].mxu0
    %v2936 = vadd.f32 %v2647, %v2935
    %v2937 = vpop.f32.mrb[0].mxu0
    %v2938 = vpop.f32.mrb[0].mxu0
    %v2939 = vadd.f32 %v2650, %v2938
    %v2940 = vpop.f32.mrb[0].mxu0
    %2941 = vmatprep.mubr.bf16.mxu0 0
    %2942 = vmatmul.mubr.bf16.gmra.mrb[0].mxu0 %v1037
    %v2943 = vpop.f32.mrb[0].mxu0
    %v2944 = vadd.f32 %v2655, %v2943
    %v2945 = vpop.f32.mrb[0].mxu0
    %v2946 = vpop.f32.mrb[0].mxu0
    %v2947 = vadd.f32 %v2658, %v2946
    %v2948 = vpop.f32.mrb[0].mxu0
    %2949 = vmatprep.mubr.bf16.mxu0 0
    %2950 = vmatmul.mubr.bf16.gmra.mrb[0].mxu0 %v1040
    %v2951 = vpop.f32.mrb[0].mxu0
    %v2952 = vadd.f32 %v2663, %v2951
    %v2953 = vpop.f32.mrb[0].mxu0
    %v2954 = vpop.f32.mrb[0].mxu0
    %v2955 = vadd.f32 %v2666, %v2954
    %v2956 = vpop.f32.mrb[0].mxu0
    %2957 = vmatprep.mubr.bf16.mxu0 0
    %2958 = vmatmul.mubr.bf16.gmra.mrb[0].mxu0 %v1043
    %v2959 = vpop.f32.mrb[0].mxu0
    %v2960 = vadd.f32 %v2671, %v2959
    %v2961 = vpop.f32.mrb[0].mxu0
    %v2962 = vpop.f32.mrb[0].mxu0
    %v2963 = vadd.f32 %v2674, %v2962
    %v2964 = vpop.f32.mrb[0].mxu0
    %2965 = vmatprep.mubr.bf16.mxu0 0
    %2966 = vmatmul.mubr.bf16.gmra.mrb[0].mxu0 %v1046
    %v2967 = vpop.f32.mrb[0].mxu0
    %v2968 = vadd.f32 %v2679, %v2967
    %v2969 = vpop.f32.mrb[0].mxu0
    %v2970 = vpop.f32.mrb[0].mxu0
    %v2971 = vadd.f32 %v2682, %v2970
    %v2972 = vpop.f32.mrb[0].mxu0
    %2973 = vmatprep.mubr.bf16.mxu0 0
    %2974 = vmatmul.mubr.bf16.gmra.mrb[0].mxu0 %v1049
    %v2975 = vpop.f32.mrb[0].mxu0
    %v2976 = vadd.f32 %v2687, %v2975
    %v2977 = vpop.f32.mrb[0].mxu0
    %v2978 = vpop.f32.mrb[0].mxu0
    %v2979 = vadd.f32 %v2690, %v2978
    %v2980 = vpop.f32.mrb[0].mxu0
    %2981 = vmatprep.mubr.bf16.mxu0 0
    %2982 = vmatmul.mubr.bf16.gmra.mrb[0].mxu0 %v1052
    %v2983 = vpop.f32.mrb[0].mxu0
    %v2984 = vadd.f32 %v2695, %v2983
    %v2985 = vpop.f32.mrb[0].mxu0
    %v2986 = vpop.f32.mrb[0].mxu0
    %v2987 = vadd.f32 %v2698, %v2986
    %v2988 = vpop.f32.mrb[0].mxu0
    %2989 = vmatprep.mubr.bf16.mxu0 0
    %2990 = vmatmul.mubr.bf16.gmra.mrb[0].mxu0 %v1055
    %v2991 = vpop.f32.mrb[0].mxu0
    %v2992 = vadd.f32 %v2703, %v2991
    %v2993 = vpop.f32.mrb[0].mxu0
    %v2994 = vpop.f32.mrb[0].mxu0
    %v2995 = vadd.f32 %v2706, %v2994
    %v2996 = vpop.f32.mrb[0].mxu0
    %2997 = vmatprep.mubr.bf16.mxu0 0
    %2998 = vmatmul.mubr.bf16.gmra.mrb[0].mxu0 %v1058
    %v2999 = vpop.f32.mrb[0].mxu0
    %v3000 = vadd.f32 %v2711, %v2999
    %v3001 = vpop.f32.mrb[0].mxu0
    %v3002 = vpop.f32.mrb[0].mxu0
    %v3003 = vadd.f32 %v2714, %v3002
    %v3004 = vpop.f32.mrb[0].mxu0
    %3005 = vmatprep.mubr.bf16.mxu0 0
    %3006 = vmatmul.mubr.bf16.gmra.mrb[0].mxu0 %v1067
    %v3007 = vpop.f32.mrb[0].mxu0
    %v3008 = vadd.f32 %v2719, %v3007
    %v3009 = vpop.f32.mrb[0].mxu0
    %v3010 = vpop.f32.mrb[0].mxu0
    %v3011 = vadd.f32 %v2722, %v3010
    %v3012 = vpop.f32.mrb[0].mxu0
    %3013 = vmatprep.mubr.bf16.mxu0 0
    %3014 = vmatmul.mubr.bf16.gmra.mrb[0].mxu0 %v1070
    %v3015 = vpop.f32.mrb[0].mxu0
    %v3016 = vadd.f32 %v2727, %v3015
    %v3017 = vpop.f32.mrb[0].mxu0
    %v3018 = vpop.f32.mrb[0].mxu0
    %v3019 = vadd.f32 %v2730, %v3018
    %v3020 = vpop.f32.mrb[0].mxu0
    %3021 = vmatprep.mubr.bf16.mxu0 0
    %3022 = vmatmul.mubr.bf16.gmra.mrb[0].mxu0 %v1073
    %v3023 = vpop.f32.mrb[0].mxu0
    %v3024 = vadd.f32 %v2735, %v3023
    %v3025 = vpop.f32.mrb[0].mxu0
    %v3026 = vpop.f32.mrb[0].mxu0
    %v3027 = vadd.f32 %v2738, %v3026
    %v3028 = vpop.f32.mrb[0].mxu0
    %3029 = vmatprep.mubr.bf16.mxu0 0
    %3030 = vmatmul.mubr.bf16.gmra.mrb[0].mxu0 %v1076
    %v3031 = vpop.f32.mrb[0].mxu0
    %v3032 = vadd.f32 %v2743, %v3031
    %v3033 = vpop.f32.mrb[0].mxu0
    %v3034 = vpop.f32.mrb[0].mxu0
    %v3035 = vadd.f32 %v2746, %v3034
    %v3036 = vpop.f32.mrb[0].mxu0
    %3037 = vmatprep.mubr.bf16.mxu0 0
    %3038 = vmatmul.mubr.bf16.gmra.mrb[0].mxu0 %v1079
    %v3039 = vpop.f32.mrb[0].mxu0
    %v3040 = vadd.f32 %v2751, %v3039
    %v3041 = vpop.f32.mrb[0].mxu0
    %v3042 = vpop.f32.mrb[0].mxu0
    %v3043 = vadd.f32 %v2754, %v3042
    %v3044 = vpop.f32.mrb[0].mxu0
    %3045 = vmatprep.mubr.bf16.mxu0 0
    %3046 = vmatmul.mubr.bf16.gmra.mrb[0].mxu0 %v1082
    %v3047 = vpop.f32.mrb[0].mxu0
    %v3048 = vadd.f32 %v2759, %v3047
    %v3049 = vpop.f32.mrb[0].mxu0
    %v3050 = vpop.f32.mrb[0].mxu0
    %v3051 = vadd.f32 %v2762, %v3050
    %v3052 = vpop.f32.mrb[0].mxu0
    %3053 = vmatprep.mubr.bf16.mxu0 0
    %3054 = vmatmul.mubr.bf16.gmra.mrb[0].mxu0 %v1085
    %v3055 = vpop.f32.mrb[0].mxu0
    %v3056 = vadd.f32 %v2767, %v3055
    %v3057 = vpop.f32.mrb[0].mxu0
    %v3058 = vpop.f32.mrb[0].mxu0
    %v3059 = vadd.f32 %v2770, %v3058
    %v3060 = vpop.f32.mrb[0].mxu0
    %3061 = vmatprep.mubr.bf16.mxu0 0
    %3062 = vmatmul.mubr.bf16.gmra.mrb[0].mxu0 %v1088
    %v3063 = vpop.f32.mrb[0].mxu0
    %v3064 = vadd.f32 %v2775, %v3063
    %v3065 = vpop.f32.mrb[0].mxu0
    %v3066 = vpop.f32.mrb[0].mxu0
    %v3067 = vadd.f32 %v2778, %v3066
    %v3068 = vpop.f32.mrb[0].mxu0
    %3069 = vmatprep.mubr.bf16.mxu0 0
    %3070 = vmatmul.mubr.bf16.gmra.mrb[0].mxu0 %v1091
    %v3071 = vpop.f32.mrb[0].mxu0
    %v3072 = vadd.f32 %v2783, %v3071
    %v3073 = vpop.f32.mrb[0].mxu0
    %v3074 = vpop.f32.mrb[0].mxu0
    %v3075 = vadd.f32 %v2786, %v3074
    %v3076 = vpop.f32.mrb[0].mxu0
    %3077 = vmatprep.mubr.bf16.mxu0 0
    %3078 = vmatmul.mubr.bf16.gmra.mrb[0].mxu0 %v1094
    %v3079 = vpop.f32.mrb[0].mxu0
    %v3080 = vadd.f32 %v2791, %v3079
    %v3081 = vpop.f32.mrb[0].mxu0
    %v3082 = vpop.f32.mrb[0].mxu0
    %v3083 = vadd.f32 %v2794, %v3082
    %v3084 = vpop.f32.mrb[0].mxu0
    %3085 = vmatprep.mubr.bf16.mxu0 0
    %3086 = vmatmul.mubr.bf16.gmra.mrb[0].mxu0 %v1097
    %v3087 = vpop.f32.mrb[0].mxu0
    %v3088 = vadd.f32 %v2799, %v3087
    %v3089 = vpop.f32.mrb[0].mxu0
    %v3090 = vpop.f32.mrb[0].mxu0
    %v3091 = vadd.f32 %v2802, %v3090
    %v3092 = vpop.f32.mrb[0].mxu0
    %3093 = vmatprep.mubr.bf16.mxu0 0
    %3094 = vmatmul.mubr.bf16.gmra.mrb[0].mxu0 %v1100
    %v3095 = vpop.f32.mrb[0].mxu0
    %v3096 = vadd.f32 %v2807, %v3095
    %v3097 = vpop.f32.mrb[0].mxu0
    %v3098 = vpop.f32.mrb[0].mxu0
    %v3099 = vadd.f32 %v2810, %v3098
    %v3100 = vpop.f32.mrb[0].mxu0
    %3101 = vmatprep.mubr.bf16.mxu0 0
    %3102 = vmatmul.mubr.bf16.gmra.mrb[0].mxu0 %v1103
    %v3103 = vpop.f32.mrb[0].mxu0
    %v3104 = vadd.f32 %v2815, %v3103
    %v3105 = vpop.f32.mrb[0].mxu0
    %v3106 = vpop.f32.mrb[0].mxu0
    %v3107 = vadd.f32 %v2818, %v3106
    %v3108 = vpop.f32.mrb[0].mxu0
    %3109 = vmatprep.mubr.bf16.mxu0 0
    %3110 = vmatmul.mubr.bf16.gmra.mrb[0].mxu0 %v1106
    %v3111 = vpop.f32.mrb[0].mxu0
    %v3112 = vadd.f32 %v2823, %v3111
    %v3113 = vpop.f32.mrb[0].mxu0
    %v3114 = vpop.f32.mrb[0].mxu0
    %v3115 = vadd.f32 %v2826, %v3114
    %v3116 = vpop.f32.mrb[0].mxu0
    %3117 = vmatprep.mubr.bf16.mxu0 0
    %3118 = vmatmul.mubr.bf16.gmra.mrb[0].mxu0 %v1109
    %v3119 = vpop.f32.mrb[0].mxu0
    %v3120 = vadd.f32 %v2831, %v3119
    %v3121 = vpop.f32.mrb[0].mxu0
    %v3122 = vpop.f32.mrb[0].mxu0
    %v3123 = vadd.f32 %v2834, %v3122
    %v3124 = vpop.f32.mrb[0].mxu0
    %3125 = vmatprep.mubr.bf16.mxu0 0
    %3126 = vmatmul.mubr.bf16.gmra.mrb[0].mxu0 %v1112
    %v3127 = vpop.f32.mrb[0].mxu0
    %v3128 = vadd.f32 %v2839, %v3127
    %v3129 = vpop.f32.mrb[0].mxu0
    %v3130 = vpop.f32.mrb[0].mxu0
    %v3131 = vadd.f32 %v2842, %v3130
    %v3132 = vpop.f32.mrb[0].mxu0
    %3133 = vdwg.mxu0
    %v3134 = vadd.f32 %v2880, %v2883
    %v3135 = vadd.f32 %v3134, %v2888
    %v3136 = vadd.f32 %v3135, %v2891
    %v3137 = vadd.f32 %v3136, %v2896
    %v3138 = vadd.f32 %v3137, %v2899
    %v3139 = vadd.f32 %v3138, %v2904
    %v3140 = vadd.f32 %v3139, %v2907
    %v3141 = vadd.f32 %v3140, %v2912
    %v3142 = vadd.f32 %v3141, %v2915
    %v3143 = vadd.f32 %v3142, %v2920
    %v3144 = vadd.f32 %v3143, %v2923
    %v3145 = vadd.f32 %v3144, %v2928
    %v3146 = vadd.f32 %v3145, %v2931
    %v3147 = vadd.f32 %v3146, %v2936
    %v3148 = vadd.f32 %v3147, %v2939
    %v3149 = vadd.f32 %v3148, %v2944
    %v3150 = vadd.f32 %v3149, %v2947
    %v3151 = vadd.f32 %v3150, %v2952
    %v3152 = vadd.f32 %v3151, %v2955
    %v3153 = vadd.f32 %v3152, %v2960
    %v3154 = vadd.f32 %v3153, %v2963
    %v3155 = vadd.f32 %v3154, %v2968
    %v3156 = vadd.f32 %v3155, %v2971
    %v3157 = vadd.f32 %v3156, %v2976
    %v3158 = vadd.f32 %v3157, %v2979
    %v3159 = vadd.f32 %v3158, %v2984
    %v3160 = vadd.f32 %v3159, %v2987
    %v3161 = vadd.f32 %v3160, %v2992
    %v3162 = vadd.f32 %v3161, %v2995
    %v3163 = vadd.f32 %v3162, %v3000
    %v3164 = vadd.f32 %v3163, %v3003
    %v3165 = vadd.f32 %v3164, %v3008
    %v3166 = vadd.f32 %v3165, %v3011
    %v3167 = vadd.f32 %v3166, %v3016
    %v3168 = vadd.f32 %v3167, %v3019
    %v3169 = vadd.f32 %v3168, %v3024
    %v3170 = vadd.f32 %v3169, %v3027
    %v3171 = vadd.f32 %v3170, %v3032
    %v3172 = vadd.f32 %v3171, %v3035
    %v3173 = vadd.f32 %v3172, %v3040
    %v3174 = vadd.f32 %v3173, %v3043
    %v3175 = vadd.f32 %v3174, %v3048
    %v3176 = vadd.f32 %v3175, %v3051
    %v3177 = vadd.f32 %v3176, %v3056
    %v3178 = vadd.f32 %v3177, %v3059
    %v3179 = vadd.f32 %v3178, %v3064
    %v3180 = vadd.f32 %v3179, %v3067
    %v3181 = vadd.f32 %v3180, %v3072
    %v3182 = vadd.f32 %v3181, %v3075
    %v3183 = vadd.f32 %v3182, %v3080
    %v3184 = vadd.f32 %v3183, %v3083
    %v3185 = vadd.f32 %v3184, %v3088
    %v3186 = vadd.f32 %v3185, %v3091
    %v3187 = vadd.f32 %v3186, %v3096
    %v3188 = vadd.f32 %v3187, %v3099
    %v3189 = vadd.f32 %v3188, %v3104
    %v3190 = vadd.f32 %v3189, %v3107
    %v3191 = vadd.f32 %v3190, %v3112
    %v3192 = vadd.f32 %v3191, %v3115
    %v3193 = vadd.f32 %v3192, %v3120
    %v3194 = vadd.f32 %v3193, %v3123
    %v3195 = vadd.f32 %v3194, %v3128
    %v3196 = vadd.f32 %v3195, %v3131
    %v3197 = vrot.slane %v3196, 4
    %v3198 = vadd.f32 %v3196, %v3197
    %v3199 = vrot.slane %v3198, 2
    %v3200 = vadd.f32 %v3198, %v3199
    %v3201 = vrot.slane %v3200, 1
    %v3202 = vadd.f32 %v3200, %v3201
    %v3203 = vmul.f32 %v2880, %v2880
    %v3204 = vmul.f32 %v2883, %v2883
    %v3205 = vmul.f32 %v2888, %v2888
    %v3206 = vmul.f32 %v2891, %v2891
    %v3207 = vmul.f32 %v2896, %v2896
    %v3208 = vmul.f32 %v2899, %v2899
    %v3209 = vmul.f32 %v2904, %v2904
    %v3210 = vmul.f32 %v2907, %v2907
    %v3211 = vmul.f32 %v2912, %v2912
    %v3212 = vmul.f32 %v2915, %v2915
    %v3213 = vmul.f32 %v2920, %v2920
    %v3214 = vmul.f32 %v2923, %v2923
    %v3215 = vmul.f32 %v2928, %v2928
    %v3216 = vmul.f32 %v2931, %v2931
    %v3217 = vmul.f32 %v2936, %v2936
    %v3218 = vmul.f32 %v2939, %v2939
    %v3219 = vmul.f32 %v2944, %v2944
    %v3220 = vmul.f32 %v2947, %v2947
    %v3221 = vmul.f32 %v2952, %v2952
    %v3222 = vmul.f32 %v2955, %v2955
    %v3223 = vmul.f32 %v2960, %v2960
    %v3224 = vmul.f32 %v2963, %v2963
    %v3225 = vmul.f32 %v2968, %v2968
    %v3226 = vmul.f32 %v2971, %v2971
    %v3227 = vmul.f32 %v2976, %v2976
    %v3228 = vmul.f32 %v2979, %v2979
    %v3229 = vmul.f32 %v2984, %v2984
    %v3230 = vmul.f32 %v2987, %v2987
    %v3231 = vmul.f32 %v2992, %v2992
    %v3232 = vmul.f32 %v2995, %v2995
    %v3233 = vmul.f32 %v3000, %v3000
    %v3234 = vmul.f32 %v3003, %v3003
    %v3235 = vmul.f32 %v3008, %v3008
    %v3236 = vmul.f32 %v3011, %v3011
    %v3237 = vmul.f32 %v3016, %v3016
    %v3238 = vmul.f32 %v3019, %v3019
    %v3239 = vmul.f32 %v3024, %v3024
    %v3240 = vmul.f32 %v3027, %v3027
    %v3241 = vmul.f32 %v3032, %v3032
    %v3242 = vmul.f32 %v3035, %v3035
    %v3243 = vmul.f32 %v3040, %v3040
    %v3244 = vmul.f32 %v3043, %v3043
    %v3245 = vmul.f32 %v3048, %v3048
    %v3246 = vmul.f32 %v3051, %v3051
    %v3247 = vmul.f32 %v3056, %v3056
    %v3248 = vmul.f32 %v3059, %v3059
    %v3249 = vmul.f32 %v3064, %v3064
    %v3250 = vmul.f32 %v3067, %v3067
    %v3251 = vmul.f32 %v3072, %v3072
    %v3252 = vmul.f32 %v3075, %v3075
    %v3253 = vmul.f32 %v3080, %v3080
    %v3254 = vmul.f32 %v3083, %v3083
    %v3255 = vmul.f32 %v3088, %v3088
    %v3256 = vmul.f32 %v3091, %v3091
    %v3257 = vmul.f32 %v3096, %v3096
    %v3258 = vmul.f32 %v3099, %v3099
    %v3259 = vmul.f32 %v3104, %v3104
    %v3260 = vmul.f32 %v3107, %v3107
    %v3261 = vmul.f32 %v3112, %v3112
    %v3262 = vmul.f32 %v3115, %v3115
    %v3263 = vmul.f32 %v3120, %v3120
    %v3264 = vmul.f32 %v3123, %v3123
    %v3265 = vmul.f32 %v3128, %v3128
    %v3266 = vmul.f32 %v3131, %v3131
    %v3267 = vadd.f32 %v3203, %v3204
    %v3268 = vadd.f32 %v3267, %v3205
    %v3269 = vadd.f32 %v3268, %v3206
    %v3270 = vadd.f32 %v3269, %v3207
    %v3271 = vadd.f32 %v3270, %v3208
    %v3272 = vadd.f32 %v3271, %v3209
    %v3273 = vadd.f32 %v3272, %v3210
    %v3274 = vadd.f32 %v3273, %v3211
    %v3275 = vadd.f32 %v3274, %v3212
    %v3276 = vadd.f32 %v3275, %v3213
    %v3277 = vadd.f32 %v3276, %v3214
    %v3278 = vadd.f32 %v3277, %v3215
    %v3279 = vadd.f32 %v3278, %v3216
    %v3280 = vadd.f32 %v3279, %v3217
    %v3281 = vadd.f32 %v3280, %v3218
    %v3282 = vadd.f32 %v3281, %v3219
    %v3283 = vadd.f32 %v3282, %v3220
    %v3284 = vadd.f32 %v3283, %v3221
    %v3285 = vadd.f32 %v3284, %v3222
    %v3286 = vadd.f32 %v3285, %v3223
    %v3287 = vadd.f32 %v3286, %v3224
    %v3288 = vadd.f32 %v3287, %v3225
    %v3289 = vadd.f32 %v3288, %v3226
    %v3290 = vadd.f32 %v3289, %v3227
    %v3291 = vadd.f32 %v3290, %v3228
    %v3292 = vadd.f32 %v3291, %v3229
    %v3293 = vadd.f32 %v3292, %v3230
    %v3294 = vadd.f32 %v3293, %v3231
    %v3295 = vadd.f32 %v3294, %v3232
    %v3296 = vadd.f32 %v3295, %v3233
    %v3297 = vadd.f32 %v3296, %v3234
    %v3298 = vadd.f32 %v3297, %v3235
    %v3299 = vadd.f32 %v3298, %v3236
    %v3300 = vadd.f32 %v3299, %v3237
    %v3301 = vadd.f32 %v3300, %v3238
    %v3302 = vadd.f32 %v3301, %v3239
    %v3303 = vadd.f32 %v3302, %v3240
    %v3304 = vadd.f32 %v3303, %v3241
    %v3305 = vadd.f32 %v3304, %v3242
    %v3306 = vadd.f32 %v3305, %v3243
    %v3307 = vadd.f32 %v3306, %v3244
    %v3308 = vadd.f32 %v3307, %v3245
    %v3309 = vadd.f32 %v3308, %v3246
    %v3310 = vadd.f32 %v3309, %v3247
    %v3311 = vadd.f32 %v3310, %v3248
    %v3312 = vadd.f32 %v3311, %v3249
    %v3313 = vadd.f32 %v3312, %v3250
    %v3314 = vadd.f32 %v3313, %v3251
    %v3315 = vadd.f32 %v3314, %v3252
    %v3316 = vadd.f32 %v3315, %v3253
    %v3317 = vadd.f32 %v3316, %v3254
    %v3318 = vadd.f32 %v3317, %v3255
    %v3319 = vadd.f32 %v3318, %v3256
    %v3320 = vadd.f32 %v3319, %v3257
    %v3321 = vadd.f32 %v3320, %v3258
    %v3322 = vadd.f32 %v3321, %v3259
    %v3323 = vadd.f32 %v3322, %v3260
    %v3324 = vadd.f32 %v3323, %v3261
    %v3325 = vadd.f32 %v3324, %v3262
    %v3326 = vadd.f32 %v3325, %v3263
    %v3327 = vadd.f32 %v3326, %v3264
    %v3328 = vadd.f32 %v3327, %v3265
    %v3329 = vadd.f32 %v3328, %v3266
    %v3330 = vrot.slane %v3329, 4
    %v3331 = vadd.f32 %v3329, %v3330
    %v3332 = vrot.slane %v3331, 2
    %v3333 = vadd.f32 %v3331, %v3332
    %v3334 = vrot.slane %v3333, 1
    %v3335 = vadd.f32 %v3333, %v3334
    %v3336 = vmul.f32 %v3202, 0.001953125
    %v3337 = vmul.f32 %v3335, 0.001953125
    %v3338 = vmul.f32 %v3336, %v3336
    %v3339 = vsub.f32 %v3337, %v3338
    %v3340 = vmax.f32 %v3339, 0.0
    %v3341 = vadd.f32 %v3340, 1e-05
    %v3342 = vrsqrt.pop %v3341
    %v3343 = vld [vmem:[%s2] sm:$0x1]
    %v3344 = vmul.f32 %v3342, %v3343
    %v3345 = vsub.f32 %v2880, %v3336
    %v3346 = vsub.f32 %v2883, %v3336
    %v3347 = vsub.f32 %v2888, %v3336
    %v3348 = vsub.f32 %v2891, %v3336
    %v3349 = vsub.f32 %v2896, %v3336
    %v3350 = vsub.f32 %v2899, %v3336
    %v3351 = vsub.f32 %v2904, %v3336
    %v3352 = vsub.f32 %v2907, %v3336
    %v3353 = vsub.f32 %v2912, %v3336
    %v3354 = vsub.f32 %v2915, %v3336
    %v3355 = vsub.f32 %v2920, %v3336
    %v3356 = vsub.f32 %v2923, %v3336
    %v3357 = vsub.f32 %v2928, %v3336
    %v3358 = vsub.f32 %v2931, %v3336
    %v3359 = vsub.f32 %v2936, %v3336
    %v3360 = vsub.f32 %v2939, %v3336
    %v3361 = vsub.f32 %v2944, %v3336
    %v3362 = vsub.f32 %v2947, %v3336
    %v3363 = vsub.f32 %v2952, %v3336
    %v3364 = vsub.f32 %v2955, %v3336
    %v3365 = vsub.f32 %v2960, %v3336
    %v3366 = vsub.f32 %v2963, %v3336
    %v3367 = vsub.f32 %v2968, %v3336
    %v3368 = vsub.f32 %v2971, %v3336
    %v3369 = vsub.f32 %v2976, %v3336
    %v3370 = vsub.f32 %v2979, %v3336
    %v3371 = vsub.f32 %v2984, %v3336
    %v3372 = vsub.f32 %v2987, %v3336
    %v3373 = vsub.f32 %v2992, %v3336
    %v3374 = vsub.f32 %v2995, %v3336
    %v3375 = vsub.f32 %v3000, %v3336
    %v3376 = vsub.f32 %v3003, %v3336
    %v3377 = vsub.f32 %v3008, %v3336
    %v3378 = vsub.f32 %v3011, %v3336
    %v3379 = vsub.f32 %v3016, %v3336
    %v3380 = vsub.f32 %v3019, %v3336
    %v3381 = vsub.f32 %v3024, %v3336
    %v3382 = vsub.f32 %v3027, %v3336
    %v3383 = vsub.f32 %v3032, %v3336
    %v3384 = vsub.f32 %v3035, %v3336
    %v3385 = vsub.f32 %v3040, %v3336
    %v3386 = vsub.f32 %v3043, %v3336
    %v3387 = vsub.f32 %v3048, %v3336
    %v3388 = vsub.f32 %v3051, %v3336
    %v3389 = vsub.f32 %v3056, %v3336
    %v3390 = vsub.f32 %v3059, %v3336
    %v3391 = vsub.f32 %v3064, %v3336
    %v3392 = vsub.f32 %v3067, %v3336
    %v3393 = vsub.f32 %v3072, %v3336
    %v3394 = vsub.f32 %v3075, %v3336
    %v3395 = vsub.f32 %v3080, %v3336
    %v3396 = vsub.f32 %v3083, %v3336
    %v3397 = vsub.f32 %v3088, %v3336
    %v3398 = vsub.f32 %v3091, %v3336
    %v3399 = vsub.f32 %v3096, %v3336
    %v3400 = vsub.f32 %v3099, %v3336
    %v3401 = vsub.f32 %v3104, %v3336
    %v3402 = vsub.f32 %v3107, %v3336
    %v3403 = vsub.f32 %v3112, %v3336
    %v3404 = vsub.f32 %v3115, %v3336
    %v3405 = vsub.f32 %v3120, %v3336
    %v3406 = vsub.f32 %v3123, %v3336
    %v3407 = vsub.f32 %v3128, %v3336
    %v3408 = vsub.f32 %v3131, %v3336
    %v3409 = vlaneseq
    %v3410 = vshrl.u32 %v3409, 7
    %v3411 = vsub.s32 0, %v3410
    %v3412 = vrot.slane %v3344, %v3411
    %v3413 = vmul.f32 %v3345, %v3412
    %v3414 = vmul.f32 %v3346, %v3412
    %v3415 = vmul.f32 %v3347, %v3412
    %v3416 = vmul.f32 %v3348, %v3412
    %v3417 = vmul.f32 %v3349, %v3412
    %v3418 = vmul.f32 %v3350, %v3412
    %v3419 = vmul.f32 %v3351, %v3412
    %v3420 = vmul.f32 %v3352, %v3412
    %v3421 = vmul.f32 %v3353, %v3412
    %v3422 = vmul.f32 %v3354, %v3412
    %v3423 = vmul.f32 %v3355, %v3412
    %v3424 = vmul.f32 %v3356, %v3412
    %v3425 = vmul.f32 %v3357, %v3412
    %v3426 = vmul.f32 %v3358, %v3412
    %v3427 = vmul.f32 %v3359, %v3412
    %v3428 = vmul.f32 %v3360, %v3412
    %v3429 = vmul.f32 %v3361, %v3412
    %v3430 = vmul.f32 %v3362, %v3412
    %v3431 = vmul.f32 %v3363, %v3412
    %v3432 = vmul.f32 %v3364, %v3412
    %v3433 = vmul.f32 %v3365, %v3412
    %v3434 = vmul.f32 %v3366, %v3412
    %v3435 = vmul.f32 %v3367, %v3412
    %v3436 = vmul.f32 %v3368, %v3412
    %v3437 = vmul.f32 %v3369, %v3412
    %v3438 = vmul.f32 %v3370, %v3412
    %v3439 = vmul.f32 %v3371, %v3412
    %v3440 = vmul.f32 %v3372, %v3412
    %v3441 = vmul.f32 %v3373, %v3412
    %v3442 = vmul.f32 %v3374, %v3412
    %v3443 = vmul.f32 %v3375, %v3412
    %v3444 = vmul.f32 %v3376, %v3412
    %v3445 = vmul.f32 %v3377, %v3412
    %v3446 = vmul.f32 %v3378, %v3412
    %v3447 = vmul.f32 %v3379, %v3412
    %v3448 = vmul.f32 %v3380, %v3412
    %v3449 = vmul.f32 %v3381, %v3412
    %v3450 = vmul.f32 %v3382, %v3412
    %v3451 = vmul.f32 %v3383, %v3412
    %v3452 = vmul.f32 %v3384, %v3412
    %v3453 = vmul.f32 %v3385, %v3412
    %v3454 = vmul.f32 %v3386, %v3412
    %v3455 = vmul.f32 %v3387, %v3412
    %v3456 = vmul.f32 %v3388, %v3412
    %v3457 = vmul.f32 %v3389, %v3412
    %v3458 = vmul.f32 %v3390, %v3412
    %v3459 = vmul.f32 %v3391, %v3412
    %v3460 = vmul.f32 %v3392, %v3412
    %v3461 = vmul.f32 %v3393, %v3412
    %v3462 = vmul.f32 %v3394, %v3412
    %v3463 = vmul.f32 %v3395, %v3412
    %v3464 = vmul.f32 %v3396, %v3412
    %v3465 = vmul.f32 %v3397, %v3412
    %v3466 = vmul.f32 %v3398, %v3412
    %v3467 = vmul.f32 %v3399, %v3412
    %v3468 = vmul.f32 %v3400, %v3412
    %v3469 = vmul.f32 %v3401, %v3412
    %v3470 = vmul.f32 %v3402, %v3412
    %v3471 = vmul.f32 %v3403, %v3412
    %v3472 = vmul.f32 %v3404, %v3412
    %v3473 = vmul.f32 %v3405, %v3412
    %v3474 = vmul.f32 %v3406, %v3412
    %v3475 = vmul.f32 %v3407, %v3412
    %v3476 = vmul.f32 %v3408, %v3412
    %v3477 = vld [vmem:[%s3] sm:$0x1]
    %v3479 = vlaneseq
    %v3480 = vshrl.u32 %v3479, 7
    %v3481 = vsub.s32 0, %v3480
    %v3482 = vrot.slane %v3477, %v3481
    %v3484 = vadd.f32 %v3413, %v3482
    %v3485 = vadd.f32 %v3414, %v3482
    %v3486 = vadd.f32 %v3415, %v3482
    %v3487 = vadd.f32 %v3416, %v3482
    %v3488 = vadd.f32 %v3417, %v3482
    %v3489 = vadd.f32 %v3418, %v3482
    %v3490 = vadd.f32 %v3419, %v3482
    %v3491 = vadd.f32 %v3420, %v3482
    %v3492 = vadd.f32 %v3421, %v3482
    %v3493 = vadd.f32 %v3422, %v3482
    %v3494 = vadd.f32 %v3423, %v3482
    %v3495 = vadd.f32 %v3424, %v3482
    %v3496 = vadd.f32 %v3425, %v3482
    %v3497 = vadd.f32 %v3426, %v3482
    %v3498 = vadd.f32 %v3427, %v3482
    %v3499 = vadd.f32 %v3428, %v3482
    %v3500 = vadd.f32 %v3429, %v3482
    %v3501 = vadd.f32 %v3430, %v3482
    %v3502 = vadd.f32 %v3431, %v3482
    %v3503 = vadd.f32 %v3432, %v3482
    %v3504 = vadd.f32 %v3433, %v3482
    %v3505 = vadd.f32 %v3434, %v3482
    %v3506 = vadd.f32 %v3435, %v3482
    %v3507 = vadd.f32 %v3436, %v3482
    %v3508 = vadd.f32 %v3437, %v3482
    %v3509 = vadd.f32 %v3438, %v3482
    %v3510 = vadd.f32 %v3439, %v3482
    %v3511 = vadd.f32 %v3440, %v3482
    %v3512 = vadd.f32 %v3441, %v3482
    %v3513 = vadd.f32 %v3442, %v3482
    %v3514 = vadd.f32 %v3443, %v3482
    %v3515 = vadd.f32 %v3444, %v3482
    %v3516 = vadd.f32 %v3445, %v3482
    %v3517 = vadd.f32 %v3446, %v3482
    %v3518 = vadd.f32 %v3447, %v3482
    %v3519 = vadd.f32 %v3448, %v3482
    %v3520 = vadd.f32 %v3449, %v3482
    %v3521 = vadd.f32 %v3450, %v3482
    %v3522 = vadd.f32 %v3451, %v3482
    %v3523 = vadd.f32 %v3452, %v3482
    %v3524 = vadd.f32 %v3453, %v3482
    %v3525 = vadd.f32 %v3454, %v3482
    %v3526 = vadd.f32 %v3455, %v3482
    %v3527 = vadd.f32 %v3456, %v3482
    %v3528 = vadd.f32 %v3457, %v3482
    %v3529 = vadd.f32 %v3458, %v3482
    %v3530 = vadd.f32 %v3459, %v3482
    %v3531 = vadd.f32 %v3460, %v3482
    %v3532 = vadd.f32 %v3461, %v3482
    %v3533 = vadd.f32 %v3462, %v3482
    %v3534 = vadd.f32 %v3463, %v3482
    %v3535 = vadd.f32 %v3464, %v3482
    %v3536 = vadd.f32 %v3465, %v3482
    %v3537 = vadd.f32 %v3466, %v3482
    %v3538 = vadd.f32 %v3467, %v3482
    %v3539 = vadd.f32 %v3468, %v3482
    %v3540 = vadd.f32 %v3469, %v3482
    %v3541 = vadd.f32 %v3470, %v3482
    %v3542 = vadd.f32 %v3471, %v3482
    %v3543 = vadd.f32 %v3472, %v3482
    %v3544 = vadd.f32 %v3473, %v3482
    %v3545 = vadd.f32 %v3474, %v3482
    %v3546 = vadd.f32 %v3475, %v3482
    %v3547 = vadd.f32 %v3476, %v3482
    %vm3548 = vcmp.ge.f32.partialorder %v3484, 0.0
    %vm3549 = vcmp.ge.f32.partialorder %v3485, 0.0
    %vm3550 = vcmp.ge.f32.partialorder %v3486, 0.0
    %vm3551 = vcmp.ge.f32.partialorder %v3487, 0.0
    %vm3552 = vcmp.ge.f32.partialorder %v3488, 0.0
    %vm3553 = vcmp.ge.f32.partialorder %v3489, 0.0
    %vm3554 = vcmp.ge.f32.partialorder %v3490, 0.0
    %vm3555 = vcmp.ge.f32.partialorder %v3491, 0.0
    %vm3556 = vcmp.ge.f32.partialorder %v3492, 0.0
    %vm3557 = vcmp.ge.f32.partialorder %v3493, 0.0
    %vm3558 = vcmp.ge.f32.partialorder %v3494, 0.0
    %vm3559 = vcmp.ge.f32.partialorder %v3495, 0.0
    %vm3560 = vcmp.ge.f32.partialorder %v3496, 0.0
    %vm3561 = vcmp.ge.f32.partialorder %v3497, 0.0
    %vm3562 = vcmp.ge.f32.partialorder %v3498, 0.0
    %vm3563 = vcmp.ge.f32.partialorder %v3499, 0.0
    %vm3564 = vcmp.ge.f32.partialorder %v3500, 0.0
    %vm3565 = vcmp.ge.f32.partialorder %v3501, 0.0
    %vm3566 = vcmp.ge.f32.partialorder %v3502, 0.0
    %vm3567 = vcmp.ge.f32.partialorder %v3503, 0.0
    %vm3568 = vcmp.ge.f32.partialorder %v3504, 0.0
    %vm3569 = vcmp.ge.f32.partialorder %v3505, 0.0
    %vm3570 = vcmp.ge.f32.partialorder %v3506, 0.0
    %vm3571 = vcmp.ge.f32.partialorder %v3507, 0.0
    %vm3572 = vcmp.ge.f32.partialorder %v3508, 0.0
    %vm3573 = vcmp.ge.f32.partialorder %v3509, 0.0
    %vm3574 = vcmp.ge.f32.partialorder %v3510, 0.0
    %vm3575 = vcmp.ge.f32.partialorder %v3511, 0.0
    %vm3576 = vcmp.ge.f32.partialorder %v3512, 0.0
    %vm3577 = vcmp.ge.f32.partialorder %v3513, 0.0
    %vm3578 = vcmp.ge.f32.partialorder %v3514, 0.0
    %vm3579 = vcmp.ge.f32.partialorder %v3515, 0.0
    %vm3580 = vcmp.ge.f32.partialorder %v3516, 0.0
    %vm3581 = vcmp.ge.f32.partialorder %v3517, 0.0
    %vm3582 = vcmp.ge.f32.partialorder %v3518, 0.0
    %vm3583 = vcmp.ge.f32.partialorder %v3519, 0.0
    %vm3584 = vcmp.ge.f32.partialorder %v3520, 0.0
    %vm3585 = vcmp.ge.f32.partialorder %v3521, 0.0
    %vm3586 = vcmp.ge.f32.partialorder %v3522, 0.0
    %vm3587 = vcmp.ge.f32.partialorder %v3523, 0.0
    %vm3588 = vcmp.ge.f32.partialorder %v3524, 0.0
    %vm3589 = vcmp.ge.f32.partialorder %v3525, 0.0
    %vm3590 = vcmp.ge.f32.partialorder %v3526, 0.0
    %vm3591 = vcmp.ge.f32.partialorder %v3527, 0.0
    %vm3592 = vcmp.ge.f32.partialorder %v3528, 0.0
    %vm3593 = vcmp.ge.f32.partialorder %v3529, 0.0
    %vm3594 = vcmp.ge.f32.partialorder %v3530, 0.0
    %vm3595 = vcmp.ge.f32.partialorder %v3531, 0.0
    %vm3596 = vcmp.ge.f32.partialorder %v3532, 0.0
    %vm3597 = vcmp.ge.f32.partialorder %v3533, 0.0
    %vm3598 = vcmp.ge.f32.partialorder %v3534, 0.0
    %vm3599 = vcmp.ge.f32.partialorder %v3535, 0.0
    %vm3600 = vcmp.ge.f32.partialorder %v3536, 0.0
    %vm3601 = vcmp.ge.f32.partialorder %v3537, 0.0
    %vm3602 = vcmp.ge.f32.partialorder %v3538, 0.0
    %vm3603 = vcmp.ge.f32.partialorder %v3539, 0.0
    %vm3604 = vcmp.ge.f32.partialorder %v3540, 0.0
    %vm3605 = vcmp.ge.f32.partialorder %v3541, 0.0
    %vm3606 = vcmp.ge.f32.partialorder %v3542, 0.0
    %vm3607 = vcmp.ge.f32.partialorder %v3543, 0.0
    %vm3608 = vcmp.ge.f32.partialorder %v3544, 0.0
    %vm3609 = vcmp.ge.f32.partialorder %v3545, 0.0
    %vm3610 = vcmp.ge.f32.partialorder %v3546, 0.0
    %vm3611 = vcmp.ge.f32.partialorder %v3547, 0.0
    %v3612 = vmul.f32 %v3484, 0.1
    %v3613 = vmul.f32 %v3485, 0.1
    %v3614 = vmul.f32 %v3486, 0.1
    %v3615 = vmul.f32 %v3487, 0.1
    %v3616 = vmul.f32 %v3488, 0.1
    %v3617 = vmul.f32 %v3489, 0.1
    %v3618 = vmul.f32 %v3490, 0.1
    %v3619 = vmul.f32 %v3491, 0.1
    %v3620 = vmul.f32 %v3492, 0.1
    %v3621 = vmul.f32 %v3493, 0.1
    %v3622 = vmul.f32 %v3494, 0.1
    %v3623 = vmul.f32 %v3495, 0.1
    %v3624 = vmul.f32 %v3496, 0.1
    %v3625 = vmul.f32 %v3497, 0.1
    %v3626 = vmul.f32 %v3498, 0.1
    %v3627 = vmul.f32 %v3499, 0.1
    %v3628 = vmul.f32 %v3500, 0.1
    %v3629 = vmul.f32 %v3501, 0.1
    %v3630 = vmul.f32 %v3502, 0.1
    %v3631 = vmul.f32 %v3503, 0.1
    %v3632 = vmul.f32 %v3504, 0.1
    %v3633 = vmul.f32 %v3505, 0.1
    %v3634 = vmul.f32 %v3506, 0.1
    %v3635 = vmul.f32 %v3507, 0.1
    %v3636 = vmul.f32 %v3508, 0.1
    %v3637 = vmul.f32 %v3509, 0.1
    %v3638 = vmul.f32 %v3510, 0.1
    %v3639 = vmul.f32 %v3511, 0.1
    %v3640 = vmul.f32 %v3512, 0.1
    %v3641 = vmul.f32 %v3513, 0.1
    %v3642 = vmul.f32 %v3514, 0.1
    %v3643 = vmul.f32 %v3515, 0.1
    %v3644 = vmul.f32 %v3516, 0.1
    %v3645 = vmul.f32 %v3517, 0.1
    %v3646 = vmul.f32 %v3518, 0.1
    %v3647 = vmul.f32 %v3519, 0.1
    %v3648 = vmul.f32 %v3520, 0.1
    %v3649 = vmul.f32 %v3521, 0.1
    %v3650 = vmul.f32 %v3522, 0.1
    %v3651 = vmul.f32 %v3523, 0.1
    %v3652 = vmul.f32 %v3524, 0.1
    %v3653 = vmul.f32 %v3525, 0.1
    %v3654 = vmul.f32 %v3526, 0.1
    %v3655 = vmul.f32 %v3527, 0.1
    %v3656 = vmul.f32 %v3528, 0.1
    %v3657 = vmul.f32 %v3529, 0.1
    %v3658 = vmul.f32 %v3530, 0.1
    %v3659 = vmul.f32 %v3531, 0.1
    %v3660 = vmul.f32 %v3532, 0.1
    %v3661 = vmul.f32 %v3533, 0.1
    %v3662 = vmul.f32 %v3534, 0.1
    %v3663 = vmul.f32 %v3535, 0.1
    %v3664 = vmul.f32 %v3536, 0.1
    %v3665 = vmul.f32 %v3537, 0.1
    %v3666 = vmul.f32 %v3538, 0.1
    %v3667 = vmul.f32 %v3539, 0.1
    %v3668 = vmul.f32 %v3540, 0.1
    %v3669 = vmul.f32 %v3541, 0.1
    %v3670 = vmul.f32 %v3542, 0.1
    %v3671 = vmul.f32 %v3543, 0.1
    %v3672 = vmul.f32 %v3544, 0.1
    %v3673 = vmul.f32 %v3545, 0.1
    %v3674 = vmul.f32 %v3546, 0.1
    %v3675 = vmul.f32 %v3547, 0.1
    %v3676 = vsel %vm3548, %v3484, %v3612
    %v3677 = vsel %vm3549, %v3485, %v3613
    %v3678 = vsel %vm3550, %v3486, %v3614
    %v3679 = vsel %vm3551, %v3487, %v3615
    %v3680 = vsel %vm3552, %v3488, %v3616
    %v3681 = vsel %vm3553, %v3489, %v3617
    %v3682 = vsel %vm3554, %v3490, %v3618
    %v3683 = vsel %vm3555, %v3491, %v3619
    %v3684 = vsel %vm3556, %v3492, %v3620
    %v3685 = vsel %vm3557, %v3493, %v3621
    %v3686 = vsel %vm3558, %v3494, %v3622
    %v3687 = vsel %vm3559, %v3495, %v3623
    %v3688 = vsel %vm3560, %v3496, %v3624
    %v3689 = vsel %vm3561, %v3497, %v3625
    %v3690 = vsel %vm3562, %v3498, %v3626
    %v3691 = vsel %vm3563, %v3499, %v3627
    %v3692 = vsel %vm3564, %v3500, %v3628
    %v3693 = vsel %vm3565, %v3501, %v3629
    %v3694 = vsel %vm3566, %v3502, %v3630
    %v3695 = vsel %vm3567, %v3503, %v3631
    %v3696 = vsel %vm3568, %v3504, %v3632
    %v3697 = vsel %vm3569, %v3505, %v3633
    %v3698 = vsel %vm3570, %v3506, %v3634
    %v3699 = vsel %vm3571, %v3507, %v3635
    %v3700 = vsel %vm3572, %v3508, %v3636
    %v3701 = vsel %vm3573, %v3509, %v3637
    %v3702 = vsel %vm3574, %v3510, %v3638
    %v3703 = vsel %vm3575, %v3511, %v3639
    %v3704 = vsel %vm3576, %v3512, %v3640
    %v3705 = vsel %vm3577, %v3513, %v3641
    %v3706 = vsel %vm3578, %v3514, %v3642
    %v3707 = vsel %vm3579, %v3515, %v3643
    %v3708 = vsel %vm3580, %v3516, %v3644
    %v3709 = vsel %vm3581, %v3517, %v3645
    %v3710 = vsel %vm3582, %v3518, %v3646
    %v3711 = vsel %vm3583, %v3519, %v3647
    %v3712 = vsel %vm3584, %v3520, %v3648
    %v3713 = vsel %vm3585, %v3521, %v3649
    %v3714 = vsel %vm3586, %v3522, %v3650
    %v3715 = vsel %vm3587, %v3523, %v3651
    %v3716 = vsel %vm3588, %v3524, %v3652
    %v3717 = vsel %vm3589, %v3525, %v3653
    %v3718 = vsel %vm3590, %v3526, %v3654
    %v3719 = vsel %vm3591, %v3527, %v3655
    %v3720 = vsel %vm3592, %v3528, %v3656
    %v3721 = vsel %vm3593, %v3529, %v3657
    %v3722 = vsel %vm3594, %v3530, %v3658
    %v3723 = vsel %vm3595, %v3531, %v3659
    %v3724 = vsel %vm3596, %v3532, %v3660
    %v3725 = vsel %vm3597, %v3533, %v3661
    %v3726 = vsel %vm3598, %v3534, %v3662
    %v3727 = vsel %vm3599, %v3535, %v3663
    %v3728 = vsel %vm3600, %v3536, %v3664
    %v3729 = vsel %vm3601, %v3537, %v3665
    %v3730 = vsel %vm3602, %v3538, %v3666
    %v3731 = vsel %vm3603, %v3539, %v3667
    %v3732 = vsel %vm3604, %v3540, %v3668
    %v3733 = vsel %vm3605, %v3541, %v3669
    %v3734 = vsel %vm3606, %v3542, %v3670
    %v3735 = vsel %vm3607, %v3543, %v3671
    %v3736 = vsel %vm3608, %v3544, %v3672
    %v3737 = vsel %vm3609, %v3545, %v3673
    %v3738 = vsel %vm3610, %v3546, %v3674
    %v3739 = vsel %vm3611, %v3547, %v3675
    %3740 = vst [vmem:[%s218 + $0x1] sm:$0xff] %v3676
    %3741 = vst [vmem:[%s218 + $0x9] sm:$0xff] %v3677
    %3742 = vst [vmem:[%s218 + $0x19] sm:$0xff] %v3678
    %3743 = vst [vmem:[%s218 + $0x21] sm:$0xff] %v3679
    %3744 = vst [vmem:[%s218 + $0x31] sm:$0xff] %v3680
    %3745 = vst [vmem:[%s218 + $0x39] sm:$0xff] %v3681
    %3746 = vst [vmem:[%s218 + $0x49] sm:$0xff] %v3682
    %3747 = vst [vmem:[%s218 + $0x51] sm:$0xff] %v3683
    %3748 = vst [vmem:[%s218 + $0x61] sm:$0xff] %v3684
    %3749 = vst [vmem:[%s218 + $0x69] sm:$0xff] %v3685
    %3750 = vst [vmem:[%s218 + $0x79] sm:$0xff] %v3686
    %3751 = vst [vmem:[%s218 + $0x81] sm:$0xff] %v3687
    %3752 = vst [vmem:[%s218 + $0x91] sm:$0xff] %v3688
    %3753 = vst [vmem:[%s218 + $0x99] sm:$0xff] %v3689
    %3754 = vst [vmem:[%s218 + $0xa9] sm:$0xff] %v3690
    %3755 = vst [vmem:[%s218 + $0xb1] sm:$0xff] %v3691
    %3756 = vst [vmem:[%s218 + $0xc1] sm:$0xff] %v3692
    %3757 = vst [vmem:[%s218 + $0xc9] sm:$0xff] %v3693
    %3758 = vst [vmem:[%s218 + $0xd9] sm:$0xff] %v3694
    %3759 = vst [vmem:[%s218 + $0xe1] sm:$0xff] %v3695
    %3760 = vst [vmem:[%s218 + $0xf1] sm:$0xff] %v3696
    %3761 = vst [vmem:[%s218 + $0xf9] sm:$0xff] %v3697
    %3762 = vst [vmem:[%s218 + $0x109] sm:$0xff] %v3698
    %3763 = vst [vmem:[%s218 + $0x111] sm:$0xff] %v3699
    %3764 = vst [vmem:[%s218 + $0x121] sm:$0xff] %v3700
    %3765 = vst [vmem:[%s218 + $0x129] sm:$0xff] %v3701
    %3766 = vst [vmem:[%s218 + $0x139] sm:$0xff] %v3702
    %3767 = vst [vmem:[%s218 + $0x141] sm:$0xff] %v3703
    %3768 = vst [vmem:[%s218 + $0x151] sm:$0xff] %v3704
    %3769 = vst [vmem:[%s218 + $0x159] sm:$0xff] %v3705
    %3770 = vst [vmem:[%s218 + $0x169] sm:$0xff] %v3706
    %3771 = vst [vmem:[%s218 + $0x171] sm:$0xff] %v3707
    %3772 = vst [vmem:[%s218 + $0x1b1] sm:$0xff] %v3708
    %3773 = vst [vmem:[%s218 + $0x1b9] sm:$0xff] %v3709
    %3774 = vst [vmem:[%s218 + $0x1c9] sm:$0xff] %v3710
    %3775 = vst [vmem:[%s218 + $0x1d1] sm:$0xff] %v3711
    %3776 = vst [vmem:[%s218 + $0x1e1] sm:$0xff] %v3712
    %3777 = vst [vmem:[%s218 + $0x1e9] sm:$0xff] %v3713
    %3778 = vst [vmem:[%s218 + $0x1f9] sm:$0xff] %v3714
    %3779 = vst [vmem:[%s218 + $0x201] sm:$0xff] %v3715
    %3780 = vst [vmem:[%s218 + $0x211] sm:$0xff] %v3716
    %3781 = vst [vmem:[%s218 + $0x219] sm:$0xff] %v3717
    %3782 = vst [vmem:[%s218 + $0x229] sm:$0xff] %v3718
    %3783 = vst [vmem:[%s218 + $0x231] sm:$0xff] %v3719
    %3784 = vst [vmem:[%s218 + $0x241] sm:$0xff] %v3720
    %3785 = vst [vmem:[%s218 + $0x249] sm:$0xff] %v3721
    %3786 = vst [vmem:[%s218 + $0x259] sm:$0xff] %v3722
    %3787 = vst [vmem:[%s218 + $0x261] sm:$0xff] %v3723
    %3788 = vst [vmem:[%s218 + $0x271] sm:$0xff] %v3724
    %3789 = vst [vmem:[%s218 + $0x279] sm:$0xff] %v3725
    %3790 = vst [vmem:[%s218 + $0x289] sm:$0xff] %v3726
    %3791 = vst [vmem:[%s218 + $0x291] sm:$0xff] %v3727
    %3792 = vst [vmem:[%s218 + $0x2a1] sm:$0xff] %v3728
    %3793 = vst [vmem:[%s218 + $0x2a9] sm:$0xff] %v3729
    %3794 = vst [vmem:[%s218 + $0x2b9] sm:$0xff] %v3730
    %3795 = vst [vmem:[%s218 + $0x2c1] sm:$0xff] %v3731
    %3796 = vst [vmem:[%s218 + $0x2d1] sm:$0xff] %v3732
    %3797 = vst [vmem:[%s218 + $0x2d9] sm:$0xff] %v3733
    %3798 = vst [vmem:[%s218 + $0x2e9] sm:$0xff] %v3734
    %3799 = vst [vmem:[%s218 + $0x2f1] sm:$0xff] %v3735
    %3800 = vst [vmem:[%s218 + $0x301] sm:$0xff] %v3736
    %3801 = vst [vmem:[%s218 + $0x309] sm:$0xff] %v3737
    %3802 = vst [vmem:[%s218 + $0x319] sm:$0xff] %v3738
    %3803 = vst [vmem:[%s218 + $0x321] sm:$0xff] %v3739
    %v3804 = vld [vmem:[#allocation2] sm:$0xff]
    %v3805 = vld [vmem:[#allocation2 + $0x8] sm:$0xff]
    %v3806 = vld [vmem:[#allocation2 + $0x10] sm:$0x3]
    %v3807 = vld [vmem:[#allocation2 + $0x18] sm:$0xff]
    %v3808 = vld [vmem:[#allocation2 + $0x20] sm:$0xff]
    %v3809 = vld [vmem:[#allocation2 + $0x28] sm:$0x3]
    %v3810 = vld [vmem:[#allocation2 + $0x30] sm:$0xff]
    %v3811 = vld [vmem:[#allocation2 + $0x38] sm:$0xff]
    %v3812 = vld [vmem:[#allocation2 + $0x40] sm:$0x3]
    %v3813 = vld [vmem:[#allocation2 + $0x48] sm:$0xff]
    %v3814 = vld [vmem:[#allocation2 + $0x50] sm:$0xff]
    %v3815 = vld [vmem:[#allocation2 + $0x58] sm:$0x3]
    %v3816 = vld [vmem:[#allocation2 + $0x60] sm:$0xff]
    %v3817 = vld [vmem:[#allocation2 + $0x68] sm:$0xff]
    %v3818 = vld [vmem:[#allocation2 + $0x70] sm:$0x3]
    %v3819 = vld [vmem:[#allocation2 + $0x78] sm:$0xff]
    %v3820 = vld [vmem:[#allocation2 + $0x80] sm:$0xff]
    %v3821 = vld [vmem:[#allocation2 + $0x88] sm:$0x3]
    %v3822 = vld [vmem:[#allocation2 + $0x90] sm:$0xff]
    %v3823 = vld [vmem:[#allocation2 + $0x98] sm:$0xff]
    %v3824 = vld [vmem:[#allocation2 + $0xa0] sm:$0x3]
    %v3825 = vld [vmem:[#allocation2 + $0xa8] sm:$0xff]
    %v3826 = vld [vmem:[#allocation2 + $0xb0] sm:$0xff]
    %v3827 = vld [vmem:[#allocation2 + $0xb8] sm:$0x3]
    %v3828 = vld [vmem:[#allocation2 + $0xc0] sm:$0xff]
    %v3829 = vld [vmem:[#allocation2 + $0xc8] sm:$0xff]
    %v3830 = vld [vmem:[#allocation2 + $0xd0] sm:$0x3]
    %v3831 = vld [vmem:[#allocation2 + $0xd8] sm:$0xff]
    %v3832 = vld [vmem:[#allocation2 + $0xe0] sm:$0xff]
    %v3833 = vld [vmem:[#allocation2 + $0xe8] sm:$0x3]
    %v3834 = vld [vmem:[#allocation2 + $0xf0] sm:$0xff]
    %v3835 = vld [vmem:[#allocation2 + $0xf8] sm:$0xff]
    %v3836 = vld [vmem:[#allocation2 + $0x100] sm:$0x3]
    %v3837 = vld [vmem:[#allocation2 + $0x108] sm:$0xff]
    %v3838 = vld [vmem:[#allocation2 + $0x110] sm:$0xff]
    %v3839 = vld [vmem:[#allocation2 + $0x118] sm:$0x3]
    %v3840 = vld [vmem:[#allocation2 + $0x120] sm:$0xff]
    %v3841 = vld [vmem:[#allocation2 + $0x128] sm:$0xff]
    %v3842 = vld [vmem:[#allocation2 + $0x130] sm:$0x3]
    %v3843 = vld [vmem:[#allocation2 + $0x138] sm:$0xff]
    %v3844 = vld [vmem:[#allocation2 + $0x140] sm:$0xff]
    %v3845 = vld [vmem:[#allocation2 + $0x148] sm:$0x3]
    %v3846 = vld [vmem:[#allocation2 + $0x150] sm:$0xff]
    %v3847 = vld [vmem:[#allocation2 + $0x158] sm:$0xff]
    %v3848 = vld [vmem:[#allocation2 + $0x160] sm:$0x3]
    %v3849 = vld [vmem:[#allocation2 + $0x168] sm:$0xff]
    %v3850 = vld [vmem:[#allocation2 + $0x170] sm:$0xff]
    %v3851 = vld [vmem:[#allocation2 + $0x178] sm:$0x3]
    %v3852 = vld [vmem:[#allocation2 + $0x180] sm:$0xff]
    %v3853 = vld [vmem:[#allocation2 + $0x188] sm:$0xff]
    %v3854 = vld [vmem:[#allocation2 + $0x190] sm:$0x3]
    %v3855 = vld [vmem:[#allocation2 + $0x198] sm:$0xff]
    %v3856 = vld [vmem:[#allocation2 + $0x1a0] sm:$0xff]
    %v3857 = vld [vmem:[#allocation2 + $0x1a8] sm:$0x3]
    %v3858 = vld [vmem:[#allocation2 + $0x1b0] sm:$0xff]
    %v3859 = vld [vmem:[#allocation2 + $0x1b8] sm:$0xff]
    %v3860 = vld [vmem:[#allocation2 + $0x1c0] sm:$0x3]
    %v3861 = vld [vmem:[#allocation2 + $0x1c8] sm:$0xff]
    %v3862 = vld [vmem:[#allocation2 + $0x1d0] sm:$0xff]
    %v3863 = vld [vmem:[#allocation2 + $0x1d8] sm:$0x3]
    %v3864 = vld [vmem:[#allocation2 + $0x1e0] sm:$0xff]
    %v3865 = vld [vmem:[#allocation2 + $0x1e8] sm:$0xff]
    %v3866 = vld [vmem:[#allocation2 + $0x1f0] sm:$0x3]
    %v3867 = vld [vmem:[#allocation2 + $0x1f8] sm:$0xff]
    %v3868 = vld [vmem:[#allocation2 + $0x200] sm:$0xff]
    %v3869 = vld [vmem:[#allocation2 + $0x208] sm:$0x3]
    %v3870 = vld [vmem:[#allocation2 + $0x210] sm:$0xff]
    %v3871 = vld [vmem:[#allocation2 + $0x218] sm:$0xff]
    %v3872 = vld [vmem:[#allocation2 + $0x220] sm:$0x3]
    %v3873 = vld [vmem:[#allocation2 + $0x228] sm:$0xff]
    %v3874 = vld [vmem:[#allocation2 + $0x230] sm:$0xff]
    %v3875 = vld [vmem:[#allocation2 + $0x238] sm:$0x3]
    %v3876 = vld [vmem:[#allocation2 + $0x240] sm:$0xff]
    %v3877 = vld [vmem:[#allocation2 + $0x248] sm:$0xff]
    %v3878 = vld [vmem:[#allocation2 + $0x250] sm:$0x3]
    %v3879 = vld [vmem:[#allocation2 + $0x258] sm:$0xff]
    %v3880 = vld [vmem:[#allocation2 + $0x260] sm:$0xff]
    %v3881 = vld [vmem:[#allocation2 + $0x268] sm:$0x3]
    %v3882 = vld [vmem:[#allocation2 + $0x270] sm:$0xff]
    %v3883 = vld [vmem:[#allocation2 + $0x278] sm:$0xff]
    %v3884 = vld [vmem:[#allocation2 + $0x280] sm:$0x3]
    %v3885 = vld [vmem:[#allocation2 + $0x288] sm:$0xff]
    %v3886 = vld [vmem:[#allocation2 + $0x290] sm:$0xff]
    %v3887 = vld [vmem:[#allocation2 + $0x298] sm:$0x3]
    %v3888 = vld [vmem:[#allocation2 + $0x2a0] sm:$0xff]
    %v3889 = vld [vmem:[#allocation2 + $0x2a8] sm:$0xff]
    %v3890 = vld [vmem:[#allocation2 + $0x2b0] sm:$0x3]
    %v3891 = vld [vmem:[#allocation2 + $0x2b8] sm:$0xff]
    %v3892 = vld [vmem:[#allocation2 + $0x2c0] sm:$0xff]
    %v3893 = vld [vmem:[#allocation2 + $0x2c8] sm:$0x3]
    %v3894 = vld [vmem:[#allocation2 + $0x2d0] sm:$0xff]
    %v3895 = vld [vmem:[#allocation2 + $0x2d8] sm:$0xff]
    %v3896 = vld [vmem:[#allocation2 + $0x2e0] sm:$0x3]
    %v3897 = vld [vmem:[#allocation2 + $0x2e8] sm:$0xff]
    %v3898 = vld [vmem:[#allocation2 + $0x2f0] sm:$0xff]
    %v3899 = vld [vmem:[#allocation2 + $0x2f8] sm:$0x3]
    %v3900 = vld [vmem:[#allocation2 + $0x300] sm:$0xff]
    %v3901 = vld [vmem:[#allocation2 + $0x308] sm:$0xff]
    %v3902 = vld [vmem:[#allocation2 + $0x310] sm:$0x3]
    %v3903 = vld [vmem:[#allocation2 + $0x318] sm:$0xff]
    %v3904 = vld [vmem:[#allocation2 + $0x320] sm:$0xff]
    %v3905 = vld [vmem:[#allocation2 + $0x328] sm:$0x3]
    %v3906 = vld [vmem:[#allocation2 + $0x330] sm:$0xff]
    %v3907 = vld [vmem:[#allocation2 + $0x338] sm:$0xff]
    %v3908 = vld [vmem:[#allocation2 + $0x340] sm:$0x3]
    %v3909 = vld [vmem:[#allocation2 + $0x348] sm:$0xff]
    %v3910 = vld [vmem:[#allocation2 + $0x350] sm:$0xff]
    %v3911 = vld [vmem:[#allocation2 + $0x358] sm:$0x3]
    %v4008 = vrot.slane %v3804, 1
    %v4009 = vrot.slane %v3805, 1
    %v4010 = vsel %vm487, %v4008, %v4009
    %v4011 = vrot.slane %v3806, 1
    %v4012 = vsel %vm487, %v4009, %v4011
    %v4013 = vrot.slane %v3807, 1
    %v4014 = vrot.slane %v3808, 1
    %v4015 = vsel %vm487, %v4013, %v4014
    %v4016 = vrot.slane %v3809, 1
    %v4017 = vsel %vm487, %v4014, %v4016
    %v4018 = vrot.slane %v3810, 1
    %v4019 = vrot.slane %v3811, 1
    %v4020 = vsel %vm487, %v4018, %v4019
    %v4021 = vrot.slane %v3812, 1
    %v4022 = vsel %vm487, %v4019, %v4021
    %v4023 = vrot.slane %v3813, 1
    %v4024 = vrot.slane %v3814, 1
    %v4025 = vsel %vm487, %v4023, %v4024
    %v4026 = vrot.slane %v3815, 1
    %v4027 = vsel %vm487, %v4024, %v4026
    %v4028 = vrot.slane %v3816, 1
    %v4029 = vrot.slane %v3817, 1
    %v4030 = vsel %vm487, %v4028, %v4029
    %v4031 = vrot.slane %v3818, 1
    %v4032 = vsel %vm487, %v4029, %v4031
    %v4033 = vrot.slane %v3819, 1
    %v4034 = vrot.slane %v3820, 1
    %v4035 = vsel %vm487, %v4033, %v4034
    %v4036 = vrot.slane %v3821, 1
    %v4037 = vsel %vm487, %v4034, %v4036
    %v4038 = vrot.slane %v3822, 1
    %v4039 = vrot.slane %v3823, 1
    %v4040 = vsel %vm487, %v4038, %v4039
    %v4041 = vrot.slane %v3824, 1
    %v4042 = vsel %vm487, %v4039, %v4041
    %v4043 = vrot.slane %v3825, 1
    %v4044 = vrot.slane %v3826, 1
    %v4045 = vsel %vm487, %v4043, %v4044
    %v4046 = vrot.slane %v3827, 1
    %v4047 = vsel %vm487, %v4044, %v4046
    %v4048 = vrot.slane %v3828, 1
    %v4049 = vrot.slane %v3829, 1
    %v4050 = vsel %vm487, %v4048, %v4049
    %v4051 = vrot.slane %v3830, 1
    %v4052 = vsel %vm487, %v4049, %v4051
    %v4053 = vrot.slane %v3831, 1
    %v4054 = vrot.slane %v3832, 1
    %v4055 = vsel %vm487, %v4053, %v4054
    %v4056 = vrot.slane %v3833, 1
    %v4057 = vsel %vm487, %v4054, %v4056
    %v4058 = vrot.slane %v3834, 1
    %v4059 = vrot.slane %v3835, 1
    %v4060 = vsel %vm487, %v4058, %v4059
    %v4061 = vrot.slane %v3836, 1
    %v4062 = vsel %vm487, %v4059, %v4061
    %v4063 = vrot.slane %v3837, 1
    %v4064 = vrot.slane %v3838, 1
    %v4065 = vsel %vm487, %v4063, %v4064
    %v4066 = vrot.slane %v3839, 1
    %v4067 = vsel %vm487, %v4064, %v4066
    %v4068 = vrot.slane %v3840, 1
    %v4069 = vrot.slane %v3841, 1
    %v4070 = vsel %vm487, %v4068, %v4069
    %v4071 = vrot.slane %v3842, 1
    %v4072 = vsel %vm487, %v4069, %v4071
    %v4073 = vrot.slane %v3843, 1
    %v4074 = vrot.slane %v3844, 1
    %v4075 = vsel %vm487, %v4073, %v4074
    %v4076 = vrot.slane %v3845, 1
    %v4077 = vsel %vm487, %v4074, %v4076
    %v4078 = vrot.slane %v3846, 1
    %v4079 = vrot.slane %v3847, 1
    %v4080 = vsel %vm487, %v4078, %v4079
    %v4081 = vrot.slane %v3848, 1
    %v4082 = vsel %vm487, %v4079, %v4081
    %v4083 = vrot.slane %v3849, 1
    %v4084 = vrot.slane %v3850, 1
    %v4085 = vsel %vm487, %v4083, %v4084
    %v4086 = vrot.slane %v3851, 1
    %v4087 = vsel %vm487, %v4084, %v4086
    %v4088 = vrot.slane %v3858, 1
    %v4089 = vrot.slane %v3859, 1
    %v4090 = vsel %vm487, %v4088, %v4089
    %v4091 = vrot.slane %v3860, 1
    %v4092 = vsel %vm487, %v4089, %v4091
    %v4093 = vrot.slane %v3861, 1
    %v4094 = vrot.slane %v3862, 1
    %v4095 = vsel %vm487, %v4093, %v4094
    %v4096 = vrot.slane %v3863, 1
    %v4097 = vsel %vm487, %v4094, %v4096
    %v4098 = vrot.slane %v3864, 1
    %v4099 = vrot.slane %v3865, 1
    %v4100 = vsel %vm487, %v4098, %v4099
    %v4101 = vrot.slane %v3866, 1
    %v4102 = vsel %vm487, %v4099, %v4101
    %v4103 = vrot.slane %v3867, 1
    %v4104 = vrot.slane %v3868, 1
    %v4105 = vsel %vm487, %v4103, %v4104
    %v4106 = vrot.slane %v3869, 1
    %v4107 = vsel %vm487, %v4104, %v4106
    %v4108 = vrot.slane %v3870, 1
    %v4109 = vrot.slane %v3871, 1
    %v4110 = vsel %vm487, %v4108, %v4109
    %v4111 = vrot.slane %v3872, 1
    %v4112 = vsel %vm487, %v4109, %v4111
    %v4113 = vrot.slane %v3873, 1
    %v4114 = vrot.slane %v3874, 1
    %v4115 = vsel %vm487, %v4113, %v4114
    %v4116 = vrot.slane %v3875, 1
    %v4117 = vsel %vm487, %v4114, %v4116
    %v4118 = vrot.slane %v3876, 1
    %v4119 = vrot.slane %v3877, 1
    %v4120 = vsel %vm487, %v4118, %v4119
    %v4121 = vrot.slane %v3878, 1
    %v4122 = vsel %vm487, %v4119, %v4121
    %v4123 = vrot.slane %v3879, 1
    %v4124 = vrot.slane %v3880, 1
    %v4125 = vsel %vm487, %v4123, %v4124
    %v4126 = vrot.slane %v3881, 1
    %v4127 = vsel %vm487, %v4124, %v4126
    %v4128 = vrot.slane %v3882, 1
    %v4129 = vrot.slane %v3883, 1
    %v4130 = vsel %vm487, %v4128, %v4129
    %v4131 = vrot.slane %v3884, 1
    %v4132 = vsel %vm487, %v4129, %v4131
    %v4133 = vrot.slane %v3885, 1
    %v4134 = vrot.slane %v3886, 1
    %v4135 = vsel %vm487, %v4133, %v4134
    %v4136 = vrot.slane %v3887, 1
    %v4137 = vsel %vm487, %v4134, %v4136
    %v4138 = vrot.slane %v3888, 1
    %v4139 = vrot.slane %v3889, 1
    %v4140 = vsel %vm487, %v4138, %v4139
    %v4141 = vrot.slane %v3890, 1
    %v4142 = vsel %vm487, %v4139, %v4141
    %v4143 = vrot.slane %v3891, 1
    %v4144 = vrot.slane %v3892, 1
    %v4145 = vsel %vm487, %v4143, %v4144
    %v4146 = vrot.slane %v3893, 1
    %v4147 = vsel %vm487, %v4144, %v4146
    %v4148 = vrot.slane %v3894, 1
    %v4149 = vrot.slane %v3895, 1
    %v4150 = vsel %vm487, %v4148, %v4149
    %v4151 = vrot.slane %v3896, 1
    %v4152 = vsel %vm487, %v4149, %v4151
    %v4153 = vrot.slane %v3897, 1
    %v4154 = vrot.slane %v3898, 1
    %v4155 = vsel %vm487, %v4153, %v4154
    %v4156 = vrot.slane %v3899, 1
    %v4157 = vsel %vm487, %v4154, %v4156
    %v4158 = vrot.slane %v3900, 1
    %v4159 = vrot.slane %v3901, 1
    %v4160 = vsel %vm487, %v4158, %v4159
    %v4161 = vrot.slane %v3902, 1
    %v4162 = vsel %vm487, %v4159, %v4161
    %v4163 = vrot.slane %v3903, 1
    %v4164 = vrot.slane %v3904, 1
    %v4165 = vsel %vm487, %v4163, %v4164
    %v4166 = vrot.slane %v3905, 1
    %v4167 = vsel %vm487, %v4164, %v4166
    %v4232 = vrot.slane %v3804, 2
    %v4233 = vrot.slane %v3805, 2
    %v4234 = vsel %vm712, %v4232, %v4233
    %v4235 = vrot.slane %v3806, 2
    %v4236 = vsel %vm712, %v4233, %v4235
    %v4237 = vrot.slane %v3807, 2
    %v4238 = vrot.slane %v3808, 2
    %v4239 = vsel %vm712, %v4237, %v4238
    %v4240 = vrot.slane %v3809, 2
    %v4241 = vsel %vm712, %v4238, %v4240
    %v4242 = vrot.slane %v3810, 2
    %v4243 = vrot.slane %v3811, 2
    %v4244 = vsel %vm712, %v4242, %v4243
    %v4245 = vrot.slane %v3812, 2
    %v4246 = vsel %vm712, %v4243, %v4245
    %v4247 = vrot.slane %v3813, 2
    %v4248 = vrot.slane %v3814, 2
    %v4249 = vsel %vm712, %v4247, %v4248
    %v4250 = vrot.slane %v3815, 2
    %v4251 = vsel %vm712, %v4248, %v4250
    %v4252 = vrot.slane %v3816, 2
    %v4253 = vrot.slane %v3817, 2
    %v4254 = vsel %vm712, %v4252, %v4253
    %v4255 = vrot.slane %v3818, 2
    %v4256 = vsel %vm712, %v4253, %v4255
    %v4257 = vrot.slane %v3819, 2
    %v4258 = vrot.slane %v3820, 2
    %v4259 = vsel %vm712, %v4257, %v4258
    %v4260 = vrot.slane %v3821, 2
    %v4261 = vsel %vm712, %v4258, %v4260
    %v4262 = vrot.slane %v3822, 2
    %v4263 = vrot.slane %v3823, 2
    %v4264 = vsel %vm712, %v4262, %v4263
    %v4265 = vrot.slane %v3824, 2
    %v4266 = vsel %vm712, %v4263, %v4265
    %v4267 = vrot.slane %v3825, 2
    %v4268 = vrot.slane %v3826, 2
    %v4269 = vsel %vm712, %v4267, %v4268
    %v4270 = vrot.slane %v3827, 2
    %v4271 = vsel %vm712, %v4268, %v4270
    %v4272 = vrot.slane %v3828, 2
    %v4273 = vrot.slane %v3829, 2
    %v4274 = vsel %vm712, %v4272, %v4273
    %v4275 = vrot.slane %v3830, 2
    %v4276 = vsel %vm712, %v4273, %v4275
    %v4277 = vrot.slane %v3831, 2
    %v4278 = vrot.slane %v3832, 2
    %v4279 = vsel %vm712, %v4277, %v4278
    %v4280 = vrot.slane %v3833, 2
    %v4281 = vsel %vm712, %v4278, %v4280
    %v4282 = vrot.slane %v3834, 2
    %v4283 = vrot.slane %v3835, 2
    %v4284 = vsel %vm712, %v4282, %v4283
    %v4285 = vrot.slane %v3836, 2
    %v4286 = vsel %vm712, %v4283, %v4285
    %v4287 = vrot.slane %v3837, 2
    %v4288 = vrot.slane %v3838, 2
    %v4289 = vsel %vm712, %v4287, %v4288
    %v4290 = vrot.slane %v3839, 2
    %v4291 = vsel %vm712, %v4288, %v4290
    %v4292 = vrot.slane %v3840, 2
    %v4293 = vrot.slane %v3841, 2
    %v4294 = vsel %vm712, %v4292, %v4293
    %v4295 = vrot.slane %v3842, 2
    %v4296 = vsel %vm712, %v4293, %v4295
    %v4297 = vrot.slane %v3843, 2
    %v4298 = vrot.slane %v3844, 2
    %v4299 = vsel %vm712, %v4297, %v4298
    %v4300 = vrot.slane %v3845, 2
    %v4301 = vsel %vm712, %v4298, %v4300
    %v4302 = vrot.slane %v3846, 2
    %v4303 = vrot.slane %v3847, 2
    %v4304 = vsel %vm712, %v4302, %v4303
    %v4305 = vrot.slane %v3848, 2
    %v4306 = vsel %vm712, %v4303, %v4305
    %v4307 = vrot.slane %v3849, 2
    %v4308 = vrot.slane %v3850, 2
    %v4309 = vsel %vm712, %v4307, %v4308
    %v4310 = vrot.slane %v3851, 2
    %v4311 = vsel %vm712, %v4308, %v4310
    %v4312 = vrot.slane %v3858, 2
    %v4313 = vrot.slane %v3859, 2
    %v4314 = vsel %vm712, %v4312, %v4313
    %v4315 = vrot.slane %v3860, 2
    %v4316 = vsel %vm712, %v4313, %v4315
    %v4317 = vrot.slane %v3861, 2
    %v4318 = vrot.slane %v3862, 2
    %v4319 = vsel %vm712, %v4317, %v4318
    %v4320 = vrot.slane %v3863, 2
    %v4321 = vsel %vm712, %v4318, %v4320
    %v4322 = vrot.slane %v3864, 2
    %v4323 = vrot.slane %v3865, 2
    %v4324 = vsel %vm712, %v4322, %v4323
    %v4325 = vrot.slane %v3866, 2
    %v4326 = vsel %vm712, %v4323, %v4325
    %v4327 = vrot.slane %v3867, 2
    %v4328 = vrot.slane %v3868, 2
    %v4329 = vsel %vm712, %v4327, %v4328
    %v4330 = vrot.slane %v3869, 2
    %v4331 = vsel %vm712, %v4328, %v4330
    %v4332 = vrot.slane %v3870, 2
    %v4333 = vrot.slane %v3871, 2
    %v4334 = vsel %vm712, %v4332, %v4333
    %v4335 = vrot.slane %v3872, 2
    %v4336 = vsel %vm712, %v4333, %v4335
    %v4337 = vrot.slane %v3873, 2
    %v4338 = vrot.slane %v3874, 2
    %v4339 = vsel %vm712, %v4337, %v4338
    %v4340 = vrot.slane %v3875, 2
    %v4341 = vsel %vm712, %v4338, %v4340
    %v4342 = vrot.slane %v3876, 2
    %v4343 = vrot.slane %v3877, 2
    %v4344 = vsel %vm712, %v4342, %v4343
    %v4345 = vrot.slane %v3878, 2
    %v4346 = vsel %vm712, %v4343, %v4345
    %v4347 = vrot.slane %v3879, 2
    %v4348 = vrot.slane %v3880, 2
    %v4349 = vsel %vm712, %v4347, %v4348
    %v4350 = vrot.slane %v3881, 2
    %v4351 = vsel %vm712, %v4348, %v4350
    %v4352 = vrot.slane %v3882, 2
    %v4353 = vrot.slane %v3883, 2
    %v4354 = vsel %vm712, %v4352, %v4353
    %v4355 = vrot.slane %v3884, 2
    %v4356 = vsel %vm712, %v4353, %v4355
    %v4357 = vrot.slane %v3885, 2
    %v4358 = vrot.slane %v3886, 2
    %v4359 = vsel %vm712, %v4357, %v4358
    %v4360 = vrot.slane %v3887, 2
    %v4361 = vsel %vm712, %v4358, %v4360
    %v4362 = vrot.slane %v3888, 2
    %v4363 = vrot.slane %v3889, 2
    %v4364 = vsel %vm712, %v4362, %v4363
    %v4365 = vrot.slane %v3890, 2
    %v4366 = vsel %vm712, %v4363, %v4365
    %v4367 = vrot.slane %v3891, 2
    %v4368 = vrot.slane %v3892, 2
    %v4369 = vsel %vm712, %v4367, %v4368
    %v4370 = vrot.slane %v3893, 2
    %v4371 = vsel %vm712, %v4368, %v4370
    %v4372 = vrot.slane %v3894, 2
    %v4373 = vrot.slane %v3895, 2
    %v4374 = vsel %vm712, %v4372, %v4373
    %v4375 = vrot.slane %v3896, 2
    %v4376 = vsel %vm712, %v4373, %v4375
    %v4377 = vrot.slane %v3897, 2
    %v4378 = vrot.slane %v3898, 2
    %v4379 = vsel %vm712, %v4377, %v4378
    %v4380 = vrot.slane %v3899, 2
    %v4381 = vsel %vm712, %v4378, %v4380
    %v4382 = vrot.slane %v3900, 2
    %v4383 = vrot.slane %v3901, 2
    %v4384 = vsel %vm712, %v4382, %v4383
    %v4385 = vrot.slane %v3902, 2
    %v4386 = vsel %vm712, %v4383, %v4385
    %v4387 = vrot.slane %v3903, 2
    %v4388 = vrot.slane %v3904, 2
    %v4389 = vsel %vm712, %v4387, %v4388
    %v4390 = vrot.slane %v3905, 2
    %v4391 = vsel %vm712, %v4388, %v4390
    %v4462 = vrot.slane %v3852, 1
    %v4463 = vrot.slane %v3853, 1
    %v4464 = vsel %vm487, %v4462, %v4463
    %v4465 = vrot.slane %v3854, 1
    %v4466 = vsel %vm487, %v4463, %v4465
    %v4467 = vrot.slane %v3906, 1
    %v4468 = vrot.slane %v3907, 1
    %v4469 = vsel %vm487, %v4467, %v4468
    %v4470 = vrot.slane %v3908, 1
    %v4471 = vsel %vm487, %v4468, %v4470
    %v4476 = vrot.slane %v3852, 2
    %v4477 = vrot.slane %v3853, 2
    %v4478 = vsel %vm712, %v4476, %v4477
    %v4479 = vrot.slane %v3854, 2
    %v4480 = vsel %vm712, %v4477, %v4479
    %v4481 = vrot.slane %v3906, 2
    %v4482 = vrot.slane %v3907, 2
    %v4483 = vsel %vm712, %v4481, %v4482
    %v4484 = vrot.slane %v3908, 2
    %v4485 = vsel %vm712, %v4482, %v4484
    %v4496 = vrot.slane %v3855, 1
    %v4497 = vrot.slane %v3856, 1
    %v4498 = vsel %vm487, %v4496, %v4497
    %v4499 = vrot.slane %v3857, 1
    %v4500 = vsel %vm487, %v4497, %v4499
    %v4501 = vrot.slane %v3909, 1
    %v4502 = vrot.slane %v3910, 1
    %v4503 = vsel %vm487, %v4501, %v4502
    %v4504 = vrot.slane %v3911, 1
    %v4505 = vsel %vm487, %v4502, %v4504
    %v4510 = vrot.slane %v3855, 2
    %v4511 = vrot.slane %v3856, 2
    %v4512 = vsel %vm712, %v4510, %v4511
    %v4513 = vrot.slane %v3857, 2
    %v4514 = vsel %vm712, %v4511, %v4513
    %v4515 = vrot.slane %v3909, 2
    %v4516 = vrot.slane %v3910, 2
    %v4517 = vsel %vm712, %v4515, %v4516
    %v4518 = vrot.slane %v3911, 2
    %v4519 = vsel %vm712, %v4516, %v4518
    %v4524 = vpack.c.bf16 %v3805, %v3804
    %v4525 = vpack.c.bf16 %v4012, %v4010
    %v4526 = vpack.c.bf16 %v4236, %v4234
    %v4527 = vpack.c.bf16 %v3808, %v3807
    %v4528 = vpack.c.bf16 %v4017, %v4015
    %v4529 = vpack.c.bf16 %v4241, %v4239
    %v4530 = vpack.c.bf16 %v3811, %v3810
    %v4531 = vpack.c.bf16 %v4022, %v4020
    %v4532 = vpack.c.bf16 %v4246, %v4244
    %v4533 = vpack.c.bf16 %v3814, %v3813
    %v4534 = vpack.c.bf16 %v4027, %v4025
    %v4535 = vpack.c.bf16 %v4251, %v4249
    %v4536 = vpack.c.bf16 %v3817, %v3816
    %v4537 = vpack.c.bf16 %v4032, %v4030
    %v4538 = vpack.c.bf16 %v4256, %v4254
    %v4539 = vpack.c.bf16 %v3820, %v3819
    %v4540 = vpack.c.bf16 %v4037, %v4035
    %v4541 = vpack.c.bf16 %v4261, %v4259
    %v4542 = vpack.c.bf16 %v3823, %v3822
    %v4543 = vpack.c.bf16 %v4042, %v4040
    %v4544 = vpack.c.bf16 %v4266, %v4264
    %v4545 = vpack.c.bf16 %v3826, %v3825
    %v4546 = vpack.c.bf16 %v4047, %v4045
    %v4547 = vpack.c.bf16 %v4271, %v4269
    %v4548 = vpack.c.bf16 %v3829, %v3828
    %v4549 = vpack.c.bf16 %v4052, %v4050
    %v4550 = vpack.c.bf16 %v4276, %v4274
    %v4551 = vpack.c.bf16 %v3832, %v3831
    %v4552 = vpack.c.bf16 %v4057, %v4055
    %v4553 = vpack.c.bf16 %v4281, %v4279
    %v4554 = vpack.c.bf16 %v3835, %v3834
    %v4555 = vpack.c.bf16 %v4062, %v4060
    %v4556 = vpack.c.bf16 %v4286, %v4284
    %v4557 = vpack.c.bf16 %v3838, %v3837
    %v4558 = vpack.c.bf16 %v4067, %v4065
    %v4559 = vpack.c.bf16 %v4291, %v4289
    %v4560 = vpack.c.bf16 %v3841, %v3840
    %v4561 = vpack.c.bf16 %v4072, %v4070
    %v4562 = vpack.c.bf16 %v4296, %v4294
    %v4563 = vpack.c.bf16 %v3844, %v3843
    %v4564 = vpack.c.bf16 %v4077, %v4075
    %v4565 = vpack.c.bf16 %v4301, %v4299
    %v4566 = vpack.c.bf16 %v3847, %v3846
    %v4567 = vpack.c.bf16 %v4082, %v4080
    %v4568 = vpack.c.bf16 %v4306, %v4304
    %v4569 = vpack.c.bf16 %v3850, %v3849
    %v4570 = vpack.c.bf16 %v4087, %v4085
    %v4571 = vpack.c.bf16 %v4311, %v4309
    %v4572 = vpack.c.bf16 %v3853, %v3852
    %v4573 = vpack.c.bf16 %v4466, %v4464
    %v4574 = vpack.c.bf16 %v4480, %v4478
    %v4575 = vpack.c.bf16 %v3856, %v3855
    %v4576 = vpack.c.bf16 %v4500, %v4498
    %v4577 = vpack.c.bf16 %v4514, %v4512
    %v4578 = vpack.c.bf16 %v3859, %v3858
    %v4579 = vpack.c.bf16 %v4092, %v4090
    %v4580 = vpack.c.bf16 %v4316, %v4314
    %v4581 = vpack.c.bf16 %v3862, %v3861
    %v4582 = vpack.c.bf16 %v4097, %v4095
    %v4583 = vpack.c.bf16 %v4321, %v4319
    %v4584 = vpack.c.bf16 %v3865, %v3864
    %v4585 = vpack.c.bf16 %v4102, %v4100
    %v4586 = vpack.c.bf16 %v4326, %v4324
    %v4587 = vpack.c.bf16 %v3868, %v3867
    %v4588 = vpack.c.bf16 %v4107, %v4105
    %v4589 = vpack.c.bf16 %v4331, %v4329
    %v4590 = vpack.c.bf16 %v3871, %v3870
    %v4591 = vpack.c.bf16 %v4112, %v4110
    %v4592 = vpack.c.bf16 %v4336, %v4334
    %v4593 = vpack.c.bf16 %v3874, %v3873
    %v4594 = vpack.c.bf16 %v4117, %v4115
    %v4595 = vpack.c.bf16 %v4341, %v4339
    %v4596 = vpack.c.bf16 %v3877, %v3876
    %v4597 = vpack.c.bf16 %v4122, %v4120
    %v4598 = vpack.c.bf16 %v4346, %v4344
    %v4599 = vpack.c.bf16 %v3880, %v3879
    %v4600 = vpack.c.bf16 %v4127, %v4125
    %v4601 = vpack.c.bf16 %v4351, %v4349
    %v4602 = vpack.c.bf16 %v3883, %v3882
    %v4603 = vpack.c.bf16 %v4132, %v4130
    %v4604 = vpack.c.bf16 %v4356, %v4354
    %v4605 = vpack.c.bf16 %v3886, %v3885
    %v4606 = vpack.c.bf16 %v4137, %v4135
    %v4607 = vpack.c.bf16 %v4361, %v4359
    %v4608 = vpack.c.bf16 %v3889, %v3888
    %v4609 = vpack.c.bf16 %v4142, %v4140
    %v4610 = vpack.c.bf16 %v4366, %v4364
    %v4611 = vpack.c.bf16 %v3892, %v3891
    %v4612 = vpack.c.bf16 %v4147, %v4145
    %v4613 = vpack.c.bf16 %v4371, %v4369
    %v4614 = vpack.c.bf16 %v3895, %v3894
    %v4615 = vpack.c.bf16 %v4152, %v4150
    %v4616 = vpack.c.bf16 %v4376, %v4374
    %v4617 = vpack.c.bf16 %v3898, %v3897
    %v4618 = vpack.c.bf16 %v4157, %v4155
    %v4619 = vpack.c.bf16 %v4381, %v4379
    %v4620 = vpack.c.bf16 %v3901, %v3900
    %v4621 = vpack.c.bf16 %v4162, %v4160
    %v4622 = vpack.c.bf16 %v4386, %v4384
    %v4623 = vpack.c.bf16 %v3904, %v3903
    %v4624 = vpack.c.bf16 %v4167, %v4165
    %v4625 = vpack.c.bf16 %v4391, %v4389
    %v4626 = vpack.c.bf16 %v3907, %v3906
    %v4627 = vpack.c.bf16 %v4471, %v4469
    %v4628 = vpack.c.bf16 %v4485, %v4483
    %v4629 = vpack.c.bf16 %v3910, %v3909
    %v4630 = vpack.c.bf16 %v4505, %v4503
    %v4631 = vpack.c.bf16 %v4519, %v4517
    %v4632 = vld [vmem:[#allocation8] sm:$0xf]
    %v4633 = vld [vmem:[#allocation8 + $0x4] sm:$0xf]
    %v4634 = vld [vmem:[#allocation8 + $0x8] sm:$0xf]
    %v4635 = vld [vmem:[#allocation8 + $0xc] sm:$0xf]
    %v4636 = vld [vmem:[#allocation8 + $0x10] sm:$0xf]
    %v4637 = vld [vmem:[#allocation8 + $0x14] sm:$0xf]
    %v4638 = vld [vmem:[#allocation8 + $0x18] sm:$0xf]
    %v4639 = vld [vmem:[#allocation8 + $0x1c] sm:$0xf]
    %v4640 = vld [vmem:[#allocation8 + $0x20] sm:$0xf]
    %v4641 = vld [vmem:[#allocation8 + $0x24] sm:$0xf]
    %v4642 = vld [vmem:[#allocation8 + $0x28] sm:$0xf]
    %v4643 = vld [vmem:[#allocation8 + $0x2c] sm:$0xf]
    %v4644 = vld [vmem:[#allocation8 + $0x30] sm:$0xf]
    %v4645 = vld [vmem:[#allocation8 + $0x34] sm:$0xf]
    %v4646 = vld [vmem:[#allocation8 + $0x38] sm:$0xf]
    %v4647 = vld [vmem:[#allocation8 + $0x3c] sm:$0xf]
    %v4648 = vld [vmem:[#allocation8 + $0x40] sm:$0xf]
    %v4649 = vld [vmem:[#allocation8 + $0x44] sm:$0xf]
    %v4650 = vld [vmem:[#allocation8 + $0x48] sm:$0xf]
    %v4651 = vld [vmem:[#allocation8 + $0x4c] sm:$0xf]
    %v4652 = vld [vmem:[#allocation8 + $0x50] sm:$0xf]
    %v4653 = vld [vmem:[#allocation8 + $0x54] sm:$0xf]
    %v4654 = vld [vmem:[#allocation8 + $0x58] sm:$0xf]
    %v4655 = vld [vmem:[#allocation8 + $0x5c] sm:$0xf]
    %v4656 = vld [vmem:[#allocation8 + $0x60] sm:$0xf]
    %v4657 = vld [vmem:[#allocation8 + $0x64] sm:$0xf]
    %v4658 = vld [vmem:[#allocation8 + $0x68] sm:$0xf]
    %v4659 = vld [vmem:[#allocation8 + $0x6c] sm:$0xf]
    %v4660 = vld [vmem:[#allocation8 + $0x70] sm:$0xf]
    %v4661 = vld [vmem:[#allocation8 + $0x74] sm:$0xf]
    %v4662 = vld [vmem:[#allocation8 + $0x78] sm:$0xf]
    %v4663 = vld [vmem:[#allocation8 + $0x7c] sm:$0xf]
    %v4664 = vld [vmem:[#allocation8 + $0x80] sm:$0xf]
    %v4665 = vld [vmem:[#allocation8 + $0x84] sm:$0xf]
    %v4666 = vld [vmem:[#allocation8 + $0x88] sm:$0xf]
    %v4667 = vld [vmem:[#allocation8 + $0x8c] sm:$0xf]
    %v4668 = vld [vmem:[#allocation8 + $0x90] sm:$0xf]
    %v4669 = vld [vmem:[#allocation8 + $0x94] sm:$0xf]
    %v4670 = vld [vmem:[#allocation8 + $0x98] sm:$0xf]
    %v4671 = vld [vmem:[#allocation8 + $0x9c] sm:$0xf]
    %v4672 = vld [vmem:[#allocation8 + $0xa0] sm:$0xf]
    %v4673 = vld [vmem:[#allocation8 + $0xa4] sm:$0xf]
    %v4674 = vld [vmem:[#allocation8 + $0xa8] sm:$0xf]
    %v4675 = vld [vmem:[#allocation8 + $0xac] sm:$0xf]
    %v4676 = vld [vmem:[#allocation8 + $0xb0] sm:$0xf]
    %v4677 = vld [vmem:[#allocation8 + $0xb4] sm:$0xf]
    %v4678 = vld [vmem:[#allocation8 + $0xb8] sm:$0xf]
    %v4679 = vld [vmem:[#allocation8 + $0xbc] sm:$0xf]
    %v4680 = vld [vmem:[#allocation8 + $0xc0] sm:$0xf]
    %v4681 = vld [vmem:[#allocation8 + $0xc4] sm:$0xf]
    %v4682 = vld [vmem:[#allocation8 + $0xc8] sm:$0xf]
    %v4683 = vld [vmem:[#allocation8 + $0xcc] sm:$0xf]
    %v4684 = vld [vmem:[#allocation8 + $0xd0] sm:$0xf]
    %v4685 = vld [vmem:[#allocation8 + $0xd4] sm:$0xf]
    %v4686 = vld [vmem:[#allocation8 + $0xd8] sm:$0xf]
    %v4687 = vld [vmem:[#allocation8 + $0xdc] sm:$0xf]
    %v4688 = vld [vmem:[#allocation8 + $0xe0] sm:$0xf]
    %v4689 = vld [vmem:[#allocation8 + $0xe4] sm:$0xf]
    %v4690 = vld [vmem:[#allocation8 + $0xe8] sm:$0xf]
    %v4691 = vld [vmem:[#allocation8 + $0xec] sm:$0xf]
    %v4692 = vld [vmem:[#allocation8 + $0xf0] sm:$0xf]
    %v4693 = vld [vmem:[#allocation8 + $0xf4] sm:$0xf]
    %v4694 = vld [vmem:[#allocation8 + $0xf8] sm:$0xf]
    %v4695 = vld [vmem:[#allocation8 + $0xfc] sm:$0xf]
    %v4696 = vld [vmem:[#allocation8 + $0x100] sm:$0xf]
    %v4697 = vld [vmem:[#allocation8 + $0x104] sm:$0xf]
    %v4698 = vld [vmem:[#allocation8 + $0x108] sm:$0xf]
    %v4699 = vld [vmem:[#allocation8 + $0x10c] sm:$0xf]
    %v4700 = vld [vmem:[#allocation8 + $0x110] sm:$0xf]
    %v4701 = vld [vmem:[#allocation8 + $0x114] sm:$0xf]
    %v4702 = vld [vmem:[#allocation8 + $0x118] sm:$0xf]
    %v4703 = vld [vmem:[#allocation8 + $0x11c] sm:$0xf]
    %v4704 = vld [vmem:[#allocation8 + $0x120] sm:$0xf]
    %v4705 = vld [vmem:[#allocation8 + $0x124] sm:$0xf]
    %v4706 = vld [vmem:[#allocation8 + $0x128] sm:$0xf]
    %v4707 = vld [vmem:[#allocation8 + $0x12c] sm:$0xf]
    %v4708 = vld [vmem:[#allocation8 + $0x130] sm:$0xf]
    %v4709 = vld [vmem:[#allocation8 + $0x134] sm:$0xf]
    %v4710 = vld [vmem:[#allocation8 + $0x138] sm:$0xf]
    %v4711 = vld [vmem:[#allocation8 + $0x13c] sm:$0xf]
    %v4712 = vld [vmem:[#allocation8 + $0x140] sm:$0xf]
    %v4713 = vld [vmem:[#allocation8 + $0x144] sm:$0xf]
    %v4714 = vld [vmem:[#allocation8 + $0x148] sm:$0xf]
    %v4715 = vld [vmem:[#allocation8 + $0x14c] sm:$0xf]
    %v4716 = vld [vmem:[#allocation8 + $0x150] sm:$0xf]
    %v4717 = vld [vmem:[#allocation8 + $0x154] sm:$0xf]
    %v4718 = vld [vmem:[#allocation8 + $0x158] sm:$0xf]
    %v4719 = vld [vmem:[#allocation8 + $0x15c] sm:$0xf]
    %v4720 = vld [vmem:[#allocation8 + $0x160] sm:$0xf]
    %v4721 = vld [vmem:[#allocation8 + $0x164] sm:$0xf]
    %v4722 = vld [vmem:[#allocation8 + $0x168] sm:$0xf]
    %v4723 = vld [vmem:[#allocation8 + $0x16c] sm:$0xf]
    %v4724 = vld [vmem:[#allocation8 + $0x170] sm:$0xf]
    %v4725 = vld [vmem:[#allocation8 + $0x174] sm:$0xf]
    %v4726 = vld [vmem:[#allocation8 + $0x178] sm:$0xf]
    %v4727 = vld [vmem:[#allocation8 + $0x17c] sm:$0xf]
    %v4728 = vld [vmem:[#allocation8 + $0x180] sm:$0xf]
    %v4729 = vld [vmem:[#allocation8 + $0x184] sm:$0xf]
    %v4730 = vld [vmem:[#allocation8 + $0x188] sm:$0xf]
    %v4731 = vld [vmem:[#allocation8 + $0x18c] sm:$0xf]
    %v4732 = vld [vmem:[#allocation8 + $0x190] sm:$0xf]
    %v4733 = vld [vmem:[#allocation8 + $0x194] sm:$0xf]
    %v4734 = vld [vmem:[#allocation8 + $0x198] sm:$0xf]
    %v4735 = vld [vmem:[#allocation8 + $0x19c] sm:$0xf]
    %v4736 = vld [vmem:[#allocation8 + $0x1a0] sm:$0xf]
    %v4737 = vld [vmem:[#allocation8 + $0x1a4] sm:$0xf]
    %v4738 = vld [vmem:[#allocation8 + $0x1a8] sm:$0xf]
    %v4739 = vld [vmem:[#allocation8 + $0x1ac] sm:$0xf]
    %v4740 = vld [vmem:[#allocation8 + $0x1b0] sm:$0xf]
    %v4741 = vld [vmem:[#allocation8 + $0x1b4] sm:$0xf]
    %v4742 = vld [vmem:[#allocation8 + $0x1b8] sm:$0xf]
    %v4743 = vld [vmem:[#allocation8 + $0x1bc] sm:$0xf]
    %v4744 = vld [vmem:[#allocation8 + $0x1c0] sm:$0xf]
    %v4745 = vld [vmem:[#allocation8 + $0x1c4] sm:$0xf]
    %v4746 = vld [vmem:[#allocation8 + $0x1c8] sm:$0xf]
    %v4747 = vld [vmem:[#allocation8 + $0x1cc] sm:$0xf]
    %v4748 = vld [vmem:[#allocation8 + $0x1d0] sm:$0xf]
    %v4749 = vld [vmem:[#allocation8 + $0x1d4] sm:$0xf]
    %v4750 = vld [vmem:[#allocation8 + $0x1d8] sm:$0xf]
    %v4751 = vld [vmem:[#allocation8 + $0x1dc] sm:$0xf]
    %v4752 = vld [vmem:[#allocation8 + $0x1e0] sm:$0xf]
    %v4753 = vld [vmem:[#allocation8 + $0x1e4] sm:$0xf]
    %v4754 = vld [vmem:[#allocation8 + $0x1e8] sm:$0xf]
    %v4755 = vld [vmem:[#allocation8 + $0x1ec] sm:$0xf]
    %v4756 = vld [vmem:[#allocation8 + $0x1f0] sm:$0xf]
    %v4757 = vld [vmem:[#allocation8 + $0x1f4] sm:$0xf]
    %v4758 = vld [vmem:[#allocation8 + $0x1f8] sm:$0xf]
    %v4759 = vld [vmem:[#allocation8 + $0x1fc] sm:$0xf]
    %v4760 = vld [vmem:[#allocation8 + $0x200] sm:$0xf]
    %v4761 = vld [vmem:[#allocation8 + $0x204] sm:$0xf]
    %v4762 = vld [vmem:[#allocation8 + $0x208] sm:$0xf]
    %v4763 = vld [vmem:[#allocation8 + $0x20c] sm:$0xf]
    %v4764 = vld [vmem:[#allocation8 + $0x210] sm:$0xf]
    %v4765 = vld [vmem:[#allocation8 + $0x214] sm:$0xf]
    %v4766 = vld [vmem:[#allocation8 + $0x218] sm:$0xf]
    %v4767 = vld [vmem:[#allocation8 + $0x21c] sm:$0xf]
    %v4768 = vld [vmem:[#allocation8 + $0x220] sm:$0xf]
    %v4769 = vld [vmem:[#allocation8 + $0x224] sm:$0xf]
    %v4770 = vld [vmem:[#allocation8 + $0x228] sm:$0xf]
    %v4771 = vld [vmem:[#allocation8 + $0x22c] sm:$0xf]
    %v4772 = vld [vmem:[#allocation8 + $0x230] sm:$0xf]
    %v4773 = vld [vmem:[#allocation8 + $0x234] sm:$0xf]
    %v4774 = vld [vmem:[#allocation8 + $0x238] sm:$0xf]
    %v4775 = vld [vmem:[#allocation8 + $0x23c] sm:$0xf]
    %v4920 = vunpack.c.l.b16 %v4632
    %v4921 = vunpack.c.l.b16 %v4633
    %v4922 = vunpack.c.l.b16 %v4634
    %v4923 = vunpack.c.l.b16 %v4635
    %v4924 = vunpack.c.l.b16 %v4636
    %v4925 = vunpack.c.l.b16 %v4637
    %v4926 = vunpack.c.l.b16 %v4638
    %v4927 = vunpack.c.l.b16 %v4639
    %v4928 = vunpack.c.l.b16 %v4640
    %v4929 = vunpack.c.l.b16 %v4641
    %v4930 = vunpack.c.l.b16 %v4642
    %v4931 = vunpack.c.l.b16 %v4643
    %v4932 = vunpack.c.l.b16 %v4644
    %v4933 = vunpack.c.l.b16 %v4645
    %v4934 = vunpack.c.l.b16 %v4646
    %v4935 = vunpack.c.l.b16 %v4647
    %v4936 = vunpack.c.l.b16 %v4648
    %v4937 = vunpack.c.l.b16 %v4649
    %v4938 = vunpack.c.l.b16 %v4650
    %v4939 = vunpack.c.l.b16 %v4651
    %v4940 = vunpack.c.l.b16 %v4652
    %v4941 = vunpack.c.l.b16 %v4653
    %v4942 = vunpack.c.l.b16 %v4654
    %v4943 = vunpack.c.l.b16 %v4655
    %v4944 = vunpack.c.l.b16 %v4656
    %v4945 = vunpack.c.l.b16 %v4657
    %v4946 = vunpack.c.l.b16 %v4658
    %v4947 = vunpack.c.l.b16 %v4659
    %v4948 = vunpack.c.l.b16 %v4660
    %v4949 = vunpack.c.l.b16 %v4661
    %v4950 = vunpack.c.l.b16 %v4662
    %v4951 = vunpack.c.l.b16 %v4663
    %v4952 = vunpack.c.l.b16 %v4664
    %v4953 = vunpack.c.l.b16 %v4665
    %v4954 = vunpack.c.l.b16 %v4666
    %v4955 = vunpack.c.l.b16 %v4667
    %v4956 = vunpack.c.l.b16 %v4668
    %v4957 = vunpack.c.l.b16 %v4669
    %v4958 = vunpack.c.l.b16 %v4670
    %v4959 = vunpack.c.l.b16 %v4671
    %v4960 = vunpack.c.l.b16 %v4672
    %v4961 = vunpack.c.l.b16 %v4673
    %v4962 = vunpack.c.l.b16 %v4674
    %v4963 = vunpack.c.l.b16 %v4675
    %v4964 = vunpack.c.l.b16 %v4676
    %v4965 = vunpack.c.l.b16 %v4677
    %v4966 = vunpack.c.l.b16 %v4678
    %v4967 = vunpack.c.l.b16 %v4679
    %v4968 = vunpack.c.l.b16 %v4680
    %v4969 = vunpack.c.l.b16 %v4681
    %v4970 = vunpack.c.l.b16 %v4682
    %v4971 = vunpack.c.l.b16 %v4683
    %v4972 = vunpack.c.l.b16 %v4684
    %v4973 = vunpack.c.l.b16 %v4685
    %v4974 = vunpack.c.l.b16 %v4686
    %v4975 = vunpack.c.l.b16 %v4687
    %v4976 = vunpack.c.l.b16 %v4688
    %v4977 = vunpack.c.l.b16 %v4689
    %v4978 = vunpack.c.l.b16 %v4690
    %v4979 = vunpack.c.l.b16 %v4691
    %v4980 = vunpack.c.l.b16 %v4692
    %v4981 = vunpack.c.l.b16 %v4693
    %v4982 = vunpack.c.l.b16 %v4694
    %v4983 = vunpack.c.l.b16 %v4695
    %v4984 = vunpack.c.l.b16 %v4696
    %v4985 = vunpack.c.l.b16 %v4697
    %v4986 = vunpack.c.l.b16 %v4698
    %v4987 = vunpack.c.l.b16 %v4699
    %v4988 = vunpack.c.l.b16 %v4700
    %v4989 = vunpack.c.l.b16 %v4701
    %v4990 = vunpack.c.l.b16 %v4702
    %v4991 = vunpack.c.l.b16 %v4703
    %v4992 = vunpack.c.l.b16 %v4704
    %v4993 = vunpack.c.l.b16 %v4705
    %v4994 = vunpack.c.l.b16 %v4706
    %v4995 = vunpack.c.l.b16 %v4707
    %v4996 = vunpack.c.l.b16 %v4708
    %v4997 = vunpack.c.l.b16 %v4709
    %v4998 = vunpack.c.l.b16 %v4710
    %v4999 = vunpack.c.l.b16 %v4711
    %v5000 = vunpack.c.l.b16 %v4712
    %v5001 = vunpack.c.l.b16 %v4713
    %v5002 = vunpack.c.l.b16 %v4714
    %v5003 = vunpack.c.l.b16 %v4715
    %v5004 = vunpack.c.l.b16 %v4716
    %v5005 = vunpack.c.l.b16 %v4717
    %v5006 = vunpack.c.l.b16 %v4718
    %v5007 = vunpack.c.l.b16 %v4719
    %v5008 = vunpack.c.l.b16 %v4720
    %v5009 = vunpack.c.l.b16 %v4721
    %v5010 = vunpack.c.l.b16 %v4722
    %v5011 = vunpack.c.l.b16 %v4723
    %v5012 = vunpack.c.l.b16 %v4724
    %v5013 = vunpack.c.l.b16 %v4725
    %v5014 = vunpack.c.l.b16 %v4726
    %v5015 = vunpack.c.l.b16 %v4727
    %v5016 = vunpack.c.l.b16 %v4728
    %v5017 = vunpack.c.l.b16 %v4729
    %v5018 = vunpack.c.l.b16 %v4730
    %v5019 = vunpack.c.l.b16 %v4731
    %v5020 = vunpack.c.l.b16 %v4732
    %v5021 = vunpack.c.l.b16 %v4733
    %v5022 = vunpack.c.l.b16 %v4734
    %v5023 = vunpack.c.l.b16 %v4735
    %v5024 = vunpack.c.l.b16 %v4736
    %v5025 = vunpack.c.l.b16 %v4737
    %v5026 = vunpack.c.l.b16 %v4738
    %v5027 = vunpack.c.l.b16 %v4739
    %v5028 = vunpack.c.l.b16 %v4740
    %v5029 = vunpack.c.l.b16 %v4741
    %v5030 = vunpack.c.l.b16 %v4742
    %v5031 = vunpack.c.l.b16 %v4743
    %v5032 = vunpack.c.l.b16 %v4744
    %v5033 = vunpack.c.l.b16 %v4745
    %v5034 = vunpack.c.l.b16 %v4746
    %v5035 = vunpack.c.l.b16 %v4747
    %v5036 = vunpack.c.l.b16 %v4748
    %v5037 = vunpack.c.l.b16 %v4749
    %v5038 = vunpack.c.l.b16 %v4750
    %v5039 = vunpack.c.l.b16 %v4751
    %v5040 = vunpack.c.l.b16 %v4752
    %v5041 = vunpack.c.l.b16 %v4753
    %v5042 = vunpack.c.l.b16 %v4754
    %v5043 = vunpack.c.l.b16 %v4755
    %v5044 = vunpack.c.l.b16 %v4756
    %v5045 = vunpack.c.l.b16 %v4757
    %v5046 = vunpack.c.l.b16 %v4758
    %v5047 = vunpack.c.l.b16 %v4759
    %v5048 = vunpack.c.l.b16 %v4760
    %v5049 = vunpack.c.l.b16 %v4761
    %v5050 = vunpack.c.l.b16 %v4762
    %v5051 = vunpack.c.l.b16 %v4763
    %v5052 = vunpack.c.l.b16 %v4764
    %v5053 = vunpack.c.l.b16 %v4765
    %v5054 = vunpack.c.l.b16 %v4766
    %v5055 = vunpack.c.l.b16 %v4767
    %v5056 = vunpack.c.l.b16 %v4768
    %v5057 = vunpack.c.l.b16 %v4769
    %v5058 = vunpack.c.l.b16 %v4770
    %v5059 = vunpack.c.l.b16 %v4771
    %v5060 = vunpack.c.l.b16 %v4772
    %v5061 = vunpack.c.l.b16 %v4773
    %v5062 = vunpack.c.l.b16 %v4774
    %v5063 = vunpack.c.l.b16 %v4775
    %v5064 = vpack.c.b16 %v4921, %v4920
    %v5065 = vpack.c.b16 %v4923, %v4922
    %v5066 = vpack.c.b16 %v4925, %v4924
    %v5067 = vpack.c.b16 %v4927, %v4926
    %v5068 = vpack.c.b16 %v4929, %v4928
    %v5069 = vpack.c.b16 %v4931, %v4930
    %v5070 = vpack.c.b16 %v4933, %v4932
    %v5071 = vpack.c.b16 %v4935, %v4934
    %v5072 = vpack.c.b16 %v4937, %v4936
    %v5073 = vpack.c.b16 %v4939, %v4938
    %v5074 = vpack.c.b16 %v4941, %v4940
    %v5075 = vpack.c.b16 %v4943, %v4942
    %v5076 = vpack.c.b16 %v4945, %v4944
    %v5077 = vpack.c.b16 %v4947, %v4946
    %v5078 = vpack.c.b16 %v4949, %v4948
    %v5079 = vpack.c.b16 %v4951, %v4950
    %v5080 = vpack.c.b16 %v4953, %v4952
    %v5081 = vpack.c.b16 %v4955, %v4954
    %v5082 = vpack.c.b16 %v4957, %v4956
    %v5083 = vpack.c.b16 %v4959, %v4958
    %v5084 = vpack.c.b16 %v4961, %v4960
    %v5085 = vpack.c.b16 %v4963, %v4962
    %v5086 = vpack.c.b16 %v4965, %v4964
    %v5087 = vpack.c.b16 %v4967, %v4966
    %v5088 = vpack.c.b16 %v4969, %v4968
    %v5089 = vpack.c.b16 %v4971, %v4970
    %v5090 = vpack.c.b16 %v4973, %v4972
    %v5091 = vpack.c.b16 %v4975, %v4974
    %v5092 = vpack.c.b16 %v4977, %v4976
    %v5093 = vpack.c.b16 %v4979, %v4978
    %v5094 = vpack.c.b16 %v4981, %v4980
    %v5095 = vpack.c.b16 %v4983, %v4982
    %v5096 = vpack.c.b16 %v4985, %v4984
    %v5097 = vpack.c.b16 %v4987, %v4986
    %v5098 = vpack.c.b16 %v4989, %v4988
    %v5099 = vpack.c.b16 %v4991, %v4990
    %v5100 = vpack.c.b16 %v4993, %v4992
    %v5101 = vpack.c.b16 %v4995, %v4994
    %v5102 = vpack.c.b16 %v4997, %v4996
    %v5103 = vpack.c.b16 %v4999, %v4998
    %v5104 = vpack.c.b16 %v5001, %v5000
    %v5105 = vpack.c.b16 %v5003, %v5002
    %v5106 = vpack.c.b16 %v5005, %v5004
    %v5107 = vpack.c.b16 %v5007, %v5006
    %v5108 = vpack.c.b16 %v5009, %v5008
    %v5109 = vpack.c.b16 %v5011, %v5010
    %v5110 = vpack.c.b16 %v5013, %v5012
    %v5111 = vpack.c.b16 %v5015, %v5014
    %v5112 = vpack.c.b16 %v5017, %v5016
    %v5113 = vpack.c.b16 %v5019, %v5018
    %v5114 = vpack.c.b16 %v5021, %v5020
    %v5115 = vpack.c.b16 %v5023, %v5022
    %v5116 = vpack.c.b16 %v5025, %v5024
    %v5117 = vpack.c.b16 %v5027, %v5026
    %v5118 = vpack.c.b16 %v5029, %v5028
    %v5119 = vpack.c.b16 %v5031, %v5030
    %v5120 = vpack.c.b16 %v5033, %v5032
    %v5121 = vpack.c.b16 %v5035, %v5034
    %v5122 = vpack.c.b16 %v5037, %v5036
    %v5123 = vpack.c.b16 %v5039, %v5038
    %v5124 = vpack.c.b16 %v5041, %v5040
    %v5125 = vpack.c.b16 %v5043, %v5042
    %v5126 = vpack.c.b16 %v5045, %v5044
    %v5127 = vpack.c.b16 %v5047, %v5046
    %v5128 = vpack.c.b16 %v5049, %v5048
    %v5129 = vpack.c.b16 %v5051, %v5050
    %v5130 = vpack.c.b16 %v5053, %v5052
    %v5131 = vpack.c.b16 %v5055, %v5054
    %v5132 = vpack.c.b16 %v5057, %v5056
    %v5133 = vpack.c.b16 %v5059, %v5058
    %v5134 = vpack.c.b16 %v5061, %v5060
    %v5135 = vpack.c.b16 %v5063, %v5062
    %5208 = vmatprep.subr.bf16.mxu0 0
    %5209 = vmatpush1.bf16.msra.mxu0 %v5064
    %5210 = vmatprep.subr.bf16.mxu0 0
    %5211 = vmatpush1.bf16.msra.mxu0 %v5065
    %5212 = vmatprep.subr.bf16.mxu0 0
    %5213 = vmatpush1.bf16.msra.mxu0 %v5066
    %5214 = vmatprep.subr.bf16.mxu0 0
    %5215 = vmatpush1.bf16.msra.mxu0 %v5067
    %5216 = vmatprep.subr.bf16.mxu0 0
    %5217 = vmatpush1.bf16.msra.mxu0 %v5068
    %5218 = vmatprep.subr.bf16.mxu0 0
    %5219 = vmatpush1.bf16.msra.mxu0 %v5069
    %5220 = vmatprep.subr.bf16.mxu0 0
    %5221 = vmatpush1.bf16.msra.mxu0 %v5070
    %5222 = vmatprep.subr.bf16.mxu0 0
    %5223 = vmatpush1.bf16.msra.mxu0 %v5071
    %5224 = vmatprep.subr.bf16.mxu0 0
    %5225 = vmatpush1.bf16.msra.mxu0 %v5072
    %5226 = vmatprep.subr.bf16.mxu0 0
    %5227 = vmatpush1.bf16.msra.mxu0 %v5073
    %5228 = vmatprep.subr.bf16.mxu0 0
    %5229 = vmatpush1.bf16.msra.mxu0 %v5074
    %5230 = vmatprep.subr.bf16.mxu0 0
    %5231 = vmatpush1.bf16.msra.mxu0 %v5075
    %5232 = vmatprep.subr.bf16.mxu0 0
    %5233 = vmatpush1.bf16.msra.mxu0 %v5076
    %5234 = vmatprep.subr.bf16.mxu0 0
    %5235 = vmatpush1.bf16.msra.mxu0 %v5077
    %5236 = vmatprep.subr.bf16.mxu0 0
    %5237 = vmatpush1.bf16.msra.mxu0 %v5078
    %5238 = vmatprep.subr.bf16.mxu0 0
    %5239 = vmatpush1.bf16.msra.mxu0 %v5079
    %5240 = vmatprep.mubr.bf16.mxu0 %v4525
    %5241 = vmatmul.mubr.bf16.gmra.mrb[0].mxu0 %v4524
    %v5242 = vpop.f32.mrb[0].mxu0
    %v5243 = vadd.f32 0.0, %v5242
    %v5244 = vpop.f32.mrb[0].mxu0
    %v5245 = vpop.f32.mrb[0].mxu0
    %v5246 = vadd.f32 0.0, %v5245
    %v5247 = vpop.f32.mrb[0].mxu0
    %5248 = vmatprep.mubr.bf16.mxu0 %v4528
    %5249 = vmatmul.mubr.bf16.gmra.mrb[0].mxu0 %v4527
    %v5250 = vpop.f32.mrb[0].mxu0
    %v5251 = vadd.f32 0.0, %v5250
    %v5252 = vpop.f32.mrb[0].mxu0
    %v5253 = vpop.f32.mrb[0].mxu0
    %v5254 = vadd.f32 0.0, %v5253
    %v5255 = vpop.f32.mrb[0].mxu0
    %5256 = vmatprep.mubr.bf16.mxu0 %v4531
    %5257 = vmatmul.mubr.bf16.gmra.mrb[0].mxu0 %v4530
    %v5258 = vpop.f32.mrb[0].mxu0
    %v5259 = vadd.f32 0.0, %v5258
    %v5260 = vpop.f32.mrb[0].mxu0
    %v5261 = vpop.f32.mrb[0].mxu0
    %v5262 = vadd.f32 0.0, %v5261
    %v5263 = vpop.f32.mrb[0].mxu0
    %5264 = vmatprep.mubr.bf16.mxu0 %v4534
    %5265 = vmatmul.mubr.bf16.gmra.mrb[0].mxu0 %v4533
    %v5266 = vpop.f32.mrb[0].mxu0
    %v5267 = vadd.f32 0.0, %v5266
    %v5268 = vpop.f32.mrb[0].mxu0
    %v5269 = vpop.f32.mrb[0].mxu0
    %v5270 = vadd.f32 0.0, %v5269
    %v5271 = vpop.f32.mrb[0].mxu0
    %5272 = vmatprep.mubr.bf16.mxu0 %v4537
    %5273 = vmatmul.mubr.bf16.gmra.mrb[0].mxu0 %v4536
    %v5274 = vpop.f32.mrb[0].mxu0
    %v5275 = vadd.f32 0.0, %v5274
    %v5276 = vpop.f32.mrb[0].mxu0
    %v5277 = vpop.f32.mrb[0].mxu0
    %v5278 = vadd.f32 0.0, %v5277
    %v5279 = vpop.f32.mrb[0].mxu0
    %5280 = vmatprep.mubr.bf16.mxu0 %v4540
    %5281 = vmatmul.mubr.bf16.gmra.mrb[0].mxu0 %v4539
    %v5282 = vpop.f32.mrb[0].mxu0
    %v5283 = vadd.f32 0.0, %v5282
    %v5284 = vpop.f32.mrb[0].mxu0
    %v5285 = vpop.f32.mrb[0].mxu0
    %v5286 = vadd.f32 0.0, %v5285
    %v5287 = vpop.f32.mrb[0].mxu0
    %5288 = vmatprep.mubr.bf16.mxu0 %v4543
    %5289 = vmatmul.mubr.bf16.gmra.mrb[0].mxu0 %v4542
    %v5290 = vpop.f32.mrb[0].mxu0
    %v5291 = vadd.f32 0.0, %v5290
    %v5292 = vpop.f32.mrb[0].mxu0
    %v5293 = vpop.f32.mrb[0].mxu0
    %v5294 = vadd.f32 0.0, %v5293
    %v5295 = vpop.f32.mrb[0].mxu0
    %5296 = vmatprep.mubr.bf16.mxu0 %v4546
    %5297 = vmatmul.mubr.bf16.gmra.mrb[0].mxu0 %v4545
    %v5298 = vpop.f32.mrb[0].mxu0
    %v5299 = vadd.f32 0.0, %v5298
    %v5300 = vpop.f32.mrb[0].mxu0
    %v5301 = vpop.f32.mrb[0].mxu0
    %v5302 = vadd.f32 0.0, %v5301
    %v5303 = vpop.f32.mrb[0].mxu0
    %5304 = vmatprep.mubr.bf16.mxu0 %v4549
    %5305 = vmatmul.mubr.bf16.gmra.mrb[0].mxu0 %v4548
    %v5306 = vpop.f32.mrb[0].mxu0
    %v5307 = vadd.f32 0.0, %v5306
    %v5308 = vpop.f32.mrb[0].mxu0
    %v5309 = vpop.f32.mrb[0].mxu0
    %v5310 = vadd.f32 0.0, %v5309
    %v5311 = vpop.f32.mrb[0].mxu0
    %5312 = vmatprep.mubr.bf16.mxu0 %v4552
    %5313 = vmatmul.mubr.bf16.gmra.mrb[0].mxu0 %v4551
    %v5314 = vpop.f32.mrb[0].mxu0
    %v5315 = vadd.f32 0.0, %v5314
    %v5316 = vpop.f32.mrb[0].mxu0
    %v5317 = vpop.f32.mrb[0].mxu0
    %v5318 = vadd.f32 0.0, %v5317
    %v5319 = vpop.f32.mrb[0].mxu0
    %5320 = vmatprep.mubr.bf16.mxu0 %v4555
    %5321 = vmatmul.mubr.bf16.gmra.mrb[0].mxu0 %v4554
    %v5322 = vpop.f32.mrb[0].mxu0
    %v5323 = vadd.f32 0.0, %v5322
    %v5324 = vpop.f32.mrb[0].mxu0
    %v5325 = vpop.f32.mrb[0].mxu0
    %v5326 = vadd.f32 0.0, %v5325
    %v5327 = vpop.f32.mrb[0].mxu0
    %5328 = vmatprep.mubr.bf16.mxu0 %v4558
    %5329 = vmatmul.mubr.bf16.gmra.mrb[0].mxu0 %v4557
    %v5330 = vpop.f32.mrb[0].mxu0
    %v5331 = vadd.f32 0.0, %v5330
    %v5332 = vpop.f32.mrb[0].mxu0
    %v5333 = vpop.f32.mrb[0].mxu0
    %v5334 = vadd.f32 0.0, %v5333
    %v5335 = vpop.f32.mrb[0].mxu0
    %5336 = vmatprep.mubr.bf16.mxu0 %v4561
    %5337 = vmatmul.mubr.bf16.gmra.mrb[0].mxu0 %v4560
    %v5338 = vpop.f32.mrb[0].mxu0
    %v5339 = vadd.f32 0.0, %v5338
    %v5340 = vpop.f32.mrb[0].mxu0
    %v5341 = vpop.f32.mrb[0].mxu0
    %v5342 = vadd.f32 0.0, %v5341
    %v5343 = vpop.f32.mrb[0].mxu0
    %5344 = vmatprep.mubr.bf16.mxu0 %v4564
    %5345 = vmatmul.mubr.bf16.gmra.mrb[0].mxu0 %v4563
    %v5346 = vpop.f32.mrb[0].mxu0
    %v5347 = vadd.f32 0.0, %v5346
    %v5348 = vpop.f32.mrb[0].mxu0
    %v5349 = vpop.f32.mrb[0].mxu0
    %v5350 = vadd.f32 0.0, %v5349
    %v5351 = vpop.f32.mrb[0].mxu0
    %5352 = vmatprep.mubr.bf16.mxu0 %v4567
    %5353 = vmatmul.mubr.bf16.gmra.mrb[0].mxu0 %v4566
    %v5354 = vpop.f32.mrb[0].mxu0
    %v5355 = vadd.f32 0.0, %v5354
    %v5356 = vpop.f32.mrb[0].mxu0
    %v5357 = vpop.f32.mrb[0].mxu0
    %v5358 = vadd.f32 0.0, %v5357
    %v5359 = vpop.f32.mrb[0].mxu0
    %5360 = vmatprep.mubr.bf16.mxu0 %v4570
    %5361 = vmatmul.mubr.bf16.gmra.mrb[0].mxu0 %v4569
    %v5362 = vpop.f32.mrb[0].mxu0
    %v5363 = vadd.f32 0.0, %v5362
    %v5364 = vpop.f32.mrb[0].mxu0
    %v5365 = vpop.f32.mrb[0].mxu0
    %v5366 = vadd.f32 0.0, %v5365
    %v5367 = vpop.f32.mrb[0].mxu0
    %5368 = vmatprep.mubr.bf16.mxu0 %v4579
    %5369 = vmatmul.mubr.bf16.gmra.mrb[0].mxu0 %v4578
    %v5370 = vpop.f32.mrb[0].mxu0
    %v5371 = vadd.f32 0.0, %v5370
    %v5372 = vpop.f32.mrb[0].mxu0
    %v5373 = vpop.f32.mrb[0].mxu0
    %v5374 = vadd.f32 0.0, %v5373
    %v5375 = vpop.f32.mrb[0].mxu0
    %5376 = vmatprep.mubr.bf16.mxu0 %v4582
    %5377 = vmatmul.mubr.bf16.gmra.mrb[0].mxu0 %v4581
    %v5378 = vpop.f32.mrb[0].mxu0
    %v5379 = vadd.f32 0.0, %v5378
    %v5380 = vpop.f32.mrb[0].mxu0
    %v5381 = vpop.f32.mrb[0].mxu0
    %v5382 = vadd.f32 0.0, %v5381
    %v5383 = vpop.f32.mrb[0].mxu0
    %5384 = vmatprep.mubr.bf16.mxu0 %v4585
    %5385 = vmatmul.mubr.bf16.gmra.mrb[0].mxu0 %v4584
    %v5386 = vpop.f32.mrb[0].mxu0
    %v5387 = vadd.f32 0.0, %v5386
    %v5388 = vpop.f32.mrb[0].mxu0
    %v5389 = vpop.f32.mrb[0].mxu0
    %v5390 = vadd.f32 0.0, %v5389
    %v5391 = vpop.f32.mrb[0].mxu0
    %5392 = vmatprep.mubr.bf16.mxu0 %v4588
    %5393 = vmatmul.mubr.bf16.gmra.mrb[0].mxu0 %v4587
    %v5394 = vpop.f32.mrb[0].mxu0
    %v5395 = vadd.f32 0.0, %v5394
    %v5396 = vpop.f32.mrb[0].mxu0
    %v5397 = vpop.f32.mrb[0].mxu0
    %v5398 = vadd.f32 0.0, %v5397
    %v5399 = vpop.f32.mrb[0].mxu0
    %5400 = vmatprep.mubr.bf16.mxu0 %v4591
    %5401 = vmatmul.mubr.bf16.gmra.mrb[0].mxu0 %v4590
    %v5402 = vpop.f32.mrb[0].mxu0
    %v5403 = vadd.f32 0.0, %v5402
    %v5404 = vpop.f32.mrb[0].mxu0
    %v5405 = vpop.f32.mrb[0].mxu0
    %v5406 = vadd.f32 0.0, %v5405
    %v5407 = vpop.f32.mrb[0].mxu0
    %5408 = vmatprep.mubr.bf16.mxu0 %v4594
    %5409 = vmatmul.mubr.bf16.gmra.mrb[0].mxu0 %v4593
    %v5410 = vpop.f32.mrb[0].mxu0
    %v5411 = vadd.f32 0.0, %v5410
    %v5412 = vpop.f32.mrb[0].mxu0
    %v5413 = vpop.f32.mrb[0].mxu0
    %v5414 = vadd.f32 0.0, %v5413
    %v5415 = vpop.f32.mrb[0].mxu0
    %5416 = vmatprep.mubr.bf16.mxu0 %v4597
    %5417 = vmatmul.mubr.bf16.gmra.mrb[0].mxu0 %v4596
    %v5418 = vpop.f32.mrb[0].mxu0
    %v5419 = vadd.f32 0.0, %v5418
    %v5420 = vpop.f32.mrb[0].mxu0
    %v5421 = vpop.f32.mrb[0].mxu0
    %v5422 = vadd.f32 0.0, %v5421
    %v5423 = vpop.f32.mrb[0].mxu0
    %5424 = vmatprep.mubr.bf16.mxu0 %v4600
    %5425 = vmatmul.mubr.bf16.gmra.mrb[0].mxu0 %v4599
    %v5426 = vpop.f32.mrb[0].mxu0
    %v5427 = vadd.f32 0.0, %v5426
    %v5428 = vpop.f32.mrb[0].mxu0
    %v5429 = vpop.f32.mrb[0].mxu0
    %v5430 = vadd.f32 0.0, %v5429
    %v5431 = vpop.f32.mrb[0].mxu0
    %5432 = vmatprep.mubr.bf16.mxu0 %v4603
    %5433 = vmatmul.mubr.bf16.gmra.mrb[0].mxu0 %v4602
    %v5434 = vpop.f32.mrb[0].mxu0
    %v5435 = vadd.f32 0.0, %v5434
    %v5436 = vpop.f32.mrb[0].mxu0
    %v5437 = vpop.f32.mrb[0].mxu0
    %v5438 = vadd.f32 0.0, %v5437
    %v5439 = vpop.f32.mrb[0].mxu0
    %5440 = vmatprep.mubr.bf16.mxu0 %v4606
    %5441 = vmatmul.mubr.bf16.gmra.mrb[0].mxu0 %v4605
    %v5442 = vpop.f32.mrb[0].mxu0
    %v5443 = vadd.f32 0.0, %v5442
    %v5444 = vpop.f32.mrb[0].mxu0
    %v5445 = vpop.f32.mrb[0].mxu0
    %v5446 = vadd.f32 0.0, %v5445
    %v5447 = vpop.f32.mrb[0].mxu0
    %5448 = vmatprep.mubr.bf16.mxu0 %v4609
    %5449 = vmatmul.mubr.bf16.gmra.mrb[0].mxu0 %v4608
    %v5450 = vpop.f32.mrb[0].mxu0
    %v5451 = vadd.f32 0.0, %v5450
    %v5452 = vpop.f32.mrb[0].mxu0
    %v5453 = vpop.f32.mrb[0].mxu0
    %v5454 = vadd.f32 0.0, %v5453
    %v5455 = vpop.f32.mrb[0].mxu0
    %5456 = vmatprep.mubr.bf16.mxu0 %v4612
    %5457 = vmatmul.mubr.bf16.gmra.mrb[0].mxu0 %v4611
    %v5458 = vpop.f32.mrb[0].mxu0
    %v5459 = vadd.f32 0.0, %v5458
    %v5460 = vpop.f32.mrb[0].mxu0
    %v5461 = vpop.f32.mrb[0].mxu0
    %v5462 = vadd.f32 0.0, %v5461
    %v5463 = vpop.f32.mrb[0].mxu0
    %5464 = vmatprep.mubr.bf16.mxu0 %v4615
    %5465 = vmatmul.mubr.bf16.gmra.mrb[0].mxu0 %v4614
    %v5466 = vpop.f32.mrb[0].mxu0
    %v5467 = vadd.f32 0.0, %v5466
    %v5468 = vpop.f32.mrb[0].mxu0
    %v5469 = vpop.f32.mrb[0].mxu0
    %v5470 = vadd.f32 0.0, %v5469
    %v5471 = vpop.f32.mrb[0].mxu0
    %5472 = vmatprep.mubr.bf16.mxu0 %v4618
    %5473 = vmatmul.mubr.bf16.gmra.mrb[0].mxu0 %v4617
    %v5474 = vpop.f32.mrb[0].mxu0
    %v5475 = vadd.f32 0.0, %v5474
    %v5476 = vpop.f32.mrb[0].mxu0
    %v5477 = vpop.f32.mrb[0].mxu0
    %v5478 = vadd.f32 0.0, %v5477
    %v5479 = vpop.f32.mrb[0].mxu0
    %5480 = vmatprep.mubr.bf16.mxu0 %v4621
    %5481 = vmatmul.mubr.bf16.gmra.mrb[0].mxu0 %v4620
    %v5482 = vpop.f32.mrb[0].mxu0
    %v5483 = vadd.f32 0.0, %v5482
    %v5484 = vpop.f32.mrb[0].mxu0
    %v5485 = vpop.f32.mrb[0].mxu0
    %v5486 = vadd.f32 0.0, %v5485
    %v5487 = vpop.f32.mrb[0].mxu0
    %5488 = vmatprep.mubr.bf16.mxu0 %v4624
    %5489 = vmatmul.mubr.bf16.gmra.mrb[0].mxu0 %v4623
    %v5490 = vpop.f32.mrb[0].mxu0
    %v5491 = vadd.f32 0.0, %v5490
    %v5492 = vpop.f32.mrb[0].mxu0
    %v5493 = vpop.f32.mrb[0].mxu0
    %v5494 = vadd.f32 0.0, %v5493
    %v5495 = vpop.f32.mrb[0].mxu0
    %5496 = vdwg.mxu0
    %5497 = vmatprep.subr.bf16.mxu0 0
    %5498 = vmatpush1.bf16.msra.mxu0 %v5080
    %5499 = vmatprep.subr.bf16.mxu0 0
    %5500 = vmatpush1.bf16.msra.mxu0 %v5081
    %5501 = vmatprep.subr.bf16.mxu0 0
    %5502 = vmatpush1.bf16.msra.mxu0 %v5082
    %5503 = vmatprep.subr.bf16.mxu0 0
    %5504 = vmatpush1.bf16.msra.mxu0 %v5083
    %5505 = vmatprep.subr.bf16.mxu0 0
    %5506 = vmatpush1.bf16.msra.mxu0 %v5084
    %5507 = vmatprep.subr.bf16.mxu0 0
    %5508 = vmatpush1.bf16.msra.mxu0 %v5085
    %5509 = vmatprep.subr.bf16.mxu0 0
    %5510 = vmatpush1.bf16.msra.mxu0 %v5086
    %5511 = vmatprep.subr.bf16.mxu0 0
    %5512 = vmatpush1.bf16.msra.mxu0 %v5087
    %5513 = vmatprep.subr.bf16.mxu0 0
    %5514 = vmatpush1.bf16.msra.mxu0 %v5088
    %5515 = vmatprep.subr.bf16.mxu0 0
    %5516 = vmatpush1.bf16.msra.mxu0 %v5089
    %5517 = vmatprep.subr.bf16.mxu0 0
    %5518 = vmatpush1.bf16.msra.mxu0 %v5090
    %5519 = vmatprep.subr.bf16.mxu0 0
    %5520 = vmatpush1.bf16.msra.mxu0 %v5091
    %5521 = vmatprep.subr.bf16.mxu0 0
    %5522 = vmatpush1.bf16.msra.mxu0 %v5092
    %5523 = vmatprep.subr.bf16.mxu0 0
    %5524 = vmatpush1.bf16.msra.mxu0 %v5093
    %5525 = vmatprep.subr.bf16.mxu0 0
    %5526 = vmatpush1.bf16.msra.mxu0 %v5094
    %5527 = vmatprep.subr.bf16.mxu0 0
    %5528 = vmatpush1.bf16.msra.mxu0 %v5095
    %5529 = vmatprep.mubr.bf16.mxu0 %v4527
    %5530 = vmatmul.mubr.bf16.gmra.mrb[0].mxu0 %v4526
    %v5531 = vpop.f32.mrb[0].mxu0
    %v5532 = vadd.f32 %v5243, %v5531
    %v5533 = vpop.f32.mrb[0].mxu0
    %v5534 = vpop.f32.mrb[0].mxu0
    %v5535 = vadd.f32 %v5246, %v5534
    %v5536 = vpop.f32.mrb[0].mxu0
    %5537 = vmatprep.mubr.bf16.mxu0 %v4530
    %5538 = vmatmul.mubr.bf16.gmra.mrb[0].mxu0 %v4529
    %v5539 = vpop.f32.mrb[0].mxu0
    %v5540 = vadd.f32 %v5251, %v5539
    %v5541 = vpop.f32.mrb[0].mxu0
    %v5542 = vpop.f32.mrb[0].mxu0
    %v5543 = vadd.f32 %v5254, %v5542
    %v5544 = vpop.f32.mrb[0].mxu0
    %5545 = vmatprep.mubr.bf16.mxu0 %v4533
    %5546 = vmatmul.mubr.bf16.gmra.mrb[0].mxu0 %v4532
    %v5547 = vpop.f32.mrb[0].mxu0
    %v5548 = vadd.f32 %v5259, %v5547
    %v5549 = vpop.f32.mrb[0].mxu0
    %v5550 = vpop.f32.mrb[0].mxu0
    %v5551 = vadd.f32 %v5262, %v5550
    %v5552 = vpop.f32.mrb[0].mxu0
    %5553 = vmatprep.mubr.bf16.mxu0 %v4536
    %5554 = vmatmul.mubr.bf16.gmra.mrb[0].mxu0 %v4535
    %v5555 = vpop.f32.mrb[0].mxu0
    %v5556 = vadd.f32 %v5267, %v5555
    %v5557 = vpop.f32.mrb[0].mxu0
    %v5558 = vpop.f32.mrb[0].mxu0
    %v5559 = vadd.f32 %v5270, %v5558
    %v5560 = vpop.f32.mrb[0].mxu0
    %5561 = vmatprep.mubr.bf16.mxu0 %v4539
    %5562 = vmatmul.mubr.bf16.gmra.mrb[0].mxu0 %v4538
    %v5563 = vpop.f32.mrb[0].mxu0
    %v5564 = vadd.f32 %v5275, %v5563
    %v5565 = vpop.f32.mrb[0].mxu0
    %v5566 = vpop.f32.mrb[0].mxu0
    %v5567 = vadd.f32 %v5278, %v5566
    %v5568 = vpop.f32.mrb[0].mxu0
    %5569 = vmatprep.mubr.bf16.mxu0 %v4542
    %5570 = vmatmul.mubr.bf16.gmra.mrb[0].mxu0 %v4541
    %v5571 = vpop.f32.mrb[0].mxu0
    %v5572 = vadd.f32 %v5283, %v5571
    %v5573 = vpop.f32.mrb[0].mxu0
    %v5574 = vpop.f32.mrb[0].mxu0
    %v5575 = vadd.f32 %v5286, %v5574
    %v5576 = vpop.f32.mrb[0].mxu0
    %5577 = vmatprep.mubr.bf16.mxu0 %v4545
    %5578 = vmatmul.mubr.bf16.gmra.mrb[0].mxu0 %v4544
    %v5579 = vpop.f32.mrb[0].mxu0
    %v5580 = vadd.f32 %v5291, %v5579
    %v5581 = vpop.f32.mrb[0].mxu0
    %v5582 = vpop.f32.mrb[0].mxu0
    %v5583 = vadd.f32 %v5294, %v5582
    %v5584 = vpop.f32.mrb[0].mxu0
    %5585 = vmatprep.mubr.bf16.mxu0 %v4548
    %5586 = vmatmul.mubr.bf16.gmra.mrb[0].mxu0 %v4547
    %v5587 = vpop.f32.mrb[0].mxu0
    %v5588 = vadd.f32 %v5299, %v5587
    %v5589 = vpop.f32.mrb[0].mxu0
    %v5590 = vpop.f32.mrb[0].mxu0
    %v5591 = vadd.f32 %v5302, %v5590
    %v5592 = vpop.f32.mrb[0].mxu0
    %5593 = vmatprep.mubr.bf16.mxu0 %v4551
    %5594 = vmatmul.mubr.bf16.gmra.mrb[0].mxu0 %v4550
    %v5595 = vpop.f32.mrb[0].mxu0
    %v5596 = vadd.f32 %v5307, %v5595
    %v5597 = vpop.f32.mrb[0].mxu0
    %v5598 = vpop.f32.mrb[0].mxu0
    %v5599 = vadd.f32 %v5310, %v5598
    %v5600 = vpop.f32.mrb[0].mxu0
    %5601 = vmatprep.mubr.bf16.mxu0 %v4554
    %5602 = vmatmul.mubr.bf16.gmra.mrb[0].mxu0 %v4553
    %v5603 = vpop.f32.mrb[0].mxu0
    %v5604 = vadd.f32 %v5315, %v5603
    %v5605 = vpop.f32.mrb[0].mxu0
    %v5606 = vpop.f32.mrb[0].mxu0
    %v5607 = vadd.f32 %v5318, %v5606
    %v5608 = vpop.f32.mrb[0].mxu0
    %5609 = vmatprep.mubr.bf16.mxu0 %v4557
    %5610 = vmatmul.mubr.bf16.gmra.mrb[0].mxu0 %v4556
    %v5611 = vpop.f32.mrb[0].mxu0
    %v5612 = vadd.f32 %v5323, %v5611
    %v5613 = vpop.f32.mrb[0].mxu0
    %v5614 = vpop.f32.mrb[0].mxu0
    %v5615 = vadd.f32 %v5326, %v5614
    %v5616 = vpop.f32.mrb[0].mxu0
    %5617 = vmatprep.mubr.bf16.mxu0 %v4560
    %5618 = vmatmul.mubr.bf16.gmra.mrb[0].mxu0 %v4559
    %v5619 = vpop.f32.mrb[0].mxu0
    %v5620 = vadd.f32 %v5331, %v5619
    %v5621 = vpop.f32.mrb[0].mxu0
    %v5622 = vpop.f32.mrb[0].mxu0
    %v5623 = vadd.f32 %v5334, %v5622
    %v5624 = vpop.f32.mrb[0].mxu0
    %5625 = vmatprep.mubr.bf16.mxu0 %v4563
    %5626 = vmatmul.mubr.bf16.gmra.mrb[0].mxu0 %v4562
    %v5627 = vpop.f32.mrb[0].mxu0
    %v5628 = vadd.f32 %v5339, %v5627
    %v5629 = vpop.f32.mrb[0].mxu0
    %v5630 = vpop.f32.mrb[0].mxu0
    %v5631 = vadd.f32 %v5342, %v5630
    %v5632 = vpop.f32.mrb[0].mxu0
    %5633 = vmatprep.mubr.bf16.mxu0 %v4566
    %5634 = vmatmul.mubr.bf16.gmra.mrb[0].mxu0 %v4565
    %v5635 = vpop.f32.mrb[0].mxu0
    %v5636 = vadd.f32 %v5347, %v5635
    %v5637 = vpop.f32.mrb[0].mxu0
    %v5638 = vpop.f32.mrb[0].mxu0
    %v5639 = vadd.f32 %v5350, %v5638
    %v5640 = vpop.f32.mrb[0].mxu0
    %5641 = vmatprep.mubr.bf16.mxu0 %v4569
    %5642 = vmatmul.mubr.bf16.gmra.mrb[0].mxu0 %v4568
    %v5643 = vpop.f32.mrb[0].mxu0
    %v5644 = vadd.f32 %v5355, %v5643
    %v5645 = vpop.f32.mrb[0].mxu0
    %v5646 = vpop.f32.mrb[0].mxu0
    %v5647 = vadd.f32 %v5358, %v5646
    %v5648 = vpop.f32.mrb[0].mxu0
    %5649 = vmatprep.mubr.bf16.mxu0 %v4572
    %5650 = vmatmul.mubr.bf16.gmra.mrb[0].mxu0 %v4571
    %v5651 = vpop.f32.mrb[0].mxu0
    %v5652 = vadd.f32 %v5363, %v5651
    %v5653 = vpop.f32.mrb[0].mxu0
    %v5654 = vpop.f32.mrb[0].mxu0
    %v5655 = vadd.f32 %v5366, %v5654
    %v5656 = vpop.f32.mrb[0].mxu0
    %5657 = vmatprep.mubr.bf16.mxu0 %v4581
    %5658 = vmatmul.mubr.bf16.gmra.mrb[0].mxu0 %v4580
    %v5659 = vpop.f32.mrb[0].mxu0
    %v5660 = vadd.f32 %v5371, %v5659
    %v5661 = vpop.f32.mrb[0].mxu0
    %v5662 = vpop.f32.mrb[0].mxu0
    %v5663 = vadd.f32 %v5374, %v5662
    %v5664 = vpop.f32.mrb[0].mxu0
    %5665 = vmatprep.mubr.bf16.mxu0 %v4584
    %5666 = vmatmul.mubr.bf16.gmra.mrb[0].mxu0 %v4583
    %v5667 = vpop.f32.mrb[0].mxu0
    %v5668 = vadd.f32 %v5379, %v5667
    %v5669 = vpop.f32.mrb[0].mxu0
    %v5670 = vpop.f32.mrb[0].mxu0
    %v5671 = vadd.f32 %v5382, %v5670
    %v5672 = vpop.f32.mrb[0].mxu0
    %5673 = vmatprep.mubr.bf16.mxu0 %v4587
    %5674 = vmatmul.mubr.bf16.gmra.mrb[0].mxu0 %v4586
    %v5675 = vpop.f32.mrb[0].mxu0
    %v5676 = vadd.f32 %v5387, %v5675
    %v5677 = vpop.f32.mrb[0].mxu0
    %v5678 = vpop.f32.mrb[0].mxu0
    %v5679 = vadd.f32 %v5390, %v5678
    %v5680 = vpop.f32.mrb[0].mxu0
    %5681 = vmatprep.mubr.bf16.mxu0 %v4590
    %5682 = vmatmul.mubr.bf16.gmra.mrb[0].mxu0 %v4589
    %v5683 = vpop.f32.mrb[0].mxu0
    %v5684 = vadd.f32 %v5395, %v5683
    %v5685 = vpop.f32.mrb[0].mxu0
    %v5686 = vpop.f32.mrb[0].mxu0
    %v5687 = vadd.f32 %v5398, %v5686
    %v5688 = vpop.f32.mrb[0].mxu0
    %5689 = vmatprep.mubr.bf16.mxu0 %v4593
    %5690 = vmatmul.mubr.bf16.gmra.mrb[0].mxu0 %v4592
    %v5691 = vpop.f32.mrb[0].mxu0
    %v5692 = vadd.f32 %v5403, %v5691
    %v5693 = vpop.f32.mrb[0].mxu0
    %v5694 = vpop.f32.mrb[0].mxu0
    %v5695 = vadd.f32 %v5406, %v5694
    %v5696 = vpop.f32.mrb[0].mxu0
    %5697 = vmatprep.mubr.bf16.mxu0 %v4596
    %5698 = vmatmul.mubr.bf16.gmra.mrb[0].mxu0 %v4595
    %v5699 = vpop.f32.mrb[0].mxu0
    %v5700 = vadd.f32 %v5411, %v5699
    %v5701 = vpop.f32.mrb[0].mxu0
    %v5702 = vpop.f32.mrb[0].mxu0
    %v5703 = vadd.f32 %v5414, %v5702
    %v5704 = vpop.f32.mrb[0].mxu0
    %5705 = vmatprep.mubr.bf16.mxu0 %v4599
    %5706 = vmatmul.mubr.bf16.gmra.mrb[0].mxu0 %v4598
    %v5707 = vpop.f32.mrb[0].mxu0
    %v5708 = vadd.f32 %v5419, %v5707
    %v5709 = vpop.f32.mrb[0].mxu0
    %v5710 = vpop.f32.mrb[0].mxu0
    %v5711 = vadd.f32 %v5422, %v5710
    %v5712 = vpop.f32.mrb[0].mxu0
    %5713 = vmatprep.mubr.bf16.mxu0 %v4602
    %5714 = vmatmul.mubr.bf16.gmra.mrb[0].mxu0 %v4601
    %v5715 = vpop.f32.mrb[0].mxu0
    %v5716 = vadd.f32 %v5427, %v5715
    %v5717 = vpop.f32.mrb[0].mxu0
    %v5718 = vpop.f32.mrb[0].mxu0
    %v5719 = vadd.f32 %v5430, %v5718
    %v5720 = vpop.f32.mrb[0].mxu0
    %5721 = vmatprep.mubr.bf16.mxu0 %v4605
    %5722 = vmatmul.mubr.bf16.gmra.mrb[0].mxu0 %v4604
    %v5723 = vpop.f32.mrb[0].mxu0
    %v5724 = vadd.f32 %v5435, %v5723
    %v5725 = vpop.f32.mrb[0].mxu0
    %v5726 = vpop.f32.mrb[0].mxu0
    %v5727 = vadd.f32 %v5438, %v5726
    %v5728 = vpop.f32.mrb[0].mxu0
    %5729 = vmatprep.mubr.bf16.mxu0 %v4608
    %5730 = vmatmul.mubr.bf16.gmra.mrb[0].mxu0 %v4607
    %v5731 = vpop.f32.mrb[0].mxu0
    %v5732 = vadd.f32 %v5443, %v5731
    %v5733 = vpop.f32.mrb[0].mxu0
    %v5734 = vpop.f32.mrb[0].mxu0
    %v5735 = vadd.f32 %v5446, %v5734
    %v5736 = vpop.f32.mrb[0].mxu0
    %5737 = vmatprep.mubr.bf16.mxu0 %v4611
    %5738 = vmatmul.mubr.bf16.gmra.mrb[0].mxu0 %v4610
    %v5739 = vpop.f32.mrb[0].mxu0
    %v5740 = vadd.f32 %v5451, %v5739
    %v5741 = vpop.f32.mrb[0].mxu0
    %v5742 = vpop.f32.mrb[0].mxu0
    %v5743 = vadd.f32 %v5454, %v5742
    %v5744 = vpop.f32.mrb[0].mxu0
    %5745 = vmatprep.mubr.bf16.mxu0 %v4614
    %5746 = vmatmul.mubr.bf16.gmra.mrb[0].mxu0 %v4613
    %v5747 = vpop.f32.mrb[0].mxu0
    %v5748 = vadd.f32 %v5459, %v5747
    %v5749 = vpop.f32.mrb[0].mxu0
    %v5750 = vpop.f32.mrb[0].mxu0
    %v5751 = vadd.f32 %v5462, %v5750
    %v5752 = vpop.f32.mrb[0].mxu0
    %5753 = vmatprep.mubr.bf16.mxu0 %v4617
    %5754 = vmatmul.mubr.bf16.gmra.mrb[0].mxu0 %v4616
    %v5755 = vpop.f32.mrb[0].mxu0
    %v5756 = vadd.f32 %v5467, %v5755
    %v5757 = vpop.f32.mrb[0].mxu0
    %v5758 = vpop.f32.mrb[0].mxu0
    %v5759 = vadd.f32 %v5470, %v5758
    %v5760 = vpop.f32.mrb[0].mxu0
    %5761 = vmatprep.mubr.bf16.mxu0 %v4620
    %5762 = vmatmul.mubr.bf16.gmra.mrb[0].mxu0 %v4619
    %v5763 = vpop.f32.mrb[0].mxu0
    %v5764 = vadd.f32 %v5475, %v5763
    %v5765 = vpop.f32.mrb[0].mxu0
    %v5766 = vpop.f32.mrb[0].mxu0
    %v5767 = vadd.f32 %v5478, %v5766
    %v5768 = vpop.f32.mrb[0].mxu0
    %5769 = vmatprep.mubr.bf16.mxu0 %v4623
    %5770 = vmatmul.mubr.bf16.gmra.mrb[0].mxu0 %v4622
    %v5771 = vpop.f32.mrb[0].mxu0
    %v5772 = vadd.f32 %v5483, %v5771
    %v5773 = vpop.f32.mrb[0].mxu0
    %v5774 = vpop.f32.mrb[0].mxu0
    %v5775 = vadd.f32 %v5486, %v5774
    %v5776 = vpop.f32.mrb[0].mxu0
    %5777 = vmatprep.mubr.bf16.mxu0 %v4626
    %5778 = vmatmul.mubr.bf16.gmra.mrb[0].mxu0 %v4625
    %v5779 = vpop.f32.mrb[0].mxu0
    %v5780 = vadd.f32 %v5491, %v5779
    %v5781 = vpop.f32.mrb[0].mxu0
    %v5782 = vpop.f32.mrb[0].mxu0
    %v5783 = vadd.f32 %v5494, %v5782
    %v5784 = vpop.f32.mrb[0].mxu0
    %5785 = vdwg.mxu0
    %5786 = vmatprep.subr.bf16.mxu0 0
    %5787 = vmatpush1.bf16.msra.mxu0 %v5096
    %5788 = vmatprep.subr.bf16.mxu0 0
    %5789 = vmatpush1.bf16.msra.mxu0 %v5097
    %5790 = vmatprep.subr.bf16.mxu0 0
    %5791 = vmatpush1.bf16.msra.mxu0 %v5098
    %5792 = vmatprep.subr.bf16.mxu0 0
    %5793 = vmatpush1.bf16.msra.mxu0 %v5099
    %5794 = vmatprep.subr.bf16.mxu0 0
    %5795 = vmatpush1.bf16.msra.mxu0 %v5100
    %5796 = vmatprep.subr.bf16.mxu0 0
    %5797 = vmatpush1.bf16.msra.mxu0 %v5101
    %5798 = vmatprep.subr.bf16.mxu0 0
    %5799 = vmatpush1.bf16.msra.mxu0 %v5102
    %5800 = vmatprep.subr.bf16.mxu0 0
    %5801 = vmatpush1.bf16.msra.mxu0 %v5103
    %5802 = vmatprep.subr.bf16.mxu0 0
    %5803 = vmatpush1.bf16.msra.mxu0 %v5104
    %5804 = vmatprep.subr.bf16.mxu0 0
    %5805 = vmatpush1.bf16.msra.mxu0 %v5105
    %5806 = vmatprep.subr.bf16.mxu0 0
    %5807 = vmatpush1.bf16.msra.mxu0 %v5106
    %5808 = vmatprep.subr.bf16.mxu0 0
    %5809 = vmatpush1.bf16.msra.mxu0 %v5107
    %5810 = vmatprep.subr.bf16.mxu0 0
    %5811 = vmatpush1.bf16.msra.mxu0 %v5108
    %5812 = vmatprep.subr.bf16.mxu0 0
    %5813 = vmatpush1.bf16.msra.mxu0 %v5109
    %5814 = vmatprep.subr.bf16.mxu0 0
    %5815 = vmatpush1.bf16.msra.mxu0 %v5110
    %5816 = vmatprep.subr.bf16.mxu0 0
    %5817 = vmatpush1.bf16.msra.mxu0 %v5111
    %5818 = vmatprep.mubr.bf16.mxu0 %v4529
    %5819 = vmatmul.mubr.bf16.gmra.mrb[0].mxu0 %v4528
    %v5820 = vpop.f32.mrb[0].mxu0
    %v5821 = vadd.f32 %v5532, %v5820
    %v5822 = vpop.f32.mrb[0].mxu0
    %v5823 = vpop.f32.mrb[0].mxu0
    %v5824 = vadd.f32 %v5535, %v5823
    %v5825 = vpop.f32.mrb[0].mxu0
    %5826 = vmatprep.mubr.bf16.mxu0 %v4532
    %5827 = vmatmul.mubr.bf16.gmra.mrb[0].mxu0 %v4531
    %v5828 = vpop.f32.mrb[0].mxu0
    %v5829 = vadd.f32 %v5540, %v5828
    %v5830 = vpop.f32.mrb[0].mxu0
    %v5831 = vpop.f32.mrb[0].mxu0
    %v5832 = vadd.f32 %v5543, %v5831
    %v5833 = vpop.f32.mrb[0].mxu0
    %5834 = vmatprep.mubr.bf16.mxu0 %v4535
    %5835 = vmatmul.mubr.bf16.gmra.mrb[0].mxu0 %v4534
    %v5836 = vpop.f32.mrb[0].mxu0
    %v5837 = vadd.f32 %v5548, %v5836
    %v5838 = vpop.f32.mrb[0].mxu0
    %v5839 = vpop.f32.mrb[0].mxu0
    %v5840 = vadd.f32 %v5551, %v5839
    %v5841 = vpop.f32.mrb[0].mxu0
    %5842 = vmatprep.mubr.bf16.mxu0 %v4538
    %5843 = vmatmul.mubr.bf16.gmra.mrb[0].mxu0 %v4537
    %v5844 = vpop.f32.mrb[0].mxu0
    %v5845 = vadd.f32 %v5556, %v5844
    %v5846 = vpop.f32.mrb[0].mxu0
    %v5847 = vpop.f32.mrb[0].mxu0
    %v5848 = vadd.f32 %v5559, %v5847
    %v5849 = vpop.f32.mrb[0].mxu0
    %5850 = vmatprep.mubr.bf16.mxu0 %v4541
    %5851 = vmatmul.mubr.bf16.gmra.mrb[0].mxu0 %v4540
    %v5852 = vpop.f32.mrb[0].mxu0
    %v5853 = vadd.f32 %v5564, %v5852
    %v5854 = vpop.f32.mrb[0].mxu0
    %v5855 = vpop.f32.mrb[0].mxu0
    %v5856 = vadd.f32 %v5567, %v5855
    %v5857 = vpop.f32.mrb[0].mxu0
    %5858 = vmatprep.mubr.bf16.mxu0 %v4544
    %5859 = vmatmul.mubr.bf16.gmra.mrb[0].mxu0 %v4543
    %v5860 = vpop.f32.mrb[0].mxu0
    %v5861 = vadd.f32 %v5572, %v5860
    %v5862 = vpop.f32.mrb[0].mxu0
    %v5863 = vpop.f32.mrb[0].mxu0
    %v5864 = vadd.f32 %v5575, %v5863
    %v5865 = vpop.f32.mrb[0].mxu0
    %5866 = vmatprep.mubr.bf16.mxu0 %v4547
    %5867 = vmatmul.mubr.bf16.gmra.mrb[0].mxu0 %v4546
    %v5868 = vpop.f32.mrb[0].mxu0
    %v5869 = vadd.f32 %v5580, %v5868
    %v5870 = vpop.f32.mrb[0].mxu0
    %v5871 = vpop.f32.mrb[0].mxu0
    %v5872 = vadd.f32 %v5583, %v5871
    %v5873 = vpop.f32.mrb[0].mxu0
    %5874 = vmatprep.mubr.bf16.mxu0 %v4550
    %5875 = vmatmul.mubr.bf16.gmra.mrb[0].mxu0 %v4549
    %v5876 = vpop.f32.mrb[0].mxu0
    %v5877 = vadd.f32 %v5588, %v5876
    %v5878 = vpop.f32.mrb[0].mxu0
    %v5879 = vpop.f32.mrb[0].mxu0
    %v5880 = vadd.f32 %v5591, %v5879
    %v5881 = vpop.f32.mrb[0].mxu0
    %5882 = vmatprep.mubr.bf16.mxu0 %v4553
    %5883 = vmatmul.mubr.bf16.gmra.mrb[0].mxu0 %v4552
    %v5884 = vpop.f32.mrb[0].mxu0
    %v5885 = vadd.f32 %v5596, %v5884
    %v5886 = vpop.f32.mrb[0].mxu0
    %v5887 = vpop.f32.mrb[0].mxu0
    %v5888 = vadd.f32 %v5599, %v5887
    %v5889 = vpop.f32.mrb[0].mxu0
    %5890 = vmatprep.mubr.bf16.mxu0 %v4556
    %5891 = vmatmul.mubr.bf16.gmra.mrb[0].mxu0 %v4555
    %v5892 = vpop.f32.mrb[0].mxu0
    %v5893 = vadd.f32 %v5604, %v5892
    %v5894 = vpop.f32.mrb[0].mxu0
    %v5895 = vpop.f32.mrb[0].mxu0
    %v5896 = vadd.f32 %v5607, %v5895
    %v5897 = vpop.f32.mrb[0].mxu0
    %5898 = vmatprep.mubr.bf16.mxu0 %v4559
    %5899 = vmatmul.mubr.bf16.gmra.mrb[0].mxu0 %v4558
    %v5900 = vpop.f32.mrb[0].mxu0
    %v5901 = vadd.f32 %v5612, %v5900
    %v5902 = vpop.f32.mrb[0].mxu0
    %v5903 = vpop.f32.mrb[0].mxu0
    %v5904 = vadd.f32 %v5615, %v5903
    %v5905 = vpop.f32.mrb[0].mxu0
    %5906 = vmatprep.mubr.bf16.mxu0 %v4562
    %5907 = vmatmul.mubr.bf16.gmra.mrb[0].mxu0 %v4561
    %v5908 = vpop.f32.mrb[0].mxu0
    %v5909 = vadd.f32 %v5620, %v5908
    %v5910 = vpop.f32.mrb[0].mxu0
    %v5911 = vpop.f32.mrb[0].mxu0
    %v5912 = vadd.f32 %v5623, %v5911
    %v5913 = vpop.f32.mrb[0].mxu0
    %5914 = vmatprep.mubr.bf16.mxu0 %v4565
    %5915 = vmatmul.mubr.bf16.gmra.mrb[0].mxu0 %v4564
    %v5916 = vpop.f32.mrb[0].mxu0
    %v5917 = vadd.f32 %v5628, %v5916
    %v5918 = vpop.f32.mrb[0].mxu0
    %v5919 = vpop.f32.mrb[0].mxu0
    %v5920 = vadd.f32 %v5631, %v5919
    %v5921 = vpop.f32.mrb[0].mxu0
    %5922 = vmatprep.mubr.bf16.mxu0 %v4568
    %5923 = vmatmul.mubr.bf16.gmra.mrb[0].mxu0 %v4567
    %v5924 = vpop.f32.mrb[0].mxu0
    %v5925 = vadd.f32 %v5636, %v5924
    %v5926 = vpop.f32.mrb[0].mxu0
    %v5927 = vpop.f32.mrb[0].mxu0
    %v5928 = vadd.f32 %v5639, %v5927
    %v5929 = vpop.f32.mrb[0].mxu0
    %5930 = vmatprep.mubr.bf16.mxu0 %v4571
    %5931 = vmatmul.mubr.bf16.gmra.mrb[0].mxu0 %v4570
    %v5932 = vpop.f32.mrb[0].mxu0
    %v5933 = vadd.f32 %v5644, %v5932
    %v5934 = vpop.f32.mrb[0].mxu0
    %v5935 = vpop.f32.mrb[0].mxu0
    %v5936 = vadd.f32 %v5647, %v5935
    %v5937 = vpop.f32.mrb[0].mxu0
    %5938 = vmatprep.mubr.bf16.mxu0 %v4574
    %5939 = vmatmul.mubr.bf16.gmra.mrb[0].mxu0 %v4573
    %v5940 = vpop.f32.mrb[0].mxu0
    %v5941 = vadd.f32 %v5652, %v5940
    %v5942 = vpop.f32.mrb[0].mxu0
    %v5943 = vpop.f32.mrb[0].mxu0
    %v5944 = vadd.f32 %v5655, %v5943
    %v5945 = vpop.f32.mrb[0].mxu0
    %5946 = vmatprep.mubr.bf16.mxu0 %v4583
    %5947 = vmatmul.mubr.bf16.gmra.mrb[0].mxu0 %v4582
    %v5948 = vpop.f32.mrb[0].mxu0
    %v5949 = vadd.f32 %v5660, %v5948
    %v5950 = vpop.f32.mrb[0].mxu0
    %v5951 = vpop.f32.mrb[0].mxu0
    %v5952 = vadd.f32 %v5663, %v5951
    %v5953 = vpop.f32.mrb[0].mxu0
    %5954 = vmatprep.mubr.bf16.mxu0 %v4586
    %5955 = vmatmul.mubr.bf16.gmra.mrb[0].mxu0 %v4585
    %v5956 = vpop.f32.mrb[0].mxu0
    %v5957 = vadd.f32 %v5668, %v5956
    %v5958 = vpop.f32.mrb[0].mxu0
    %v5959 = vpop.f32.mrb[0].mxu0
    %v5960 = vadd.f32 %v5671, %v5959
    %v5961 = vpop.f32.mrb[0].mxu0
    %5962 = vmatprep.mubr.bf16.mxu0 %v4589
    %5963 = vmatmul.mubr.bf16.gmra.mrb[0].mxu0 %v4588
    %v5964 = vpop.f32.mrb[0].mxu0
    %v5965 = vadd.f32 %v5676, %v5964
    %v5966 = vpop.f32.mrb[0].mxu0
    %v5967 = vpop.f32.mrb[0].mxu0
    %v5968 = vadd.f32 %v5679, %v5967
    %v5969 = vpop.f32.mrb[0].mxu0
    %5970 = vmatprep.mubr.bf16.mxu0 %v4592
    %5971 = vmatmul.mubr.bf16.gmra.mrb[0].mxu0 %v4591
    %v5972 = vpop.f32.mrb[0].mxu0
    %v5973 = vadd.f32 %v5684, %v5972
    %v5974 = vpop.f32.mrb[0].mxu0
    %v5975 = vpop.f32.mrb[0].mxu0
    %v5976 = vadd.f32 %v5687, %v5975
    %v5977 = vpop.f32.mrb[0].mxu0
    %5978 = vmatprep.mubr.bf16.mxu0 %v4595
    %5979 = vmatmul.mubr.bf16.gmra.mrb[0].mxu0 %v4594
    %v5980 = vpop.f32.mrb[0].mxu0
    %v5981 = vadd.f32 %v5692, %v5980
    %v5982 = vpop.f32.mrb[0].mxu0
    %v5983 = vpop.f32.mrb[0].mxu0
    %v5984 = vadd.f32 %v5695, %v5983
    %v5985 = vpop.f32.mrb[0].mxu0
    %5986 = vmatprep.mubr.bf16.mxu0 %v4598
    %5987 = vmatmul.mubr.bf16.gmra.mrb[0].mxu0 %v4597
    %v5988 = vpop.f32.mrb[0].mxu0
    %v5989 = vadd.f32 %v5700, %v5988
    %v5990 = vpop.f32.mrb[0].mxu0
    %v5991 = vpop.f32.mrb[0].mxu0
    %v5992 = vadd.f32 %v5703, %v5991
    %v5993 = vpop.f32.mrb[0].mxu0
    %5994 = vmatprep.mubr.bf16.mxu0 %v4601
    %5995 = vmatmul.mubr.bf16.gmra.mrb[0].mxu0 %v4600
    %v5996 = vpop.f32.mrb[0].mxu0
    %v5997 = vadd.f32 %v5708, %v5996
    %v5998 = vpop.f32.mrb[0].mxu0
    %v5999 = vpop.f32.mrb[0].mxu0
    %v6000 = vadd.f32 %v5711, %v5999
    %v6001 = vpop.f32.mrb[0].mxu0
    %6002 = vmatprep.mubr.bf16.mxu0 %v4604
    %6003 = vmatmul.mubr.bf16.gmra.mrb[0].mxu0 %v4603
    %v6004 = vpop.f32.mrb[0].mxu0
    %v6005 = vadd.f32 %v5716, %v6004
    %v6006 = vpop.f32.mrb[0].mxu0
    %v6007 = vpop.f32.mrb[0].mxu0
    %v6008 = vadd.f32 %v5719, %v6007
    %v6009 = vpop.f32.mrb[0].mxu0
    %6010 = vmatprep.mubr.bf16.mxu0 %v4607
    %6011 = vmatmul.mubr.bf16.gmra.mrb[0].mxu0 %v4606
    %v6012 = vpop.f32.mrb[0].mxu0
    %v6013 = vadd.f32 %v5724, %v6012
    %v6014 = vpop.f32.mrb[0].mxu0
    %v6015 = vpop.f32.mrb[0].mxu0
    %v6016 = vadd.f32 %v5727, %v6015
    %v6017 = vpop.f32.mrb[0].mxu0
    %6018 = vmatprep.mubr.bf16.mxu0 %v4610
    %6019 = vmatmul.mubr.bf16.gmra.mrb[0].mxu0 %v4609
    %v6020 = vpop.f32.mrb[0].mxu0
    %v6021 = vadd.f32 %v5732, %v6020
    %v6022 = vpop.f32.mrb[0].mxu0
    %v6023 = vpop.f32.mrb[0].mxu0
    %v6024 = vadd.f32 %v5735, %v6023
    %v6025 = vpop.f32.mrb[0].mxu0
    %6026 = vmatprep.mubr.bf16.mxu0 %v4613
    %6027 = vmatmul.mubr.bf16.gmra.mrb[0].mxu0 %v4612
    %v6028 = vpop.f32.mrb[0].mxu0
    %v6029 = vadd.f32 %v5740, %v6028
    %v6030 = vpop.f32.mrb[0].mxu0
    %v6031 = vpop.f32.mrb[0].mxu0
    %v6032 = vadd.f32 %v5743, %v6031
    %v6033 = vpop.f32.mrb[0].mxu0
    %6034 = vmatprep.mubr.bf16.mxu0 %v4616
    %6035 = vmatmul.mubr.bf16.gmra.mrb[0].mxu0 %v4615
    %v6036 = vpop.f32.mrb[0].mxu0
    %v6037 = vadd.f32 %v5748, %v6036
    %v6038 = vpop.f32.mrb[0].mxu0
    %v6039 = vpop.f32.mrb[0].mxu0
    %v6040 = vadd.f32 %v5751, %v6039
    %v6041 = vpop.f32.mrb[0].mxu0
    %6042 = vmatprep.mubr.bf16.mxu0 %v4619
    %6043 = vmatmul.mubr.bf16.gmra.mrb[0].mxu0 %v4618
    %v6044 = vpop.f32.mrb[0].mxu0
    %v6045 = vadd.f32 %v5756, %v6044
    %v6046 = vpop.f32.mrb[0].mxu0
    %v6047 = vpop.f32.mrb[0].mxu0
    %v6048 = vadd.f32 %v5759, %v6047
    %v6049 = vpop.f32.mrb[0].mxu0
    %6050 = vmatprep.mubr.bf16.mxu0 %v4622
    %6051 = vmatmul.mubr.bf16.gmra.mrb[0].mxu0 %v4621
    %v6052 = vpop.f32.mrb[0].mxu0
    %v6053 = vadd.f32 %v5764, %v6052
    %v6054 = vpop.f32.mrb[0].mxu0
    %v6055 = vpop.f32.mrb[0].mxu0
    %v6056 = vadd.f32 %v5767, %v6055
    %v6057 = vpop.f32.mrb[0].mxu0
    %6058 = vmatprep.mubr.bf16.mxu0 %v4625
    %6059 = vmatmul.mubr.bf16.gmra.mrb[0].mxu0 %v4624
    %v6060 = vpop.f32.mrb[0].mxu0
    %v6061 = vadd.f32 %v5772, %v6060
    %v6062 = vpop.f32.mrb[0].mxu0
    %v6063 = vpop.f32.mrb[0].mxu0
    %v6064 = vadd.f32 %v5775, %v6063
    %v6065 = vpop.f32.mrb[0].mxu0
    %6066 = vmatprep.mubr.bf16.mxu0 %v4628
    %6067 = vmatmul.mubr.bf16.gmra.mrb[0].mxu0 %v4627
    %v6068 = vpop.f32.mrb[0].mxu0
    %v6069 = vadd.f32 %v5780, %v6068
    %v6070 = vpop.f32.mrb[0].mxu0
    %v6071 = vpop.f32.mrb[0].mxu0
    %v6072 = vadd.f32 %v5783, %v6071
    %v6073 = vpop.f32.mrb[0].mxu0
    %6074 = vdwg.mxu0
    %6075 = vmatprep.subr.bf16.mxu0 0
    %6076 = vmatpush1.bf16.msra.mxu0 %v5112
    %6077 = vmatprep.subr.bf16.mxu0 0
    %6078 = vmatpush1.bf16.msra.mxu0 %v5113
    %6079 = vmatprep.subr.bf16.mxu0 0
    %6080 = vmatpush1.bf16.msra.mxu0 %v5114
    %6081 = vmatprep.subr.bf16.mxu0 0
    %6082 = vmatpush1.bf16.msra.mxu0 %v5115
    %6083 = vmatprep.subr.bf16.mxu0 0
    %6084 = vmatpush1.bf16.msra.mxu0 %v5116
    %6085 = vmatprep.subr.bf16.mxu0 0
    %6086 = vmatpush1.bf16.msra.mxu0 %v5117
    %6087 = vmatprep.subr.bf16.mxu0 0
    %6088 = vmatpush1.bf16.msra.mxu0 %v5118
    %6089 = vmatprep.subr.bf16.mxu0 0
    %6090 = vmatpush1.bf16.msra.mxu0 %v5119
    %6091 = vmatprep.subr.bf16.mxu0 0
    %6092 = vmatpush1.bf16.msra.mxu0 %v5120
    %6093 = vmatprep.subr.bf16.mxu0 0
    %6094 = vmatpush1.bf16.msra.mxu0 %v5121
    %6095 = vmatprep.subr.bf16.mxu0 0
    %6096 = vmatpush1.bf16.msra.mxu0 %v5122
    %6097 = vmatprep.subr.bf16.mxu0 0
    %6098 = vmatpush1.bf16.msra.mxu0 %v5123
    %6099 = vmatprep.subr.bf16.mxu0 0
    %6100 = vmatpush1.bf16.msra.mxu0 %v5124
    %6101 = vmatprep.subr.bf16.mxu0 0
    %6102 = vmatpush1.bf16.msra.mxu0 %v5125
    %6103 = vmatprep.subr.bf16.mxu0 0
    %6104 = vmatpush1.bf16.msra.mxu0 %v5126
    %6105 = vmatprep.subr.bf16.mxu0 0
    %6106 = vmatpush1.bf16.msra.mxu0 %v5127
    %6107 = vmatprep.mubr.bf16.mxu0 %v4531
    %6108 = vmatmul.mubr.bf16.gmra.mrb[0].mxu0 %v4530
    %v6109 = vpop.f32.mrb[0].mxu0
    %v6110 = vadd.f32 %v5821, %v6109
    %v6111 = vpop.f32.mrb[0].mxu0
    %v6112 = vpop.f32.mrb[0].mxu0
    %v6113 = vadd.f32 %v5824, %v6112
    %v6114 = vpop.f32.mrb[0].mxu0
    %6115 = vmatprep.mubr.bf16.mxu0 %v4534
    %6116 = vmatmul.mubr.bf16.gmra.mrb[0].mxu0 %v4533
    %v6117 = vpop.f32.mrb[0].mxu0
    %v6118 = vadd.f32 %v5829, %v6117
    %v6119 = vpop.f32.mrb[0].mxu0
    %v6120 = vpop.f32.mrb[0].mxu0
    %v6121 = vadd.f32 %v5832, %v6120
    %v6122 = vpop.f32.mrb[0].mxu0
    %6123 = vmatprep.mubr.bf16.mxu0 %v4537
    %6124 = vmatmul.mubr.bf16.gmra.mrb[0].mxu0 %v4536
    %v6125 = vpop.f32.mrb[0].mxu0
    %v6126 = vadd.f32 %v5837, %v6125
    %v6127 = vpop.f32.mrb[0].mxu0
    %v6128 = vpop.f32.mrb[0].mxu0
    %v6129 = vadd.f32 %v5840, %v6128
    %v6130 = vpop.f32.mrb[0].mxu0
    %6131 = vmatprep.mubr.bf16.mxu0 %v4540
    %6132 = vmatmul.mubr.bf16.gmra.mrb[0].mxu0 %v4539
    %v6133 = vpop.f32.mrb[0].mxu0
    %v6134 = vadd.f32 %v5845, %v6133
    %v6135 = vpop.f32.mrb[0].mxu0
    %v6136 = vpop.f32.mrb[0].mxu0
    %v6137 = vadd.f32 %v5848, %v6136
    %v6138 = vpop.f32.mrb[0].mxu0
    %6139 = vmatprep.mubr.bf16.mxu0 %v4543
    %6140 = vmatmul.mubr.bf16.gmra.mrb[0].mxu0 %v4542
    %v6141 = vpop.f32.mrb[0].mxu0
    %v6142 = vadd.f32 %v5853, %v6141
    %v6143 = vpop.f32.mrb[0].mxu0
    %v6144 = vpop.f32.mrb[0].mxu0
    %v6145 = vadd.f32 %v5856, %v6144
    %v6146 = vpop.f32.mrb[0].mxu0
    %6147 = vmatprep.mubr.bf16.mxu0 %v4546
    %6148 = vmatmul.mubr.bf16.gmra.mrb[0].mxu0 %v4545
    %v6149 = vpop.f32.mrb[0].mxu0
    %v6150 = vadd.f32 %v5861, %v6149
    %v6151 = vpop.f32.mrb[0].mxu0
    %v6152 = vpop.f32.mrb[0].mxu0
    %v6153 = vadd.f32 %v5864, %v6152
    %v6154 = vpop.f32.mrb[0].mxu0
    %6155 = vmatprep.mubr.bf16.mxu0 %v4549
    %6156 = vmatmul.mubr.bf16.gmra.mrb[0].mxu0 %v4548
    %v6157 = vpop.f32.mrb[0].mxu0
    %v6158 = vadd.f32 %v5869, %v6157
    %v6159 = vpop.f32.mrb[0].mxu0
    %v6160 = vpop.f32.mrb[0].mxu0
    %v6161 = vadd.f32 %v5872, %v6160
    %v6162 = vpop.f32.mrb[0].mxu0
    %6163 = vmatprep.mubr.bf16.mxu0 %v4552
    %6164 = vmatmul.mubr.bf16.gmra.mrb[0].mxu0 %v4551
    %v6165 = vpop.f32.mrb[0].mxu0
    %v6166 = vadd.f32 %v5877, %v6165
    %v6167 = vpop.f32.mrb[0].mxu0
    %v6168 = vpop.f32.mrb[0].mxu0
    %v6169 = vadd.f32 %v5880, %v6168
    %v6170 = vpop.f32.mrb[0].mxu0
    %6171 = vmatprep.mubr.bf16.mxu0 %v4555
    %6172 = vmatmul.mubr.bf16.gmra.mrb[0].mxu0 %v4554
    %v6173 = vpop.f32.mrb[0].mxu0
    %v6174 = vadd.f32 %v5885, %v6173
    %v6175 = vpop.f32.mrb[0].mxu0
    %v6176 = vpop.f32.mrb[0].mxu0
    %v6177 = vadd.f32 %v5888, %v6176
    %v6178 = vpop.f32.mrb[0].mxu0
    %6179 = vmatprep.mubr.bf16.mxu0 %v4558
    %6180 = vmatmul.mubr.bf16.gmra.mrb[0].mxu0 %v4557
    %v6181 = vpop.f32.mrb[0].mxu0
    %v6182 = vadd.f32 %v5893, %v6181
    %v6183 = vpop.f32.mrb[0].mxu0
    %v6184 = vpop.f32.mrb[0].mxu0
    %v6185 = vadd.f32 %v5896, %v6184
    %v6186 = vpop.f32.mrb[0].mxu0
    %6187 = vmatprep.mubr.bf16.mxu0 %v4561
    %6188 = vmatmul.mubr.bf16.gmra.mrb[0].mxu0 %v4560
    %v6189 = vpop.f32.mrb[0].mxu0
    %v6190 = vadd.f32 %v5901, %v6189
    %v6191 = vpop.f32.mrb[0].mxu0
    %v6192 = vpop.f32.mrb[0].mxu0
    %v6193 = vadd.f32 %v5904, %v6192
    %v6194 = vpop.f32.mrb[0].mxu0
    %6195 = vmatprep.mubr.bf16.mxu0 %v4564
    %6196 = vmatmul.mubr.bf16.gmra.mrb[0].mxu0 %v4563
    %v6197 = vpop.f32.mrb[0].mxu0
    %v6198 = vadd.f32 %v5909, %v6197
    %v6199 = vpop.f32.mrb[0].mxu0
    %v6200 = vpop.f32.mrb[0].mxu0
    %v6201 = vadd.f32 %v5912, %v6200
    %v6202 = vpop.f32.mrb[0].mxu0
    %6203 = vmatprep.mubr.bf16.mxu0 %v4567
    %6204 = vmatmul.mubr.bf16.gmra.mrb[0].mxu0 %v4566
    %v6205 = vpop.f32.mrb[0].mxu0
    %v6206 = vadd.f32 %v5917, %v6205
    %v6207 = vpop.f32.mrb[0].mxu0
    %v6208 = vpop.f32.mrb[0].mxu0
    %v6209 = vadd.f32 %v5920, %v6208
    %v6210 = vpop.f32.mrb[0].mxu0
    %6211 = vmatprep.mubr.bf16.mxu0 %v4570
    %6212 = vmatmul.mubr.bf16.gmra.mrb[0].mxu0 %v4569
    %v6213 = vpop.f32.mrb[0].mxu0
    %v6214 = vadd.f32 %v5925, %v6213
    %v6215 = vpop.f32.mrb[0].mxu0
    %v6216 = vpop.f32.mrb[0].mxu0
    %v6217 = vadd.f32 %v5928, %v6216
    %v6218 = vpop.f32.mrb[0].mxu0
    %6219 = vmatprep.mubr.bf16.mxu0 %v4573
    %6220 = vmatmul.mubr.bf16.gmra.mrb[0].mxu0 %v4572
    %v6221 = vpop.f32.mrb[0].mxu0
    %v6222 = vadd.f32 %v5933, %v6221
    %v6223 = vpop.f32.mrb[0].mxu0
    %v6224 = vpop.f32.mrb[0].mxu0
    %v6225 = vadd.f32 %v5936, %v6224
    %v6226 = vpop.f32.mrb[0].mxu0
    %6227 = vmatprep.mubr.bf16.mxu0 %v4576
    %6228 = vmatmul.mubr.bf16.gmra.mrb[0].mxu0 %v4575
    %v6229 = vpop.f32.mrb[0].mxu0
    %v6230 = vadd.f32 %v5941, %v6229
    %v6231 = vpop.f32.mrb[0].mxu0
    %v6232 = vpop.f32.mrb[0].mxu0
    %v6233 = vadd.f32 %v5944, %v6232
    %v6234 = vpop.f32.mrb[0].mxu0
    %6235 = vmatprep.mubr.bf16.mxu0 %v4585
    %6236 = vmatmul.mubr.bf16.gmra.mrb[0].mxu0 %v4584
    %v6237 = vpop.f32.mrb[0].mxu0
    %v6238 = vadd.f32 %v5949, %v6237
    %v6239 = vpop.f32.mrb[0].mxu0
    %v6240 = vpop.f32.mrb[0].mxu0
    %v6241 = vadd.f32 %v5952, %v6240
    %v6242 = vpop.f32.mrb[0].mxu0
    %6243 = vmatprep.mubr.bf16.mxu0 %v4588
    %6244 = vmatmul.mubr.bf16.gmra.mrb[0].mxu0 %v4587
    %v6245 = vpop.f32.mrb[0].mxu0
    %v6246 = vadd.f32 %v5957, %v6245
    %v6247 = vpop.f32.mrb[0].mxu0
    %v6248 = vpop.f32.mrb[0].mxu0
    %v6249 = vadd.f32 %v5960, %v6248
    %v6250 = vpop.f32.mrb[0].mxu0
    %6251 = vmatprep.mubr.bf16.mxu0 %v4591
    %6252 = vmatmul.mubr.bf16.gmra.mrb[0].mxu0 %v4590
    %v6253 = vpop.f32.mrb[0].mxu0
    %v6254 = vadd.f32 %v5965, %v6253
    %v6255 = vpop.f32.mrb[0].mxu0
    %v6256 = vpop.f32.mrb[0].mxu0
    %v6257 = vadd.f32 %v5968, %v6256
    %v6258 = vpop.f32.mrb[0].mxu0
    %6259 = vmatprep.mubr.bf16.mxu0 %v4594
    %6260 = vmatmul.mubr.bf16.gmra.mrb[0].mxu0 %v4593
    %v6261 = vpop.f32.mrb[0].mxu0
    %v6262 = vadd.f32 %v5973, %v6261
    %v6263 = vpop.f32.mrb[0].mxu0
    %v6264 = vpop.f32.mrb[0].mxu0
    %v6265 = vadd.f32 %v5976, %v6264
    %v6266 = vpop.f32.mrb[0].mxu0
    %6267 = vmatprep.mubr.bf16.mxu0 %v4597
    %6268 = vmatmul.mubr.bf16.gmra.mrb[0].mxu0 %v4596
    %v6269 = vpop.f32.mrb[0].mxu0
    %v6270 = vadd.f32 %v5981, %v6269
    %v6271 = vpop.f32.mrb[0].mxu0
    %v6272 = vpop.f32.mrb[0].mxu0
    %v6273 = vadd.f32 %v5984, %v6272
    %v6274 = vpop.f32.mrb[0].mxu0
    %6275 = vmatprep.mubr.bf16.mxu0 %v4600
    %6276 = vmatmul.mubr.bf16.gmra.mrb[0].mxu0 %v4599
    %v6277 = vpop.f32.mrb[0].mxu0
    %v6278 = vadd.f32 %v5989, %v6277
    %v6279 = vpop.f32.mrb[0].mxu0
    %v6280 = vpop.f32.mrb[0].mxu0
    %v6281 = vadd.f32 %v5992, %v6280
    %v6282 = vpop.f32.mrb[0].mxu0
    %6283 = vmatprep.mubr.bf16.mxu0 %v4603
    %6284 = vmatmul.mubr.bf16.gmra.mrb[0].mxu0 %v4602
    %v6285 = vpop.f32.mrb[0].mxu0
    %v6286 = vadd.f32 %v5997, %v6285
    %v6287 = vpop.f32.mrb[0].mxu0
    %v6288 = vpop.f32.mrb[0].mxu0
    %v6289 = vadd.f32 %v6000, %v6288
    %v6290 = vpop.f32.mrb[0].mxu0
    %6291 = vmatprep.mubr.bf16.mxu0 %v4606
    %6292 = vmatmul.mubr.bf16.gmra.mrb[0].mxu0 %v4605
    %v6293 = vpop.f32.mrb[0].mxu0
    %v6294 = vadd.f32 %v6005, %v6293
    %v6295 = vpop.f32.mrb[0].mxu0
    %v6296 = vpop.f32.mrb[0].mxu0
    %v6297 = vadd.f32 %v6008, %v6296
    %v6298 = vpop.f32.mrb[0].mxu0
    %6299 = vmatprep.mubr.bf16.mxu0 %v4609
    %6300 = vmatmul.mubr.bf16.gmra.mrb[0].mxu0 %v4608
    %v6301 = vpop.f32.mrb[0].mxu0
    %v6302 = vadd.f32 %v6013, %v6301
    %v6303 = vpop.f32.mrb[0].mxu0
    %v6304 = vpop.f32.mrb[0].mxu0
    %v6305 = vadd.f32 %v6016, %v6304
    %v6306 = vpop.f32.mrb[0].mxu0
    %6307 = vmatprep.mubr.bf16.mxu0 %v4612
    %6308 = vmatmul.mubr.bf16.gmra.mrb[0].mxu0 %v4611
    %v6309 = vpop.f32.mrb[0].mxu0
    %v6310 = vadd.f32 %v6021, %v6309
    %v6311 = vpop.f32.mrb[0].mxu0
    %v6312 = vpop.f32.mrb[0].mxu0
    %v6313 = vadd.f32 %v6024, %v6312
    %v6314 = vpop.f32.mrb[0].mxu0
    %6315 = vmatprep.mubr.bf16.mxu0 %v4615
    %6316 = vmatmul.mubr.bf16.gmra.mrb[0].mxu0 %v4614
    %v6317 = vpop.f32.mrb[0].mxu0
    %v6318 = vadd.f32 %v6029, %v6317
    %v6319 = vpop.f32.mrb[0].mxu0
    %v6320 = vpop.f32.mrb[0].mxu0
    %v6321 = vadd.f32 %v6032, %v6320
    %v6322 = vpop.f32.mrb[0].mxu0
    %6323 = vmatprep.mubr.bf16.mxu0 %v4618
    %6324 = vmatmul.mubr.bf16.gmra.mrb[0].mxu0 %v4617
    %v6325 = vpop.f32.mrb[0].mxu0
    %v6326 = vadd.f32 %v6037, %v6325
    %v6327 = vpop.f32.mrb[0].mxu0
    %v6328 = vpop.f32.mrb[0].mxu0
    %v6329 = vadd.f32 %v6040, %v6328
    %v6330 = vpop.f32.mrb[0].mxu0
    %6331 = vmatprep.mubr.bf16.mxu0 %v4621
    %6332 = vmatmul.mubr.bf16.gmra.mrb[0].mxu0 %v4620
    %v6333 = vpop.f32.mrb[0].mxu0
    %v6334 = vadd.f32 %v6045, %v6333
    %v6335 = vpop.f32.mrb[0].mxu0
    %v6336 = vpop.f32.mrb[0].mxu0
    %v6337 = vadd.f32 %v6048, %v6336
    %v6338 = vpop.f32.mrb[0].mxu0
    %6339 = vmatprep.mubr.bf16.mxu0 %v4624
    %6340 = vmatmul.mubr.bf16.gmra.mrb[0].mxu0 %v4623
    %v6341 = vpop.f32.mrb[0].mxu0
    %v6342 = vadd.f32 %v6053, %v6341
    %v6343 = vpop.f32.mrb[0].mxu0
    %v6344 = vpop.f32.mrb[0].mxu0
    %v6345 = vadd.f32 %v6056, %v6344
    %v6346 = vpop.f32.mrb[0].mxu0
    %6347 = vmatprep.mubr.bf16.mxu0 %v4627
    %6348 = vmatmul.mubr.bf16.gmra.mrb[0].mxu0 %v4626
    %v6349 = vpop.f32.mrb[0].mxu0
    %v6350 = vadd.f32 %v6061, %v6349
    %v6351 = vpop.f32.mrb[0].mxu0
    %v6352 = vpop.f32.mrb[0].mxu0
    %v6353 = vadd.f32 %v6064, %v6352
    %v6354 = vpop.f32.mrb[0].mxu0
    %6355 = vmatprep.mubr.bf16.mxu0 %v4630
    %6356 = vmatmul.mubr.bf16.gmra.mrb[0].mxu0 %v4629
    %v6357 = vpop.f32.mrb[0].mxu0
    %v6358 = vadd.f32 %v6069, %v6357
    %v6359 = vpop.f32.mrb[0].mxu0
    %v6360 = vpop.f32.mrb[0].mxu0
    %v6361 = vadd.f32 %v6072, %v6360
    %v6362 = vpop.f32.mrb[0].mxu0
    %6363 = vdwg.mxu0
    %6364 = vmatprep.subr.bf16.mxu0 0
    %6365 = vmatpush1.bf16.msra.mxu0 %v5128
    %6366 = vmatprep.subr.bf16.mxu0 0
    %6367 = vmatpush1.bf16.msra.mxu0 %v5129
    %6368 = vmatprep.subr.bf16.mxu0 0
    %6369 = vmatpush1.bf16.msra.mxu0 %v5130
    %6370 = vmatprep.subr.bf16.mxu0 0
    %6371 = vmatpush1.bf16.msra.mxu0 %v5131
    %6372 = vmatprep.subr.bf16.mxu0 0
    %6373 = vmatpush1.bf16.msra.mxu0 %v5132
    %6374 = vmatprep.subr.bf16.mxu0 0
    %6375 = vmatpush1.bf16.msra.mxu0 %v5133
    %6376 = vmatprep.subr.bf16.mxu0 0
    %6377 = vmatpush1.bf16.msra.mxu0 %v5134
    %6378 = vmatprep.subr.bf16.mxu0 0
    %6379 = vmatpush1.bf16.msra.mxu0 %v5135
    %6380 = vmatprep.subr.bf16.mxu0 0
    %6381 = vmatpush1.bf16.msra.mxu0 0
    %6382 = vmatprep.subr.bf16.mxu0 0
    %6383 = vmatpush1.bf16.msra.mxu0 0
    %6384 = vmatprep.subr.bf16.mxu0 0
    %6385 = vmatpush1.bf16.msra.mxu0 0
    %6386 = vmatprep.subr.bf16.mxu0 0
    %6387 = vmatpush1.bf16.msra.mxu0 0
    %6388 = vmatprep.subr.bf16.mxu0 0
    %6389 = vmatpush1.bf16.msra.mxu0 0
    %6390 = vmatprep.subr.bf16.mxu0 0
    %6391 = vmatpush1.bf16.msra.mxu0 0
    %6392 = vmatprep.subr.bf16.mxu0 0
    %6393 = vmatpush1.bf16.msra.mxu0 0
    %6394 = vmatprep.subr.bf16.mxu0 0
    %6395 = vmatpush1.bf16.msra.mxu0 0
    %6396 = vmatprep.mubr.bf16.mxu0 0
    %6397 = vmatmul.mubr.bf16.gmra.mrb[0].mxu0 %v4532
    %v6398 = vpop.f32.mrb[0].mxu0
    %v6399 = vadd.f32 %v6110, %v6398
    %v6400 = vpop.f32.mrb[0].mxu0
    %v6401 = vpop.f32.mrb[0].mxu0
    %v6402 = vadd.f32 %v6113, %v6401
    %v6403 = vpop.f32.mrb[0].mxu0
    %6404 = vmatprep.mubr.bf16.mxu0 0
    %6405 = vmatmul.mubr.bf16.gmra.mrb[0].mxu0 %v4535
    %v6406 = vpop.f32.mrb[0].mxu0
    %v6407 = vadd.f32 %v6118, %v6406
    %v6408 = vpop.f32.mrb[0].mxu0
    %v6409 = vpop.f32.mrb[0].mxu0
    %v6410 = vadd.f32 %v6121, %v6409
    %v6411 = vpop.f32.mrb[0].mxu0
    %6412 = vmatprep.mubr.bf16.mxu0 0
    %6413 = vmatmul.mubr.bf16.gmra.mrb[0].mxu0 %v4538
    %v6414 = vpop.f32.mrb[0].mxu0
    %v6415 = vadd.f32 %v6126, %v6414
    %v6416 = vpop.f32.mrb[0].mxu0
    %v6417 = vpop.f32.mrb[0].mxu0
    %v6418 = vadd.f32 %v6129, %v6417
    %v6419 = vpop.f32.mrb[0].mxu0
    %6420 = vmatprep.mubr.bf16.mxu0 0
    %6421 = vmatmul.mubr.bf16.gmra.mrb[0].mxu0 %v4541
    %v6422 = vpop.f32.mrb[0].mxu0
    %v6423 = vadd.f32 %v6134, %v6422
    %v6424 = vpop.f32.mrb[0].mxu0
    %v6425 = vpop.f32.mrb[0].mxu0
    %v6426 = vadd.f32 %v6137, %v6425
    %v6427 = vpop.f32.mrb[0].mxu0
    %6428 = vmatprep.mubr.bf16.mxu0 0
    %6429 = vmatmul.mubr.bf16.gmra.mrb[0].mxu0 %v4544
    %v6430 = vpop.f32.mrb[0].mxu0
    %v6431 = vadd.f32 %v6142, %v6430
    %v6432 = vpop.f32.mrb[0].mxu0
    %v6433 = vpop.f32.mrb[0].mxu0
    %v6434 = vadd.f32 %v6145, %v6433
    %v6435 = vpop.f32.mrb[0].mxu0
    %6436 = vmatprep.mubr.bf16.mxu0 0
    %6437 = vmatmul.mubr.bf16.gmra.mrb[0].mxu0 %v4547
    %v6438 = vpop.f32.mrb[0].mxu0
    %v6439 = vadd.f32 %v6150, %v6438
    %v6440 = vpop.f32.mrb[0].mxu0
    %v6441 = vpop.f32.mrb[0].mxu0
    %v6442 = vadd.f32 %v6153, %v6441
    %v6443 = vpop.f32.mrb[0].mxu0
    %6444 = vmatprep.mubr.bf16.mxu0 0
    %6445 = vmatmul.mubr.bf16.gmra.mrb[0].mxu0 %v4550
    %v6446 = vpop.f32.mrb[0].mxu0
    %v6447 = vadd.f32 %v6158, %v6446
    %v6448 = vpop.f32.mrb[0].mxu0
    %v6449 = vpop.f32.mrb[0].mxu0
    %v6450 = vadd.f32 %v6161, %v6449
    %v6451 = vpop.f32.mrb[0].mxu0
    %6452 = vmatprep.mubr.bf16.mxu0 0
    %6453 = vmatmul.mubr.bf16.gmra.mrb[0].mxu0 %v4553
    %v6454 = vpop.f32.mrb[0].mxu0
    %v6455 = vadd.f32 %v6166, %v6454
    %v6456 = vpop.f32.mrb[0].mxu0
    %v6457 = vpop.f32.mrb[0].mxu0
    %v6458 = vadd.f32 %v6169, %v6457
    %v6459 = vpop.f32.mrb[0].mxu0
    %6460 = vmatprep.mubr.bf16.mxu0 0
    %6461 = vmatmul.mubr.bf16.gmra.mrb[0].mxu0 %v4556
    %v6462 = vpop.f32.mrb[0].mxu0
    %v6463 = vadd.f32 %v6174, %v6462
    %v6464 = vpop.f32.mrb[0].mxu0
    %v6465 = vpop.f32.mrb[0].mxu0
    %v6466 = vadd.f32 %v6177, %v6465
    %v6467 = vpop.f32.mrb[0].mxu0
    %6468 = vmatprep.mubr.bf16.mxu0 0
    %6469 = vmatmul.mubr.bf16.gmra.mrb[0].mxu0 %v4559
    %v6470 = vpop.f32.mrb[0].mxu0
    %v6471 = vadd.f32 %v6182, %v6470
    %v6472 = vpop.f32.mrb[0].mxu0
    %v6473 = vpop.f32.mrb[0].mxu0
    %v6474 = vadd.f32 %v6185, %v6473
    %v6475 = vpop.f32.mrb[0].mxu0
    %6476 = vmatprep.mubr.bf16.mxu0 0
    %6477 = vmatmul.mubr.bf16.gmra.mrb[0].mxu0 %v4562
    %v6478 = vpop.f32.mrb[0].mxu0
    %v6479 = vadd.f32 %v6190, %v6478
    %v6480 = vpop.f32.mrb[0].mxu0
    %v6481 = vpop.f32.mrb[0].mxu0
    %v6482 = vadd.f32 %v6193, %v6481
    %v6483 = vpop.f32.mrb[0].mxu0
    %6484 = vmatprep.mubr.bf16.mxu0 0
    %6485 = vmatmul.mubr.bf16.gmra.mrb[0].mxu0 %v4565
    %v6486 = vpop.f32.mrb[0].mxu0
    %v6487 = vadd.f32 %v6198, %v6486
    %v6488 = vpop.f32.mrb[0].mxu0
    %v6489 = vpop.f32.mrb[0].mxu0
    %v6490 = vadd.f32 %v6201, %v6489
    %v6491 = vpop.f32.mrb[0].mxu0
    %6492 = vmatprep.mubr.bf16.mxu0 0
    %6493 = vmatmul.mubr.bf16.gmra.mrb[0].mxu0 %v4568
    %v6494 = vpop.f32.mrb[0].mxu0
    %v6495 = vadd.f32 %v6206, %v6494
    %v6496 = vpop.f32.mrb[0].mxu0
    %v6497 = vpop.f32.mrb[0].mxu0
    %v6498 = vadd.f32 %v6209, %v6497
    %v6499 = vpop.f32.mrb[0].mxu0
    %6500 = vmatprep.mubr.bf16.mxu0 0
    %6501 = vmatmul.mubr.bf16.gmra.mrb[0].mxu0 %v4571
    %v6502 = vpop.f32.mrb[0].mxu0
    %v6503 = vadd.f32 %v6214, %v6502
    %v6504 = vpop.f32.mrb[0].mxu0
    %v6505 = vpop.f32.mrb[0].mxu0
    %v6506 = vadd.f32 %v6217, %v6505
    %v6507 = vpop.f32.mrb[0].mxu0
    %6508 = vmatprep.mubr.bf16.mxu0 0
    %6509 = vmatmul.mubr.bf16.gmra.mrb[0].mxu0 %v4574
    %v6510 = vpop.f32.mrb[0].mxu0
    %v6511 = vadd.f32 %v6222, %v6510
    %v6512 = vpop.f32.mrb[0].mxu0
    %v6513 = vpop.f32.mrb[0].mxu0
    %v6514 = vadd.f32 %v6225, %v6513
    %v6515 = vpop.f32.mrb[0].mxu0
    %6516 = vmatprep.mubr.bf16.mxu0 0
    %6517 = vmatmul.mubr.bf16.gmra.mrb[0].mxu0 %v4577
    %v6518 = vpop.f32.mrb[0].mxu0
    %v6519 = vadd.f32 %v6230, %v6518
    %v6520 = vpop.f32.mrb[0].mxu0
    %v6521 = vpop.f32.mrb[0].mxu0
    %v6522 = vadd.f32 %v6233, %v6521
    %v6523 = vpop.f32.mrb[0].mxu0
    %6524 = vmatprep.mubr.bf16.mxu0 0
    %6525 = vmatmul.mubr.bf16.gmra.mrb[0].mxu0 %v4586
    %v6526 = vpop.f32.mrb[0].mxu0
    %v6527 = vadd.f32 %v6238, %v6526
    %v6528 = vpop.f32.mrb[0].mxu0
    %v6529 = vpop.f32.mrb[0].mxu0
    %v6530 = vadd.f32 %v6241, %v6529
    %v6531 = vpop.f32.mrb[0].mxu0
    %6532 = vmatprep.mubr.bf16.mxu0 0
    %6533 = vmatmul.mubr.bf16.gmra.mrb[0].mxu0 %v4589
    %v6534 = vpop.f32.mrb[0].mxu0
    %v6535 = vadd.f32 %v6246, %v6534
    %v6536 = vpop.f32.mrb[0].mxu0
    %v6537 = vpop.f32.mrb[0].mxu0
    %v6538 = vadd.f32 %v6249, %v6537
    %v6539 = vpop.f32.mrb[0].mxu0
    %6540 = vmatprep.mubr.bf16.mxu0 0
    %6541 = vmatmul.mubr.bf16.gmra.mrb[0].mxu0 %v4592
    %v6542 = vpop.f32.mrb[0].mxu0
    %v6543 = vadd.f32 %v6254, %v6542
    %v6544 = vpop.f32.mrb[0].mxu0
    %v6545 = vpop.f32.mrb[0].mxu0
    %v6546 = vadd.f32 %v6257, %v6545
    %v6547 = vpop.f32.mrb[0].mxu0
    %6548 = vmatprep.mubr.bf16.mxu0 0
    %6549 = vmatmul.mubr.bf16.gmra.mrb[0].mxu0 %v4595
    %v6550 = vpop.f32.mrb[0].mxu0
    %v6551 = vadd.f32 %v6262, %v6550
    %v6552 = vpop.f32.mrb[0].mxu0
    %v6553 = vpop.f32.mrb[0].mxu0
    %v6554 = vadd.f32 %v6265, %v6553
    %v6555 = vpop.f32.mrb[0].mxu0
    %6556 = vmatprep.mubr.bf16.mxu0 0
    %6557 = vmatmul.mubr.bf16.gmra.mrb[0].mxu0 %v4598
    %v6558 = vpop.f32.mrb[0].mxu0
    %v6559 = vadd.f32 %v6270, %v6558
    %v6560 = vpop.f32.mrb[0].mxu0
    %v6561 = vpop.f32.mrb[0].mxu0
    %v6562 = vadd.f32 %v6273, %v6561
    %v6563 = vpop.f32.mrb[0].mxu0
    %6564 = vmatprep.mubr.bf16.mxu0 0
    %6565 = vmatmul.mubr.bf16.gmra.mrb[0].mxu0 %v4601
    %v6566 = vpop.f32.mrb[0].mxu0
    %v6567 = vadd.f32 %v6278, %v6566
    %v6568 = vpop.f32.mrb[0].mxu0
    %v6569 = vpop.f32.mrb[0].mxu0
    %v6570 = vadd.f32 %v6281, %v6569
    %v6571 = vpop.f32.mrb[0].mxu0
    %6572 = vmatprep.mubr.bf16.mxu0 0
    %6573 = vmatmul.mubr.bf16.gmra.mrb[0].mxu0 %v4604
    %v6574 = vpop.f32.mrb[0].mxu0
    %v6575 = vadd.f32 %v6286, %v6574
    %v6576 = vpop.f32.mrb[0].mxu0
    %v6577 = vpop.f32.mrb[0].mxu0
    %v6578 = vadd.f32 %v6289, %v6577
    %v6579 = vpop.f32.mrb[0].mxu0
    %6580 = vmatprep.mubr.bf16.mxu0 0
    %6581 = vmatmul.mubr.bf16.gmra.mrb[0].mxu0 %v4607
    %v6582 = vpop.f32.mrb[0].mxu0
    %v6583 = vadd.f32 %v6294, %v6582
    %v6584 = vpop.f32.mrb[0].mxu0
    %v6585 = vpop.f32.mrb[0].mxu0
    %v6586 = vadd.f32 %v6297, %v6585
    %v6587 = vpop.f32.mrb[0].mxu0
    %6588 = vmatprep.mubr.bf16.mxu0 0
    %6589 = vmatmul.mubr.bf16.gmra.mrb[0].mxu0 %v4610
    %v6590 = vpop.f32.mrb[0].mxu0
    %v6591 = vadd.f32 %v6302, %v6590
    %v6592 = vpop.f32.mrb[0].mxu0
    %v6593 = vpop.f32.mrb[0].mxu0
    %v6594 = vadd.f32 %v6305, %v6593
    %v6595 = vpop.f32.mrb[0].mxu0
    %6596 = vmatprep.mubr.bf16.mxu0 0
    %6597 = vmatmul.mubr.bf16.gmra.mrb[0].mxu0 %v4613
    %v6598 = vpop.f32.mrb[0].mxu0
    %v6599 = vadd.f32 %v6310, %v6598
    %v6600 = vpop.f32.mrb[0].mxu0
    %v6601 = vpop.f32.mrb[0].mxu0
    %v6602 = vadd.f32 %v6313, %v6601
    %v6603 = vpop.f32.mrb[0].mxu0
    %6604 = vmatprep.mubr.bf16.mxu0 0
    %6605 = vmatmul.mubr.bf16.gmra.mrb[0].mxu0 %v4616
    %v6606 = vpop.f32.mrb[0].mxu0
    %v6607 = vadd.f32 %v6318, %v6606
    %v6608 = vpop.f32.mrb[0].mxu0
    %v6609 = vpop.f32.mrb[0].mxu0
    %v6610 = vadd.f32 %v6321, %v6609
    %v6611 = vpop.f32.mrb[0].mxu0
    %6612 = vmatprep.mubr.bf16.mxu0 0
    %6613 = vmatmul.mubr.bf16.gmra.mrb[0].mxu0 %v4619
    %v6614 = vpop.f32.mrb[0].mxu0
    %v6615 = vadd.f32 %v6326, %v6614
    %v6616 = vpop.f32.mrb[0].mxu0
    %v6617 = vpop.f32.mrb[0].mxu0
    %v6618 = vadd.f32 %v6329, %v6617
    %v6619 = vpop.f32.mrb[0].mxu0
    %6620 = vmatprep.mubr.bf16.mxu0 0
    %6621 = vmatmul.mubr.bf16.gmra.mrb[0].mxu0 %v4622
    %v6622 = vpop.f32.mrb[0].mxu0
    %v6623 = vadd.f32 %v6334, %v6622
    %v6624 = vpop.f32.mrb[0].mxu0
    %v6625 = vpop.f32.mrb[0].mxu0
    %v6626 = vadd.f32 %v6337, %v6625
    %v6627 = vpop.f32.mrb[0].mxu0
    %6628 = vmatprep.mubr.bf16.mxu0 0
    %6629 = vmatmul.mubr.bf16.gmra.mrb[0].mxu0 %v4625
    %v6630 = vpop.f32.mrb[0].mxu0
    %v6631 = vadd.f32 %v6342, %v6630
    %v6632 = vpop.f32.mrb[0].mxu0
    %v6633 = vpop.f32.mrb[0].mxu0
    %v6634 = vadd.f32 %v6345, %v6633
    %v6635 = vpop.f32.mrb[0].mxu0
    %6636 = vmatprep.mubr.bf16.mxu0 0
    %6637 = vmatmul.mubr.bf16.gmra.mrb[0].mxu0 %v4628
    %v6638 = vpop.f32.mrb[0].mxu0
    %v6639 = vadd.f32 %v6350, %v6638
    %v6640 = vpop.f32.mrb[0].mxu0
    %v6641 = vpop.f32.mrb[0].mxu0
    %v6642 = vadd.f32 %v6353, %v6641
    %v6643 = vpop.f32.mrb[0].mxu0
    %6644 = vmatprep.mubr.bf16.mxu0 0
    %6645 = vmatmul.mubr.bf16.gmra.mrb[0].mxu0 %v4631
    %v6646 = vpop.f32.mrb[0].mxu0
    %v6647 = vadd.f32 %v6358, %v6646
    %v6648 = vpop.f32.mrb[0].mxu0
    %v6649 = vpop.f32.mrb[0].mxu0
    %v6650 = vadd.f32 %v6361, %v6649
    %v6651 = vpop.f32.mrb[0].mxu0
    %6652 = vdwg.mxu0
    %v6653 = vadd.f32 %v6399, %v6402
    %v6654 = vadd.f32 %v6653, %v6407
    %v6655 = vadd.f32 %v6654, %v6410
    %v6656 = vadd.f32 %v6655, %v6415
    %v6657 = vadd.f32 %v6656, %v6418
    %v6658 = vadd.f32 %v6657, %v6423
    %v6659 = vadd.f32 %v6658, %v6426
    %v6660 = vadd.f32 %v6659, %v6431
    %v6661 = vadd.f32 %v6660, %v6434
    %v6662 = vadd.f32 %v6661, %v6439
    %v6663 = vadd.f32 %v6662, %v6442
    %v6664 = vadd.f32 %v6663, %v6447
    %v6665 = vadd.f32 %v6664, %v6450
    %v6666 = vadd.f32 %v6665, %v6455
    %v6667 = vadd.f32 %v6666, %v6458
    %v6668 = vadd.f32 %v6667, %v6463
    %v6669 = vadd.f32 %v6668, %v6466
    %v6670 = vadd.f32 %v6669, %v6471
    %v6671 = vadd.f32 %v6670, %v6474
    %v6672 = vadd.f32 %v6671, %v6479
    %v6673 = vadd.f32 %v6672, %v6482
    %v6674 = vadd.f32 %v6673, %v6487
    %v6675 = vadd.f32 %v6674, %v6490
    %v6676 = vadd.f32 %v6675, %v6495
    %v6677 = vadd.f32 %v6676, %v6498
    %v6678 = vadd.f32 %v6677, %v6503
    %v6679 = vadd.f32 %v6678, %v6506
    %v6680 = vadd.f32 %v6679, %v6511
    %v6681 = vadd.f32 %v6680, %v6514
    %v6682 = vadd.f32 %v6681, %v6519
    %v6683 = vadd.f32 %v6682, %v6522
    %v6684 = vadd.f32 %v6683, %v6527
    %v6685 = vadd.f32 %v6684, %v6530
    %v6686 = vadd.f32 %v6685, %v6535
    %v6687 = vadd.f32 %v6686, %v6538
    %v6688 = vadd.f32 %v6687, %v6543
    %v6689 = vadd.f32 %v6688, %v6546
    %v6690 = vadd.f32 %v6689, %v6551
    %v6691 = vadd.f32 %v6690, %v6554
    %v6692 = vadd.f32 %v6691, %v6559
    %v6693 = vadd.f32 %v6692, %v6562
    %v6694 = vadd.f32 %v6693, %v6567
    %v6695 = vadd.f32 %v6694, %v6570
    %v6696 = vadd.f32 %v6695, %v6575
    %v6697 = vadd.f32 %v6696, %v6578
    %v6698 = vadd.f32 %v6697, %v6583
    %v6699 = vadd.f32 %v6698, %v6586
    %v6700 = vadd.f32 %v6699, %v6591
    %v6701 = vadd.f32 %v6700, %v6594
    %v6702 = vadd.f32 %v6701, %v6599
    %v6703 = vadd.f32 %v6702, %v6602
    %v6704 = vadd.f32 %v6703, %v6607
    %v6705 = vadd.f32 %v6704, %v6610
    %v6706 = vadd.f32 %v6705, %v6615
    %v6707 = vadd.f32 %v6706, %v6618
    %v6708 = vadd.f32 %v6707, %v6623
    %v6709 = vadd.f32 %v6708, %v6626
    %v6710 = vadd.f32 %v6709, %v6631
    %v6711 = vadd.f32 %v6710, %v6634
    %v6712 = vadd.f32 %v6711, %v6639
    %v6713 = vadd.f32 %v6712, %v6642
    %v6714 = vadd.f32 %v6713, %v6647
    %v6715 = vadd.f32 %v6714, %v6650
    %v6716 = vrot.slane %v6715, 4
    %v6717 = vadd.f32 %v6715, %v6716
    %v6718 = vrot.slane %v6717, 2
    %v6719 = vadd.f32 %v6717, %v6718
    %v6720 = vrot.slane %v6719, 1
    %v6721 = vadd.f32 %v6719, %v6720
    %v6722 = vmul.f32 %v6399, %v6399
    %v6723 = vmul.f32 %v6402, %v6402
    %v6724 = vmul.f32 %v6407, %v6407
    %v6725 = vmul.f32 %v6410, %v6410
    %v6726 = vmul.f32 %v6415, %v6415
    %v6727 = vmul.f32 %v6418, %v6418
    %v6728 = vmul.f32 %v6423, %v6423
    %v6729 = vmul.f32 %v6426, %v6426
    %v6730 = vmul.f32 %v6431, %v6431
    %v6731 = vmul.f32 %v6434, %v6434
    %v6732 = vmul.f32 %v6439, %v6439
    %v6733 = vmul.f32 %v6442, %v6442
    %v6734 = vmul.f32 %v6447, %v6447
    %v6735 = vmul.f32 %v6450, %v6450
    %v6736 = vmul.f32 %v6455, %v6455
    %v6737 = vmul.f32 %v6458, %v6458
    %v6738 = vmul.f32 %v6463, %v6463
    %v6739 = vmul.f32 %v6466, %v6466
    %v6740 = vmul.f32 %v6471, %v6471
    %v6741 = vmul.f32 %v6474, %v6474
    %v6742 = vmul.f32 %v6479, %v6479
    %v6743 = vmul.f32 %v6482, %v6482
    %v6744 = vmul.f32 %v6487, %v6487
    %v6745 = vmul.f32 %v6490, %v6490
    %v6746 = vmul.f32 %v6495, %v6495
    %v6747 = vmul.f32 %v6498, %v6498
    %v6748 = vmul.f32 %v6503, %v6503
    %v6749 = vmul.f32 %v6506, %v6506
    %v6750 = vmul.f32 %v6511, %v6511
    %v6751 = vmul.f32 %v6514, %v6514
    %v6752 = vmul.f32 %v6519, %v6519
    %v6753 = vmul.f32 %v6522, %v6522
    %v6754 = vmul.f32 %v6527, %v6527
    %v6755 = vmul.f32 %v6530, %v6530
    %v6756 = vmul.f32 %v6535, %v6535
    %v6757 = vmul.f32 %v6538, %v6538
    %v6758 = vmul.f32 %v6543, %v6543
    %v6759 = vmul.f32 %v6546, %v6546
    %v6760 = vmul.f32 %v6551, %v6551
    %v6761 = vmul.f32 %v6554, %v6554
    %v6762 = vmul.f32 %v6559, %v6559
    %v6763 = vmul.f32 %v6562, %v6562
    %v6764 = vmul.f32 %v6567, %v6567
    %v6765 = vmul.f32 %v6570, %v6570
    %v6766 = vmul.f32 %v6575, %v6575
    %v6767 = vmul.f32 %v6578, %v6578
    %v6768 = vmul.f32 %v6583, %v6583
    %v6769 = vmul.f32 %v6586, %v6586
    %v6770 = vmul.f32 %v6591, %v6591
    %v6771 = vmul.f32 %v6594, %v6594
    %v6772 = vmul.f32 %v6599, %v6599
    %v6773 = vmul.f32 %v6602, %v6602
    %v6774 = vmul.f32 %v6607, %v6607
    %v6775 = vmul.f32 %v6610, %v6610
    %v6776 = vmul.f32 %v6615, %v6615
    %v6777 = vmul.f32 %v6618, %v6618
    %v6778 = vmul.f32 %v6623, %v6623
    %v6779 = vmul.f32 %v6626, %v6626
    %v6780 = vmul.f32 %v6631, %v6631
    %v6781 = vmul.f32 %v6634, %v6634
    %v6782 = vmul.f32 %v6639, %v6639
    %v6783 = vmul.f32 %v6642, %v6642
    %v6784 = vmul.f32 %v6647, %v6647
    %v6785 = vmul.f32 %v6650, %v6650
    %v6786 = vadd.f32 %v6722, %v6723
    %v6787 = vadd.f32 %v6786, %v6724
    %v6788 = vadd.f32 %v6787, %v6725
    %v6789 = vadd.f32 %v6788, %v6726
    %v6790 = vadd.f32 %v6789, %v6727
    %v6791 = vadd.f32 %v6790, %v6728
    %v6792 = vadd.f32 %v6791, %v6729
    %v6793 = vadd.f32 %v6792, %v6730
    %v6794 = vadd.f32 %v6793, %v6731
    %v6795 = vadd.f32 %v6794, %v6732
    %v6796 = vadd.f32 %v6795, %v6733
    %v6797 = vadd.f32 %v6796, %v6734
    %v6798 = vadd.f32 %v6797, %v6735
    %v6799 = vadd.f32 %v6798, %v6736
    %v6800 = vadd.f32 %v6799, %v6737
    %v6801 = vadd.f32 %v6800, %v6738
    %v6802 = vadd.f32 %v6801, %v6739
    %v6803 = vadd.f32 %v6802, %v6740
    %v6804 = vadd.f32 %v6803, %v6741
    %v6805 = vadd.f32 %v6804, %v6742
    %v6806 = vadd.f32 %v6805, %v6743
    %v6807 = vadd.f32 %v6806, %v6744
    %v6808 = vadd.f32 %v6807, %v6745
    %v6809 = vadd.f32 %v6808, %v6746
    %v6810 = vadd.f32 %v6809, %v6747
    %v6811 = vadd.f32 %v6810, %v6748
    %v6812 = vadd.f32 %v6811, %v6749
    %v6813 = vadd.f32 %v6812, %v6750
    %v6814 = vadd.f32 %v6813, %v6751
    %v6815 = vadd.f32 %v6814, %v6752
    %v6816 = vadd.f32 %v6815, %v6753
    %v6817 = vadd.f32 %v6816, %v6754
    %v6818 = vadd.f32 %v6817, %v6755
    %v6819 = vadd.f32 %v6818, %v6756
    %v6820 = vadd.f32 %v6819, %v6757
    %v6821 = vadd.f32 %v6820, %v6758
    %v6822 = vadd.f32 %v6821, %v6759
    %v6823 = vadd.f32 %v6822, %v6760
    %v6824 = vadd.f32 %v6823, %v6761
    %v6825 = vadd.f32 %v6824, %v6762
    %v6826 = vadd.f32 %v6825, %v6763
    %v6827 = vadd.f32 %v6826, %v6764
    %v6828 = vadd.f32 %v6827, %v6765
    %v6829 = vadd.f32 %v6828, %v6766
    %v6830 = vadd.f32 %v6829, %v6767
    %v6831 = vadd.f32 %v6830, %v6768
    %v6832 = vadd.f32 %v6831, %v6769
    %v6833 = vadd.f32 %v6832, %v6770
    %v6834 = vadd.f32 %v6833, %v6771
    %v6835 = vadd.f32 %v6834, %v6772
    %v6836 = vadd.f32 %v6835, %v6773
    %v6837 = vadd.f32 %v6836, %v6774
    %v6838 = vadd.f32 %v6837, %v6775
    %v6839 = vadd.f32 %v6838, %v6776
    %v6840 = vadd.f32 %v6839, %v6777
    %v6841 = vadd.f32 %v6840, %v6778
    %v6842 = vadd.f32 %v6841, %v6779
    %v6843 = vadd.f32 %v6842, %v6780
    %v6844 = vadd.f32 %v6843, %v6781
    %v6845 = vadd.f32 %v6844, %v6782
    %v6846 = vadd.f32 %v6845, %v6783
    %v6847 = vadd.f32 %v6846, %v6784
    %v6848 = vadd.f32 %v6847, %v6785
    %v6849 = vrot.slane %v6848, 4
    %v6850 = vadd.f32 %v6848, %v6849
    %v6851 = vrot.slane %v6850, 2
    %v6852 = vadd.f32 %v6850, %v6851
    %v6853 = vrot.slane %v6852, 1
    %v6854 = vadd.f32 %v6852, %v6853
    %v6855 = vmul.f32 %v6721, 0.001953125
    %v6856 = vmul.f32 %v6854, 0.001953125
    %v6857 = vmul.f32 %v6855, %v6855
    %v6858 = vsub.f32 %v6856, %v6857
    %v6859 = vmax.f32 %v6858, 0.0
    %v6860 = vadd.f32 %v6859, 1e-05
    %v6861 = vrsqrt.pop %v6860
    %v6862 = vld [vmem:[%s5] sm:$0x1]
    %v6863 = vmul.f32 %v6861, %v6862
    %v6864 = vsub.f32 %v6399, %v6855
    %v6865 = vsub.f32 %v6402, %v6855
    %v6866 = vsub.f32 %v6407, %v6855
    %v6867 = vsub.f32 %v6410, %v6855
    %v6868 = vsub.f32 %v6415, %v6855
    %v6869 = vsub.f32 %v6418, %v6855
    %v6870 = vsub.f32 %v6423, %v6855
    %v6871 = vsub.f32 %v6426, %v6855
    %v6872 = vsub.f32 %v6431, %v6855
    %v6873 = vsub.f32 %v6434, %v6855
    %v6874 = vsub.f32 %v6439, %v6855
    %v6875 = vsub.f32 %v6442, %v6855
    %v6876 = vsub.f32 %v6447, %v6855
    %v6877 = vsub.f32 %v6450, %v6855
    %v6878 = vsub.f32 %v6455, %v6855
    %v6879 = vsub.f32 %v6458, %v6855
    %v6880 = vsub.f32 %v6463, %v6855
    %v6881 = vsub.f32 %v6466, %v6855
    %v6882 = vsub.f32 %v6471, %v6855
    %v6883 = vsub.f32 %v6474, %v6855
    %v6884 = vsub.f32 %v6479, %v6855
    %v6885 = vsub.f32 %v6482, %v6855
    %v6886 = vsub.f32 %v6487, %v6855
    %v6887 = vsub.f32 %v6490, %v6855
    %v6888 = vsub.f32 %v6495, %v6855
    %v6889 = vsub.f32 %v6498, %v6855
    %v6890 = vsub.f32 %v6503, %v6855
    %v6891 = vsub.f32 %v6506, %v6855
    %v6892 = vsub.f32 %v6511, %v6855
    %v6893 = vsub.f32 %v6514, %v6855
    %v6894 = vsub.f32 %v6519, %v6855
    %v6895 = vsub.f32 %v6522, %v6855
    %v6896 = vsub.f32 %v6527, %v6855
    %v6897 = vsub.f32 %v6530, %v6855
    %v6898 = vsub.f32 %v6535, %v6855
    %v6899 = vsub.f32 %v6538, %v6855
    %v6900 = vsub.f32 %v6543, %v6855
    %v6901 = vsub.f32 %v6546, %v6855
    %v6902 = vsub.f32 %v6551, %v6855
    %v6903 = vsub.f32 %v6554, %v6855
    %v6904 = vsub.f32 %v6559, %v6855
    %v6905 = vsub.f32 %v6562, %v6855
    %v6906 = vsub.f32 %v6567, %v6855
    %v6907 = vsub.f32 %v6570, %v6855
    %v6908 = vsub.f32 %v6575, %v6855
    %v6909 = vsub.f32 %v6578, %v6855
    %v6910 = vsub.f32 %v6583, %v6855
    %v6911 = vsub.f32 %v6586, %v6855
    %v6912 = vsub.f32 %v6591, %v6855
    %v6913 = vsub.f32 %v6594, %v6855
    %v6914 = vsub.f32 %v6599, %v6855
    %v6915 = vsub.f32 %v6602, %v6855
    %v6916 = vsub.f32 %v6607, %v6855
    %v6917 = vsub.f32 %v6610, %v6855
    %v6918 = vsub.f32 %v6615, %v6855
    %v6919 = vsub.f32 %v6618, %v6855
    %v6920 = vsub.f32 %v6623, %v6855
    %v6921 = vsub.f32 %v6626, %v6855
    %v6922 = vsub.f32 %v6631, %v6855
    %v6923 = vsub.f32 %v6634, %v6855
    %v6924 = vsub.f32 %v6639, %v6855
    %v6925 = vsub.f32 %v6642, %v6855
    %v6926 = vsub.f32 %v6647, %v6855
    %v6927 = vsub.f32 %v6650, %v6855
    %v6928 = vlaneseq
    %v6929 = vshrl.u32 %v6928, 7
    %v6930 = vsub.s32 0, %v6929
    %v6931 = vrot.slane %v6863, %v6930
    %v6932 = vmul.f32 %v6864, %v6931
    %v6933 = vmul.f32 %v6865, %v6931
    %v6934 = vmul.f32 %v6866, %v6931
    %v6935 = vmul.f32 %v6867, %v6931
    %v6936 = vmul.f32 %v6868, %v6931
    %v6937 = vmul.f32 %v6869, %v6931
    %v6938 = vmul.f32 %v6870, %v6931
    %v6939 = vmul.f32 %v6871, %v6931
    %v6940 = vmul.f32 %v6872, %v6931
    %v6941 = vmul.f32 %v6873, %v6931
    %v6942 = vmul.f32 %v6874, %v6931
    %v6943 = vmul.f32 %v6875, %v6931
    %v6944 = vmul.f32 %v6876, %v6931
    %v6945 = vmul.f32 %v6877, %v6931
    %v6946 = vmul.f32 %v6878, %v6931
    %v6947 = vmul.f32 %v6879, %v6931
    %v6948 = vmul.f32 %v6880, %v6931
    %v6949 = vmul.f32 %v6881, %v6931
    %v6950 = vmul.f32 %v6882, %v6931
    %v6951 = vmul.f32 %v6883, %v6931
    %v6952 = vmul.f32 %v6884, %v6931
    %v6953 = vmul.f32 %v6885, %v6931
    %v6954 = vmul.f32 %v6886, %v6931
    %v6955 = vmul.f32 %v6887, %v6931
    %v6956 = vmul.f32 %v6888, %v6931
    %v6957 = vmul.f32 %v6889, %v6931
    %v6958 = vmul.f32 %v6890, %v6931
    %v6959 = vmul.f32 %v6891, %v6931
    %v6960 = vmul.f32 %v6892, %v6931
    %v6961 = vmul.f32 %v6893, %v6931
    %v6962 = vmul.f32 %v6894, %v6931
    %v6963 = vmul.f32 %v6895, %v6931
    %v6964 = vmul.f32 %v6896, %v6931
    %v6965 = vmul.f32 %v6897, %v6931
    %v6966 = vmul.f32 %v6898, %v6931
    %v6967 = vmul.f32 %v6899, %v6931
    %v6968 = vmul.f32 %v6900, %v6931
    %v6969 = vmul.f32 %v6901, %v6931
    %v6970 = vmul.f32 %v6902, %v6931
    %v6971 = vmul.f32 %v6903, %v6931
    %v6972 = vmul.f32 %v6904, %v6931
    %v6973 = vmul.f32 %v6905, %v6931
    %v6974 = vmul.f32 %v6906, %v6931
    %v6975 = vmul.f32 %v6907, %v6931
    %v6976 = vmul.f32 %v6908, %v6931
    %v6977 = vmul.f32 %v6909, %v6931
    %v6978 = vmul.f32 %v6910, %v6931
    %v6979 = vmul.f32 %v6911, %v6931
    %v6980 = vmul.f32 %v6912, %v6931
    %v6981 = vmul.f32 %v6913, %v6931
    %v6982 = vmul.f32 %v6914, %v6931
    %v6983 = vmul.f32 %v6915, %v6931
    %v6984 = vmul.f32 %v6916, %v6931
    %v6985 = vmul.f32 %v6917, %v6931
    %v6986 = vmul.f32 %v6918, %v6931
    %v6987 = vmul.f32 %v6919, %v6931
    %v6988 = vmul.f32 %v6920, %v6931
    %v6989 = vmul.f32 %v6921, %v6931
    %v6990 = vmul.f32 %v6922, %v6931
    %v6991 = vmul.f32 %v6923, %v6931
    %v6992 = vmul.f32 %v6924, %v6931
    %v6993 = vmul.f32 %v6925, %v6931
    %v6994 = vmul.f32 %v6926, %v6931
    %v6995 = vmul.f32 %v6927, %v6931
    %v6996 = vld [vmem:[%s6] sm:$0x1]
    %v6998 = vlaneseq
    %v6999 = vshrl.u32 %v6998, 7
    %v7000 = vsub.s32 0, %v6999
    %v7001 = vrot.slane %v6996, %v7000
    %v7003 = vadd.f32 %v6932, %v7001
    %v7004 = vadd.f32 %v6933, %v7001
    %v7005 = vadd.f32 %v6934, %v7001
    %v7006 = vadd.f32 %v6935, %v7001
    %v7007 = vadd.f32 %v6936, %v7001
    %v7008 = vadd.f32 %v6937, %v7001
    %v7009 = vadd.f32 %v6938, %v7001
    %v7010 = vadd.f32 %v6939, %v7001
    %v7011 = vadd.f32 %v6940, %v7001
    %v7012 = vadd.f32 %v6941, %v7001
    %v7013 = vadd.f32 %v6942, %v7001
    %v7014 = vadd.f32 %v6943, %v7001
    %v7015 = vadd.f32 %v6944, %v7001
    %v7016 = vadd.f32 %v6945, %v7001
    %v7017 = vadd.f32 %v6946, %v7001
    %v7018 = vadd.f32 %v6947, %v7001
    %v7019 = vadd.f32 %v6948, %v7001
    %v7020 = vadd.f32 %v6949, %v7001
    %v7021 = vadd.f32 %v6950, %v7001
    %v7022 = vadd.f32 %v6951, %v7001
    %v7023 = vadd.f32 %v6952, %v7001
    %v7024 = vadd.f32 %v6953, %v7001
    %v7025 = vadd.f32 %v6954, %v7001
    %v7026 = vadd.f32 %v6955, %v7001
    %v7027 = vadd.f32 %v6956, %v7001
    %v7028 = vadd.f32 %v6957, %v7001
    %v7029 = vadd.f32 %v6958, %v7001
    %v7030 = vadd.f32 %v6959, %v7001
    %v7031 = vadd.f32 %v6960, %v7001
    %v7032 = vadd.f32 %v6961, %v7001
    %v7033 = vadd.f32 %v6962, %v7001
    %v7034 = vadd.f32 %v6963, %v7001
    %v7035 = vadd.f32 %v6964, %v7001
    %v7036 = vadd.f32 %v6965, %v7001
    %v7037 = vadd.f32 %v6966, %v7001
    %v7038 = vadd.f32 %v6967, %v7001
    %v7039 = vadd.f32 %v6968, %v7001
    %v7040 = vadd.f32 %v6969, %v7001
    %v7041 = vadd.f32 %v6970, %v7001
    %v7042 = vadd.f32 %v6971, %v7001
    %v7043 = vadd.f32 %v6972, %v7001
    %v7044 = vadd.f32 %v6973, %v7001
    %v7045 = vadd.f32 %v6974, %v7001
    %v7046 = vadd.f32 %v6975, %v7001
    %v7047 = vadd.f32 %v6976, %v7001
    %v7048 = vadd.f32 %v6977, %v7001
    %v7049 = vadd.f32 %v6978, %v7001
    %v7050 = vadd.f32 %v6979, %v7001
    %v7051 = vadd.f32 %v6980, %v7001
    %v7052 = vadd.f32 %v6981, %v7001
    %v7053 = vadd.f32 %v6982, %v7001
    %v7054 = vadd.f32 %v6983, %v7001
    %v7055 = vadd.f32 %v6984, %v7001
    %v7056 = vadd.f32 %v6985, %v7001
    %v7057 = vadd.f32 %v6986, %v7001
    %v7058 = vadd.f32 %v6987, %v7001
    %v7059 = vadd.f32 %v6988, %v7001
    %v7060 = vadd.f32 %v6989, %v7001
    %v7061 = vadd.f32 %v6990, %v7001
    %v7062 = vadd.f32 %v6991, %v7001
    %v7063 = vadd.f32 %v6992, %v7001
    %v7064 = vadd.f32 %v6993, %v7001
    %v7065 = vadd.f32 %v6994, %v7001
    %v7066 = vadd.f32 %v6995, %v7001
    %v7067 = vld [vmem:[#allocation3] sm:$0xff]
    %v7068 = vld [vmem:[#allocation3 + $0x8] sm:$0xff]
    %v7069 = vld [vmem:[#allocation3 + $0x10] sm:$0xff]
    %v7070 = vld [vmem:[#allocation3 + $0x18] sm:$0xff]
    %v7071 = vld [vmem:[#allocation3 + $0x20] sm:$0xff]
    %v7072 = vld [vmem:[#allocation3 + $0x28] sm:$0xff]
    %v7073 = vld [vmem:[#allocation3 + $0x30] sm:$0xff]
    %v7074 = vld [vmem:[#allocation3 + $0x38] sm:$0xff]
    %v7075 = vld [vmem:[#allocation3 + $0x40] sm:$0xff]
    %v7076 = vld [vmem:[#allocation3 + $0x48] sm:$0xff]
    %v7077 = vld [vmem:[#allocation3 + $0x50] sm:$0xff]
    %v7078 = vld [vmem:[#allocation3 + $0x58] sm:$0xff]
    %v7079 = vld [vmem:[#allocation3 + $0x60] sm:$0xff]
    %v7080 = vld [vmem:[#allocation3 + $0x68] sm:$0xff]
    %v7081 = vld [vmem:[#allocation3 + $0x70] sm:$0xff]
    %v7082 = vld [vmem:[#allocation3 + $0x78] sm:$0xff]
    %v7083 = vld [vmem:[#allocation3 + $0x80] sm:$0xff]
    %v7084 = vld [vmem:[#allocation3 + $0x88] sm:$0xff]
    %v7085 = vld [vmem:[#allocation3 + $0x90] sm:$0xff]
    %v7086 = vld [vmem:[#allocation3 + $0x98] sm:$0xff]
    %v7087 = vld [vmem:[#allocation3 + $0xa0] sm:$0xff]
    %v7088 = vld [vmem:[#allocation3 + $0xa8] sm:$0xff]
    %v7089 = vld [vmem:[#allocation3 + $0xb0] sm:$0xff]
    %v7090 = vld [vmem:[#allocation3 + $0xb8] sm:$0xff]
    %v7091 = vld [vmem:[#allocation3 + $0xc0] sm:$0xff]
    %v7092 = vld [vmem:[#allocation3 + $0xc8] sm:$0xff]
    %v7093 = vld [vmem:[#allocation3 + $0xd0] sm:$0xff]
    %v7094 = vld [vmem:[#allocation3 + $0xd8] sm:$0xff]
    %v7095 = vld [vmem:[#allocation3 + $0xe0] sm:$0xff]
    %v7096 = vld [vmem:[#allocation3 + $0xe8] sm:$0xff]
    %v7097 = vld [vmem:[#allocation3 + $0xf0] sm:$0xff]
    %v7098 = vld [vmem:[#allocation3 + $0xf8] sm:$0xff]
    %v7099 = vld [vmem:[#allocation3 + $0x100] sm:$0xff]
    %v7100 = vld [vmem:[#allocation3 + $0x108] sm:$0xff]
    %v7101 = vld [vmem:[#allocation3 + $0x110] sm:$0xff]
    %v7102 = vld [vmem:[#allocation3 + $0x118] sm:$0xff]
    %v7103 = vld [vmem:[#allocation3 + $0x120] sm:$0xff]
    %v7104 = vld [vmem:[#allocation3 + $0x128] sm:$0xff]
    %v7105 = vld [vmem:[#allocation3 + $0x130] sm:$0xff]
    %v7106 = vld [vmem:[#allocation3 + $0x138] sm:$0xff]
    %v7107 = vld [vmem:[#allocation3 + $0x140] sm:$0xff]
    %v7108 = vld [vmem:[#allocation3 + $0x148] sm:$0xff]
    %v7109 = vld [vmem:[#allocation3 + $0x150] sm:$0xff]
    %v7110 = vld [vmem:[#allocation3 + $0x158] sm:$0xff]
    %v7111 = vld [vmem:[#allocation3 + $0x160] sm:$0xff]
    %v7112 = vld [vmem:[#allocation3 + $0x168] sm:$0xff]
    %v7113 = vld [vmem:[#allocation3 + $0x170] sm:$0xff]
    %v7114 = vld [vmem:[#allocation3 + $0x178] sm:$0xff]
    %v7115 = vld [vmem:[#allocation3 + $0x180] sm:$0xff]
    %v7116 = vld [vmem:[#allocation3 + $0x188] sm:$0xff]
    %v7117 = vld [vmem:[#allocation3 + $0x190] sm:$0xff]
    %v7118 = vld [vmem:[#allocation3 + $0x198] sm:$0xff]
    %v7119 = vld [vmem:[#allocation3 + $0x1a0] sm:$0xff]
    %v7120 = vld [vmem:[#allocation3 + $0x1a8] sm:$0xff]
    %v7121 = vld [vmem:[#allocation3 + $0x1b0] sm:$0xff]
    %v7122 = vld [vmem:[#allocation3 + $0x1b8] sm:$0xff]
    %v7123 = vld [vmem:[#allocation3 + $0x1c0] sm:$0xff]
    %v7124 = vld [vmem:[#allocation3 + $0x1c8] sm:$0xff]
    %v7125 = vld [vmem:[#allocation3 + $0x1d0] sm:$0xff]
    %v7126 = vld [vmem:[#allocation3 + $0x1d8] sm:$0xff]
    %v7127 = vld [vmem:[#allocation3 + $0x1e0] sm:$0xff]
    %v7128 = vld [vmem:[#allocation3 + $0x1e8] sm:$0xff]
    %v7129 = vld [vmem:[#allocation3 + $0x1f0] sm:$0xff]
    %v7130 = vld [vmem:[#allocation3 + $0x1f8] sm:$0xff]
    %v7131 = vadd.f32 %v7067, %v7003
    %v7132 = vadd.f32 %v7068, %v7004
    %v7133 = vadd.f32 %v7069, %v7005
    %v7134 = vadd.f32 %v7070, %v7006
    %v7135 = vadd.f32 %v7071, %v7007
    %v7136 = vadd.f32 %v7072, %v7008
    %v7137 = vadd.f32 %v7073, %v7009
    %v7138 = vadd.f32 %v7074, %v7010
    %v7139 = vadd.f32 %v7075, %v7011
    %v7140 = vadd.f32 %v7076, %v7012
    %v7141 = vadd.f32 %v7077, %v7013
    %v7142 = vadd.f32 %v7078, %v7014
    %v7143 = vadd.f32 %v7079, %v7015
    %v7144 = vadd.f32 %v7080, %v7016
    %v7145 = vadd.f32 %v7081, %v7017
    %v7146 = vadd.f32 %v7082, %v7018
    %v7147 = vadd.f32 %v7083, %v7019
    %v7148 = vadd.f32 %v7084, %v7020
    %v7149 = vadd.f32 %v7085, %v7021
    %v7150 = vadd.f32 %v7086, %v7022
    %v7151 = vadd.f32 %v7087, %v7023
    %v7152 = vadd.f32 %v7088, %v7024
    %v7153 = vadd.f32 %v7089, %v7025
    %v7154 = vadd.f32 %v7090, %v7026
    %v7155 = vadd.f32 %v7091, %v7027
    %v7156 = vadd.f32 %v7092, %v7028
    %v7157 = vadd.f32 %v7093, %v7029
    %v7158 = vadd.f32 %v7094, %v7030
    %v7159 = vadd.f32 %v7095, %v7031
    %v7160 = vadd.f32 %v7096, %v7032
    %v7161 = vadd.f32 %v7097, %v7033
    %v7162 = vadd.f32 %v7098, %v7034
    %v7163 = vadd.f32 %v7099, %v7035
    %v7164 = vadd.f32 %v7100, %v7036
    %v7165 = vadd.f32 %v7101, %v7037
    %v7166 = vadd.f32 %v7102, %v7038
    %v7167 = vadd.f32 %v7103, %v7039
    %v7168 = vadd.f32 %v7104, %v7040
    %v7169 = vadd.f32 %v7105, %v7041
    %v7170 = vadd.f32 %v7106, %v7042
    %v7171 = vadd.f32 %v7107, %v7043
    %v7172 = vadd.f32 %v7108, %v7044
    %v7173 = vadd.f32 %v7109, %v7045
    %v7174 = vadd.f32 %v7110, %v7046
    %v7175 = vadd.f32 %v7111, %v7047
    %v7176 = vadd.f32 %v7112, %v7048
    %v7177 = vadd.f32 %v7113, %v7049
    %v7178 = vadd.f32 %v7114, %v7050
    %v7179 = vadd.f32 %v7115, %v7051
    %v7180 = vadd.f32 %v7116, %v7052
    %v7181 = vadd.f32 %v7117, %v7053
    %v7182 = vadd.f32 %v7118, %v7054
    %v7183 = vadd.f32 %v7119, %v7055
    %v7184 = vadd.f32 %v7120, %v7056
    %v7185 = vadd.f32 %v7121, %v7057
    %v7186 = vadd.f32 %v7122, %v7058
    %v7187 = vadd.f32 %v7123, %v7059
    %v7188 = vadd.f32 %v7124, %v7060
    %v7189 = vadd.f32 %v7125, %v7061
    %v7190 = vadd.f32 %v7126, %v7062
    %v7191 = vadd.f32 %v7127, %v7063
    %v7192 = vadd.f32 %v7128, %v7064
    %v7193 = vadd.f32 %v7129, %v7065
    %v7194 = vadd.f32 %v7130, %v7066
    %vm7195 = vcmp.ge.f32.partialorder %v7131, 0.0
    %vm7196 = vcmp.ge.f32.partialorder %v7132, 0.0
    %vm7197 = vcmp.ge.f32.partialorder %v7133, 0.0
    %vm7198 = vcmp.ge.f32.partialorder %v7134, 0.0
    %vm7199 = vcmp.ge.f32.partialorder %v7135, 0.0
    %vm7200 = vcmp.ge.f32.partialorder %v7136, 0.0
    %vm7201 = vcmp.ge.f32.partialorder %v7137, 0.0
    %vm7202 = vcmp.ge.f32.partialorder %v7138, 0.0
    %vm7203 = vcmp.ge.f32.partialorder %v7139, 0.0
    %vm7204 = vcmp.ge.f32.partialorder %v7140, 0.0
    %vm7205 = vcmp.ge.f32.partialorder %v7141, 0.0
    %vm7206 = vcmp.ge.f32.partialorder %v7142, 0.0
    %vm7207 = vcmp.ge.f32.partialorder %v7143, 0.0
    %vm7208 = vcmp.ge.f32.partialorder %v7144, 0.0
    %vm7209 = vcmp.ge.f32.partialorder %v7145, 0.0
    %vm7210 = vcmp.ge.f32.partialorder %v7146, 0.0
    %vm7211 = vcmp.ge.f32.partialorder %v7147, 0.0
    %vm7212 = vcmp.ge.f32.partialorder %v7148, 0.0
    %vm7213 = vcmp.ge.f32.partialorder %v7149, 0.0
    %vm7214 = vcmp.ge.f32.partialorder %v7150, 0.0
    %vm7215 = vcmp.ge.f32.partialorder %v7151, 0.0
    %vm7216 = vcmp.ge.f32.partialorder %v7152, 0.0
    %vm7217 = vcmp.ge.f32.partialorder %v7153, 0.0
    %vm7218 = vcmp.ge.f32.partialorder %v7154, 0.0
    %vm7219 = vcmp.ge.f32.partialorder %v7155, 0.0
    %vm7220 = vcmp.ge.f32.partialorder %v7156, 0.0
    %vm7221 = vcmp.ge.f32.partialorder %v7157, 0.0
    %vm7222 = vcmp.ge.f32.partialorder %v7158, 0.0
    %vm7223 = vcmp.ge.f32.partialorder %v7159, 0.0
    %vm7224 = vcmp.ge.f32.partialorder %v7160, 0.0
    %vm7225 = vcmp.ge.f32.partialorder %v7161, 0.0
    %vm7226 = vcmp.ge.f32.partialorder %v7162, 0.0
    %vm7227 = vcmp.ge.f32.partialorder %v7163, 0.0
    %vm7228 = vcmp.ge.f32.partialorder %v7164, 0.0
    %vm7229 = vcmp.ge.f32.partialorder %v7165, 0.0
    %vm7230 = vcmp.ge.f32.partialorder %v7166, 0.0
    %vm7231 = vcmp.ge.f32.partialorder %v7167, 0.0
    %vm7232 = vcmp.ge.f32.partialorder %v7168, 0.0
    %vm7233 = vcmp.ge.f32.partialorder %v7169, 0.0
    %vm7234 = vcmp.ge.f32.partialorder %v7170, 0.0
    %vm7235 = vcmp.ge.f32.partialorder %v7171, 0.0
    %vm7236 = vcmp.ge.f32.partialorder %v7172, 0.0
    %vm7237 = vcmp.ge.f32.partialorder %v7173, 0.0
    %vm7238 = vcmp.ge.f32.partialorder %v7174, 0.0
    %vm7239 = vcmp.ge.f32.partialorder %v7175, 0.0
    %vm7240 = vcmp.ge.f32.partialorder %v7176, 0.0
    %vm7241 = vcmp.ge.f32.partialorder %v7177, 0.0
    %vm7242 = vcmp.ge.f32.partialorder %v7178, 0.0
    %vm7243 = vcmp.ge.f32.partialorder %v7179, 0.0
    %vm7244 = vcmp.ge.f32.partialorder %v7180, 0.0
    %vm7245 = vcmp.ge.f32.partialorder %v7181, 0.0
    %vm7246 = vcmp.ge.f32.partialorder %v7182, 0.0
    %vm7247 = vcmp.ge.f32.partialorder %v7183, 0.0
    %vm7248 = vcmp.ge.f32.partialorder %v7184, 0.0
    %vm7249 = vcmp.ge.f32.partialorder %v7185, 0.0
    %vm7250 = vcmp.ge.f32.partialorder %v7186, 0.0
    %vm7251 = vcmp.ge.f32.partialorder %v7187, 0.0
    %vm7252 = vcmp.ge.f32.partialorder %v7188, 0.0
    %vm7253 = vcmp.ge.f32.partialorder %v7189, 0.0
    %vm7254 = vcmp.ge.f32.partialorder %v7190, 0.0
    %vm7255 = vcmp.ge.f32.partialorder %v7191, 0.0
    %vm7256 = vcmp.ge.f32.partialorder %v7192, 0.0
    %vm7257 = vcmp.ge.f32.partialorder %v7193, 0.0
    %vm7258 = vcmp.ge.f32.partialorder %v7194, 0.0
    %v7259 = vmul.f32 %v7131, 0.1
    %v7260 = vmul.f32 %v7132, 0.1
    %v7261 = vmul.f32 %v7133, 0.1
    %v7262 = vmul.f32 %v7134, 0.1
    %v7263 = vmul.f32 %v7135, 0.1
    %v7264 = vmul.f32 %v7136, 0.1
    %v7265 = vmul.f32 %v7137, 0.1
    %v7266 = vmul.f32 %v7138, 0.1
    %v7267 = vmul.f32 %v7139, 0.1
    %v7268 = vmul.f32 %v7140, 0.1
    %v7269 = vmul.f32 %v7141, 0.1
    %v7270 = vmul.f32 %v7142, 0.1
    %v7271 = vmul.f32 %v7143, 0.1
    %v7272 = vmul.f32 %v7144, 0.1
    %v7273 = vmul.f32 %v7145, 0.1
    %v7274 = vmul.f32 %v7146, 0.1
    %v7275 = vmul.f32 %v7147, 0.1
    %v7276 = vmul.f32 %v7148, 0.1
    %v7277 = vmul.f32 %v7149, 0.1
    %v7278 = vmul.f32 %v7150, 0.1
    %v7279 = vmul.f32 %v7151, 0.1
    %v7280 = vmul.f32 %v7152, 0.1
    %v7281 = vmul.f32 %v7153, 0.1
    %v7282 = vmul.f32 %v7154, 0.1
    %v7283 = vmul.f32 %v7155, 0.1
    %v7284 = vmul.f32 %v7156, 0.1
    %v7285 = vmul.f32 %v7157, 0.1
    %v7286 = vmul.f32 %v7158, 0.1
    %v7287 = vmul.f32 %v7159, 0.1
    %v7288 = vmul.f32 %v7160, 0.1
    %v7289 = vmul.f32 %v7161, 0.1
    %v7290 = vmul.f32 %v7162, 0.1
    %v7291 = vmul.f32 %v7163, 0.1
    %v7292 = vmul.f32 %v7164, 0.1
    %v7293 = vmul.f32 %v7165, 0.1
    %v7294 = vmul.f32 %v7166, 0.1
    %v7295 = vmul.f32 %v7167, 0.1
    %v7296 = vmul.f32 %v7168, 0.1
    %v7297 = vmul.f32 %v7169, 0.1
    %v7298 = vmul.f32 %v7170, 0.1
    %v7299 = vmul.f32 %v7171, 0.1
    %v7300 = vmul.f32 %v7172, 0.1
    %v7301 = vmul.f32 %v7173, 0.1
    %v7302 = vmul.f32 %v7174, 0.1
    %v7303 = vmul.f32 %v7175, 0.1
    %v7304 = vmul.f32 %v7176, 0.1
    %v7305 = vmul.f32 %v7177, 0.1
    %v7306 = vmul.f32 %v7178, 0.1
    %v7307 = vmul.f32 %v7179, 0.1
    %v7308 = vmul.f32 %v7180, 0.1
    %v7309 = vmul.f32 %v7181, 0.1
    %v7310 = vmul.f32 %v7182, 0.1
    %v7311 = vmul.f32 %v7183, 0.1
    %v7312 = vmul.f32 %v7184, 0.1
    %v7313 = vmul.f32 %v7185, 0.1
    %v7314 = vmul.f32 %v7186, 0.1
    %v7315 = vmul.f32 %v7187, 0.1
    %v7316 = vmul.f32 %v7188, 0.1
    %v7317 = vmul.f32 %v7189, 0.1
    %v7318 = vmul.f32 %v7190, 0.1
    %v7319 = vmul.f32 %v7191, 0.1
    %v7320 = vmul.f32 %v7192, 0.1
    %v7321 = vmul.f32 %v7193, 0.1
    %v7322 = vmul.f32 %v7194, 0.1
    %v7323 = vsel %vm7195, %v7131, %v7259
    %v7324 = vsel %vm7196, %v7132, %v7260
    %v7325 = vsel %vm7197, %v7133, %v7261
    %v7326 = vsel %vm7198, %v7134, %v7262
    %v7327 = vsel %vm7199, %v7135, %v7263
    %v7328 = vsel %vm7200, %v7136, %v7264
    %v7329 = vsel %vm7201, %v7137, %v7265
    %v7330 = vsel %vm7202, %v7138, %v7266
    %v7331 = vsel %vm7203, %v7139, %v7267
    %v7332 = vsel %vm7204, %v7140, %v7268
    %v7333 = vsel %vm7205, %v7141, %v7269
    %v7334 = vsel %vm7206, %v7142, %v7270
    %v7335 = vsel %vm7207, %v7143, %v7271
    %v7336 = vsel %vm7208, %v7144, %v7272
    %v7337 = vsel %vm7209, %v7145, %v7273
    %v7338 = vsel %vm7210, %v7146, %v7274
    %v7339 = vsel %vm7211, %v7147, %v7275
    %v7340 = vsel %vm7212, %v7148, %v7276
    %v7341 = vsel %vm7213, %v7149, %v7277
    %v7342 = vsel %vm7214, %v7150, %v7278
    %v7343 = vsel %vm7215, %v7151, %v7279
    %v7344 = vsel %vm7216, %v7152, %v7280
    %v7345 = vsel %vm7217, %v7153, %v7281
    %v7346 = vsel %vm7218, %v7154, %v7282
    %v7347 = vsel %vm7219, %v7155, %v7283
    %v7348 = vsel %vm7220, %v7156, %v7284
    %v7349 = vsel %vm7221, %v7157, %v7285
    %v7350 = vsel %vm7222, %v7158, %v7286
    %v7351 = vsel %vm7223, %v7159, %v7287
    %v7352 = vsel %vm7224, %v7160, %v7288
    %v7353 = vsel %vm7225, %v7161, %v7289
    %v7354 = vsel %vm7226, %v7162, %v7290
    %v7355 = vsel %vm7227, %v7163, %v7291
    %v7356 = vsel %vm7228, %v7164, %v7292
    %v7357 = vsel %vm7229, %v7165, %v7293
    %v7358 = vsel %vm7230, %v7166, %v7294
    %v7359 = vsel %vm7231, %v7167, %v7295
    %v7360 = vsel %vm7232, %v7168, %v7296
    %v7361 = vsel %vm7233, %v7169, %v7297
    %v7362 = vsel %vm7234, %v7170, %v7298
    %v7363 = vsel %vm7235, %v7171, %v7299
    %v7364 = vsel %vm7236, %v7172, %v7300
    %v7365 = vsel %vm7237, %v7173, %v7301
    %v7366 = vsel %vm7238, %v7174, %v7302
    %v7367 = vsel %vm7239, %v7175, %v7303
    %v7368 = vsel %vm7240, %v7176, %v7304
    %v7369 = vsel %vm7241, %v7177, %v7305
    %v7370 = vsel %vm7242, %v7178, %v7306
    %v7371 = vsel %vm7243, %v7179, %v7307
    %v7372 = vsel %vm7244, %v7180, %v7308
    %v7373 = vsel %vm7245, %v7181, %v7309
    %v7374 = vsel %vm7246, %v7182, %v7310
    %v7375 = vsel %vm7247, %v7183, %v7311
    %v7376 = vsel %vm7248, %v7184, %v7312
    %v7377 = vsel %vm7249, %v7185, %v7313
    %v7378 = vsel %vm7250, %v7186, %v7314
    %v7379 = vsel %vm7251, %v7187, %v7315
    %v7380 = vsel %vm7252, %v7188, %v7316
    %v7381 = vsel %vm7253, %v7189, %v7317
    %v7382 = vsel %vm7254, %v7190, %v7318
    %v7383 = vsel %vm7255, %v7191, %v7319
    %v7384 = vsel %vm7256, %v7192, %v7320
    %v7385 = vsel %vm7257, %v7193, %v7321
    %v7386 = vsel %vm7258, %v7194, %v7322
    %7387 = vst [vmem:[#allocation9] sm:$0xff] %v7323
    %7388 = vst [vmem:[#allocation9 + $0x8] sm:$0xff] %v7324
    %7389 = vst [vmem:[#allocation9 + $0x10] sm:$0xff] %v7325
    %7390 = vst [vmem:[#allocation9 + $0x18] sm:$0xff] %v7326
    %7391 = vst [vmem:[#allocation9 + $0x20] sm:$0xff] %v7327
    %7392 = vst [vmem:[#allocation9 + $0x28] sm:$0xff] %v7328
    %7393 = vst [vmem:[#allocation9 + $0x30] sm:$0xff] %v7329
    %7394 = vst [vmem:[#allocation9 + $0x38] sm:$0xff] %v7330
    %7395 = vst [vmem:[#allocation9 + $0x40] sm:$0xff] %v7331
    %7396 = vst [vmem:[#allocation9 + $0x48] sm:$0xff] %v7332
    %7397 = vst [vmem:[#allocation9 + $0x50] sm:$0xff] %v7333
    %7398 = vst [vmem:[#allocation9 + $0x58] sm:$0xff] %v7334
    %7399 = vst [vmem:[#allocation9 + $0x60] sm:$0xff] %v7335
    %7400 = vst [vmem:[#allocation9 + $0x68] sm:$0xff] %v7336
    %7401 = vst [vmem:[#allocation9 + $0x70] sm:$0xff] %v7337
    %7402 = vst [vmem:[#allocation9 + $0x78] sm:$0xff] %v7338
    %7403 = vst [vmem:[#allocation9 + $0x80] sm:$0xff] %v7339
    %7404 = vst [vmem:[#allocation9 + $0x88] sm:$0xff] %v7340
    %7405 = vst [vmem:[#allocation9 + $0x90] sm:$0xff] %v7341
    %7406 = vst [vmem:[#allocation9 + $0x98] sm:$0xff] %v7342
    %7407 = vst [vmem:[#allocation9 + $0xa0] sm:$0xff] %v7343
    %7408 = vst [vmem:[#allocation9 + $0xa8] sm:$0xff] %v7344
    %7409 = vst [vmem:[#allocation9 + $0xb0] sm:$0xff] %v7345
    %7410 = vst [vmem:[#allocation9 + $0xb8] sm:$0xff] %v7346
    %7411 = vst [vmem:[#allocation9 + $0xc0] sm:$0xff] %v7347
    %7412 = vst [vmem:[#allocation9 + $0xc8] sm:$0xff] %v7348
    %7413 = vst [vmem:[#allocation9 + $0xd0] sm:$0xff] %v7349
    %7414 = vst [vmem:[#allocation9 + $0xd8] sm:$0xff] %v7350
    %7415 = vst [vmem:[#allocation9 + $0xe0] sm:$0xff] %v7351
    %7416 = vst [vmem:[#allocation9 + $0xe8] sm:$0xff] %v7352
    %7417 = vst [vmem:[#allocation9 + $0xf0] sm:$0xff] %v7353
    %7418 = vst [vmem:[#allocation9 + $0xf8] sm:$0xff] %v7354
    %7419 = vst [vmem:[#allocation9 + $0x100] sm:$0xff] %v7355
    %7420 = vst [vmem:[#allocation9 + $0x108] sm:$0xff] %v7356
    %7421 = vst [vmem:[#allocation9 + $0x110] sm:$0xff] %v7357
    %7422 = vst [vmem:[#allocation9 + $0x118] sm:$0xff] %v7358
    %7423 = vst [vmem:[#allocation9 + $0x120] sm:$0xff] %v7359
    %7424 = vst [vmem:[#allocation9 + $0x128] sm:$0xff] %v7360
    %7425 = vst [vmem:[#allocation9 + $0x130] sm:$0xff] %v7361
    %7426 = vst [vmem:[#allocation9 + $0x138] sm:$0xff] %v7362
    %7427 = vst [vmem:[#allocation9 + $0x140] sm:$0xff] %v7363
    %7428 = vst [vmem:[#allocation9 + $0x148] sm:$0xff] %v7364
    %7429 = vst [vmem:[#allocation9 + $0x150] sm:$0xff] %v7365
    %7430 = vst [vmem:[#allocation9 + $0x158] sm:$0xff] %v7366
    %7431 = vst [vmem:[#allocation9 + $0x160] sm:$0xff] %v7367
    %7432 = vst [vmem:[#allocation9 + $0x168] sm:$0xff] %v7368
    %7433 = vst [vmem:[#allocation9 + $0x170] sm:$0xff] %v7369
    %7434 = vst [vmem:[#allocation9 + $0x178] sm:$0xff] %v7370
    %7435 = vst [vmem:[#allocation9 + $0x180] sm:$0xff] %v7371
    %7436 = vst [vmem:[#allocation9 + $0x188] sm:$0xff] %v7372
    %7437 = vst [vmem:[#allocation9 + $0x190] sm:$0xff] %v7373
    %7438 = vst [vmem:[#allocation9 + $0x198] sm:$0xff] %v7374
    %7439 = vst [vmem:[#allocation9 + $0x1a0] sm:$0xff] %v7375
    %7440 = vst [vmem:[#allocation9 + $0x1a8] sm:$0xff] %v7376
    %7441 = vst [vmem:[#allocation9 + $0x1b0] sm:$0xff] %v7377
    %7442 = vst [vmem:[#allocation9 + $0x1b8] sm:$0xff] %v7378
    %7443 = vst [vmem:[#allocation9 + $0x1c0] sm:$0xff] %v7379
    %7444 = vst [vmem:[#allocation9 + $0x1c8] sm:$0xff] %v7380
    %7445 = vst [vmem:[#allocation9 + $0x1d0] sm:$0xff] %v7381
    %7446 = vst [vmem:[#allocation9 + $0x1d8] sm:$0xff] %v7382
    %7447 = vst [vmem:[#allocation9 + $0x1e0] sm:$0xff] %v7383
    %7448 = vst [vmem:[#allocation9 + $0x1e8] sm:$0xff] %v7384
    %7449 = vst [vmem:[#allocation9 + $0x1f0] sm:$0xff] %v7385
    %7450 = vst [vmem:[#allocation9 + $0x1f8] sm:$0xff] %v7386
    // Predicated region
    $region42: #{tpu_custom_call.1} parent=1 // pred_check
      _
    $region43: #{tpu_custom_call.1} parent=1 // pred_check_branch
      %7452 = sbr.rel (0) target = $region45
    $region44: #{tpu_custom_call.1} parent=1 // pred_region
      %s7454 = ssub.s32 8192, 8192
      %7455 = vsyncadd [#allocation5], %s7454
      %s7456 = sshll.u32 [#allocation9], 4
      %s7457 = int_to_ptr.vmem [resolvable:$true] %s7456
      %7462 = dma.vmem_to_hbm [thread:$0]  %s7457, 8192, %s7, [#allocation5], 128, 128, 8
    $region45: #{tpu_custom_call.1} parent=1 // pred_fallthru
      _
    // Predicated region
    $region46: #{tpu_custom_call.1} parent=1 // pred_check
      _
    $region47: #{tpu_custom_call.1} parent=1 // pred_check_branch
      %7464 = sbr.rel (0) target = $region49
    $region48: #{tpu_custom_call.1} parent=1 // pred_region
      %7465 = dma.done [#allocation5], 8192
    $region49: #{tpu_custom_call.1} parent=1 // pred_fallthru
      _
    %7466 = vsyncpa [#allocation4], 1
    %7467 = vsyncpa [#allocation7], 1
    %7468 = vsyncpa [#allocation5], 1

</llo_original>
